<compile_context>
chip_gen: v5e
topology: v5e:2x2
jax: 0.10.0
libtpu: 0.0.40
codegen_flags: <defaults>
</compile_context>

<pallas_src>
import functools

import jax
import jax.numpy as jnp
from jax.experimental import pallas as pl
from jax.experimental.pallas import tpu as pltpu

LANE = 128
MAX_BLOCK_ROWS = 2048   # single-block threshold for the row axis
ROW_TILE = 512          # row tile when an array exceeds the threshold


# ------------------------------ small helpers -------------------------------

def _round_up(x, m):
    return ((x + m - 1) // m) * m


def _pad_rows(x, mult):
    m = x.shape[0]
    mp = _round_up(m, mult)
    if mp != m:
        x = jnp.pad(x, ((0, mp - m), (0, 0)))
    return x


def _row_tiling(m):
    """(tile_rows, grid_steps) for the row axis; single block when small."""
    if m <= MAX_BLOCK_ROWS:
        return m, 1
    return ROW_TILE, (m + ROW_TILE - 1) // ROW_TILE


def _lane_group(c):
    """Pack g channel-groups per row so the last dim is >=128 lanes wide."""
    if c < LANE and LANE % c == 0:
        return LANE // c
    return 1


# ----------------------------- Pallas kernels -------------------------------

def _mm_kernel(x_ref, w_ref, o_ref):
    o_ref[...] = jnp.dot(x_ref[...], w_ref[...],
                         preferred_element_type=jnp.float32)


def _mm_stats_kernel(x_ref, w_ref, o_ref, s_ref, sq_ref):
    # Conv matmul with fused BN batch-statistic accumulators (per channel).
    @pl.when(pl.program_id(0) == 0)
    def _():
        s_ref[...] = jnp.zeros_like(s_ref)
        sq_ref[...] = jnp.zeros_like(sq_ref)

    y = jnp.dot(x_ref[...], w_ref[...], preferred_element_type=jnp.float32)
    o_ref[...] = y
    s_ref[...] += jnp.sum(y, axis=0, keepdims=True)
    sq_ref[...] += jnp.sum(y * y, axis=0, keepdims=True)


def _mm_bias_kernel(x_ref, w_ref, b_ref, o_ref):
    o_ref[...] = (jnp.dot(x_ref[...], w_ref[...],
                          preferred_element_type=jnp.float32) + b_ref[...])


def _pool_stats_kernel(a_ref, b_ref, c_ref, d_ref, o_ref, s_ref, sq_ref):
    # 2x2 max-pool (4 pre-sliced views) fused with BN batch-stat accumulators.
    @pl.when(pl.program_id(0) == 0)
    def _():
        s_ref[...] = jnp.zeros_like(s_ref)
        sq_ref[...] = jnp.zeros_like(sq_ref)

    y = jnp.maximum(jnp.maximum(a_ref[...], b_ref[...]),
                    jnp.maximum(c_ref[...], d_ref[...]))
    o_ref[...] = y
    s_ref[...] += jnp.sum(y, axis=0, keepdims=True)
    sq_ref[...] += jnp.sum(y * y, axis=0, keepdims=True)


def _erf(x):
    # Abramowitz & Stegun 7.1.26 (|abs err| < 1.5e-7): matches PyTorch's exact
    # (erf-based) GELU to ~float32 precision.
    a1, a2, a3, a4, a5 = (0.254829592, -0.284496736, 1.421413741,
                          -1.453152027, 1.061405429)
    p = 0.3275911
    sgn = jnp.where(x >= 0.0, 1.0, -1.0)
    ax = jnp.abs(x)
    t = pl.reciprocal(1.0 + p * ax, approx=False)   # EUP reciprocal, exact
    poly = ((((a5 * t + a4) * t + a3) * t + a2) * t + a1) * t
    return sgn * (1.0 - poly * jnp.exp(-ax * ax))


def _gelu(x):
    return 0.5 * x * (1.0 + _erf(x * jnp.float32(0.70710678118654752)))


def _scale_bias_gelu_kernel(x_ref, sc_ref, bi_ref, o_ref):
    o_ref[...] = _gelu(x_ref[...] * sc_ref[...] + bi_ref[...])


def _scale_bias_gelu_res_kernel(x_ref, sc_ref, bi_ref, r_ref, o_ref):
    o_ref[...] = _gelu(x_ref[...] * sc_ref[...] + bi_ref[...]) + r_ref[...]


# ----------------------------- kernel wrappers -------------------------------

def _matmul(x, w, bias=None, with_stats=False):
    """x:(M,K) @ w:(K,C) -> (M,C) [+ per-channel (sum, sum_sq) accumulators]."""
    m, k = x.shape
    c = w.shape[1]
    tm, steps = _row_tiling(m)
    xp = _pad_rows(x, tm * steps)           # zero rows contribute 0 to stats
    mp = xp.shape[0]

    x_spec = pl.BlockSpec((tm, k), lambda i: (i, 0))
    w_spec = pl.BlockSpec((k, c), lambda i: (0, 0))
    o_spec = pl.BlockSpec((tm, c), lambda i: (i, 0))
    acc_spec = pl.BlockSpec((1, c), lambda i: (0, 0))

    if with_stats:
        out, s, sq = pl.pallas_call(
            _mm_stats_kernel,
            out_shape=(jax.ShapeDtypeStruct((mp, c), jnp.float32),
                       jax.ShapeDtypeStruct((1, c), jnp.float32),
                       jax.ShapeDtypeStruct((1, c), jnp.float32)),
            grid=(steps,),
            in_specs=[x_spec, w_spec],
            out_specs=(o_spec, acc_spec, acc_spec),
            compiler_params=pltpu.CompilerParams(
                dimension_semantics=("arbitrary",)),
        )(xp, w)
        return out[:m], s, sq

    if bias is not None:
        b = bias.reshape(1, c).astype(jnp.float32)
        out = pl.pallas_call(
            _mm_bias_kernel,
            out_shape=jax.ShapeDtypeStruct((mp, c), jnp.float32),
            grid=(steps,),
            in_specs=[x_spec, w_spec, acc_spec],
            out_specs=o_spec,
            compiler_params=pltpu.CompilerParams(
                dimension_semantics=("parallel",)),
        )(xp, w, b)
        return out[:m]

    out = pl.pallas_call(
        _mm_kernel,
        out_shape=jax.ShapeDtypeStruct((mp, c), jnp.float32),
        grid=(steps,),
        in_specs=[x_spec, w_spec],
        out_specs=o_spec,
        compiler_params=pltpu.CompilerParams(
            dimension_semantics=("parallel",)),
    )(xp, w)
    return out[:m]


def _maxpool2x2_stats(x_nhwc):
    """2x2 max-pool + fused BN batch stats; returns (flat (M,C), sum, sum_sq)."""
    n, h, w, c = x_nhwc.shape
    ho, wo = h // 2, w // 2
    m = n * ho * wo
    views = [x_nhwc[:, i::2, j::2, :].reshape(m, c)
             for i in (0, 1) for j in (0, 1)]

    g = _lane_group(c)
    views = [_pad_rows(v, g).reshape(-1, g * c) for v in views]
    rows = views[0].shape[0]
    tm, steps = _row_tiling(rows)
    views = [_pad_rows(v, tm * steps) for v in views]
    mp = views[0].shape[0]

    row_spec = pl.BlockSpec((tm, g * c), lambda i: (i, 0))
    acc_spec = pl.BlockSpec((1, g * c), lambda i: (0, 0))
    out, s, sq = pl.pallas_call(
        _pool_stats_kernel,
        out_shape=(jax.ShapeDtypeStruct((mp, g * c), jnp.float32),
                   jax.ShapeDtypeStruct((1, g * c), jnp.float32),
                   jax.ShapeDtypeStruct((1, g * c), jnp.float32)),
        grid=(steps,),
        in_specs=[row_spec] * 4,
        out_specs=(row_spec, acc_spec, acc_spec),
        compiler_params=pltpu.CompilerParams(
            dimension_semantics=("arbitrary",)),
    )(*views)

    out = out.reshape(-1, c)[:m]
    s = s.reshape(g, c).sum(axis=0, keepdims=True)
    sq = sq.reshape(g, c).sum(axis=0, keepdims=True)
    return out, s, sq


def _bn_gelu(x, s, sq, m_true, gamma, beta, eps=1e-12, residual=None):
    """Training-mode BN (batch stats pre-accumulated) + exact GELU (+residual).

    BN params are folded into (scale, bias) so the kernel does one FMA + GELU.
    The kernel runs on a lane-dense (rows/g, g*C) view of the activations.
    """
    m, c = x.shape
    mean = s / m_true
    var = jnp.maximum(sq / m_true - mean * mean, 0.0)   # biased batch variance
    inv = jax.lax.rsqrt(var + jnp.float32(eps))
    scale = (inv * gamma.reshape(1, c)).astype(jnp.float32)
    bias = (beta.reshape(1, c) - mean * scale).astype(jnp.float32)

    g = _lane_group(c)
    xg = _pad_rows(x, g).reshape(-1, g * c)
    rows = xg.shape[0]
    tm, steps = _row_tiling(rows)
    xg = _pad_rows(xg, tm * steps)
    mp = xg.shape[0]
    scg = jnp.tile(scale, (1, g))
    big = jnp.tile(bias, (1, g))

    row_spec = pl.BlockSpec((tm, g * c), lambda i: (i, 0))
    ch_spec = pl.BlockSpec((1, g * c), lambda i: (0, 0))

    if residual is None:
        out = pl.pallas_call(
            _scale_bias_gelu_kernel,
            out_shape=jax.ShapeDtypeStruct((mp, g * c), jnp.float32),
            grid=(steps,),
            in_specs=[row_spec, ch_spec, ch_spec],
            out_specs=row_spec,
            compiler_params=pltpu.CompilerParams(
                dimension_semantics=("parallel",)),
        )(xg, scg, big)
    else:
        rg = _pad_rows(_pad_rows(residual, g).reshape(-1, g * c), tm * steps)
        out = pl.pallas_call(
            _scale_bias_gelu_res_kernel,
            out_shape=jax.ShapeDtypeStruct((mp, g * c), jnp.float32),
            grid=(steps,),
            in_specs=[row_spec, ch_spec, ch_spec, row_spec],
            out_specs=row_spec,
            compiler_params=pltpu.CompilerParams(
                dimension_semantics=("parallel",)),
        )(xg, scg, big, rg)
    return out.reshape(-1, c)[:m]


# --------------------------------- JAX glue ----------------------------------

def _im2col_3x3(x_nhwc):
    """'same' zero-padded 3x3 patches: (N,H,W,C) -> (N*H*W, 9*C), (kh,kw,c)."""
    # TODO(synk): move im2col into the matmul kernel (9 shifted in-VMEM slices)
    # to cut conv-input HBM traffic ~9x; kept as XLA glue for lowering safety.
    n, h, w, c = x_nhwc.shape
    xp = jnp.pad(x_nhwc, ((0, 0), (1, 1), (1, 1), (0, 0)))
    patches = [xp[:, kh:kh + h, kw:kw + w, :]
               for kh in range(3) for kw in range(3)]
    return jnp.concatenate(patches, axis=-1).reshape(n * h * w, 9 * c)


def _conv3x3(x_nhwc, w_oihw, with_stats):
    """3x3 'same' conv, no bias; returns flattened (N*H*W, C_out) [+ stats]."""
    c_in = x_nhwc.shape[-1]
    c_out = w_oihw.shape[0]
    w2 = jnp.transpose(w_oihw, (2, 3, 1, 0)).reshape(9 * c_in, c_out)
    w2 = w2.astype(jnp.float32)
    cols = _im2col_3x3(x_nhwc)
    if with_stats:
        return _matmul(cols, w2, with_stats=True)
    return _matmul(cols, w2)


def _conv_group(x_nhwc, p, pool, eps=1e-12):
    n, h, w, _ = x_nhwc.shape
    c = p["w1"].shape[0]

    if pool:
        # conv1 -> pool -> BN: stats must be over the *pooled* tensor, so they
        # are fused into the pooling kernel instead of the matmul.
        y1 = _conv3x3(x_nhwc, p["w1"], with_stats=False).reshape(n, h, w, c)
        y1, s1, sq1 = _maxpool2x2_stats(y1)
        h, w = h // 2, w // 2
    else:
        y1, s1, sq1 = _conv3x3(x_nhwc, p["w1"], with_stats=True)
    m = n * h * w

    x1 = _bn_gelu(y1, s1, sq1, m, p["g1"], p["b1"], eps)
    residual = x1

    y2, s2, sq2 = _conv3x3(x1.reshape(n, h, w, c), p["w2"], with_stats=True)
    x2 = _bn_gelu(y2, s2, sq2, m, p["g2"], p["b2"], eps)

    y3, s3, sq3 = _conv3x3(x2.reshape(n, h, w, c), p["w3"], with_stats=True)
    x3 = _bn_gelu(y3, s3, sq3, m, p["g3"], p["b3"], eps, residual=residual)
    return x3.reshape(n, h, w, c)
    # TODO(synk): BatchNorm running-stat updates (momentum=0.8) are module
    # state and do not affect the returned tensor; omitted.


def _heads(x_nhwc, p, eps=1e-12):
    """layer_reg and layer_class fused column-wise (shared input, disjoint cols)."""
    n, h, w, c = x_nhwc.shape          # c == 256
    m = n * h * w
    x2d = x_nhwc.reshape(m, c)

    # First 1x1 convs of both heads fused: (256 -> 128) || (256 -> 128).
    # NOTE: their biases cancel exactly under the following training-mode BN
    # (they only shift the batch mean), so they are not applied.
    w1 = jnp.concatenate([p["reg_w1"].reshape(128, 256).T,
                          p["cls_w1"].reshape(128, 256).T], axis=1)   # (256,256)
    y, s, sq = _matmul(x2d, w1.astype(jnp.float32), with_stats=True)

    gamma = jnp.concatenate([p["reg_bn_g"], p["cls_bn_g"]])
    beta = jnp.concatenate([p["reg_bn_b"], p["cls_bn_b"]])
    a = _bn_gelu(y, s, sq, m, gamma, beta, eps)                        # (m,256)

    # Final 1x1 convs fused block-diagonally: cols [0:2]=reg, [2:3]=class.
    w2 = jnp.zeros((256, 3), jnp.float32)
    w2 = w2.at[:128, :2].set(p["reg_w2"].reshape(2, 128).T)
    w2 = w2.at[128:, 2:].set(p["cls_w2"].reshape(1, 128).T)
    b2 = jnp.concatenate([p["reg_bias2"], p["cls_bias2"]])             # (3,)
    out = _matmul(a, w2, bias=b2)                                      # (m,3)

    out_reg = out[:, :2].reshape(n, h, w, 2)
    out_cls = out[:, 2:3].reshape(n, h, w, 1)
    return out_cls, out_reg


def phd_net_res_forward(x_nchw, params, branch_scheme="multi"):
    x = jnp.transpose(x_nchw, (0, 2, 3, 1)).astype(jnp.float32)   # NCHW -> NHWC
    x = _conv_group(x, params["layer1"], pool=True)
    x = _conv_group(x, params["layer2"], pool=True)
    x = _conv_group(x, params["layer3"], pool=True)
    x = _conv_group(x, params["layer4"], pool=False)

    out_cls_nhwc, out_reg_nhwc = _heads(x, params["heads"])
    out_class = jnp.transpose(out_cls_nhwc, (0, 3, 1, 2))            # (N,1,H,W)
    out_reg = jnp.transpose(out_reg_nhwc, (0, 3, 1, 2))[:, None]     # (N,1,2,H,W)

    # Mirrors the PyTorch forward: both heads are always evaluated because the
    # `or 'displacement'` / `or 'heatmap'` conditions are always truthy.
    if branch_scheme == "multi":
        return [out_class, out_reg]
    elif branch_scheme == "heatmap":
        return out_class
    else:
        return out_reg


# ----------------------------------- main ------------------------------------

if __name__ == "__main__":
    N, C_IN, H, W = 2, 1, 16, 16

    key = jax.random.PRNGKey(0)
    kg1, kg2, kg3, kg4, kh, kx = jax.random.split(key, 6)

    def init_conv3x3(k, cin, cout):
        bound = 1.0 / jnp.sqrt(jnp.float32(cin * 9))
        return jax.random.uniform(k, (cout, cin, 3, 3), jnp.float32,
                                  -bound, bound)

    def init_conv1x1(k, cin, cout):
        kw_, kb_ = jax.random.split(k)
        bound = 1.0 / jnp.sqrt(jnp.float32(cin))
        wgt = jax.random.uniform(kw_, (cout, cin, 1, 1), jnp.float32,
                                 -bound, bound)
        bia = jax.random.uniform(kb_, (cout,), jnp.float32, -bound, bound)
        return wgt, bia

    def init_group(k, cin, cout):
        k1, k2, k3 = jax.random.split(k, 3)
        return {
            "w1": init_conv3x3(k1, cin, cout),
            "w2": init_conv3x3(k2, cout, cout),
            "w3": init_conv3x3(k3, cout, cout),
            "g1": jnp.ones((cout,), jnp.float32),
            "b1": jnp.zeros((cout,), jnp.float32),
            "g2": jnp.ones((cout,), jnp.float32),
            "b2": jnp.zeros((cout,), jnp.float32),
            "g3": jnp.ones((cout,), jnp.float32),
            "b3": jnp.zeros((cout,), jnp.float32),
        }

    kr1, kr2, kc1, kc2 = jax.random.split(kh, 4)
    reg_w1, reg_bias1 = init_conv1x1(kr1, 256, 128)
    reg_w2, reg_bias2 = init_conv1x1(kr2, 128, 2)
    cls_w1, cls_bias1 = init_conv1x1(kc1, 256, 128)
    cls_w2, cls_bias2 = init_conv1x1(kc2, 128, 1)

    params = {
        "layer1": init_group(kg1, 1, 32),
        "layer2": init_group(kg2, 32, 64),
        "layer3": init_group(kg3, 64, 128),
        "layer4": init_group(kg4, 128, 256),
        "heads": {
            "reg_w1": reg_w1, "reg_bias1": reg_bias1,
            "reg_bn_g": jnp.ones((128,), jnp.float32),
            "reg_bn_b": jnp.zeros((128,), jnp.float32),
            "reg_w2": reg_w2, "reg_bias2": reg_bias2,
            "cls_w1": cls_w1, "cls_bias1": cls_bias1,
            "cls_bn_g": jnp.ones((128,), jnp.float32),
            "cls_bn_b": jnp.zeros((128,), jnp.float32),
            "cls_w2": cls_w2, "cls_bias2": cls_bias2,
        },
    }

    x = jax.random.normal(kx, (N, C_IN, H, W), jnp.float32)

    fwd = jax.jit(functools.partial(phd_net_res_forward, branch_scheme="multi"))
    out_class, out_reg = fwd(x, params)
    jax.block_until_ready(out_class)
    jax.block_until_ready(out_reg)

    # 16 -> 8 -> 4 -> 2 spatial after the three pooled groups; layer4 keeps 2.
    assert out_class.shape == (N, 1, 2, 2), out_class.shape
    assert out_reg.shape == (N, 1, 2, 2, 2), out_reg.shape
    assert out_class.dtype == jnp.float32 and out_reg.dtype == jnp.float32
    assert bool(jnp.all(jnp.isfinite(out_class)))
    assert bool(jnp.all(jnp.isfinite(out_reg)))
    print("KERNEL_OK")
</pallas_src>

<mosaic_0001>
module attributes {stable_mosaic.version = 11 : i64} {
  func.func @_mm_kernel(%arg0: i32, %arg1: memref<512x9xf32, #tpu.memory_space<vmem>>, %arg2: memref<9x32xf32, #tpu.memory_space<vmem>>, %arg3: memref<512x32xf32, #tpu.memory_space<vmem>>) attributes {dimension_semantics = [#tpu.dimension_semantics<parallel>], iteration_bounds = array<i64: 1>, scalar_prefetch = 0 : i64, scratch_operands = 0 : i64, tpu.core_type = #tpu.core_type<tc>, window_params = [{transform_indices = @transform_0, window_bounds = array<i64: 512, 9>}, {pipeline_mode = #tpu.pipeline_mode<synchronous>, transform_indices = @transform_1, window_bounds = array<i64: 9, 32>}, {transform_indices = @transform_2, window_bounds = array<i64: 512, 32>}]} {
    %c0 = arith.constant 0 : index
    %c0_0 = arith.constant 0 : index
    %0 = vector.load %arg1[%c0, %c0_0] : memref<512x9xf32, #tpu.memory_space<vmem>>, vector<512x9xf32>
    %c0_1 = arith.constant 0 : index
    %c0_2 = arith.constant 0 : index
    %1 = vector.load %arg2[%c0_1, %c0_2] : memref<9x32xf32, #tpu.memory_space<vmem>>, vector<9x32xf32>
    %cst = arith.constant dense<0.000000e+00> : vector<512x32xf32>
    %2 = tpu.matmul %0, %1, %cst {dimension_numbers = #tpu.dot_dimension_numbers<[1], [0], [0], [1], [0, 0, 1, 1], [], []>} : vector<512x9xf32>, vector<9x32xf32>, vector<512x32xf32> -> vector<512x32xf32>
    %c0_3 = arith.constant 0 : index
    %c0_4 = arith.constant 0 : index
    %3 = vector.load %arg3[%c0_3, %c0_4] : memref<512x32xf32, #tpu.memory_space<vmem>>, vector<512x32xf32>
    tpu.vector_store %arg3[%c0_3, %c0_4], %2 {strides = array<i32>} : memref<512x32xf32, #tpu.memory_space<vmem>>, vector<512x32xf32>,
    return
  }
  func.func @transform_0(%arg0: i32) -> (i32, i32) {
    %c0_i32 = arith.constant 0 : i32
    %c0_i32_0 = arith.constant 0 : i32
    return %arg0, %c0_i32 : i32, i32
  }
  func.func @transform_1(%arg0: i32) -> (i32, i32) {
    %c0_i32 = arith.constant 0 : i32
    %c0_i32_0 = arith.constant 0 : i32
    %c0_i32_1 = arith.constant 0 : i32
    return %c0_i32, %c0_i32_0 : i32, i32
  }
  func.func @transform_2(%arg0: i32) -> (i32, i32) {
    %c0_i32 = arith.constant 0 : i32
    %c0_i32_0 = arith.constant 0 : i32
    return %arg0, %c0_i32 : i32, i32
  }
}

module attributes {stable_mosaic.version = 11 : i64} {
  func.func @_pool_stats_kernel(%arg0: i32, %arg1: memref<32x128xf32, #tpu.memory_space<vmem>>, %arg2: memref<32x128xf32, #tpu.memory_space<vmem>>, %arg3: memref<32x128xf32, #tpu.memory_space<vmem>>, %arg4: memref<32x128xf32, #tpu.memory_space<vmem>>, %arg5: memref<32x128xf32, #tpu.memory_space<vmem>>, %arg6: memref<1x128xf32, #tpu.memory_space<vmem>>, %arg7: memref<1x128xf32, #tpu.memory_space<vmem>>) attributes {dimension_semantics = [#tpu.dimension_semantics<arbitrary>], iteration_bounds = array<i64: 1>, scalar_prefetch = 0 : i64, scratch_operands = 0 : i64, tpu.core_type = #tpu.core_type<tc>, window_params = [{transform_indices = @transform_0, window_bounds = array<i64: 32, 128>}, {transform_indices = @transform_1, window_bounds = array<i64: 32, 128>}, {transform_indices = @transform_2, window_bounds = array<i64: 32, 128>}, {transform_indices = @transform_3, window_bounds = array<i64: 32, 128>}, {transform_indices = @transform_4, window_bounds = array<i64: 32, 128>}, {pipeline_mode = #tpu.pipeline_mode<synchronous>, transform_indices = @transform_5, window_bounds = array<i64: 1, 128>}, {pipeline_mode = #tpu.pipeline_mode<synchronous>, transform_indices = @transform_6, window_bounds = array<i64: 1, 128>}]} {
    %c0_i32 = arith.constant 0 : i32
    %0 = arith.cmpi eq, %arg0, %c0_i32 : i32
    %1 = arith.extui %0 : i1 to i32
    %c0_i32_0 = arith.constant 0 : i32
    %2 = arith.cmpi ne, %1, %c0_i32_0 : i32
    scf.if %2 {
      %cst_19 = arith.constant 0.000000e+00 : f32
      %22 = vector.broadcast %cst_19 : f32 to vector<1x128xf32>
      %c0_20 = arith.constant 0 : index
      %c0_21 = arith.constant 0 : index
      %23 = vector.load %arg6[%c0_20, %c0_21] : memref<1x128xf32, #tpu.memory_space<vmem>>, vector<1x128xf32>
      tpu.vector_store %arg6[%c0_20, %c0_21], %22 {strides = array<i32>} : memref<1x128xf32, #tpu.memory_space<vmem>>, vector<1x128xf32>,
      %cst_22 = arith.constant 0.000000e+00 : f32
      %24 = vector.broadcast %cst_22 : f32 to vector<1x128xf32>
      %c0_23 = arith.constant 0 : index
      %c0_24 = arith.constant 0 : index
      %25 = vector.load %arg7[%c0_23, %c0_24] : memref<1x128xf32, #tpu.memory_space<vmem>>, vector<1x128xf32>
      tpu.vector_store %arg7[%c0_23, %c0_24], %24 {strides = array<i32>} : memref<1x128xf32, #tpu.memory_space<vmem>>, vector<1x128xf32>,
    } else {
    }
    %c0 = arith.constant 0 : index
    %c0_1 = arith.constant 0 : index
    %3 = vector.load %arg1[%c0, %c0_1] : memref<32x128xf32, #tpu.memory_space<vmem>>, vector<32x128xf32>
    %c0_2 = arith.constant 0 : index
    %c0_3 = arith.constant 0 : index
    %4 = vector.load %arg2[%c0_2, %c0_3] : memref<32x128xf32, #tpu.memory_space<vmem>>, vector<32x128xf32>
    %5 = arith.maximumf %3, %4 : vector<32x128xf32>
    %c0_4 = arith.constant 0 : index
    %c0_5 = arith.constant 0 : index
    %6 = vector.load %arg3[%c0_4, %c0_5] : memref<32x128xf32, #tpu.memory_space<vmem>>, vector<32x128xf32>
    %c0_6 = arith.constant 0 : index
    %c0_7 = arith.constant 0 : index
    %7 = vector.load %arg4[%c0_6, %c0_7] : memref<32x128xf32, #tpu.memory_space<vmem>>, vector<32x128xf32>
    %8 = arith.maximumf %6, %7 : vector<32x128xf32>
    %9 = arith.maximumf %5, %8 : vector<32x128xf32>
    %c0_8 = arith.constant 0 : index
    %c0_9 = arith.constant 0 : index
    %10 = vector.load %arg5[%c0_8, %c0_9] : memref<32x128xf32, #tpu.memory_space<vmem>>, vector<32x128xf32>
    tpu.vector_store %arg5[%c0_8, %c0_9], %9 {strides = array<i32>} : memref<32x128xf32, #tpu.memory_space<vmem>>, vector<32x128xf32>,
    %c0_10 = arith.constant 0 : index
    %c0_11 = arith.constant 0 : index
    %11 = vector.load %arg6[%c0_10, %c0_11] : memref<1x128xf32, #tpu.memory_space<vmem>>, vector<1x128xf32>
    %cst = arith.constant dense<0.000000e+00> : vector<128xf32>
    %12 = vector.multi_reduction <add>, %9, %cst [0] : vector<32x128xf32> to vector<128xf32>
    %13 = vector.shape_cast %12 : vector<128xf32> to vector<1x128xf32>
    %14 = arith.addf %11, %13 : vector<1x128xf32>
    %c0_12 = arith.constant 0 : index
    %c0_13 = arith.constant 0 : index
    %15 = vector.load %arg6[%c0_12, %c0_13] : memref<1x128xf32, #tpu.memory_space<vmem>>, vector<1x128xf32>
    tpu.vector_store %arg6[%c0_12, %c0_13], %14 {strides = array<i32>} : memref<1x128xf32, #tpu.memory_space<vmem>>, vector<1x128xf32>,
    %c0_14 = arith.constant 0 : index
    %c0_15 = arith.constant 0 : index
    %16 = vector.load %arg7[%c0_14, %c0_15] : memref<1x128xf32, #tpu.memory_space<vmem>>, vector<1x128xf32>
    %17 = arith.mulf %9, %9 : vector<32x128xf32>
    %cst_16 = arith.constant dense<0.000000e+00> : vector<128xf32>
    %18 = vector.multi_reduction <add>, %17, %cst_16 [0] : vector<32x128xf32> to vector<128xf32>
    %19 = vector.shape_cast %18 : vector<128xf32> to vector<1x128xf32>
    %20 = arith.addf %16, %19 : vector<1x128xf32>
    %c0_17 = arith.constant 0 : index
    %c0_18 = arith.constant 0 : index
    %21 = vector.load %arg7[%c0_17, %c0_18] : memref<1x128xf32, #tpu.memory_space<vmem>>, vector<1x128xf32>
    tpu.vector_store %arg7[%c0_17, %c0_18], %20 {strides = array<i32>} : memref<1x128xf32, #tpu.memory_space<vmem>>, vector<1x128xf32>,
    return
  }
  func.func @transform_0(%arg0: i32) -> (i32, i32) {
    %c0_i32 = arith.constant 0 : i32
    %c0_i32_0 = arith.constant 0 : i32
    return %arg0, %c0_i32 : i32, i32
  }
  func.func @transform_1(%arg0: i32) -> (i32, i32) {
    %c0_i32 = arith.constant 0 : i32
    %c0_i32_0 = arith.constant 0 : i32
    return %arg0, %c0_i32 : i32, i32
  }
  func.func @transform_2(%arg0: i32) -> (i32, i32) {
    %c0_i32 = arith.constant 0 : i32
    %c0_i32_0 = arith.constant 0 : i32
    return %arg0, %c0_i32 : i32, i32
  }
  func.func @transform_3(%arg0: i32) -> (i32, i32) {
    %c0_i32 = arith.constant 0 : i32
    %c0_i32_0 = arith.constant 0 : i32
    return %arg0, %c0_i32 : i32, i32
  }
  func.func @transform_4(%arg0: i32) -> (i32, i32) {
    %c0_i32 = arith.constant 0 : i32
    %c0_i32_0 = arith.constant 0 : i32
    return %arg0, %c0_i32 : i32, i32
  }
  func.func @transform_5(%arg0: i32) -> (i32, i32) {
    %c0_i32 = arith.constant 0 : i32
    %c0_i32_0 = arith.constant 0 : i32
    %c0_i32_1 = arith.constant 0 : i32
    return %c0_i32, %c0_i32_0 : i32, i32
  }
  func.func @transform_6(%arg0: i32) -> (i32, i32) {
    %c0_i32 = arith.constant 0 : i32
    %c0_i32_0 = arith.constant 0 : i32
    %c0_i32_1 = arith.constant 0 : i32
    return %c0_i32, %c0_i32_0 : i32, i32
  }
}

module attributes {stable_mosaic.version = 11 : i64} {
  func.func @_scale_bias_gelu_kernel(%arg0: i32, %arg1: memref<32x128xf32, #tpu.memory_space<vmem>>, %arg2: memref<1x128xf32, #tpu.memory_space<vmem>>, %arg3: memref<1x128xf32, #tpu.memory_space<vmem>>, %arg4: memref<32x128xf32, #tpu.memory_space<vmem>>) attributes {dimension_semantics = [#tpu.dimension_semantics<parallel>], iteration_bounds = array<i64: 1>, scalar_prefetch = 0 : i64, scratch_operands = 0 : i64, tpu.core_type = #tpu.core_type<tc>, window_params = [{transform_indices = @transform_0, window_bounds = array<i64: 32, 128>}, {pipeline_mode = #tpu.pipeline_mode<synchronous>, transform_indices = @transform_1, window_bounds = array<i64: 1, 128>}, {pipeline_mode = #tpu.pipeline_mode<synchronous>, transform_indices = @transform_2, window_bounds = array<i64: 1, 128>}, {transform_indices = @transform_3, window_bounds = array<i64: 32, 128>}]} {
    %c0 = arith.constant 0 : index
    %c0_0 = arith.constant 0 : index
    %0 = vector.load %arg1[%c0, %c0_0] : memref<32x128xf32, #tpu.memory_space<vmem>>, vector<32x128xf32>
    %c0_1 = arith.constant 0 : index
    %c0_2 = arith.constant 0 : index
    %1 = vector.load %arg2[%c0_1, %c0_2] : memref<1x128xf32, #tpu.memory_space<vmem>>, vector<1x128xf32>
    %2 = vector.broadcast %1 : vector<1x128xf32> to vector<32x128xf32>
    %3 = arith.mulf %0, %2 : vector<32x128xf32>
    %c0_3 = arith.constant 0 : index
    %c0_4 = arith.constant 0 : index
    %4 = vector.load %arg3[%c0_3, %c0_4] : memref<1x128xf32, #tpu.memory_space<vmem>>, vector<1x128xf32>
    %5 = vector.broadcast %4 : vector<1x128xf32> to vector<32x128xf32>
    %6 = arith.addf %3, %5 : vector<32x128xf32>
    %cst = arith.constant 5.000000e-01 : f32
    %7 = vector.broadcast %cst : f32 to vector<32x128xf32>
    %8 = arith.mulf %7, %6 : vector<32x128xf32>
    %cst_5 = arith.constant 0.707106769 : f32
    %9 = vector.broadcast %cst_5 : f32 to vector<32x128xf32>
    %10 = arith.mulf %6, %9 : vector<32x128xf32>
    %cst_6 = arith.constant 0.000000e+00 : f32
    %11 = vector.broadcast %cst_6 : f32 to vector<32x128xf32>
    %12 = arith.cmpf oge, %10, %11 : vector<32x128xf32>
    %cst_7 = arith.constant 1.000000e+00 : f32
    %cst_8 = arith.constant -1.000000e+00 : f32
    %13 = vector.broadcast %cst_7 : f32 to vector<32x128xf32>
    %14 = vector.broadcast %cst_8 : f32 to vector<32x128xf32>
    %15 = arith.select %12, %13, %14 : vector<32x128xi1>, vector<32x128xf32>
    %16 = math.absf %10 : vector<32x128xf32>
    %cst_9 = arith.constant 0.327591091 : f32
    %17 = vector.broadcast %cst_9 : f32 to vector<32x128xf32>
    %18 = arith.mulf %17, %16 : vector<32x128xf32>
    %cst_10 = arith.constant 1.000000e+00 : f32
    %19 = vector.broadcast %cst_10 : f32 to vector<32x128xf32>
    %20 = arith.addf %19, %18 : vector<32x128xf32>
    %21 = tpu.reciprocal %20 : vector<32x128xf32> -> vector<32x128xf32>
    %cst_11 = arith.constant 1.06140542 : f32
    %22 = vector.broadcast %cst_11 : f32 to vector<32x128xf32>
    %23 = arith.mulf %22, %21 : vector<32x128xf32>
    %cst_12 = arith.constant -1.45315206 : f32
    %24 = vector.broadcast %cst_12 : f32 to vector<32x128xf32>
    %25 = arith.addf %23, %24 : vector<32x128xf32>
    %26 = arith.mulf %25, %21 : vector<32x128xf32>
    %cst_13 = arith.constant 1.42141378 : f32
    %27 = vector.broadcast %cst_13 : f32 to vector<32x128xf32>
    %28 = arith.addf %26, %27 : vector<32x128xf32>
    %29 = arith.mulf %28, %21 : vector<32x128xf32>
    %cst_14 = arith.constant -0.284496725 : f32
    %30 = vector.broadcast %cst_14 : f32 to vector<32x128xf32>
    %31 = arith.addf %29, %30 : vector<32x128xf32>
    %32 = arith.mulf %31, %21 : vector<32x128xf32>
    %cst_15 = arith.constant 0.254829586 : f32
    %33 = vector.broadcast %cst_15 : f32 to vector<32x128xf32>
    %34 = arith.addf %32, %33 : vector<32x128xf32>
    %35 = arith.mulf %34, %21 : vector<32x128xf32>
    %cst_16 = arith.constant 0.000000e+00 : f32
    %36 = vector.broadcast %cst_16 : f32 to vector<32x128xf32>
    %37 = arith.subf %36, %16 : vector<32x128xf32>
    %38 = arith.mulf %37, %16 : vector<32x128xf32>
    %39 = math.exp %38 : vector<32x128xf32>
    %40 = arith.mulf %35, %39 : vector<32x128xf32>
    %cst_17 = arith.constant 1.000000e+00 : f32
    %41 = vector.broadcast %cst_17 : f32 to vector<32x128xf32>
    %42 = arith.subf %41, %40 : vector<32x128xf32>
    %43 = arith.mulf %15, %42 : vector<32x128xf32>
    %cst_18 = arith.constant 1.000000e+00 : f32
    %44 = vector.broadcast %cst_18 : f32 to vector<32x128xf32>
    %45 = arith.addf %44, %43 : vector<32x128xf32>
    %46 = arith.mulf %8, %45 : vector<32x128xf32>
    %c0_19 = arith.constant 0 : index
    %c0_20 = arith.constant 0 : index
    %47 = vector.load %arg4[%c0_19, %c0_20] : memref<32x128xf32, #tpu.memory_space<vmem>>, vector<32x128xf32>
    tpu.vector_store %arg4[%c0_19, %c0_20], %46 {strides = array<i32>} : memref<32x128xf32, #tpu.memory_space<vmem>>, vector<32x128xf32>,
    return
  }
  func.func @transform_0(%arg0: i32) -> (i32, i32) {
    %c0_i32 = arith.constant 0 : i32
    %c0_i32_0 = arith.constant 0 : i32
    return %arg0, %c0_i32 : i32, i32
  }
  func.func @transform_1(%arg0: i32) -> (i32, i32) {
    %c0_i32 = arith.constant 0 : i32
    %c0_i32_0 = arith.constant 0 : i32
    %c0_i32_1 = arith.constant 0 : i32
    return %c0_i32, %c0_i32_0 : i32, i32
  }
  func.func @transform_2(%arg0: i32) -> (i32, i32) {
    %c0_i32 = arith.constant 0 : i32
    %c0_i32_0 = arith.constant 0 : i32
    %c0_i32_1 = arith.constant 0 : i32
    return %c0_i32, %c0_i32_0 : i32, i32
  }
  func.func @transform_3(%arg0: i32) -> (i32, i32) {
    %c0_i32 = arith.constant 0 : i32
    %c0_i32_0 = arith.constant 0 : i32
    return %arg0, %c0_i32 : i32, i32
  }
}

module attributes {stable_mosaic.version = 11 : i64} {
  func.func @_mm_stats_kernel(%arg0: i32, %arg1: memref<128x288xf32, #tpu.memory_space<vmem>>, %arg2: memref<288x32xf32, #tpu.memory_space<vmem>>, %arg3: memref<128x32xf32, #tpu.memory_space<vmem>>, %arg4: memref<1x32xf32, #tpu.memory_space<vmem>>, %arg5: memref<1x32xf32, #tpu.memory_space<vmem>>) attributes {dimension_semantics = [#tpu.dimension_semantics<arbitrary>], iteration_bounds = array<i64: 1>, scalar_prefetch = 0 : i64, scratch_operands = 0 : i64, tpu.core_type = #tpu.core_type<tc>, window_params = [{transform_indices = @transform_0, window_bounds = array<i64: 128, 288>}, {pipeline_mode = #tpu.pipeline_mode<synchronous>, transform_indices = @transform_1, window_bounds = array<i64: 288, 32>}, {transform_indices = @transform_2, window_bounds = array<i64: 128, 32>}, {pipeline_mode = #tpu.pipeline_mode<synchronous>, transform_indices = @transform_3, window_bounds = array<i64: 1, 32>}, {pipeline_mode = #tpu.pipeline_mode<synchronous>, transform_indices = @transform_4, window_bounds = array<i64: 1, 32>}]} {
    %c0_i32 = arith.constant 0 : i32
    %0 = arith.cmpi eq, %arg0, %c0_i32 : i32
    %1 = arith.extui %0 : i1 to i32
    %c0_i32_0 = arith.constant 0 : i32
    %2 = arith.cmpi ne, %1, %c0_i32_0 : i32
    scf.if %2 {
      %cst_16 = arith.constant 0.000000e+00 : f32
      %18 = vector.broadcast %cst_16 : f32 to vector<1x32xf32>
      %c0_17 = arith.constant 0 : index
      %c0_18 = arith.constant 0 : index
      %19 = vector.load %arg4[%c0_17, %c0_18] : memref<1x32xf32, #tpu.memory_space<vmem>>, vector<1x32xf32>
      tpu.vector_store %arg4[%c0_17, %c0_18], %18 {strides = array<i32>} : memref<1x32xf32, #tpu.memory_space<vmem>>, vector<1x32xf32>,
      %cst_19 = arith.constant 0.000000e+00 : f32
      %20 = vector.broadcast %cst_19 : f32 to vector<1x32xf32>
      %c0_20 = arith.constant 0 : index
      %c0_21 = arith.constant 0 : index
      %21 = vector.load %arg5[%c0_20, %c0_21] : memref<1x32xf32, #tpu.memory_space<vmem>>, vector<1x32xf32>
      tpu.vector_store %arg5[%c0_20, %c0_21], %20 {strides = array<i32>} : memref<1x32xf32, #tpu.memory_space<vmem>>, vector<1x32xf32>,
    } else {
    }
    %c0 = arith.constant 0 : index
    %c0_1 = arith.constant 0 : index
    %3 = vector.load %arg1[%c0, %c0_1] : memref<128x288xf32, #tpu.memory_space<vmem>>, vector<128x288xf32>
    %c0_2 = arith.constant 0 : index
    %c0_3 = arith.constant 0 : index
    %4 = vector.load %arg2[%c0_2, %c0_3] : memref<288x32xf32, #tpu.memory_space<vmem>>, vector<288x32xf32>
    %cst = arith.constant dense<0.000000e+00> : vector<128x32xf32>
    %5 = tpu.matmul %3, %4, %cst {dimension_numbers = #tpu.dot_dimension_numbers<[1], [0], [0], [1], [0, 0, 1, 1], [], []>} : vector<128x288xf32>, vector<288x32xf32>, vector<128x32xf32> -> vector<128x32xf32>
    %c0_4 = arith.constant 0 : index
    %c0_5 = arith.constant 0 : index
    %6 = vector.load %arg3[%c0_4, %c0_5] : memref<128x32xf32, #tpu.memory_space<vmem>>, vector<128x32xf32>
    tpu.vector_store %arg3[%c0_4, %c0_5], %5 {strides = array<i32>} : memref<128x32xf32, #tpu.memory_space<vmem>>, vector<128x32xf32>,
    %c0_6 = arith.constant 0 : index
    %c0_7 = arith.constant 0 : index
    %7 = vector.load %arg4[%c0_6, %c0_7] : memref<1x32xf32, #tpu.memory_space<vmem>>, vector<1x32xf32>
    %cst_8 = arith.constant dense<0.000000e+00> : vector<32xf32>
    %8 = vector.multi_reduction <add>, %5, %cst_8 [0] : vector<128x32xf32> to vector<32xf32>
    %9 = vector.shape_cast %8 : vector<32xf32> to vector<1x32xf32>
    %10 = arith.addf %7, %9 : vector<1x32xf32>
    %c0_9 = arith.constant 0 : index
    %c0_10 = arith.constant 0 : index
    %11 = vector.load %arg4[%c0_9, %c0_10] : memref<1x32xf32, #tpu.memory_space<vmem>>, vector<1x32xf32>
    tpu.vector_store %arg4[%c0_9, %c0_10], %10 {strides = array<i32>} : memref<1x32xf32, #tpu.memory_space<vmem>>, vector<1x32xf32>,
    %c0_11 = arith.constant 0 : index
    %c0_12 = arith.constant 0 : index
    %12 = vector.load %arg5[%c0_11, %c0_12] : memref<1x32xf32, #tpu.memory_space<vmem>>, vector<1x32xf32>
    %13 = arith.mulf %5, %5 : vector<128x32xf32>
    %cst_13 = arith.constant dense<0.000000e+00> : vector<32xf32>
    %14 = vector.multi_reduction <add>, %13, %cst_13 [0] : vector<128x32xf32> to vector<32xf32>
    %15 = vector.shape_cast %14 : vector<32xf32> to vector<1x32xf32>
    %16 = arith.addf %12, %15 : vector<1x32xf32>
    %c0_14 = arith.constant 0 : index
    %c0_15 = arith.constant 0 : index
    %17 = vector.load %arg5[%c0_14, %c0_15] : memref<1x32xf32, #tpu.memory_space<vmem>>, vector<1x32xf32>
    tpu.vector_store %arg5[%c0_14, %c0_15], %16 {strides = array<i32>} : memref<1x32xf32, #tpu.memory_space<vmem>>, vector<1x32xf32>,
    return
  }
  func.func @transform_0(%arg0: i32) -> (i32, i32) {
    %c0_i32 = arith.constant 0 : i32
    %c0_i32_0 = arith.constant 0 : i32
    return %arg0, %c0_i32 : i32, i32
  }
  func.func @transform_1(%arg0: i32) -> (i32, i32) {
    %c0_i32 = arith.constant 0 : i32
    %c0_i32_0 = arith.constant 0 : i32
    %c0_i32_1 = arith.constant 0 : i32
    return %c0_i32, %c0_i32_0 : i32, i32
  }
  func.func @transform_2(%arg0: i32) -> (i32, i32) {
    %c0_i32 = arith.constant 0 : i32
    %c0_i32_0 = arith.constant 0 : i32
    return %arg0, %c0_i32 : i32, i32
  }
  func.func @transform_3(%arg0: i32) -> (i32, i32) {
    %c0_i32 = arith.constant 0 : i32
    %c0_i32_0 = arith.constant 0 : i32
    %c0_i32_1 = arith.constant 0 : i32
    return %c0_i32, %c0_i32_0 : i32, i32
  }
  func.func @transform_4(%arg0: i32) -> (i32, i32) {
    %c0_i32 = arith.constant 0 : i32
    %c0_i32_0 = arith.constant 0 : i32
    %c0_i32_1 = arith.constant 0 : i32
    return %c0_i32, %c0_i32_0 : i32, i32
  }
}

module attributes {stable_mosaic.version = 11 : i64} {
  func.func @_mm_kernel(%arg0: i32, %arg1: memref<128x288xf32, #tpu.memory_space<vmem>>, %arg2: memref<288x64xf32, #tpu.memory_space<vmem>>, %arg3: memref<128x64xf32, #tpu.memory_space<vmem>>) attributes {dimension_semantics = [#tpu.dimension_semantics<parallel>], iteration_bounds = array<i64: 1>, scalar_prefetch = 0 : i64, scratch_operands = 0 : i64, tpu.core_type = #tpu.core_type<tc>, window_params = [{transform_indices = @transform_0, window_bounds = array<i64: 128, 288>}, {pipeline_mode = #tpu.pipeline_mode<synchronous>, transform_indices = @transform_1, window_bounds = array<i64: 288, 64>}, {transform_indices = @transform_2, window_bounds = array<i64: 128, 64>}]} {
    %c0 = arith.constant 0 : index
    %c0_0 = arith.constant 0 : index
    %0 = vector.load %arg1[%c0, %c0_0] : memref<128x288xf32, #tpu.memory_space<vmem>>, vector<128x288xf32>
    %c0_1 = arith.constant 0 : index
    %c0_2 = arith.constant 0 : index
    %1 = vector.load %arg2[%c0_1, %c0_2] : memref<288x64xf32, #tpu.memory_space<vmem>>, vector<288x64xf32>
    %cst = arith.constant dense<0.000000e+00> : vector<128x64xf32>
    %2 = tpu.matmul %0, %1, %cst {dimension_numbers = #tpu.dot_dimension_numbers<[1], [0], [0], [1], [0, 0, 1, 1], [], []>} : vector<128x288xf32>, vector<288x64xf32>, vector<128x64xf32> -> vector<128x64xf32>
    %c0_3 = arith.constant 0 : index
    %c0_4 = arith.constant 0 : index
    %3 = vector.load %arg3[%c0_3, %c0_4] : memref<128x64xf32, #tpu.memory_space<vmem>>, vector<128x64xf32>
    tpu.vector_store %arg3[%c0_3, %c0_4], %2 {strides = array<i32>} : memref<128x64xf32, #tpu.memory_space<vmem>>, vector<128x64xf32>,
    return
  }
  func.func @transform_0(%arg0: i32) -> (i32, i32) {
    %c0_i32 = arith.constant 0 : i32
    %c0_i32_0 = arith.constant 0 : i32
    return %arg0, %c0_i32 : i32, i32
  }
  func.func @transform_1(%arg0: i32) -> (i32, i32) {
    %c0_i32 = arith.constant 0 : i32
    %c0_i32_0 = arith.constant 0 : i32
    %c0_i32_1 = arith.constant 0 : i32
    return %c0_i32, %c0_i32_0 : i32, i32
  }
  func.func @transform_2(%arg0: i32) -> (i32, i32) {
    %c0_i32 = arith.constant 0 : i32
    %c0_i32_0 = arith.constant 0 : i32
    return %arg0, %c0_i32 : i32, i32
  }
}

module attributes {stable_mosaic.version = 11 : i64} {
  func.func @_scale_bias_gelu_res_kernel(%arg0: i32, %arg1: memref<32x128xf32, #tpu.memory_space<vmem>>, %arg2: memref<1x128xf32, #tpu.memory_space<vmem>>, %arg3: memref<1x128xf32, #tpu.memory_space<vmem>>, %arg4: memref<32x128xf32, #tpu.memory_space<vmem>>, %arg5: memref<32x128xf32, #tpu.memory_space<vmem>>) attributes {dimension_semantics = [#tpu.dimension_semantics<parallel>], iteration_bounds = array<i64: 1>, scalar_prefetch = 0 : i64, scratch_operands = 0 : i64, tpu.core_type = #tpu.core_type<tc>, window_params = [{transform_indices = @transform_0, window_bounds = array<i64: 32, 128>}, {pipeline_mode = #tpu.pipeline_mode<synchronous>, transform_indices = @transform_1, window_bounds = array<i64: 1, 128>}, {pipeline_mode = #tpu.pipeline_mode<synchronous>, transform_indices = @transform_2, window_bounds = array<i64: 1, 128>}, {transform_indices = @transform_3, window_bounds = array<i64: 32, 128>}, {transform_indices = @transform_4, window_bounds = array<i64: 32, 128>}]} {
    %c0 = arith.constant 0 : index
    %c0_0 = arith.constant 0 : index
    %0 = vector.load %arg1[%c0, %c0_0] : memref<32x128xf32, #tpu.memory_space<vmem>>, vector<32x128xf32>
    %c0_1 = arith.constant 0 : index
    %c0_2 = arith.constant 0 : index
    %1 = vector.load %arg2[%c0_1, %c0_2] : memref<1x128xf32, #tpu.memory_space<vmem>>, vector<1x128xf32>
    %2 = vector.broadcast %1 : vector<1x128xf32> to vector<32x128xf32>
    %3 = arith.mulf %0, %2 : vector<32x128xf32>
    %c0_3 = arith.constant 0 : index
    %c0_4 = arith.constant 0 : index
    %4 = vector.load %arg3[%c0_3, %c0_4] : memref<1x128xf32, #tpu.memory_space<vmem>>, vector<1x128xf32>
    %5 = vector.broadcast %4 : vector<1x128xf32> to vector<32x128xf32>
    %6 = arith.addf %3, %5 : vector<32x128xf32>
    %cst = arith.constant 5.000000e-01 : f32
    %7 = vector.broadcast %cst : f32 to vector<32x128xf32>
    %8 = arith.mulf %7, %6 : vector<32x128xf32>
    %cst_5 = arith.constant 0.707106769 : f32
    %9 = vector.broadcast %cst_5 : f32 to vector<32x128xf32>
    %10 = arith.mulf %6, %9 : vector<32x128xf32>
    %cst_6 = arith.constant 0.000000e+00 : f32
    %11 = vector.broadcast %cst_6 : f32 to vector<32x128xf32>
    %12 = arith.cmpf oge, %10, %11 : vector<32x128xf32>
    %cst_7 = arith.constant 1.000000e+00 : f32
    %cst_8 = arith.constant -1.000000e+00 : f32
    %13 = vector.broadcast %cst_7 : f32 to vector<32x128xf32>
    %14 = vector.broadcast %cst_8 : f32 to vector<32x128xf32>
    %15 = arith.select %12, %13, %14 : vector<32x128xi1>, vector<32x128xf32>
    %16 = math.absf %10 : vector<32x128xf32>
    %cst_9 = arith.constant 0.327591091 : f32
    %17 = vector.broadcast %cst_9 : f32 to vector<32x128xf32>
    %18 = arith.mulf %17, %16 : vector<32x128xf32>
    %cst_10 = arith.constant 1.000000e+00 : f32
    %19 = vector.broadcast %cst_10 : f32 to vector<32x128xf32>
    %20 = arith.addf %19, %18 : vector<32x128xf32>
    %21 = tpu.reciprocal %20 : vector<32x128xf32> -> vector<32x128xf32>
    %cst_11 = arith.constant 1.06140542 : f32
    %22 = vector.broadcast %cst_11 : f32 to vector<32x128xf32>
    %23 = arith.mulf %22, %21 : vector<32x128xf32>
    %cst_12 = arith.constant -1.45315206 : f32
    %24 = vector.broadcast %cst_12 : f32 to vector<32x128xf32>
    %25 = arith.addf %23, %24 : vector<32x128xf32>
    %26 = arith.mulf %25, %21 : vector<32x128xf32>
    %cst_13 = arith.constant 1.42141378 : f32
    %27 = vector.broadcast %cst_13 : f32 to vector<32x128xf32>
    %28 = arith.addf %26, %27 : vector<32x128xf32>
    %29 = arith.mulf %28, %21 : vector<32x128xf32>
    %cst_14 = arith.constant -0.284496725 : f32
    %30 = vector.broadcast %cst_14 : f32 to vector<32x128xf32>
    %31 = arith.addf %29, %30 : vector<32x128xf32>
    %32 = arith.mulf %31, %21 : vector<32x128xf32>
    %cst_15 = arith.constant 0.254829586 : f32
    %33 = vector.broadcast %cst_15 : f32 to vector<32x128xf32>
    %34 = arith.addf %32, %33 : vector<32x128xf32>
    %35 = arith.mulf %34, %21 : vector<32x128xf32>
    %cst_16 = arith.constant 0.000000e+00 : f32
    %36 = vector.broadcast %cst_16 : f32 to vector<32x128xf32>
    %37 = arith.subf %36, %16 : vector<32x128xf32>
    %38 = arith.mulf %37, %16 : vector<32x128xf32>
    %39 = math.exp %38 : vector<32x128xf32>
    %40 = arith.mulf %35, %39 : vector<32x128xf32>
    %cst_17 = arith.constant 1.000000e+00 : f32
    %41 = vector.broadcast %cst_17 : f32 to vector<32x128xf32>
    %42 = arith.subf %41, %40 : vector<32x128xf32>
    %43 = arith.mulf %15, %42 : vector<32x128xf32>
    %cst_18 = arith.constant 1.000000e+00 : f32
    %44 = vector.broadcast %cst_18 : f32 to vector<32x128xf32>
    %45 = arith.addf %44, %43 : vector<32x128xf32>
    %46 = arith.mulf %8, %45 : vector<32x128xf32>
    %c0_19 = arith.constant 0 : index
    %c0_20 = arith.constant 0 : index
    %47 = vector.load %arg4[%c0_19, %c0_20] : memref<32x128xf32, #tpu.memory_space<vmem>>, vector<32x128xf32>
    %48 = arith.addf %46, %47 : vector<32x128xf32>
    %c0_21 = arith.constant 0 : index
    %c0_22 = arith.constant 0 : index
    %49 = vector.load %arg5[%c0_21, %c0_22] : memref<32x128xf32, #tpu.memory_space<vmem>>, vector<32x128xf32>
    tpu.vector_store %arg5[%c0_21, %c0_22], %48 {strides = array<i32>} : memref<32x128xf32, #tpu.memory_space<vmem>>, vector<32x128xf32>,
    return
  }
  func.func @transform_0(%arg0: i32) -> (i32, i32) {
    %c0_i32 = arith.constant 0 : i32
    %c0_i32_0 = arith.constant 0 : i32
    return %arg0, %c0_i32 : i32, i32
  }
  func.func @transform_1(%arg0: i32) -> (i32, i32) {
    %c0_i32 = arith.constant 0 : i32
    %c0_i32_0 = arith.constant 0 : i32
    %c0_i32_1 = arith.constant 0 : i32
    return %c0_i32, %c0_i32_0 : i32, i32
  }
  func.func @transform_2(%arg0: i32) -> (i32, i32) {
    %c0_i32 = arith.constant 0 : i32
    %c0_i32_0 = arith.constant 0 : i32
    %c0_i32_1 = arith.constant 0 : i32
    return %c0_i32, %c0_i32_0 : i32, i32
  }
  func.func @transform_3(%arg0: i32) -> (i32, i32) {
    %c0_i32 = arith.constant 0 : i32
    %c0_i32_0 = arith.constant 0 : i32
    return %arg0, %c0_i32 : i32, i32
  }
  func.func @transform_4(%arg0: i32) -> (i32, i32) {
    %c0_i32 = arith.constant 0 : i32
    %c0_i32_0 = arith.constant 0 : i32
    return %arg0, %c0_i32 : i32, i32
  }
}

module attributes {stable_mosaic.version = 11 : i64} {
  func.func @_pool_stats_kernel(%arg0: i32, %arg1: memref<16x128xf32, #tpu.memory_space<vmem>>, %arg2: memref<16x128xf32, #tpu.memory_space<vmem>>, %arg3: memref<16x128xf32, #tpu.memory_space<vmem>>, %arg4: memref<16x128xf32, #tpu.memory_space<vmem>>, %arg5: memref<16x128xf32, #tpu.memory_space<vmem>>, %arg6: memref<1x128xf32, #tpu.memory_space<vmem>>, %arg7: memref<1x128xf32, #tpu.memory_space<vmem>>) attributes {dimension_semantics = [#tpu.dimension_semantics<arbitrary>], iteration_bounds = array<i64: 1>, scalar_prefetch = 0 : i64, scratch_operands = 0 : i64, tpu.core_type = #tpu.core_type<tc>, window_params = [{transform_indices = @transform_0, window_bounds = array<i64: 16, 128>}, {transform_indices = @transform_1, window_bounds = array<i64: 16, 128>}, {transform_indices = @transform_2, window_bounds = array<i64: 16, 128>}, {transform_indices = @transform_3, window_bounds = array<i64: 16, 128>}, {transform_indices = @transform_4, window_bounds = array<i64: 16, 128>}, {pipeline_mode = #tpu.pipeline_mode<synchronous>, transform_indices = @transform_5, window_bounds = array<i64: 1, 128>}, {pipeline_mode = #tpu.pipeline_mode<synchronous>, transform_indices = @transform_6, window_bounds = array<i64: 1, 128>}]} {
    %c0_i32 = arith.constant 0 : i32
    %0 = arith.cmpi eq, %arg0, %c0_i32 : i32
    %1 = arith.extui %0 : i1 to i32
    %c0_i32_0 = arith.constant 0 : i32
    %2 = arith.cmpi ne, %1, %c0_i32_0 : i32
    scf.if %2 {
      %cst_19 = arith.constant 0.000000e+00 : f32
      %22 = vector.broadcast %cst_19 : f32 to vector<1x128xf32>
      %c0_20 = arith.constant 0 : index
      %c0_21 = arith.constant 0 : index
      %23 = vector.load %arg6[%c0_20, %c0_21] : memref<1x128xf32, #tpu.memory_space<vmem>>, vector<1x128xf32>
      tpu.vector_store %arg6[%c0_20, %c0_21], %22 {strides = array<i32>} : memref<1x128xf32, #tpu.memory_space<vmem>>, vector<1x128xf32>,
      %cst_22 = arith.constant 0.000000e+00 : f32
      %24 = vector.broadcast %cst_22 : f32 to vector<1x128xf32>
      %c0_23 = arith.constant 0 : index
      %c0_24 = arith.constant 0 : index
      %25 = vector.load %arg7[%c0_23, %c0_24] : memref<1x128xf32, #tpu.memory_space<vmem>>, vector<1x128xf32>
      tpu.vector_store %arg7[%c0_23, %c0_24], %24 {strides = array<i32>} : memref<1x128xf32, #tpu.memory_space<vmem>>, vector<1x128xf32>,
    } else {
    }
    %c0 = arith.constant 0 : index
    %c0_1 = arith.constant 0 : index
    %3 = vector.load %arg1[%c0, %c0_1] : memref<16x128xf32, #tpu.memory_space<vmem>>, vector<16x128xf32>
    %c0_2 = arith.constant 0 : index
    %c0_3 = arith.constant 0 : index
    %4 = vector.load %arg2[%c0_2, %c0_3] : memref<16x128xf32, #tpu.memory_space<vmem>>, vector<16x128xf32>
    %5 = arith.maximumf %3, %4 : vector<16x128xf32>
    %c0_4 = arith.constant 0 : index
    %c0_5 = arith.constant 0 : index
    %6 = vector.load %arg3[%c0_4, %c0_5] : memref<16x128xf32, #tpu.memory_space<vmem>>, vector<16x128xf32>
    %c0_6 = arith.constant 0 : index
    %c0_7 = arith.constant 0 : index
    %7 = vector.load %arg4[%c0_6, %c0_7] : memref<16x128xf32, #tpu.memory_space<vmem>>, vector<16x128xf32>
    %8 = arith.maximumf %6, %7 : vector<16x128xf32>
    %9 = arith.maximumf %5, %8 : vector<16x128xf32>
    %c0_8 = arith.constant 0 : index
    %c0_9 = arith.constant 0 : index
    %10 = vector.load %arg5[%c0_8, %c0_9] : memref<16x128xf32, #tpu.memory_space<vmem>>, vector<16x128xf32>
    tpu.vector_store %arg5[%c0_8, %c0_9], %9 {strides = array<i32>} : memref<16x128xf32, #tpu.memory_space<vmem>>, vector<16x128xf32>,
    %c0_10 = arith.constant 0 : index
    %c0_11 = arith.constant 0 : index
    %11 = vector.load %arg6[%c0_10, %c0_11] : memref<1x128xf32, #tpu.memory_space<vmem>>, vector<1x128xf32>
    %cst = arith.constant dense<0.000000e+00> : vector<128xf32>
    %12 = vector.multi_reduction <add>, %9, %cst [0] : vector<16x128xf32> to vector<128xf32>
    %13 = vector.shape_cast %12 : vector<128xf32> to vector<1x128xf32>
    %14 = arith.addf %11, %13 : vector<1x128xf32>
    %c0_12 = arith.constant 0 : index
    %c0_13 = arith.constant 0 : index
    %15 = vector.load %arg6[%c0_12, %c0_13] : memref<1x128xf32, #tpu.memory_space<vmem>>, vector<1x128xf32>
    tpu.vector_store %arg6[%c0_12, %c0_13], %14 {strides = array<i32>} : memref<1x128xf32, #tpu.memory_space<vmem>>, vector<1x128xf32>,
    %c0_14 = arith.constant 0 : index
    %c0_15 = arith.constant 0 : index
    %16 = vector.load %arg7[%c0_14, %c0_15] : memref<1x128xf32, #tpu.memory_space<vmem>>, vector<1x128xf32>
    %17 = arith.mulf %9, %9 : vector<16x128xf32>
    %cst_16 = arith.constant dense<0.000000e+00> : vector<128xf32>
    %18 = vector.multi_reduction <add>, %17, %cst_16 [0] : vector<16x128xf32> to vector<128xf32>
    %19 = vector.shape_cast %18 : vector<128xf32> to vector<1x128xf32>
    %20 = arith.addf %16, %19 : vector<1x128xf32>
    %c0_17 = arith.constant 0 : index
    %c0_18 = arith.constant 0 : index
    %21 = vector.load %arg7[%c0_17, %c0_18] : memref<1x128xf32, #tpu.memory_space<vmem>>, vector<1x128xf32>
    tpu.vector_store %arg7[%c0_17, %c0_18], %20 {strides = array<i32>} : memref<1x128xf32, #tpu.memory_space<vmem>>, vector<1x128xf32>,
    return
  }
  func.func @transform_0(%arg0: i32) -> (i32, i32) {
    %c0_i32 = arith.constant 0 : i32
    %c0_i32_0 = arith.constant 0 : i32
    return %arg0, %c0_i32 : i32, i32
  }
  func.func @transform_1(%arg0: i32) -> (i32, i32) {
    %c0_i32 = arith.constant 0 : i32
    %c0_i32_0 = arith.constant 0 : i32
    return %arg0, %c0_i32 : i32, i32
  }
  func.func @transform_2(%arg0: i32) -> (i32, i32) {
    %c0_i32 = arith.constant 0 : i32
    %c0_i32_0 = arith.constant 0 : i32
    return %arg0, %c0_i32 : i32, i32
  }
  func.func @transform_3(%arg0: i32) -> (i32, i32) {
    %c0_i32 = arith.constant 0 : i32
    %c0_i32_0 = arith.constant 0 : i32
    return %arg0, %c0_i32 : i32, i32
  }
  func.func @transform_4(%arg0: i32) -> (i32, i32) {
    %c0_i32 = arith.constant 0 : i32
    %c0_i32_0 = arith.constant 0 : i32
    return %arg0, %c0_i32 : i32, i32
  }
  func.func @transform_5(%arg0: i32) -> (i32, i32) {
    %c0_i32 = arith.constant 0 : i32
    %c0_i32_0 = arith.constant 0 : i32
    %c0_i32_1 = arith.constant 0 : i32
    return %c0_i32, %c0_i32_0 : i32, i32
  }
  func.func @transform_6(%arg0: i32) -> (i32, i32) {
    %c0_i32 = arith.constant 0 : i32
    %c0_i32_0 = arith.constant 0 : i32
    %c0_i32_1 = arith.constant 0 : i32
    return %c0_i32, %c0_i32_0 : i32, i32
  }
}

module attributes {stable_mosaic.version = 11 : i64} {
  func.func @_scale_bias_gelu_kernel(%arg0: i32, %arg1: memref<16x128xf32, #tpu.memory_space<vmem>>, %arg2: memref<1x128xf32, #tpu.memory_space<vmem>>, %arg3: memref<1x128xf32, #tpu.memory_space<vmem>>, %arg4: memref<16x128xf32, #tpu.memory_space<vmem>>) attributes {dimension_semantics = [#tpu.dimension_semantics<parallel>], iteration_bounds = array<i64: 1>, scalar_prefetch = 0 : i64, scratch_operands = 0 : i64, tpu.core_type = #tpu.core_type<tc>, window_params = [{transform_indices = @transform_0, window_bounds = array<i64: 16, 128>}, {pipeline_mode = #tpu.pipeline_mode<synchronous>, transform_indices = @transform_1, window_bounds = array<i64: 1, 128>}, {pipeline_mode = #tpu.pipeline_mode<synchronous>, transform_indices = @transform_2, window_bounds = array<i64: 1, 128>}, {transform_indices = @transform_3, window_bounds = array<i64: 16, 128>}]} {
    %c0 = arith.constant 0 : index
    %c0_0 = arith.constant 0 : index
    %0 = vector.load %arg1[%c0, %c0_0] : memref<16x128xf32, #tpu.memory_space<vmem>>, vector<16x128xf32>
    %c0_1 = arith.constant 0 : index
    %c0_2 = arith.constant 0 : index
    %1 = vector.load %arg2[%c0_1, %c0_2] : memref<1x128xf32, #tpu.memory_space<vmem>>, vector<1x128xf32>
    %2 = vector.broadcast %1 : vector<1x128xf32> to vector<16x128xf32>
    %3 = arith.mulf %0, %2 : vector<16x128xf32>
    %c0_3 = arith.constant 0 : index
    %c0_4 = arith.constant 0 : index
    %4 = vector.load %arg3[%c0_3, %c0_4] : memref<1x128xf32, #tpu.memory_space<vmem>>, vector<1x128xf32>
    %5 = vector.broadcast %4 : vector<1x128xf32> to vector<16x128xf32>
    %6 = arith.addf %3, %5 : vector<16x128xf32>
    %cst = arith.constant 5.000000e-01 : f32
    %7 = vector.broadcast %cst : f32 to vector<16x128xf32>
    %8 = arith.mulf %7, %6 : vector<16x128xf32>
    %cst_5 = arith.constant 0.707106769 : f32
    %9 = vector.broadcast %cst_5 : f32 to vector<16x128xf32>
    %10 = arith.mulf %6, %9 : vector<16x128xf32>
    %cst_6 = arith.constant 0.000000e+00 : f32
    %11 = vector.broadcast %cst_6 : f32 to vector<16x128xf32>
    %12 = arith.cmpf oge, %10, %11 : vector<16x128xf32>
    %cst_7 = arith.constant 1.000000e+00 : f32
    %cst_8 = arith.constant -1.000000e+00 : f32
    %13 = vector.broadcast %cst_7 : f32 to vector<16x128xf32>
    %14 = vector.broadcast %cst_8 : f32 to vector<16x128xf32>
    %15 = arith.select %12, %13, %14 : vector<16x128xi1>, vector<16x128xf32>
    %16 = math.absf %10 : vector<16x128xf32>
    %cst_9 = arith.constant 0.327591091 : f32
    %17 = vector.broadcast %cst_9 : f32 to vector<16x128xf32>
    %18 = arith.mulf %17, %16 : vector<16x128xf32>
    %cst_10 = arith.constant 1.000000e+00 : f32
    %19 = vector.broadcast %cst_10 : f32 to vector<16x128xf32>
    %20 = arith.addf %19, %18 : vector<16x128xf32>
    %21 = tpu.reciprocal %20 : vector<16x128xf32> -> vector<16x128xf32>
    %cst_11 = arith.constant 1.06140542 : f32
    %22 = vector.broadcast %cst_11 : f32 to vector<16x128xf32>
    %23 = arith.mulf %22, %21 : vector<16x128xf32>
    %cst_12 = arith.constant -1.45315206 : f32
    %24 = vector.broadcast %cst_12 : f32 to vector<16x128xf32>
    %25 = arith.addf %23, %24 : vector<16x128xf32>
    %26 = arith.mulf %25, %21 : vector<16x128xf32>
    %cst_13 = arith.constant 1.42141378 : f32
    %27 = vector.broadcast %cst_13 : f32 to vector<16x128xf32>
    %28 = arith.addf %26, %27 : vector<16x128xf32>
    %29 = arith.mulf %28, %21 : vector<16x128xf32>
    %cst_14 = arith.constant -0.284496725 : f32
    %30 = vector.broadcast %cst_14 : f32 to vector<16x128xf32>
    %31 = arith.addf %29, %30 : vector<16x128xf32>
    %32 = arith.mulf %31, %21 : vector<16x128xf32>
    %cst_15 = arith.constant 0.254829586 : f32
    %33 = vector.broadcast %cst_15 : f32 to vector<16x128xf32>
    %34 = arith.addf %32, %33 : vector<16x128xf32>
    %35 = arith.mulf %34, %21 : vector<16x128xf32>
    %cst_16 = arith.constant 0.000000e+00 : f32
    %36 = vector.broadcast %cst_16 : f32 to vector<16x128xf32>
    %37 = arith.subf %36, %16 : vector<16x128xf32>
    %38 = arith.mulf %37, %16 : vector<16x128xf32>
    %39 = math.exp %38 : vector<16x128xf32>
    %40 = arith.mulf %35, %39 : vector<16x128xf32>
    %cst_17 = arith.constant 1.000000e+00 : f32
    %41 = vector.broadcast %cst_17 : f32 to vector<16x128xf32>
    %42 = arith.subf %41, %40 : vector<16x128xf32>
    %43 = arith.mulf %15, %42 : vector<16x128xf32>
    %cst_18 = arith.constant 1.000000e+00 : f32
    %44 = vector.broadcast %cst_18 : f32 to vector<16x128xf32>
    %45 = arith.addf %44, %43 : vector<16x128xf32>
    %46 = arith.mulf %8, %45 : vector<16x128xf32>
    %c0_19 = arith.constant 0 : index
    %c0_20 = arith.constant 0 : index
    %47 = vector.load %arg4[%c0_19, %c0_20] : memref<16x128xf32, #tpu.memory_space<vmem>>, vector<16x128xf32>
    tpu.vector_store %arg4[%c0_19, %c0_20], %46 {strides = array<i32>} : memref<16x128xf32, #tpu.memory_space<vmem>>, vector<16x128xf32>,
    return
  }
  func.func @transform_0(%arg0: i32) -> (i32, i32) {
    %c0_i32 = arith.constant 0 : i32
    %c0_i32_0 = arith.constant 0 : i32
    return %arg0, %c0_i32 : i32, i32
  }
  func.func @transform_1(%arg0: i32) -> (i32, i32) {
    %c0_i32 = arith.constant 0 : i32
    %c0_i32_0 = arith.constant 0 : i32
    %c0_i32_1 = arith.constant 0 : i32
    return %c0_i32, %c0_i32_0 : i32, i32
  }
  func.func @transform_2(%arg0: i32) -> (i32, i32) {
    %c0_i32 = arith.constant 0 : i32
    %c0_i32_0 = arith.constant 0 : i32
    %c0_i32_1 = arith.constant 0 : i32
    return %c0_i32, %c0_i32_0 : i32, i32
  }
  func.func @transform_3(%arg0: i32) -> (i32, i32) {
    %c0_i32 = arith.constant 0 : i32
    %c0_i32_0 = arith.constant 0 : i32
    return %arg0, %c0_i32 : i32, i32
  }
}

module attributes {stable_mosaic.version = 11 : i64} {
  func.func @_mm_stats_kernel(%arg0: i32, %arg1: memref<32x576xf32, #tpu.memory_space<vmem>>, %arg2: memref<576x64xf32, #tpu.memory_space<vmem>>, %arg3: memref<32x64xf32, #tpu.memory_space<vmem>>, %arg4: memref<1x64xf32, #tpu.memory_space<vmem>>, %arg5: memref<1x64xf32, #tpu.memory_space<vmem>>) attributes {dimension_semantics = [#tpu.dimension_semantics<arbitrary>], iteration_bounds = array<i64: 1>, scalar_prefetch = 0 : i64, scratch_operands = 0 : i64, tpu.core_type = #tpu.core_type<tc>, window_params = [{transform_indices = @transform_0, window_bounds = array<i64: 32, 576>}, {pipeline_mode = #tpu.pipeline_mode<synchronous>, transform_indices = @transform_1, window_bounds = array<i64: 576, 64>}, {transform_indices = @transform_2, window_bounds = array<i64: 32, 64>}, {pipeline_mode = #tpu.pipeline_mode<synchronous>, transform_indices = @transform_3, window_bounds = array<i64: 1, 64>}, {pipeline_mode = #tpu.pipeline_mode<synchronous>, transform_indices = @transform_4, window_bounds = array<i64: 1, 64>}]} {
    %c0_i32 = arith.constant 0 : i32
    %0 = arith.cmpi eq, %arg0, %c0_i32 : i32
    %1 = arith.extui %0 : i1 to i32
    %c0_i32_0 = arith.constant 0 : i32
    %2 = arith.cmpi ne, %1, %c0_i32_0 : i32
    scf.if %2 {
      %cst_16 = arith.constant 0.000000e+00 : f32
      %18 = vector.broadcast %cst_16 : f32 to vector<1x64xf32>
      %c0_17 = arith.constant 0 : index
      %c0_18 = arith.constant 0 : index
      %19 = vector.load %arg4[%c0_17, %c0_18] : memref<1x64xf32, #tpu.memory_space<vmem>>, vector<1x64xf32>
      tpu.vector_store %arg4[%c0_17, %c0_18], %18 {strides = array<i32>} : memref<1x64xf32, #tpu.memory_space<vmem>>, vector<1x64xf32>,
      %cst_19 = arith.constant 0.000000e+00 : f32
      %20 = vector.broadcast %cst_19 : f32 to vector<1x64xf32>
      %c0_20 = arith.constant 0 : index
      %c0_21 = arith.constant 0 : index
      %21 = vector.load %arg5[%c0_20, %c0_21] : memref<1x64xf32, #tpu.memory_space<vmem>>, vector<1x64xf32>
      tpu.vector_store %arg5[%c0_20, %c0_21], %20 {strides = array<i32>} : memref<1x64xf32, #tpu.memory_space<vmem>>, vector<1x64xf32>,
    } else {
    }
    %c0 = arith.constant 0 : index
    %c0_1 = arith.constant 0 : index
    %3 = vector.load %arg1[%c0, %c0_1] : memref<32x576xf32, #tpu.memory_space<vmem>>, vector<32x576xf32>
    %c0_2 = arith.constant 0 : index
    %c0_3 = arith.constant 0 : index
    %4 = vector.load %arg2[%c0_2, %c0_3] : memref<576x64xf32, #tpu.memory_space<vmem>>, vector<576x64xf32>
    %cst = arith.constant dense<0.000000e+00> : vector<32x64xf32>
    %5 = tpu.matmul %3, %4, %cst {dimension_numbers = #tpu.dot_dimension_numbers<[1], [0], [0], [1], [0, 0, 1, 1], [], []>} : vector<32x576xf32>, vector<576x64xf32>, vector<32x64xf32> -> vector<32x64xf32>
    %c0_4 = arith.constant 0 : index
    %c0_5 = arith.constant 0 : index
    %6 = vector.load %arg3[%c0_4, %c0_5] : memref<32x64xf32, #tpu.memory_space<vmem>>, vector<32x64xf32>
    tpu.vector_store %arg3[%c0_4, %c0_5], %5 {strides = array<i32>} : memref<32x64xf32, #tpu.memory_space<vmem>>, vector<32x64xf32>,
    %c0_6 = arith.constant 0 : index
    %c0_7 = arith.constant 0 : index
    %7 = vector.load %arg4[%c0_6, %c0_7] : memref<1x64xf32, #tpu.memory_space<vmem>>, vector<1x64xf32>
    %cst_8 = arith.constant dense<0.000000e+00> : vector<64xf32>
    %8 = vector.multi_reduction <add>, %5, %cst_8 [0] : vector<32x64xf32> to vector<64xf32>
    %9 = vector.shape_cast %8 : vector<64xf32> to vector<1x64xf32>
    %10 = arith.addf %7, %9 : vector<1x64xf32>
    %c0_9 = arith.constant 0 : index
    %c0_10 = arith.constant 0 : index
    %11 = vector.load %arg4[%c0_9, %c0_10] : memref<1x64xf32, #tpu.memory_space<vmem>>, vector<1x64xf32>
    tpu.vector_store %arg4[%c0_9, %c0_10], %10 {strides = array<i32>} : memref<1x64xf32, #tpu.memory_space<vmem>>, vector<1x64xf32>,
    %c0_11 = arith.constant 0 : index
    %c0_12 = arith.constant 0 : index
    %12 = vector.load %arg5[%c0_11, %c0_12] : memref<1x64xf32, #tpu.memory_space<vmem>>, vector<1x64xf32>
    %13 = arith.mulf %5, %5 : vector<32x64xf32>
    %cst_13 = arith.constant dense<0.000000e+00> : vector<64xf32>
    %14 = vector.multi_reduction <add>, %13, %cst_13 [0] : vector<32x64xf32> to vector<64xf32>
    %15 = vector.shape_cast %14 : vector<64xf32> to vector<1x64xf32>
    %16 = arith.addf %12, %15 : vector<1x64xf32>
    %c0_14 = arith.constant 0 : index
    %c0_15 = arith.constant 0 : index
    %17 = vector.load %arg5[%c0_14, %c0_15] : memref<1x64xf32, #tpu.memory_space<vmem>>, vector<1x64xf32>
    tpu.vector_store %arg5[%c0_14, %c0_15], %16 {strides = array<i32>} : memref<1x64xf32, #tpu.memory_space<vmem>>, vector<1x64xf32>,
    return
  }
  func.func @transform_0(%arg0: i32) -> (i32, i32) {
    %c0_i32 = arith.constant 0 : i32
    %c0_i32_0 = arith.constant 0 : i32
    return %arg0, %c0_i32 : i32, i32
  }
  func.func @transform_1(%arg0: i32) -> (i32, i32) {
    %c0_i32 = arith.constant 0 : i32
    %c0_i32_0 = arith.constant 0 : i32
    %c0_i32_1 = arith.constant 0 : i32
    return %c0_i32, %c0_i32_0 : i32, i32
  }
  func.func @transform_2(%arg0: i32) -> (i32, i32) {
    %c0_i32 = arith.constant 0 : i32
    %c0_i32_0 = arith.constant 0 : i32
    return %arg0, %c0_i32 : i32, i32
  }
  func.func @transform_3(%arg0: i32) -> (i32, i32) {
    %c0_i32 = arith.constant 0 : i32
    %c0_i32_0 = arith.constant 0 : i32
    %c0_i32_1 = arith.constant 0 : i32
    return %c0_i32, %c0_i32_0 : i32, i32
  }
  func.func @transform_4(%arg0: i32) -> (i32, i32) {
    %c0_i32 = arith.constant 0 : i32
    %c0_i32_0 = arith.constant 0 : i32
    %c0_i32_1 = arith.constant 0 : i32
    return %c0_i32, %c0_i32_0 : i32, i32
  }
}

module attributes {stable_mosaic.version = 11 : i64} {
  func.func @_mm_kernel(%arg0: i32, %arg1: memref<32x576xf32, #tpu.memory_space<vmem>>, %arg2: memref<576x128xf32, #tpu.memory_space<vmem>>, %arg3: memref<32x128xf32, #tpu.memory_space<vmem>>) attributes {dimension_semantics = [#tpu.dimension_semantics<parallel>], iteration_bounds = array<i64: 1>, scalar_prefetch = 0 : i64, scratch_operands = 0 : i64, tpu.core_type = #tpu.core_type<tc>, window_params = [{transform_indices = @transform_0, window_bounds = array<i64: 32, 576>}, {pipeline_mode = #tpu.pipeline_mode<synchronous>, transform_indices = @transform_1, window_bounds = array<i64: 576, 128>}, {transform_indices = @transform_2, window_bounds = array<i64: 32, 128>}]} {
    %c0 = arith.constant 0 : index
    %c0_0 = arith.constant 0 : index
    %0 = vector.load %arg1[%c0, %c0_0] : memref<32x576xf32, #tpu.memory_space<vmem>>, vector<32x576xf32>
    %c0_1 = arith.constant 0 : index
    %c0_2 = arith.constant 0 : index
    %1 = vector.load %arg2[%c0_1, %c0_2] : memref<576x128xf32, #tpu.memory_space<vmem>>, vector<576x128xf32>
    %cst = arith.constant dense<0.000000e+00> : vector<32x128xf32>
    %2 = tpu.matmul %0, %1, %cst {dimension_numbers = #tpu.dot_dimension_numbers<[1], [0], [0], [1], [0, 0, 1, 1], [], []>} : vector<32x576xf32>, vector<576x128xf32>, vector<32x128xf32> -> vector<32x128xf32>
    %c0_3 = arith.constant 0 : index
    %c0_4 = arith.constant 0 : index
    %3 = vector.load %arg3[%c0_3, %c0_4] : memref<32x128xf32, #tpu.memory_space<vmem>>, vector<32x128xf32>
    tpu.vector_store %arg3[%c0_3, %c0_4], %2 {strides = array<i32>} : memref<32x128xf32, #tpu.memory_space<vmem>>, vector<32x128xf32>,
    return
  }
  func.func @transform_0(%arg0: i32) -> (i32, i32) {
    %c0_i32 = arith.constant 0 : i32
    %c0_i32_0 = arith.constant 0 : i32
    return %arg0, %c0_i32 : i32, i32
  }
  func.func @transform_1(%arg0: i32) -> (i32, i32) {
    %c0_i32 = arith.constant 0 : i32
    %c0_i32_0 = arith.constant 0 : i32
    %c0_i32_1 = arith.constant 0 : i32
    return %c0_i32, %c0_i32_0 : i32, i32
  }
  func.func @transform_2(%arg0: i32) -> (i32, i32) {
    %c0_i32 = arith.constant 0 : i32
    %c0_i32_0 = arith.constant 0 : i32
    return %arg0, %c0_i32 : i32, i32
  }
}

module attributes {stable_mosaic.version = 11 : i64} {
  func.func @_scale_bias_gelu_res_kernel(%arg0: i32, %arg1: memref<16x128xf32, #tpu.memory_space<vmem>>, %arg2: memref<1x128xf32, #tpu.memory_space<vmem>>, %arg3: memref<1x128xf32, #tpu.memory_space<vmem>>, %arg4: memref<16x128xf32, #tpu.memory_space<vmem>>, %arg5: memref<16x128xf32, #tpu.memory_space<vmem>>) attributes {dimension_semantics = [#tpu.dimension_semantics<parallel>], iteration_bounds = array<i64: 1>, scalar_prefetch = 0 : i64, scratch_operands = 0 : i64, tpu.core_type = #tpu.core_type<tc>, window_params = [{transform_indices = @transform_0, window_bounds = array<i64: 16, 128>}, {pipeline_mode = #tpu.pipeline_mode<synchronous>, transform_indices = @transform_1, window_bounds = array<i64: 1, 128>}, {pipeline_mode = #tpu.pipeline_mode<synchronous>, transform_indices = @transform_2, window_bounds = array<i64: 1, 128>}, {transform_indices = @transform_3, window_bounds = array<i64: 16, 128>}, {transform_indices = @transform_4, window_bounds = array<i64: 16, 128>}]} {
    %c0 = arith.constant 0 : index
    %c0_0 = arith.constant 0 : index
    %0 = vector.load %arg1[%c0, %c0_0] : memref<16x128xf32, #tpu.memory_space<vmem>>, vector<16x128xf32>
    %c0_1 = arith.constant 0 : index
    %c0_2 = arith.constant 0 : index
    %1 = vector.load %arg2[%c0_1, %c0_2] : memref<1x128xf32, #tpu.memory_space<vmem>>, vector<1x128xf32>
    %2 = vector.broadcast %1 : vector<1x128xf32> to vector<16x128xf32>
    %3 = arith.mulf %0, %2 : vector<16x128xf32>
    %c0_3 = arith.constant 0 : index
    %c0_4 = arith.constant 0 : index
    %4 = vector.load %arg3[%c0_3, %c0_4] : memref<1x128xf32, #tpu.memory_space<vmem>>, vector<1x128xf32>
    %5 = vector.broadcast %4 : vector<1x128xf32> to vector<16x128xf32>
    %6 = arith.addf %3, %5 : vector<16x128xf32>
    %cst = arith.constant 5.000000e-01 : f32
    %7 = vector.broadcast %cst : f32 to vector<16x128xf32>
    %8 = arith.mulf %7, %6 : vector<16x128xf32>
    %cst_5 = arith.constant 0.707106769 : f32
    %9 = vector.broadcast %cst_5 : f32 to vector<16x128xf32>
    %10 = arith.mulf %6, %9 : vector<16x128xf32>
    %cst_6 = arith.constant 0.000000e+00 : f32
    %11 = vector.broadcast %cst_6 : f32 to vector<16x128xf32>
    %12 = arith.cmpf oge, %10, %11 : vector<16x128xf32>
    %cst_7 = arith.constant 1.000000e+00 : f32
    %cst_8 = arith.constant -1.000000e+00 : f32
    %13 = vector.broadcast %cst_7 : f32 to vector<16x128xf32>
    %14 = vector.broadcast %cst_8 : f32 to vector<16x128xf32>
    %15 = arith.select %12, %13, %14 : vector<16x128xi1>, vector<16x128xf32>
    %16 = math.absf %10 : vector<16x128xf32>
    %cst_9 = arith.constant 0.327591091 : f32
    %17 = vector.broadcast %cst_9 : f32 to vector<16x128xf32>
    %18 = arith.mulf %17, %16 : vector<16x128xf32>
    %cst_10 = arith.constant 1.000000e+00 : f32
    %19 = vector.broadcast %cst_10 : f32 to vector<16x128xf32>
    %20 = arith.addf %19, %18 : vector<16x128xf32>
    %21 = tpu.reciprocal %20 : vector<16x128xf32> -> vector<16x128xf32>
    %cst_11 = arith.constant 1.06140542 : f32
    %22 = vector.broadcast %cst_11 : f32 to vector<16x128xf32>
    %23 = arith.mulf %22, %21 : vector<16x128xf32>
    %cst_12 = arith.constant -1.45315206 : f32
    %24 = vector.broadcast %cst_12 : f32 to vector<16x128xf32>
    %25 = arith.addf %23, %24 : vector<16x128xf32>
    %26 = arith.mulf %25, %21 : vector<16x128xf32>
    %cst_13 = arith.constant 1.42141378 : f32
    %27 = vector.broadcast %cst_13 : f32 to vector<16x128xf32>
    %28 = arith.addf %26, %27 : vector<16x128xf32>
    %29 = arith.mulf %28, %21 : vector<16x128xf32>
    %cst_14 = arith.constant -0.284496725 : f32
    %30 = vector.broadcast %cst_14 : f32 to vector<16x128xf32>
    %31 = arith.addf %29, %30 : vector<16x128xf32>
    %32 = arith.mulf %31, %21 : vector<16x128xf32>
    %cst_15 = arith.constant 0.254829586 : f32
    %33 = vector.broadcast %cst_15 : f32 to vector<16x128xf32>
    %34 = arith.addf %32, %33 : vector<16x128xf32>
    %35 = arith.mulf %34, %21 : vector<16x128xf32>
    %cst_16 = arith.constant 0.000000e+00 : f32
    %36 = vector.broadcast %cst_16 : f32 to vector<16x128xf32>
    %37 = arith.subf %36, %16 : vector<16x128xf32>
    %38 = arith.mulf %37, %16 : vector<16x128xf32>
    %39 = math.exp %38 : vector<16x128xf32>
    %40 = arith.mulf %35, %39 : vector<16x128xf32>
    %cst_17 = arith.constant 1.000000e+00 : f32
    %41 = vector.broadcast %cst_17 : f32 to vector<16x128xf32>
    %42 = arith.subf %41, %40 : vector<16x128xf32>
    %43 = arith.mulf %15, %42 : vector<16x128xf32>
    %cst_18 = arith.constant 1.000000e+00 : f32
    %44 = vector.broadcast %cst_18 : f32 to vector<16x128xf32>
    %45 = arith.addf %44, %43 : vector<16x128xf32>
    %46 = arith.mulf %8, %45 : vector<16x128xf32>
    %c0_19 = arith.constant 0 : index
    %c0_20 = arith.constant 0 : index
    %47 = vector.load %arg4[%c0_19, %c0_20] : memref<16x128xf32, #tpu.memory_space<vmem>>, vector<16x128xf32>
    %48 = arith.addf %46, %47 : vector<16x128xf32>
    %c0_21 = arith.constant 0 : index
    %c0_22 = arith.constant 0 : index
    %49 = vector.load %arg5[%c0_21, %c0_22] : memref<16x128xf32, #tpu.memory_space<vmem>>, vector<16x128xf32>
    tpu.vector_store %arg5[%c0_21, %c0_22], %48 {strides = array<i32>} : memref<16x128xf32, #tpu.memory_space<vmem>>, vector<16x128xf32>,
    return
  }
  func.func @transform_0(%arg0: i32) -> (i32, i32) {
    %c0_i32 = arith.constant 0 : i32
    %c0_i32_0 = arith.constant 0 : i32
    return %arg0, %c0_i32 : i32, i32
  }
  func.func @transform_1(%arg0: i32) -> (i32, i32) {
    %c0_i32 = arith.constant 0 : i32
    %c0_i32_0 = arith.constant 0 : i32
    %c0_i32_1 = arith.constant 0 : i32
    return %c0_i32, %c0_i32_0 : i32, i32
  }
  func.func @transform_2(%arg0: i32) -> (i32, i32) {
    %c0_i32 = arith.constant 0 : i32
    %c0_i32_0 = arith.constant 0 : i32
    %c0_i32_1 = arith.constant 0 : i32
    return %c0_i32, %c0_i32_0 : i32, i32
  }
  func.func @transform_3(%arg0: i32) -> (i32, i32) {
    %c0_i32 = arith.constant 0 : i32
    %c0_i32_0 = arith.constant 0 : i32
    return %arg0, %c0_i32 : i32, i32
  }
  func.func @transform_4(%arg0: i32) -> (i32, i32) {
    %c0_i32 = arith.constant 0 : i32
    %c0_i32_0 = arith.constant 0 : i32
    return %arg0, %c0_i32 : i32, i32
  }
}

module attributes {stable_mosaic.version = 11 : i64} {
  func.func @_pool_stats_kernel(%arg0: i32, %arg1: memref<8x128xf32, #tpu.memory_space<vmem>>, %arg2: memref<8x128xf32, #tpu.memory_space<vmem>>, %arg3: memref<8x128xf32, #tpu.memory_space<vmem>>, %arg4: memref<8x128xf32, #tpu.memory_space<vmem>>, %arg5: memref<8x128xf32, #tpu.memory_space<vmem>>, %arg6: memref<1x128xf32, #tpu.memory_space<vmem>>, %arg7: memref<1x128xf32, #tpu.memory_space<vmem>>) attributes {dimension_semantics = [#tpu.dimension_semantics<arbitrary>], iteration_bounds = array<i64: 1>, scalar_prefetch = 0 : i64, scratch_operands = 0 : i64, tpu.core_type = #tpu.core_type<tc>, window_params = [{transform_indices = @transform_0, window_bounds = array<i64: 8, 128>}, {transform_indices = @transform_1, window_bounds = array<i64: 8, 128>}, {transform_indices = @transform_2, window_bounds = array<i64: 8, 128>}, {transform_indices = @transform_3, window_bounds = array<i64: 8, 128>}, {transform_indices = @transform_4, window_bounds = array<i64: 8, 128>}, {pipeline_mode = #tpu.pipeline_mode<synchronous>, transform_indices = @transform_5, window_bounds = array<i64: 1, 128>}, {pipeline_mode = #tpu.pipeline_mode<synchronous>, transform_indices = @transform_6, window_bounds = array<i64: 1, 128>}]} {
    %c0_i32 = arith.constant 0 : i32
    %0 = arith.cmpi eq, %arg0, %c0_i32 : i32
    %1 = arith.extui %0 : i1 to i32
    %c0_i32_0 = arith.constant 0 : i32
    %2 = arith.cmpi ne, %1, %c0_i32_0 : i32
    scf.if %2 {
      %cst_19 = arith.constant 0.000000e+00 : f32
      %22 = vector.broadcast %cst_19 : f32 to vector<1x128xf32>
      %c0_20 = arith.constant 0 : index
      %c0_21 = arith.constant 0 : index
      %23 = vector.load %arg6[%c0_20, %c0_21] : memref<1x128xf32, #tpu.memory_space<vmem>>, vector<1x128xf32>
      tpu.vector_store %arg6[%c0_20, %c0_21], %22 {strides = array<i32>} : memref<1x128xf32, #tpu.memory_space<vmem>>, vector<1x128xf32>,
      %cst_22 = arith.constant 0.000000e+00 : f32
      %24 = vector.broadcast %cst_22 : f32 to vector<1x128xf32>
      %c0_23 = arith.constant 0 : index
      %c0_24 = arith.constant 0 : index
      %25 = vector.load %arg7[%c0_23, %c0_24] : memref<1x128xf32, #tpu.memory_space<vmem>>, vector<1x128xf32>
      tpu.vector_store %arg7[%c0_23, %c0_24], %24 {strides = array<i32>} : memref<1x128xf32, #tpu.memory_space<vmem>>, vector<1x128xf32>,
    } else {
    }
    %c0 = arith.constant 0 : index
    %c0_1 = arith.constant 0 : index
    %3 = vector.load %arg1[%c0, %c0_1] : memref<8x128xf32, #tpu.memory_space<vmem>>, vector<8x128xf32>
    %c0_2 = arith.constant 0 : index
    %c0_3 = arith.constant 0 : index
    %4 = vector.load %arg2[%c0_2, %c0_3] : memref<8x128xf32, #tpu.memory_space<vmem>>, vector<8x128xf32>
    %5 = arith.maximumf %3, %4 : vector<8x128xf32>
    %c0_4 = arith.constant 0 : index
    %c0_5 = arith.constant 0 : index
    %6 = vector.load %arg3[%c0_4, %c0_5] : memref<8x128xf32, #tpu.memory_space<vmem>>, vector<8x128xf32>
    %c0_6 = arith.constant 0 : index
    %c0_7 = arith.constant 0 : index
    %7 = vector.load %arg4[%c0_6, %c0_7] : memref<8x128xf32, #tpu.memory_space<vmem>>, vector<8x128xf32>
    %8 = arith.maximumf %6, %7 : vector<8x128xf32>
    %9 = arith.maximumf %5, %8 : vector<8x128xf32>
    %c0_8 = arith.constant 0 : index
    %c0_9 = arith.constant 0 : index
    %10 = vector.load %arg5[%c0_8, %c0_9] : memref<8x128xf32, #tpu.memory_space<vmem>>, vector<8x128xf32>
    tpu.vector_store %arg5[%c0_8, %c0_9], %9 {strides = array<i32>} : memref<8x128xf32, #tpu.memory_space<vmem>>, vector<8x128xf32>,
    %c0_10 = arith.constant 0 : index
    %c0_11 = arith.constant 0 : index
    %11 = vector.load %arg6[%c0_10, %c0_11] : memref<1x128xf32, #tpu.memory_space<vmem>>, vector<1x128xf32>
    %cst = arith.constant dense<0.000000e+00> : vector<128xf32>
    %12 = vector.multi_reduction <add>, %9, %cst [0] : vector<8x128xf32> to vector<128xf32>
    %13 = vector.shape_cast %12 : vector<128xf32> to vector<1x128xf32>
    %14 = arith.addf %11, %13 : vector<1x128xf32>
    %c0_12 = arith.constant 0 : index
    %c0_13 = arith.constant 0 : index
    %15 = vector.load %arg6[%c0_12, %c0_13] : memref<1x128xf32, #tpu.memory_space<vmem>>, vector<1x128xf32>
    tpu.vector_store %arg6[%c0_12, %c0_13], %14 {strides = array<i32>} : memref<1x128xf32, #tpu.memory_space<vmem>>, vector<1x128xf32>,
    %c0_14 = arith.constant 0 : index
    %c0_15 = arith.constant 0 : index
    %16 = vector.load %arg7[%c0_14, %c0_15] : memref<1x128xf32, #tpu.memory_space<vmem>>, vector<1x128xf32>
    %17 = arith.mulf %9, %9 : vector<8x128xf32>
    %cst_16 = arith.constant dense<0.000000e+00> : vector<128xf32>
    %18 = vector.multi_reduction <add>, %17, %cst_16 [0] : vector<8x128xf32> to vector<128xf32>
    %19 = vector.shape_cast %18 : vector<128xf32> to vector<1x128xf32>
    %20 = arith.addf %16, %19 : vector<1x128xf32>
    %c0_17 = arith.constant 0 : index
    %c0_18 = arith.constant 0 : index
    %21 = vector.load %arg7[%c0_17, %c0_18] : memref<1x128xf32, #tpu.memory_space<vmem>>, vector<1x128xf32>
    tpu.vector_store %arg7[%c0_17, %c0_18], %20 {strides = array<i32>} : memref<1x128xf32, #tpu.memory_space<vmem>>, vector<1x128xf32>,
    return
  }
  func.func @transform_0(%arg0: i32) -> (i32, i32) {
    %c0_i32 = arith.constant 0 : i32
    %c0_i32_0 = arith.constant 0 : i32
    return %arg0, %c0_i32 : i32, i32
  }
  func.func @transform_1(%arg0: i32) -> (i32, i32) {
    %c0_i32 = arith.constant 0 : i32
    %c0_i32_0 = arith.constant 0 : i32
    return %arg0, %c0_i32 : i32, i32
  }
  func.func @transform_2(%arg0: i32) -> (i32, i32) {
    %c0_i32 = arith.constant 0 : i32
    %c0_i32_0 = arith.constant 0 : i32
    return %arg0, %c0_i32 : i32, i32
  }
  func.func @transform_3(%arg0: i32) -> (i32, i32) {
    %c0_i32 = arith.constant 0 : i32
    %c0_i32_0 = arith.constant 0 : i32
    return %arg0, %c0_i32 : i32, i32
  }
  func.func @transform_4(%arg0: i32) -> (i32, i32) {
    %c0_i32 = arith.constant 0 : i32
    %c0_i32_0 = arith.constant 0 : i32
    return %arg0, %c0_i32 : i32, i32
  }
  func.func @transform_5(%arg0: i32) -> (i32, i32) {
    %c0_i32 = arith.constant 0 : i32
    %c0_i32_0 = arith.constant 0 : i32
    %c0_i32_1 = arith.constant 0 : i32
    return %c0_i32, %c0_i32_0 : i32, i32
  }
  func.func @transform_6(%arg0: i32) -> (i32, i32) {
    %c0_i32 = arith.constant 0 : i32
    %c0_i32_0 = arith.constant 0 : i32
    %c0_i32_1 = arith.constant 0 : i32
    return %c0_i32, %c0_i32_0 : i32, i32
  }
}

module attributes {stable_mosaic.version = 11 : i64} {
  func.func @_scale_bias_gelu_kernel(%arg0: i32, %arg1: memref<8x128xf32, #tpu.memory_space<vmem>>, %arg2: memref<1x128xf32, #tpu.memory_space<vmem>>, %arg3: memref<1x128xf32, #tpu.memory_space<vmem>>, %arg4: memref<8x128xf32, #tpu.memory_space<vmem>>) attributes {dimension_semantics = [#tpu.dimension_semantics<parallel>], iteration_bounds = array<i64: 1>, scalar_prefetch = 0 : i64, scratch_operands = 0 : i64, tpu.core_type = #tpu.core_type<tc>, window_params = [{transform_indices = @transform_0, window_bounds = array<i64: 8, 128>}, {pipeline_mode = #tpu.pipeline_mode<synchronous>, transform_indices = @transform_1, window_bounds = array<i64: 1, 128>}, {pipeline_mode = #tpu.pipeline_mode<synchronous>, transform_indices = @transform_2, window_bounds = array<i64: 1, 128>}, {transform_indices = @transform_3, window_bounds = array<i64: 8, 128>}]} {
    %c0 = arith.constant 0 : index
    %c0_0 = arith.constant 0 : index
    %0 = vector.load %arg1[%c0, %c0_0] : memref<8x128xf32, #tpu.memory_space<vmem>>, vector<8x128xf32>
    %c0_1 = arith.constant 0 : index
    %c0_2 = arith.constant 0 : index
    %1 = vector.load %arg2[%c0_1, %c0_2] : memref<1x128xf32, #tpu.memory_space<vmem>>, vector<1x128xf32>
    %2 = vector.broadcast %1 : vector<1x128xf32> to vector<8x128xf32>
    %3 = arith.mulf %0, %2 : vector<8x128xf32>
    %c0_3 = arith.constant 0 : index
    %c0_4 = arith.constant 0 : index
    %4 = vector.load %arg3[%c0_3, %c0_4] : memref<1x128xf32, #tpu.memory_space<vmem>>, vector<1x128xf32>
    %5 = vector.broadcast %4 : vector<1x128xf32> to vector<8x128xf32>
    %6 = arith.addf %3, %5 : vector<8x128xf32>
    %cst = arith.constant 5.000000e-01 : f32
    %7 = vector.broadcast %cst : f32 to vector<8x128xf32>
    %8 = arith.mulf %7, %6 : vector<8x128xf32>
    %cst_5 = arith.constant 0.707106769 : f32
    %9 = vector.broadcast %cst_5 : f32 to vector<8x128xf32>
    %10 = arith.mulf %6, %9 : vector<8x128xf32>
    %cst_6 = arith.constant 0.000000e+00 : f32
    %11 = vector.broadcast %cst_6 : f32 to vector<8x128xf32>
    %12 = arith.cmpf oge, %10, %11 : vector<8x128xf32>
    %cst_7 = arith.constant 1.000000e+00 : f32
    %cst_8 = arith.constant -1.000000e+00 : f32
    %13 = vector.broadcast %cst_7 : f32 to vector<8x128xf32>
    %14 = vector.broadcast %cst_8 : f32 to vector<8x128xf32>
    %15 = arith.select %12, %13, %14 : vector<8x128xi1>, vector<8x128xf32>
    %16 = math.absf %10 : vector<8x128xf32>
    %cst_9 = arith.constant 0.327591091 : f32
    %17 = vector.broadcast %cst_9 : f32 to vector<8x128xf32>
    %18 = arith.mulf %17, %16 : vector<8x128xf32>
    %cst_10 = arith.constant 1.000000e+00 : f32
    %19 = vector.broadcast %cst_10 : f32 to vector<8x128xf32>
    %20 = arith.addf %19, %18 : vector<8x128xf32>
    %21 = tpu.reciprocal %20 : vector<8x128xf32> -> vector<8x128xf32>
    %cst_11 = arith.constant 1.06140542 : f32
    %22 = vector.broadcast %cst_11 : f32 to vector<8x128xf32>
    %23 = arith.mulf %22, %21 : vector<8x128xf32>
    %cst_12 = arith.constant -1.45315206 : f32
    %24 = vector.broadcast %cst_12 : f32 to vector<8x128xf32>
    %25 = arith.addf %23, %24 : vector<8x128xf32>
    %26 = arith.mulf %25, %21 : vector<8x128xf32>
    %cst_13 = arith.constant 1.42141378 : f32
    %27 = vector.broadcast %cst_13 : f32 to vector<8x128xf32>
    %28 = arith.addf %26, %27 : vector<8x128xf32>
    %29 = arith.mulf %28, %21 : vector<8x128xf32>
    %cst_14 = arith.constant -0.284496725 : f32
    %30 = vector.broadcast %cst_14 : f32 to vector<8x128xf32>
    %31 = arith.addf %29, %30 : vector<8x128xf32>
    %32 = arith.mulf %31, %21 : vector<8x128xf32>
    %cst_15 = arith.constant 0.254829586 : f32
    %33 = vector.broadcast %cst_15 : f32 to vector<8x128xf32>
    %34 = arith.addf %32, %33 : vector<8x128xf32>
    %35 = arith.mulf %34, %21 : vector<8x128xf32>
    %cst_16 = arith.constant 0.000000e+00 : f32
    %36 = vector.broadcast %cst_16 : f32 to vector<8x128xf32>
    %37 = arith.subf %36, %16 : vector<8x128xf32>
    %38 = arith.mulf %37, %16 : vector<8x128xf32>
    %39 = math.exp %38 : vector<8x128xf32>
    %40 = arith.mulf %35, %39 : vector<8x128xf32>
    %cst_17 = arith.constant 1.000000e+00 : f32
    %41 = vector.broadcast %cst_17 : f32 to vector<8x128xf32>
    %42 = arith.subf %41, %40 : vector<8x128xf32>
    %43 = arith.mulf %15, %42 : vector<8x128xf32>
    %cst_18 = arith.constant 1.000000e+00 : f32
    %44 = vector.broadcast %cst_18 : f32 to vector<8x128xf32>
    %45 = arith.addf %44, %43 : vector<8x128xf32>
    %46 = arith.mulf %8, %45 : vector<8x128xf32>
    %c0_19 = arith.constant 0 : index
    %c0_20 = arith.constant 0 : index
    %47 = vector.load %arg4[%c0_19, %c0_20] : memref<8x128xf32, #tpu.memory_space<vmem>>, vector<8x128xf32>
    tpu.vector_store %arg4[%c0_19, %c0_20], %46 {strides = array<i32>} : memref<8x128xf32, #tpu.memory_space<vmem>>, vector<8x128xf32>,
    return
  }
  func.func @transform_0(%arg0: i32) -> (i32, i32) {
    %c0_i32 = arith.constant 0 : i32
    %c0_i32_0 = arith.constant 0 : i32
    return %arg0, %c0_i32 : i32, i32
  }
  func.func @transform_1(%arg0: i32) -> (i32, i32) {
    %c0_i32 = arith.constant 0 : i32
    %c0_i32_0 = arith.constant 0 : i32
    %c0_i32_1 = arith.constant 0 : i32
    return %c0_i32, %c0_i32_0 : i32, i32
  }
  func.func @transform_2(%arg0: i32) -> (i32, i32) {
    %c0_i32 = arith.constant 0 : i32
    %c0_i32_0 = arith.constant 0 : i32
    %c0_i32_1 = arith.constant 0 : i32
    return %c0_i32, %c0_i32_0 : i32, i32
  }
  func.func @transform_3(%arg0: i32) -> (i32, i32) {
    %c0_i32 = arith.constant 0 : i32
    %c0_i32_0 = arith.constant 0 : i32
    return %arg0, %c0_i32 : i32, i32
  }
}

module attributes {stable_mosaic.version = 11 : i64} {
  func.func @_mm_stats_kernel(%arg0: i32, %arg1: memref<8x1152xf32, #tpu.memory_space<vmem>>, %arg2: memref<1152x128xf32, #tpu.memory_space<vmem>>, %arg3: memref<8x128xf32, #tpu.memory_space<vmem>>, %arg4: memref<1x128xf32, #tpu.memory_space<vmem>>, %arg5: memref<1x128xf32, #tpu.memory_space<vmem>>) attributes {dimension_semantics = [#tpu.dimension_semantics<arbitrary>], iteration_bounds = array<i64: 1>, scalar_prefetch = 0 : i64, scratch_operands = 0 : i64, tpu.core_type = #tpu.core_type<tc>, window_params = [{transform_indices = @transform_0, window_bounds = array<i64: 8, 1152>}, {pipeline_mode = #tpu.pipeline_mode<synchronous>, transform_indices = @transform_1, window_bounds = array<i64: 1152, 128>}, {transform_indices = @transform_2, window_bounds = array<i64: 8, 128>}, {pipeline_mode = #tpu.pipeline_mode<synchronous>, transform_indices = @transform_3, window_bounds = array<i64: 1, 128>}, {pipeline_mode = #tpu.pipeline_mode<synchronous>, transform_indices = @transform_4, window_bounds = array<i64: 1, 128>}]} {
    %c0_i32 = arith.constant 0 : i32
    %0 = arith.cmpi eq, %arg0, %c0_i32 : i32
    %1 = arith.extui %0 : i1 to i32
    %c0_i32_0 = arith.constant 0 : i32
    %2 = arith.cmpi ne, %1, %c0_i32_0 : i32
    scf.if %2 {
      %cst_16 = arith.constant 0.000000e+00 : f32
      %18 = vector.broadcast %cst_16 : f32 to vector<1x128xf32>
      %c0_17 = arith.constant 0 : index
      %c0_18 = arith.constant 0 : index
      %19 = vector.load %arg4[%c0_17, %c0_18] : memref<1x128xf32, #tpu.memory_space<vmem>>, vector<1x128xf32>
      tpu.vector_store %arg4[%c0_17, %c0_18], %18 {strides = array<i32>} : memref<1x128xf32, #tpu.memory_space<vmem>>, vector<1x128xf32>,
      %cst_19 = arith.constant 0.000000e+00 : f32
      %20 = vector.broadcast %cst_19 : f32 to vector<1x128xf32>
      %c0_20 = arith.constant 0 : index
      %c0_21 = arith.constant 0 : index
      %21 = vector.load %arg5[%c0_20, %c0_21] : memref<1x128xf32, #tpu.memory_space<vmem>>, vector<1x128xf32>
      tpu.vector_store %arg5[%c0_20, %c0_21], %20 {strides = array<i32>} : memref<1x128xf32, #tpu.memory_space<vmem>>, vector<1x128xf32>,
    } else {
    }
    %c0 = arith.constant 0 : index
    %c0_1 = arith.constant 0 : index
    %3 = vector.load %arg1[%c0, %c0_1] : memref<8x1152xf32, #tpu.memory_space<vmem>>, vector<8x1152xf32>
    %c0_2 = arith.constant 0 : index
    %c0_3 = arith.constant 0 : index
    %4 = vector.load %arg2[%c0_2, %c0_3] : memref<1152x128xf32, #tpu.memory_space<vmem>>, vector<1152x128xf32>
    %cst = arith.constant dense<0.000000e+00> : vector<8x128xf32>
    %5 = tpu.matmul %3, %4, %cst {dimension_numbers = #tpu.dot_dimension_numbers<[1], [0], [0], [1], [0, 0, 1, 1], [], []>} : vector<8x1152xf32>, vector<1152x128xf32>, vector<8x128xf32> -> vector<8x128xf32>
    %c0_4 = arith.constant 0 : index
    %c0_5 = arith.constant 0 : index
    %6 = vector.load %arg3[%c0_4, %c0_5] : memref<8x128xf32, #tpu.memory_space<vmem>>, vector<8x128xf32>
    tpu.vector_store %arg3[%c0_4, %c0_5], %5 {strides = array<i32>} : memref<8x128xf32, #tpu.memory_space<vmem>>, vector<8x128xf32>,
    %c0_6 = arith.constant 0 : index
    %c0_7 = arith.constant 0 : index
    %7 = vector.load %arg4[%c0_6, %c0_7] : memref<1x128xf32, #tpu.memory_space<vmem>>, vector<1x128xf32>
    %cst_8 = arith.constant dense<0.000000e+00> : vector<128xf32>
    %8 = vector.multi_reduction <add>, %5, %cst_8 [0] : vector<8x128xf32> to vector<128xf32>
    %9 = vector.shape_cast %8 : vector<128xf32> to vector<1x128xf32>
    %10 = arith.addf %7, %9 : vector<1x128xf32>
    %c0_9 = arith.constant 0 : index
    %c0_10 = arith.constant 0 : index
    %11 = vector.load %arg4[%c0_9, %c0_10] : memref<1x128xf32, #tpu.memory_space<vmem>>, vector<1x128xf32>
    tpu.vector_store %arg4[%c0_9, %c0_10], %10 {strides = array<i32>} : memref<1x128xf32, #tpu.memory_space<vmem>>, vector<1x128xf32>,
    %c0_11 = arith.constant 0 : index
    %c0_12 = arith.constant 0 : index
    %12 = vector.load %arg5[%c0_11, %c0_12] : memref<1x128xf32, #tpu.memory_space<vmem>>, vector<1x128xf32>
    %13 = arith.mulf %5, %5 : vector<8x128xf32>
    %cst_13 = arith.constant dense<0.000000e+00> : vector<128xf32>
    %14 = vector.multi_reduction <add>, %13, %cst_13 [0] : vector<8x128xf32> to vector<128xf32>
    %15 = vector.shape_cast %14 : vector<128xf32> to vector<1x128xf32>
    %16 = arith.addf %12, %15 : vector<1x128xf32>
    %c0_14 = arith.constant 0 : index
    %c0_15 = arith.constant 0 : index
    %17 = vector.load %arg5[%c0_14, %c0_15] : memref<1x128xf32, #tpu.memory_space<vmem>>, vector<1x128xf32>
    tpu.vector_store %arg5[%c0_14, %c0_15], %16 {strides = array<i32>} : memref<1x128xf32, #tpu.memory_space<vmem>>, vector<1x128xf32>,
    return
  }
  func.func @transform_0(%arg0: i32) -> (i32, i32) {
    %c0_i32 = arith.constant 0 : i32
    %c0_i32_0 = arith.constant 0 : i32
    return %arg0, %c0_i32 : i32, i32
  }
  func.func @transform_1(%arg0: i32) -> (i32, i32) {
    %c0_i32 = arith.constant 0 : i32
    %c0_i32_0 = arith.constant 0 : i32
    %c0_i32_1 = arith.constant 0 : i32
    return %c0_i32, %c0_i32_0 : i32, i32
  }
  func.func @transform_2(%arg0: i32) -> (i32, i32) {
    %c0_i32 = arith.constant 0 : i32
    %c0_i32_0 = arith.constant 0 : i32
    return %arg0, %c0_i32 : i32, i32
  }
  func.func @transform_3(%arg0: i32) -> (i32, i32) {
    %c0_i32 = arith.constant 0 : i32
    %c0_i32_0 = arith.constant 0 : i32
    %c0_i32_1 = arith.constant 0 : i32
    return %c0_i32, %c0_i32_0 : i32, i32
  }
  func.func @transform_4(%arg0: i32) -> (i32, i32) {
    %c0_i32 = arith.constant 0 : i32
    %c0_i32_0 = arith.constant 0 : i32
    %c0_i32_1 = arith.constant 0 : i32
    return %c0_i32, %c0_i32_0 : i32, i32
  }
}

module attributes {stable_mosaic.version = 11 : i64} {
  func.func @_scale_bias_gelu_res_kernel(%arg0: i32, %arg1: memref<8x128xf32, #tpu.memory_space<vmem>>, %arg2: memref<1x128xf32, #tpu.memory_space<vmem>>, %arg3: memref<1x128xf32, #tpu.memory_space<vmem>>, %arg4: memref<8x128xf32, #tpu.memory_space<vmem>>, %arg5: memref<8x128xf32, #tpu.memory_space<vmem>>) attributes {dimension_semantics = [#tpu.dimension_semantics<parallel>], iteration_bounds = array<i64: 1>, scalar_prefetch = 0 : i64, scratch_operands = 0 : i64, tpu.core_type = #tpu.core_type<tc>, window_params = [{transform_indices = @transform_0, window_bounds = array<i64: 8, 128>}, {pipeline_mode = #tpu.pipeline_mode<synchronous>, transform_indices = @transform_1, window_bounds = array<i64: 1, 128>}, {pipeline_mode = #tpu.pipeline_mode<synchronous>, transform_indices = @transform_2, window_bounds = array<i64: 1, 128>}, {transform_indices = @transform_3, window_bounds = array<i64: 8, 128>}, {transform_indices = @transform_4, window_bounds = array<i64: 8, 128>}]} {
    %c0 = arith.constant 0 : index
    %c0_0 = arith.constant 0 : index
    %0 = vector.load %arg1[%c0, %c0_0] : memref<8x128xf32, #tpu.memory_space<vmem>>, vector<8x128xf32>
    %c0_1 = arith.constant 0 : index
    %c0_2 = arith.constant 0 : index
    %1 = vector.load %arg2[%c0_1, %c0_2] : memref<1x128xf32, #tpu.memory_space<vmem>>, vector<1x128xf32>
    %2 = vector.broadcast %1 : vector<1x128xf32> to vector<8x128xf32>
    %3 = arith.mulf %0, %2 : vector<8x128xf32>
    %c0_3 = arith.constant 0 : index
    %c0_4 = arith.constant 0 : index
    %4 = vector.load %arg3[%c0_3, %c0_4] : memref<1x128xf32, #tpu.memory_space<vmem>>, vector<1x128xf32>
    %5 = vector.broadcast %4 : vector<1x128xf32> to vector<8x128xf32>
    %6 = arith.addf %3, %5 : vector<8x128xf32>
    %cst = arith.constant 5.000000e-01 : f32
    %7 = vector.broadcast %cst : f32 to vector<8x128xf32>
    %8 = arith.mulf %7, %6 : vector<8x128xf32>
    %cst_5 = arith.constant 0.707106769 : f32
    %9 = vector.broadcast %cst_5 : f32 to vector<8x128xf32>
    %10 = arith.mulf %6, %9 : vector<8x128xf32>
    %cst_6 = arith.constant 0.000000e+00 : f32
    %11 = vector.broadcast %cst_6 : f32 to vector<8x128xf32>
    %12 = arith.cmpf oge, %10, %11 : vector<8x128xf32>
    %cst_7 = arith.constant 1.000000e+00 : f32
    %cst_8 = arith.constant -1.000000e+00 : f32
    %13 = vector.broadcast %cst_7 : f32 to vector<8x128xf32>
    %14 = vector.broadcast %cst_8 : f32 to vector<8x128xf32>
    %15 = arith.select %12, %13, %14 : vector<8x128xi1>, vector<8x128xf32>
    %16 = math.absf %10 : vector<8x128xf32>
    %cst_9 = arith.constant 0.327591091 : f32
    %17 = vector.broadcast %cst_9 : f32 to vector<8x128xf32>
    %18 = arith.mulf %17, %16 : vector<8x128xf32>
    %cst_10 = arith.constant 1.000000e+00 : f32
    %19 = vector.broadcast %cst_10 : f32 to vector<8x128xf32>
    %20 = arith.addf %19, %18 : vector<8x128xf32>
    %21 = tpu.reciprocal %20 : vector<8x128xf32> -> vector<8x128xf32>
    %cst_11 = arith.constant 1.06140542 : f32
    %22 = vector.broadcast %cst_11 : f32 to vector<8x128xf32>
    %23 = arith.mulf %22, %21 : vector<8x128xf32>
    %cst_12 = arith.constant -1.45315206 : f32
    %24 = vector.broadcast %cst_12 : f32 to vector<8x128xf32>
    %25 = arith.addf %23, %24 : vector<8x128xf32>
    %26 = arith.mulf %25, %21 : vector<8x128xf32>
    %cst_13 = arith.constant 1.42141378 : f32
    %27 = vector.broadcast %cst_13 : f32 to vector<8x128xf32>
    %28 = arith.addf %26, %27 : vector<8x128xf32>
    %29 = arith.mulf %28, %21 : vector<8x128xf32>
    %cst_14 = arith.constant -0.284496725 : f32
    %30 = vector.broadcast %cst_14 : f32 to vector<8x128xf32>
    %31 = arith.addf %29, %30 : vector<8x128xf32>
    %32 = arith.mulf %31, %21 : vector<8x128xf32>
    %cst_15 = arith.constant 0.254829586 : f32
    %33 = vector.broadcast %cst_15 : f32 to vector<8x128xf32>
    %34 = arith.addf %32, %33 : vector<8x128xf32>
    %35 = arith.mulf %34, %21 : vector<8x128xf32>
    %cst_16 = arith.constant 0.000000e+00 : f32
    %36 = vector.broadcast %cst_16 : f32 to vector<8x128xf32>
    %37 = arith.subf %36, %16 : vector<8x128xf32>
    %38 = arith.mulf %37, %16 : vector<8x128xf32>
    %39 = math.exp %38 : vector<8x128xf32>
    %40 = arith.mulf %35, %39 : vector<8x128xf32>
    %cst_17 = arith.constant 1.000000e+00 : f32
    %41 = vector.broadcast %cst_17 : f32 to vector<8x128xf32>
    %42 = arith.subf %41, %40 : vector<8x128xf32>
    %43 = arith.mulf %15, %42 : vector<8x128xf32>
    %cst_18 = arith.constant 1.000000e+00 : f32
    %44 = vector.broadcast %cst_18 : f32 to vector<8x128xf32>
    %45 = arith.addf %44, %43 : vector<8x128xf32>
    %46 = arith.mulf %8, %45 : vector<8x128xf32>
    %c0_19 = arith.constant 0 : index
    %c0_20 = arith.constant 0 : index
    %47 = vector.load %arg4[%c0_19, %c0_20] : memref<8x128xf32, #tpu.memory_space<vmem>>, vector<8x128xf32>
    %48 = arith.addf %46, %47 : vector<8x128xf32>
    %c0_21 = arith.constant 0 : index
    %c0_22 = arith.constant 0 : index
    %49 = vector.load %arg5[%c0_21, %c0_22] : memref<8x128xf32, #tpu.memory_space<vmem>>, vector<8x128xf32>
    tpu.vector_store %arg5[%c0_21, %c0_22], %48 {strides = array<i32>} : memref<8x128xf32, #tpu.memory_space<vmem>>, vector<8x128xf32>,
    return
  }
  func.func @transform_0(%arg0: i32) -> (i32, i32) {
    %c0_i32 = arith.constant 0 : i32
    %c0_i32_0 = arith.constant 0 : i32
    return %arg0, %c0_i32 : i32, i32
  }
  func.func @transform_1(%arg0: i32) -> (i32, i32) {
    %c0_i32 = arith.constant 0 : i32
    %c0_i32_0 = arith.constant 0 : i32
    %c0_i32_1 = arith.constant 0 : i32
    return %c0_i32, %c0_i32_0 : i32, i32
  }
  func.func @transform_2(%arg0: i32) -> (i32, i32) {
    %c0_i32 = arith.constant 0 : i32
    %c0_i32_0 = arith.constant 0 : i32
    %c0_i32_1 = arith.constant 0 : i32
    return %c0_i32, %c0_i32_0 : i32, i32
  }
  func.func @transform_3(%arg0: i32) -> (i32, i32) {
    %c0_i32 = arith.constant 0 : i32
    %c0_i32_0 = arith.constant 0 : i32
    return %arg0, %c0_i32 : i32, i32
  }
  func.func @transform_4(%arg0: i32) -> (i32, i32) {
    %c0_i32 = arith.constant 0 : i32
    %c0_i32_0 = arith.constant 0 : i32
    return %arg0, %c0_i32 : i32, i32
  }
}

module attributes {stable_mosaic.version = 11 : i64} {
  func.func @_mm_stats_kernel(%arg0: i32, %arg1: memref<8x1152xf32, #tpu.memory_space<vmem>>, %arg2: memref<1152x256xf32, #tpu.memory_space<vmem>>, %arg3: memref<8x256xf32, #tpu.memory_space<vmem>>, %arg4: memref<1x256xf32, #tpu.memory_space<vmem>>, %arg5: memref<1x256xf32, #tpu.memory_space<vmem>>) attributes {dimension_semantics = [#tpu.dimension_semantics<arbitrary>], iteration_bounds = array<i64: 1>, scalar_prefetch = 0 : i64, scratch_operands = 0 : i64, tpu.core_type = #tpu.core_type<tc>, window_params = [{transform_indices = @transform_0, window_bounds = array<i64: 8, 1152>}, {pipeline_mode = #tpu.pipeline_mode<synchronous>, transform_indices = @transform_1, window_bounds = array<i64: 1152, 256>}, {transform_indices = @transform_2, window_bounds = array<i64: 8, 256>}, {pipeline_mode = #tpu.pipeline_mode<synchronous>, transform_indices = @transform_3, window_bounds = array<i64: 1, 256>}, {pipeline_mode = #tpu.pipeline_mode<synchronous>, transform_indices = @transform_4, window_bounds = array<i64: 1, 256>}]} {
    %c0_i32 = arith.constant 0 : i32
    %0 = arith.cmpi eq, %arg0, %c0_i32 : i32
    %1 = arith.extui %0 : i1 to i32
    %c0_i32_0 = arith.constant 0 : i32
    %2 = arith.cmpi ne, %1, %c0_i32_0 : i32
    scf.if %2 {
      %cst_16 = arith.constant 0.000000e+00 : f32
      %18 = vector.broadcast %cst_16 : f32 to vector<1x256xf32>
      %c0_17 = arith.constant 0 : index
      %c0_18 = arith.constant 0 : index
      %19 = vector.load %arg4[%c0_17, %c0_18] : memref<1x256xf32, #tpu.memory_space<vmem>>, vector<1x256xf32>
      tpu.vector_store %arg4[%c0_17, %c0_18], %18 {strides = array<i32>} : memref<1x256xf32, #tpu.memory_space<vmem>>, vector<1x256xf32>,
      %cst_19 = arith.constant 0.000000e+00 : f32
      %20 = vector.broadcast %cst_19 : f32 to vector<1x256xf32>
      %c0_20 = arith.constant 0 : index
      %c0_21 = arith.constant 0 : index
      %21 = vector.load %arg5[%c0_20, %c0_21] : memref<1x256xf32, #tpu.memory_space<vmem>>, vector<1x256xf32>
      tpu.vector_store %arg5[%c0_20, %c0_21], %20 {strides = array<i32>} : memref<1x256xf32, #tpu.memory_space<vmem>>, vector<1x256xf32>,
    } else {
    }
    %c0 = arith.constant 0 : index
    %c0_1 = arith.constant 0 : index
    %3 = vector.load %arg1[%c0, %c0_1] : memref<8x1152xf32, #tpu.memory_space<vmem>>, vector<8x1152xf32>
    %c0_2 = arith.constant 0 : index
    %c0_3 = arith.constant 0 : index
    %4 = vector.load %arg2[%c0_2, %c0_3] : memref<1152x256xf32, #tpu.memory_space<vmem>>, vector<1152x256xf32>
    %cst = arith.constant dense<0.000000e+00> : vector<8x256xf32>
    %5 = tpu.matmul %3, %4, %cst {dimension_numbers = #tpu.dot_dimension_numbers<[1], [0], [0], [1], [0, 0, 1, 1], [], []>} : vector<8x1152xf32>, vector<1152x256xf32>, vector<8x256xf32> -> vector<8x256xf32>
    %c0_4 = arith.constant 0 : index
    %c0_5 = arith.constant 0 : index
    %6 = vector.load %arg3[%c0_4, %c0_5] : memref<8x256xf32, #tpu.memory_space<vmem>>, vector<8x256xf32>
    tpu.vector_store %arg3[%c0_4, %c0_5], %5 {strides = array<i32>} : memref<8x256xf32, #tpu.memory_space<vmem>>, vector<8x256xf32>,
    %c0_6 = arith.constant 0 : index
    %c0_7 = arith.constant 0 : index
    %7 = vector.load %arg4[%c0_6, %c0_7] : memref<1x256xf32, #tpu.memory_space<vmem>>, vector<1x256xf32>
    %cst_8 = arith.constant dense<0.000000e+00> : vector<256xf32>
    %8 = vector.multi_reduction <add>, %5, %cst_8 [0] : vector<8x256xf32> to vector<256xf32>
    %9 = vector.shape_cast %8 : vector<256xf32> to vector<1x256xf32>
    %10 = arith.addf %7, %9 : vector<1x256xf32>
    %c0_9 = arith.constant 0 : index
    %c0_10 = arith.constant 0 : index
    %11 = vector.load %arg4[%c0_9, %c0_10] : memref<1x256xf32, #tpu.memory_space<vmem>>, vector<1x256xf32>
    tpu.vector_store %arg4[%c0_9, %c0_10], %10 {strides = array<i32>} : memref<1x256xf32, #tpu.memory_space<vmem>>, vector<1x256xf32>,
    %c0_11 = arith.constant 0 : index
    %c0_12 = arith.constant 0 : index
    %12 = vector.load %arg5[%c0_11, %c0_12] : memref<1x256xf32, #tpu.memory_space<vmem>>, vector<1x256xf32>
    %13 = arith.mulf %5, %5 : vector<8x256xf32>
    %cst_13 = arith.constant dense<0.000000e+00> : vector<256xf32>
    %14 = vector.multi_reduction <add>, %13, %cst_13 [0] : vector<8x256xf32> to vector<256xf32>
    %15 = vector.shape_cast %14 : vector<256xf32> to vector<1x256xf32>
    %16 = arith.addf %12, %15 : vector<1x256xf32>
    %c0_14 = arith.constant 0 : index
    %c0_15 = arith.constant 0 : index
    %17 = vector.load %arg5[%c0_14, %c0_15] : memref<1x256xf32, #tpu.memory_space<vmem>>, vector<1x256xf32>
    tpu.vector_store %arg5[%c0_14, %c0_15], %16 {strides = array<i32>} : memref<1x256xf32, #tpu.memory_space<vmem>>, vector<1x256xf32>,
    return
  }
  func.func @transform_0(%arg0: i32) -> (i32, i32) {
    %c0_i32 = arith.constant 0 : i32
    %c0_i32_0 = arith.constant 0 : i32
    return %arg0, %c0_i32 : i32, i32
  }
  func.func @transform_1(%arg0: i32) -> (i32, i32) {
    %c0_i32 = arith.constant 0 : i32
    %c0_i32_0 = arith.constant 0 : i32
    %c0_i32_1 = arith.constant 0 : i32
    return %c0_i32, %c0_i32_0 : i32, i32
  }
  func.func @transform_2(%arg0: i32) -> (i32, i32) {
    %c0_i32 = arith.constant 0 : i32
    %c0_i32_0 = arith.constant 0 : i32
    return %arg0, %c0_i32 : i32, i32
  }
  func.func @transform_3(%arg0: i32) -> (i32, i32) {
    %c0_i32 = arith.constant 0 : i32
    %c0_i32_0 = arith.constant 0 : i32
    %c0_i32_1 = arith.constant 0 : i32
    return %c0_i32, %c0_i32_0 : i32, i32
  }
  func.func @transform_4(%arg0: i32) -> (i32, i32) {
    %c0_i32 = arith.constant 0 : i32
    %c0_i32_0 = arith.constant 0 : i32
    %c0_i32_1 = arith.constant 0 : i32
    return %c0_i32, %c0_i32_0 : i32, i32
  }
}

module attributes {stable_mosaic.version = 11 : i64} {
  func.func @_scale_bias_gelu_kernel(%arg0: i32, %arg1: memref<8x256xf32, #tpu.memory_space<vmem>>, %arg2: memref<1x256xf32, #tpu.memory_space<vmem>>, %arg3: memref<1x256xf32, #tpu.memory_space<vmem>>, %arg4: memref<8x256xf32, #tpu.memory_space<vmem>>) attributes {dimension_semantics = [#tpu.dimension_semantics<parallel>], iteration_bounds = array<i64: 1>, scalar_prefetch = 0 : i64, scratch_operands = 0 : i64, tpu.core_type = #tpu.core_type<tc>, window_params = [{transform_indices = @transform_0, window_bounds = array<i64: 8, 256>}, {pipeline_mode = #tpu.pipeline_mode<synchronous>, transform_indices = @transform_1, window_bounds = array<i64: 1, 256>}, {pipeline_mode = #tpu.pipeline_mode<synchronous>, transform_indices = @transform_2, window_bounds = array<i64: 1, 256>}, {transform_indices = @transform_3, window_bounds = array<i64: 8, 256>}]} {
    %c0 = arith.constant 0 : index
    %c0_0 = arith.constant 0 : index
    %0 = vector.load %arg1[%c0, %c0_0] : memref<8x256xf32, #tpu.memory_space<vmem>>, vector<8x256xf32>
    %c0_1 = arith.constant 0 : index
    %c0_2 = arith.constant 0 : index
    %1 = vector.load %arg2[%c0_1, %c0_2] : memref<1x256xf32, #tpu.memory_space<vmem>>, vector<1x256xf32>
    %2 = vector.broadcast %1 : vector<1x256xf32> to vector<8x256xf32>
    %3 = arith.mulf %0, %2 : vector<8x256xf32>
    %c0_3 = arith.constant 0 : index
    %c0_4 = arith.constant 0 : index
    %4 = vector.load %arg3[%c0_3, %c0_4] : memref<1x256xf32, #tpu.memory_space<vmem>>, vector<1x256xf32>
    %5 = vector.broadcast %4 : vector<1x256xf32> to vector<8x256xf32>
    %6 = arith.addf %3, %5 : vector<8x256xf32>
    %cst = arith.constant 5.000000e-01 : f32
    %7 = vector.broadcast %cst : f32 to vector<8x256xf32>
    %8 = arith.mulf %7, %6 : vector<8x256xf32>
    %cst_5 = arith.constant 0.707106769 : f32
    %9 = vector.broadcast %cst_5 : f32 to vector<8x256xf32>
    %10 = arith.mulf %6, %9 : vector<8x256xf32>
    %cst_6 = arith.constant 0.000000e+00 : f32
    %11 = vector.broadcast %cst_6 : f32 to vector<8x256xf32>
    %12 = arith.cmpf oge, %10, %11 : vector<8x256xf32>
    %cst_7 = arith.constant 1.000000e+00 : f32
    %cst_8 = arith.constant -1.000000e+00 : f32
    %13 = vector.broadcast %cst_7 : f32 to vector<8x256xf32>
    %14 = vector.broadcast %cst_8 : f32 to vector<8x256xf32>
    %15 = arith.select %12, %13, %14 : vector<8x256xi1>, vector<8x256xf32>
    %16 = math.absf %10 : vector<8x256xf32>
    %cst_9 = arith.constant 0.327591091 : f32
    %17 = vector.broadcast %cst_9 : f32 to vector<8x256xf32>
    %18 = arith.mulf %17, %16 : vector<8x256xf32>
    %cst_10 = arith.constant 1.000000e+00 : f32
    %19 = vector.broadcast %cst_10 : f32 to vector<8x256xf32>
    %20 = arith.addf %19, %18 : vector<8x256xf32>
    %21 = tpu.reciprocal %20 : vector<8x256xf32> -> vector<8x256xf32>
    %cst_11 = arith.constant 1.06140542 : f32
    %22 = vector.broadcast %cst_11 : f32 to vector<8x256xf32>
    %23 = arith.mulf %22, %21 : vector<8x256xf32>
    %cst_12 = arith.constant -1.45315206 : f32
    %24 = vector.broadcast %cst_12 : f32 to vector<8x256xf32>
    %25 = arith.addf %23, %24 : vector<8x256xf32>
    %26 = arith.mulf %25, %21 : vector<8x256xf32>
    %cst_13 = arith.constant 1.42141378 : f32
    %27 = vector.broadcast %cst_13 : f32 to vector<8x256xf32>
    %28 = arith.addf %26, %27 : vector<8x256xf32>
    %29 = arith.mulf %28, %21 : vector<8x256xf32>
    %cst_14 = arith.constant -0.284496725 : f32
    %30 = vector.broadcast %cst_14 : f32 to vector<8x256xf32>
    %31 = arith.addf %29, %30 : vector<8x256xf32>
    %32 = arith.mulf %31, %21 : vector<8x256xf32>
    %cst_15 = arith.constant 0.254829586 : f32
    %33 = vector.broadcast %cst_15 : f32 to vector<8x256xf32>
    %34 = arith.addf %32, %33 : vector<8x256xf32>
    %35 = arith.mulf %34, %21 : vector<8x256xf32>
    %cst_16 = arith.constant 0.000000e+00 : f32
    %36 = vector.broadcast %cst_16 : f32 to vector<8x256xf32>
    %37 = arith.subf %36, %16 : vector<8x256xf32>
    %38 = arith.mulf %37, %16 : vector<8x256xf32>
    %39 = math.exp %38 : vector<8x256xf32>
    %40 = arith.mulf %35, %39 : vector<8x256xf32>
    %cst_17 = arith.constant 1.000000e+00 : f32
    %41 = vector.broadcast %cst_17 : f32 to vector<8x256xf32>
    %42 = arith.subf %41, %40 : vector<8x256xf32>
    %43 = arith.mulf %15, %42 : vector<8x256xf32>
    %cst_18 = arith.constant 1.000000e+00 : f32
    %44 = vector.broadcast %cst_18 : f32 to vector<8x256xf32>
    %45 = arith.addf %44, %43 : vector<8x256xf32>
    %46 = arith.mulf %8, %45 : vector<8x256xf32>
    %c0_19 = arith.constant 0 : index
    %c0_20 = arith.constant 0 : index
    %47 = vector.load %arg4[%c0_19, %c0_20] : memref<8x256xf32, #tpu.memory_space<vmem>>, vector<8x256xf32>
    tpu.vector_store %arg4[%c0_19, %c0_20], %46 {strides = array<i32>} : memref<8x256xf32, #tpu.memory_space<vmem>>, vector<8x256xf32>,
    return
  }
  func.func @transform_0(%arg0: i32) -> (i32, i32) {
    %c0_i32 = arith.constant 0 : i32
    %c0_i32_0 = arith.constant 0 : i32
    return %arg0, %c0_i32 : i32, i32
  }
  func.func @transform_1(%arg0: i32) -> (i32, i32) {
    %c0_i32 = arith.constant 0 : i32
    %c0_i32_0 = arith.constant 0 : i32
    %c0_i32_1 = arith.constant 0 : i32
    return %c0_i32, %c0_i32_0 : i32, i32
  }
  func.func @transform_2(%arg0: i32) -> (i32, i32) {
    %c0_i32 = arith.constant 0 : i32
    %c0_i32_0 = arith.constant 0 : i32
    %c0_i32_1 = arith.constant 0 : i32
    return %c0_i32, %c0_i32_0 : i32, i32
  }
  func.func @transform_3(%arg0: i32) -> (i32, i32) {
    %c0_i32 = arith.constant 0 : i32
    %c0_i32_0 = arith.constant 0 : i32
    return %arg0, %c0_i32 : i32, i32
  }
}

module attributes {stable_mosaic.version = 11 : i64} {
  func.func @_mm_stats_kernel(%arg0: i32, %arg1: memref<8x2304xf32, #tpu.memory_space<vmem>>, %arg2: memref<2304x256xf32, #tpu.memory_space<vmem>>, %arg3: memref<8x256xf32, #tpu.memory_space<vmem>>, %arg4: memref<1x256xf32, #tpu.memory_space<vmem>>, %arg5: memref<1x256xf32, #tpu.memory_space<vmem>>) attributes {dimension_semantics = [#tpu.dimension_semantics<arbitrary>], iteration_bounds = array<i64: 1>, scalar_prefetch = 0 : i64, scratch_operands = 0 : i64, tpu.core_type = #tpu.core_type<tc>, window_params = [{transform_indices = @transform_0, window_bounds = array<i64: 8, 2304>}, {pipeline_mode = #tpu.pipeline_mode<synchronous>, transform_indices = @transform_1, window_bounds = array<i64: 2304, 256>}, {transform_indices = @transform_2, window_bounds = array<i64: 8, 256>}, {pipeline_mode = #tpu.pipeline_mode<synchronous>, transform_indices = @transform_3, window_bounds = array<i64: 1, 256>}, {pipeline_mode = #tpu.pipeline_mode<synchronous>, transform_indices = @transform_4, window_bounds = array<i64: 1, 256>}]} {
    %c0_i32 = arith.constant 0 : i32
    %0 = arith.cmpi eq, %arg0, %c0_i32 : i32
    %1 = arith.extui %0 : i1 to i32
    %c0_i32_0 = arith.constant 0 : i32
    %2 = arith.cmpi ne, %1, %c0_i32_0 : i32
    scf.if %2 {
      %cst_16 = arith.constant 0.000000e+00 : f32
      %18 = vector.broadcast %cst_16 : f32 to vector<1x256xf32>
      %c0_17 = arith.constant 0 : index
      %c0_18 = arith.constant 0 : index
      %19 = vector.load %arg4[%c0_17, %c0_18] : memref<1x256xf32, #tpu.memory_space<vmem>>, vector<1x256xf32>
      tpu.vector_store %arg4[%c0_17, %c0_18], %18 {strides = array<i32>} : memref<1x256xf32, #tpu.memory_space<vmem>>, vector<1x256xf32>,
      %cst_19 = arith.constant 0.000000e+00 : f32
      %20 = vector.broadcast %cst_19 : f32 to vector<1x256xf32>
      %c0_20 = arith.constant 0 : index
      %c0_21 = arith.constant 0 : index
      %21 = vector.load %arg5[%c0_20, %c0_21] : memref<1x256xf32, #tpu.memory_space<vmem>>, vector<1x256xf32>
      tpu.vector_store %arg5[%c0_20, %c0_21], %20 {strides = array<i32>} : memref<1x256xf32, #tpu.memory_space<vmem>>, vector<1x256xf32>,
    } else {
    }
    %c0 = arith.constant 0 : index
    %c0_1 = arith.constant 0 : index
    %3 = vector.load %arg1[%c0, %c0_1] : memref<8x2304xf32, #tpu.memory_space<vmem>>, vector<8x2304xf32>
    %c0_2 = arith.constant 0 : index
    %c0_3 = arith.constant 0 : index
    %4 = vector.load %arg2[%c0_2, %c0_3] : memref<2304x256xf32, #tpu.memory_space<vmem>>, vector<2304x256xf32>
    %cst = arith.constant dense<0.000000e+00> : vector<8x256xf32>
    %5 = tpu.matmul %3, %4, %cst {dimension_numbers = #tpu.dot_dimension_numbers<[1], [0], [0], [1], [0, 0, 1, 1], [], []>} : vector<8x2304xf32>, vector<2304x256xf32>, vector<8x256xf32> -> vector<8x256xf32>
    %c0_4 = arith.constant 0 : index
    %c0_5 = arith.constant 0 : index
    %6 = vector.load %arg3[%c0_4, %c0_5] : memref<8x256xf32, #tpu.memory_space<vmem>>, vector<8x256xf32>
    tpu.vector_store %arg3[%c0_4, %c0_5], %5 {strides = array<i32>} : memref<8x256xf32, #tpu.memory_space<vmem>>, vector<8x256xf32>,
    %c0_6 = arith.constant 0 : index
    %c0_7 = arith.constant 0 : index
    %7 = vector.load %arg4[%c0_6, %c0_7] : memref<1x256xf32, #tpu.memory_space<vmem>>, vector<1x256xf32>
    %cst_8 = arith.constant dense<0.000000e+00> : vector<256xf32>
    %8 = vector.multi_reduction <add>, %5, %cst_8 [0] : vector<8x256xf32> to vector<256xf32>
    %9 = vector.shape_cast %8 : vector<256xf32> to vector<1x256xf32>
    %10 = arith.addf %7, %9 : vector<1x256xf32>
    %c0_9 = arith.constant 0 : index
    %c0_10 = arith.constant 0 : index
    %11 = vector.load %arg4[%c0_9, %c0_10] : memref<1x256xf32, #tpu.memory_space<vmem>>, vector<1x256xf32>
    tpu.vector_store %arg4[%c0_9, %c0_10], %10 {strides = array<i32>} : memref<1x256xf32, #tpu.memory_space<vmem>>, vector<1x256xf32>,
    %c0_11 = arith.constant 0 : index
    %c0_12 = arith.constant 0 : index
    %12 = vector.load %arg5[%c0_11, %c0_12] : memref<1x256xf32, #tpu.memory_space<vmem>>, vector<1x256xf32>
    %13 = arith.mulf %5, %5 : vector<8x256xf32>
    %cst_13 = arith.constant dense<0.000000e+00> : vector<256xf32>
    %14 = vector.multi_reduction <add>, %13, %cst_13 [0] : vector<8x256xf32> to vector<256xf32>
    %15 = vector.shape_cast %14 : vector<256xf32> to vector<1x256xf32>
    %16 = arith.addf %12, %15 : vector<1x256xf32>
    %c0_14 = arith.constant 0 : index
    %c0_15 = arith.constant 0 : index
    %17 = vector.load %arg5[%c0_14, %c0_15] : memref<1x256xf32, #tpu.memory_space<vmem>>, vector<1x256xf32>
    tpu.vector_store %arg5[%c0_14, %c0_15], %16 {strides = array<i32>} : memref<1x256xf32, #tpu.memory_space<vmem>>, vector<1x256xf32>,
    return
  }
  func.func @transform_0(%arg0: i32) -> (i32, i32) {
    %c0_i32 = arith.constant 0 : i32
    %c0_i32_0 = arith.constant 0 : i32
    return %arg0, %c0_i32 : i32, i32
  }
  func.func @transform_1(%arg0: i32) -> (i32, i32) {
    %c0_i32 = arith.constant 0 : i32
    %c0_i32_0 = arith.constant 0 : i32
    %c0_i32_1 = arith.constant 0 : i32
    return %c0_i32, %c0_i32_0 : i32, i32
  }
  func.func @transform_2(%arg0: i32) -> (i32, i32) {
    %c0_i32 = arith.constant 0 : i32
    %c0_i32_0 = arith.constant 0 : i32
    return %arg0, %c0_i32 : i32, i32
  }
  func.func @transform_3(%arg0: i32) -> (i32, i32) {
    %c0_i32 = arith.constant 0 : i32
    %c0_i32_0 = arith.constant 0 : i32
    %c0_i32_1 = arith.constant 0 : i32
    return %c0_i32, %c0_i32_0 : i32, i32
  }
  func.func @transform_4(%arg0: i32) -> (i32, i32) {
    %c0_i32 = arith.constant 0 : i32
    %c0_i32_0 = arith.constant 0 : i32
    %c0_i32_1 = arith.constant 0 : i32
    return %c0_i32, %c0_i32_0 : i32, i32
  }
}

module attributes {stable_mosaic.version = 11 : i64} {
  func.func @_scale_bias_gelu_res_kernel(%arg0: i32, %arg1: memref<8x256xf32, #tpu.memory_space<vmem>>, %arg2: memref<1x256xf32, #tpu.memory_space<vmem>>, %arg3: memref<1x256xf32, #tpu.memory_space<vmem>>, %arg4: memref<8x256xf32, #tpu.memory_space<vmem>>, %arg5: memref<8x256xf32, #tpu.memory_space<vmem>>) attributes {dimension_semantics = [#tpu.dimension_semantics<parallel>], iteration_bounds = array<i64: 1>, scalar_prefetch = 0 : i64, scratch_operands = 0 : i64, tpu.core_type = #tpu.core_type<tc>, window_params = [{transform_indices = @transform_0, window_bounds = array<i64: 8, 256>}, {pipeline_mode = #tpu.pipeline_mode<synchronous>, transform_indices = @transform_1, window_bounds = array<i64: 1, 256>}, {pipeline_mode = #tpu.pipeline_mode<synchronous>, transform_indices = @transform_2, window_bounds = array<i64: 1, 256>}, {transform_indices = @transform_3, window_bounds = array<i64: 8, 256>}, {transform_indices = @transform_4, window_bounds = array<i64: 8, 256>}]} {
    %c0 = arith.constant 0 : index
    %c0_0 = arith.constant 0 : index
    %0 = vector.load %arg1[%c0, %c0_0] : memref<8x256xf32, #tpu.memory_space<vmem>>, vector<8x256xf32>
    %c0_1 = arith.constant 0 : index
    %c0_2 = arith.constant 0 : index
    %1 = vector.load %arg2[%c0_1, %c0_2] : memref<1x256xf32, #tpu.memory_space<vmem>>, vector<1x256xf32>
    %2 = vector.broadcast %1 : vector<1x256xf32> to vector<8x256xf32>
    %3 = arith.mulf %0, %2 : vector<8x256xf32>
    %c0_3 = arith.constant 0 : index
    %c0_4 = arith.constant 0 : index
    %4 = vector.load %arg3[%c0_3, %c0_4] : memref<1x256xf32, #tpu.memory_space<vmem>>, vector<1x256xf32>
    %5 = vector.broadcast %4 : vector<1x256xf32> to vector<8x256xf32>
    %6 = arith.addf %3, %5 : vector<8x256xf32>
    %cst = arith.constant 5.000000e-01 : f32
    %7 = vector.broadcast %cst : f32 to vector<8x256xf32>
    %8 = arith.mulf %7, %6 : vector<8x256xf32>
    %cst_5 = arith.constant 0.707106769 : f32
    %9 = vector.broadcast %cst_5 : f32 to vector<8x256xf32>
    %10 = arith.mulf %6, %9 : vector<8x256xf32>
    %cst_6 = arith.constant 0.000000e+00 : f32
    %11 = vector.broadcast %cst_6 : f32 to vector<8x256xf32>
    %12 = arith.cmpf oge, %10, %11 : vector<8x256xf32>
    %cst_7 = arith.constant 1.000000e+00 : f32
    %cst_8 = arith.constant -1.000000e+00 : f32
    %13 = vector.broadcast %cst_7 : f32 to vector<8x256xf32>
    %14 = vector.broadcast %cst_8 : f32 to vector<8x256xf32>
    %15 = arith.select %12, %13, %14 : vector<8x256xi1>, vector<8x256xf32>
    %16 = math.absf %10 : vector<8x256xf32>
    %cst_9 = arith.constant 0.327591091 : f32
    %17 = vector.broadcast %cst_9 : f32 to vector<8x256xf32>
    %18 = arith.mulf %17, %16 : vector<8x256xf32>
    %cst_10 = arith.constant 1.000000e+00 : f32
    %19 = vector.broadcast %cst_10 : f32 to vector<8x256xf32>
    %20 = arith.addf %19, %18 : vector<8x256xf32>
    %21 = tpu.reciprocal %20 : vector<8x256xf32> -> vector<8x256xf32>
    %cst_11 = arith.constant 1.06140542 : f32
    %22 = vector.broadcast %cst_11 : f32 to vector<8x256xf32>
    %23 = arith.mulf %22, %21 : vector<8x256xf32>
    %cst_12 = arith.constant -1.45315206 : f32
    %24 = vector.broadcast %cst_12 : f32 to vector<8x256xf32>
    %25 = arith.addf %23, %24 : vector<8x256xf32>
    %26 = arith.mulf %25, %21 : vector<8x256xf32>
    %cst_13 = arith.constant 1.42141378 : f32
    %27 = vector.broadcast %cst_13 : f32 to vector<8x256xf32>
    %28 = arith.addf %26, %27 : vector<8x256xf32>
    %29 = arith.mulf %28, %21 : vector<8x256xf32>
    %cst_14 = arith.constant -0.284496725 : f32
    %30 = vector.broadcast %cst_14 : f32 to vector<8x256xf32>
    %31 = arith.addf %29, %30 : vector<8x256xf32>
    %32 = arith.mulf %31, %21 : vector<8x256xf32>
    %cst_15 = arith.constant 0.254829586 : f32
    %33 = vector.broadcast %cst_15 : f32 to vector<8x256xf32>
    %34 = arith.addf %32, %33 : vector<8x256xf32>
    %35 = arith.mulf %34, %21 : vector<8x256xf32>
    %cst_16 = arith.constant 0.000000e+00 : f32
    %36 = vector.broadcast %cst_16 : f32 to vector<8x256xf32>
    %37 = arith.subf %36, %16 : vector<8x256xf32>
    %38 = arith.mulf %37, %16 : vector<8x256xf32>
    %39 = math.exp %38 : vector<8x256xf32>
    %40 = arith.mulf %35, %39 : vector<8x256xf32>
    %cst_17 = arith.constant 1.000000e+00 : f32
    %41 = vector.broadcast %cst_17 : f32 to vector<8x256xf32>
    %42 = arith.subf %41, %40 : vector<8x256xf32>
    %43 = arith.mulf %15, %42 : vector<8x256xf32>
    %cst_18 = arith.constant 1.000000e+00 : f32
    %44 = vector.broadcast %cst_18 : f32 to vector<8x256xf32>
    %45 = arith.addf %44, %43 : vector<8x256xf32>
    %46 = arith.mulf %8, %45 : vector<8x256xf32>
    %c0_19 = arith.constant 0 : index
    %c0_20 = arith.constant 0 : index
    %47 = vector.load %arg4[%c0_19, %c0_20] : memref<8x256xf32, #tpu.memory_space<vmem>>, vector<8x256xf32>
    %48 = arith.addf %46, %47 : vector<8x256xf32>
    %c0_21 = arith.constant 0 : index
    %c0_22 = arith.constant 0 : index
    %49 = vector.load %arg5[%c0_21, %c0_22] : memref<8x256xf32, #tpu.memory_space<vmem>>, vector<8x256xf32>
    tpu.vector_store %arg5[%c0_21, %c0_22], %48 {strides = array<i32>} : memref<8x256xf32, #tpu.memory_space<vmem>>, vector<8x256xf32>,
    return
  }
  func.func @transform_0(%arg0: i32) -> (i32, i32) {
    %c0_i32 = arith.constant 0 : i32
    %c0_i32_0 = arith.constant 0 : i32
    return %arg0, %c0_i32 : i32, i32
  }
  func.func @transform_1(%arg0: i32) -> (i32, i32) {
    %c0_i32 = arith.constant 0 : i32
    %c0_i32_0 = arith.constant 0 : i32
    %c0_i32_1 = arith.constant 0 : i32
    return %c0_i32, %c0_i32_0 : i32, i32
  }
  func.func @transform_2(%arg0: i32) -> (i32, i32) {
    %c0_i32 = arith.constant 0 : i32
    %c0_i32_0 = arith.constant 0 : i32
    %c0_i32_1 = arith.constant 0 : i32
    return %c0_i32, %c0_i32_0 : i32, i32
  }
  func.func @transform_3(%arg0: i32) -> (i32, i32) {
    %c0_i32 = arith.constant 0 : i32
    %c0_i32_0 = arith.constant 0 : i32
    return %arg0, %c0_i32 : i32, i32
  }
  func.func @transform_4(%arg0: i32) -> (i32, i32) {
    %c0_i32 = arith.constant 0 : i32
    %c0_i32_0 = arith.constant 0 : i32
    return %arg0, %c0_i32 : i32, i32
  }
}

module attributes {stable_mosaic.version = 11 : i64} {
  func.func @_mm_stats_kernel(%arg0: i32, %arg1: memref<8x256xf32, #tpu.memory_space<vmem>>, %arg2: memref<256x256xf32, #tpu.memory_space<vmem>>, %arg3: memref<8x256xf32, #tpu.memory_space<vmem>>, %arg4: memref<1x256xf32, #tpu.memory_space<vmem>>, %arg5: memref<1x256xf32, #tpu.memory_space<vmem>>) attributes {dimension_semantics = [#tpu.dimension_semantics<arbitrary>], iteration_bounds = array<i64: 1>, scalar_prefetch = 0 : i64, scratch_operands = 0 : i64, tpu.core_type = #tpu.core_type<tc>, window_params = [{transform_indices = @transform_0, window_bounds = array<i64: 8, 256>}, {pipeline_mode = #tpu.pipeline_mode<synchronous>, transform_indices = @transform_1, window_bounds = array<i64: 256, 256>}, {transform_indices = @transform_2, window_bounds = array<i64: 8, 256>}, {pipeline_mode = #tpu.pipeline_mode<synchronous>, transform_indices = @transform_3, window_bounds = array<i64: 1, 256>}, {pipeline_mode = #tpu.pipeline_mode<synchronous>, transform_indices = @transform_4, window_bounds = array<i64: 1, 256>}]} {
    %c0_i32 = arith.constant 0 : i32
    %0 = arith.cmpi eq, %arg0, %c0_i32 : i32
    %1 = arith.extui %0 : i1 to i32
    %c0_i32_0 = arith.constant 0 : i32
    %2 = arith.cmpi ne, %1, %c0_i32_0 : i32
    scf.if %2 {
      %cst_16 = arith.constant 0.000000e+00 : f32
      %18 = vector.broadcast %cst_16 : f32 to vector<1x256xf32>
      %c0_17 = arith.constant 0 : index
      %c0_18 = arith.constant 0 : index
      %19 = vector.load %arg4[%c0_17, %c0_18] : memref<1x256xf32, #tpu.memory_space<vmem>>, vector<1x256xf32>
      tpu.vector_store %arg4[%c0_17, %c0_18], %18 {strides = array<i32>} : memref<1x256xf32, #tpu.memory_space<vmem>>, vector<1x256xf32>,
      %cst_19 = arith.constant 0.000000e+00 : f32
      %20 = vector.broadcast %cst_19 : f32 to vector<1x256xf32>
      %c0_20 = arith.constant 0 : index
      %c0_21 = arith.constant 0 : index
      %21 = vector.load %arg5[%c0_20, %c0_21] : memref<1x256xf32, #tpu.memory_space<vmem>>, vector<1x256xf32>
      tpu.vector_store %arg5[%c0_20, %c0_21], %20 {strides = array<i32>} : memref<1x256xf32, #tpu.memory_space<vmem>>, vector<1x256xf32>,
    } else {
    }
    %c0 = arith.constant 0 : index
    %c0_1 = arith.constant 0 : index
    %3 = vector.load %arg1[%c0, %c0_1] : memref<8x256xf32, #tpu.memory_space<vmem>>, vector<8x256xf32>
    %c0_2 = arith.constant 0 : index
    %c0_3 = arith.constant 0 : index
    %4 = vector.load %arg2[%c0_2, %c0_3] : memref<256x256xf32, #tpu.memory_space<vmem>>, vector<256x256xf32>
    %cst = arith.constant dense<0.000000e+00> : vector<8x256xf32>
    %5 = tpu.matmul %3, %4, %cst {dimension_numbers = #tpu.dot_dimension_numbers<[1], [0], [0], [1], [0, 0, 1, 1], [], []>} : vector<8x256xf32>, vector<256x256xf32>, vector<8x256xf32> -> vector<8x256xf32>
    %c0_4 = arith.constant 0 : index
    %c0_5 = arith.constant 0 : index
    %6 = vector.load %arg3[%c0_4, %c0_5] : memref<8x256xf32, #tpu.memory_space<vmem>>, vector<8x256xf32>
    tpu.vector_store %arg3[%c0_4, %c0_5], %5 {strides = array<i32>} : memref<8x256xf32, #tpu.memory_space<vmem>>, vector<8x256xf32>,
    %c0_6 = arith.constant 0 : index
    %c0_7 = arith.constant 0 : index
    %7 = vector.load %arg4[%c0_6, %c0_7] : memref<1x256xf32, #tpu.memory_space<vmem>>, vector<1x256xf32>
    %cst_8 = arith.constant dense<0.000000e+00> : vector<256xf32>
    %8 = vector.multi_reduction <add>, %5, %cst_8 [0] : vector<8x256xf32> to vector<256xf32>
    %9 = vector.shape_cast %8 : vector<256xf32> to vector<1x256xf32>
    %10 = arith.addf %7, %9 : vector<1x256xf32>
    %c0_9 = arith.constant 0 : index
    %c0_10 = arith.constant 0 : index
    %11 = vector.load %arg4[%c0_9, %c0_10] : memref<1x256xf32, #tpu.memory_space<vmem>>, vector<1x256xf32>
    tpu.vector_store %arg4[%c0_9, %c0_10], %10 {strides = array<i32>} : memref<1x256xf32, #tpu.memory_space<vmem>>, vector<1x256xf32>,
    %c0_11 = arith.constant 0 : index
    %c0_12 = arith.constant 0 : index
    %12 = vector.load %arg5[%c0_11, %c0_12] : memref<1x256xf32, #tpu.memory_space<vmem>>, vector<1x256xf32>
    %13 = arith.mulf %5, %5 : vector<8x256xf32>
    %cst_13 = arith.constant dense<0.000000e+00> : vector<256xf32>
    %14 = vector.multi_reduction <add>, %13, %cst_13 [0] : vector<8x256xf32> to vector<256xf32>
    %15 = vector.shape_cast %14 : vector<256xf32> to vector<1x256xf32>
    %16 = arith.addf %12, %15 : vector<1x256xf32>
    %c0_14 = arith.constant 0 : index
    %c0_15 = arith.constant 0 : index
    %17 = vector.load %arg5[%c0_14, %c0_15] : memref<1x256xf32, #tpu.memory_space<vmem>>, vector<1x256xf32>
    tpu.vector_store %arg5[%c0_14, %c0_15], %16 {strides = array<i32>} : memref<1x256xf32, #tpu.memory_space<vmem>>, vector<1x256xf32>,
    return
  }
  func.func @transform_0(%arg0: i32) -> (i32, i32) {
    %c0_i32 = arith.constant 0 : i32
    %c0_i32_0 = arith.constant 0 : i32
    return %arg0, %c0_i32 : i32, i32
  }
  func.func @transform_1(%arg0: i32) -> (i32, i32) {
    %c0_i32 = arith.constant 0 : i32
    %c0_i32_0 = arith.constant 0 : i32
    %c0_i32_1 = arith.constant 0 : i32
    return %c0_i32, %c0_i32_0 : i32, i32
  }
  func.func @transform_2(%arg0: i32) -> (i32, i32) {
    %c0_i32 = arith.constant 0 : i32
    %c0_i32_0 = arith.constant 0 : i32
    return %arg0, %c0_i32 : i32, i32
  }
  func.func @transform_3(%arg0: i32) -> (i32, i32) {
    %c0_i32 = arith.constant 0 : i32
    %c0_i32_0 = arith.constant 0 : i32
    %c0_i32_1 = arith.constant 0 : i32
    return %c0_i32, %c0_i32_0 : i32, i32
  }
  func.func @transform_4(%arg0: i32) -> (i32, i32) {
    %c0_i32 = arith.constant 0 : i32
    %c0_i32_0 = arith.constant 0 : i32
    %c0_i32_1 = arith.constant 0 : i32
    return %c0_i32, %c0_i32_0 : i32, i32
  }
}

module attributes {stable_mosaic.version = 11 : i64} {
  func.func @_mm_bias_kernel(%arg0: i32, %arg1: memref<8x256xf32, #tpu.memory_space<vmem>>, %arg2: memref<256x3xf32, #tpu.memory_space<vmem>>, %arg3: memref<1x3xf32, #tpu.memory_space<vmem>>, %arg4: memref<8x3xf32, #tpu.memory_space<vmem>>) attributes {dimension_semantics = [#tpu.dimension_semantics<parallel>], iteration_bounds = array<i64: 1>, scalar_prefetch = 0 : i64, scratch_operands = 0 : i64, tpu.core_type = #tpu.core_type<tc>, window_params = [{transform_indices = @transform_0, window_bounds = array<i64: 8, 256>}, {pipeline_mode = #tpu.pipeline_mode<synchronous>, transform_indices = @transform_1, window_bounds = array<i64: 256, 3>}, {pipeline_mode = #tpu.pipeline_mode<synchronous>, transform_indices = @transform_2, window_bounds = array<i64: 1, 3>}, {transform_indices = @transform_3, window_bounds = array<i64: 8, 3>}]} {
    %c0 = arith.constant 0 : index
    %c0_0 = arith.constant 0 : index
    %0 = vector.load %arg1[%c0, %c0_0] : memref<8x256xf32, #tpu.memory_space<vmem>>, vector<8x256xf32>
    %c0_1 = arith.constant 0 : index
    %c0_2 = arith.constant 0 : index
    %1 = vector.load %arg2[%c0_1, %c0_2] : memref<256x3xf32, #tpu.memory_space<vmem>>, vector<256x3xf32>
    %cst = arith.constant dense<0.000000e+00> : vector<8x3xf32>
    %2 = tpu.matmul %0, %1, %cst {dimension_numbers = #tpu.dot_dimension_numbers<[1], [0], [0], [1], [0, 0, 1, 1], [], []>} : vector<8x256xf32>, vector<256x3xf32>, vector<8x3xf32> -> vector<8x3xf32>
    %c0_3 = arith.constant 0 : index
    %c0_4 = arith.constant 0 : index
    %3 = vector.load %arg3[%c0_3, %c0_4] : memref<1x3xf32, #tpu.memory_space<vmem>>, vector<1x3xf32>
    %4 = vector.broadcast %3 : vector<1x3xf32> to vector<8x3xf32>
    %5 = arith.addf %2, %4 : vector<8x3xf32>
    %c0_5 = arith.constant 0 : index
    %c0_6 = arith.constant 0 : index
    %6 = vector.load %arg4[%c0_5, %c0_6] : memref<8x3xf32, #tpu.memory_space<vmem>>, vector<8x3xf32>
    tpu.vector_store %arg4[%c0_5, %c0_6], %5 {strides = array<i32>} : memref<8x3xf32, #tpu.memory_space<vmem>>, vector<8x3xf32>,
    return
  }
  func.func @transform_0(%arg0: i32) -> (i32, i32) {
    %c0_i32 = arith.constant 0 : i32
    %c0_i32_0 = arith.constant 0 : i32
    return %arg0, %c0_i32 : i32, i32
  }
  func.func @transform_1(%arg0: i32) -> (i32, i32) {
    %c0_i32 = arith.constant 0 : i32
    %c0_i32_0 = arith.constant 0 : i32
    %c0_i32_1 = arith.constant 0 : i32
    return %c0_i32, %c0_i32_0 : i32, i32
  }
  func.func @transform_2(%arg0: i32) -> (i32, i32) {
    %c0_i32 = arith.constant 0 : i32
    %c0_i32_0 = arith.constant 0 : i32
    %c0_i32_1 = arith.constant 0 : i32
    return %c0_i32, %c0_i32_0 : i32, i32
  }
  func.func @transform_3(%arg0: i32) -> (i32, i32) {
    %c0_i32 = arith.constant 0 : i32
    %c0_i32_0 = arith.constant 0 : i32
    return %arg0, %c0_i32 : i32, i32
  }
}

</mosaic_0001>

<llo_original>
// kernel: phd_net_res_forward.30
$region0: #{phd_net_res_forward.30}
  #allocation0 [shape = 'u32[]', space=smem, size = 0x4, offset = 0x4, fixed_abs, tag = 'smem constant byte address 0x4 - core index']
  #allocation1 [shape = 'u32[72,128]{1,0:T(1,128)}', space=vmem, size = 0x9000, scoped, tag = 'internal scratch']
  %s0 = inlined_call_operand.vmem [shape: f32[512,9], index: 0, kind: input, shape index: {}]
  %s1 = inlined_call_operand.vmem [shape: f32[9,32], index: 1, kind: input, shape index: {}]
  %s2 = inlined_call_operand.vmem [shape: f32[512,32], index: 2, kind: output, shape index: {}]
  %s3 = sld [smem:[#allocation0]]
  $region18: #{phd_net_res_forward.30} parent=0
    _
  %s5 = ssub.s32 1, %s3
  %s6 = scalar_select 0, %s5, %s3
  // Predicated region
  $region2: #{phd_net_res_forward.30} parent=0 // pred_check
    _
  $region3: #{phd_net_res_forward.30} parent=0 // pred_check_branch
    %8 = sbr.rel (0) target = $region5
  $region4: #{phd_net_res_forward.30} parent=0 // pred_region
    _
  $region5: #{phd_net_res_forward.30} parent=0 // pred_fallthru
    _
  // Predicated region
  $region6: #{phd_net_res_forward.30} parent=0 // pred_check
    _
  $region7: #{phd_net_res_forward.30} parent=0 // pred_check_branch
    %10 = sbr.rel (0) target = $region9
  $region8: #{phd_net_res_forward.30} parent=0 // pred_region
    _
  $region9: #{phd_net_res_forward.30} parent=0 // pred_fallthru
    _
  %v11 = vld [vmem:[%s0] sm:$0xff]
  %v12 = vld [vmem:[%s0 + $0x8] sm:$0xff]
  %v13 = vld [vmem:[%s0 + $0x10] sm:$0xff]
  %v14 = vld [vmem:[%s0 + $0x18] sm:$0xff]
  %v15 = vld [vmem:[%s0 + $0x20] sm:$0xff]
  %v16 = vld [vmem:[%s0 + $0x28] sm:$0xff]
  %v17 = vld [vmem:[%s0 + $0x30] sm:$0xff]
  %v18 = vld [vmem:[%s0 + $0x38] sm:$0xff]
  %v19 = vld [vmem:[%s0 + $0x40] sm:$0xff]
  %v20 = vld [vmem:[%s0 + $0x48] sm:$0xff]
  %v21 = vld [vmem:[%s0 + $0x50] sm:$0xff]
  %v22 = vld [vmem:[%s0 + $0x58] sm:$0xff]
  %v23 = vld [vmem:[%s0 + $0x60] sm:$0xff]
  %v24 = vld [vmem:[%s0 + $0x68] sm:$0xff]
  %v25 = vld [vmem:[%s0 + $0x70] sm:$0xff]
  %v26 = vld [vmem:[%s0 + $0x78] sm:$0xff]
  %v27 = vld [vmem:[%s0 + $0x80] sm:$0xff]
  %v28 = vld [vmem:[%s0 + $0x88] sm:$0xff]
  %v29 = vld [vmem:[%s0 + $0x90] sm:$0xff]
  %v30 = vld [vmem:[%s0 + $0x98] sm:$0xff]
  %v31 = vld [vmem:[%s0 + $0xa0] sm:$0xff]
  %v32 = vld [vmem:[%s0 + $0xa8] sm:$0xff]
  %v33 = vld [vmem:[%s0 + $0xb0] sm:$0xff]
  %v34 = vld [vmem:[%s0 + $0xb8] sm:$0xff]
  %v35 = vld [vmem:[%s0 + $0xc0] sm:$0xff]
  %v36 = vld [vmem:[%s0 + $0xc8] sm:$0xff]
  %v37 = vld [vmem:[%s0 + $0xd0] sm:$0xff]
  %v38 = vld [vmem:[%s0 + $0xd8] sm:$0xff]
  %v39 = vld [vmem:[%s0 + $0xe0] sm:$0xff]
  %v40 = vld [vmem:[%s0 + $0xe8] sm:$0xff]
  %v41 = vld [vmem:[%s0 + $0xf0] sm:$0xff]
  %v42 = vld [vmem:[%s0 + $0xf8] sm:$0xff]
  %v43 = vld [vmem:[%s0 + $0x100] sm:$0xff]
  %v44 = vld [vmem:[%s0 + $0x108] sm:$0xff]
  %v45 = vld [vmem:[%s0 + $0x110] sm:$0xff]
  %v46 = vld [vmem:[%s0 + $0x118] sm:$0xff]
  %v47 = vld [vmem:[%s0 + $0x120] sm:$0xff]
  %v48 = vld [vmem:[%s0 + $0x128] sm:$0xff]
  %v49 = vld [vmem:[%s0 + $0x130] sm:$0xff]
  %v50 = vld [vmem:[%s0 + $0x138] sm:$0xff]
  %v51 = vld [vmem:[%s0 + $0x140] sm:$0xff]
  %v52 = vld [vmem:[%s0 + $0x148] sm:$0xff]
  %v53 = vld [vmem:[%s0 + $0x150] sm:$0xff]
  %v54 = vld [vmem:[%s0 + $0x158] sm:$0xff]
  %v55 = vld [vmem:[%s0 + $0x160] sm:$0xff]
  %v56 = vld [vmem:[%s0 + $0x168] sm:$0xff]
  %v57 = vld [vmem:[%s0 + $0x170] sm:$0xff]
  %v58 = vld [vmem:[%s0 + $0x178] sm:$0xff]
  %v59 = vld [vmem:[%s0 + $0x180] sm:$0xff]
  %v60 = vld [vmem:[%s0 + $0x188] sm:$0xff]
  %v61 = vld [vmem:[%s0 + $0x190] sm:$0xff]
  %v62 = vld [vmem:[%s0 + $0x198] sm:$0xff]
  %v63 = vld [vmem:[%s0 + $0x1a0] sm:$0xff]
  %v64 = vld [vmem:[%s0 + $0x1a8] sm:$0xff]
  %v65 = vld [vmem:[%s0 + $0x1b0] sm:$0xff]
  %v66 = vld [vmem:[%s0 + $0x1b8] sm:$0xff]
  %v67 = vld [vmem:[%s0 + $0x1c0] sm:$0xff]
  %v68 = vld [vmem:[%s0 + $0x1c8] sm:$0xff]
  %v69 = vld [vmem:[%s0 + $0x1d0] sm:$0xff]
  %v70 = vld [vmem:[%s0 + $0x1d8] sm:$0xff]
  %v71 = vld [vmem:[%s0 + $0x1e0] sm:$0xff]
  %v72 = vld [vmem:[%s0 + $0x1e8] sm:$0xff]
  %v73 = vld [vmem:[%s0 + $0x1f0] sm:$0xff]
  %v74 = vld [vmem:[%s0 + $0x1f8] sm:$0xff]
  %v75 = vld [vmem:[%s1] sm:$0xff]
  %v76 = vld [vmem:[%s1 + $0x8] sm:$0x1]
  %vm77 = vcmask 72704
  %v79 = vsel %vm77, %v11, 0
  %v82 = vsel %vm77, %v12, 0
  %v85 = vsel %vm77, %v13, 0
  %v88 = vsel %vm77, %v14, 0
  %v91 = vsel %vm77, %v15, 0
  %v94 = vsel %vm77, %v16, 0
  %v97 = vsel %vm77, %v17, 0
  %v100 = vsel %vm77, %v18, 0
  %v103 = vsel %vm77, %v19, 0
  %v106 = vsel %vm77, %v20, 0
  %v109 = vsel %vm77, %v21, 0
  %v112 = vsel %vm77, %v22, 0
  %v115 = vsel %vm77, %v23, 0
  %v118 = vsel %vm77, %v24, 0
  %v121 = vsel %vm77, %v25, 0
  %v124 = vsel %vm77, %v26, 0
  %v127 = vsel %vm77, %v27, 0
  %v130 = vsel %vm77, %v28, 0
  %v133 = vsel %vm77, %v29, 0
  %v136 = vsel %vm77, %v30, 0
  %v139 = vsel %vm77, %v31, 0
  %v142 = vsel %vm77, %v32, 0
  %v145 = vsel %vm77, %v33, 0
  %v148 = vsel %vm77, %v34, 0
  %v151 = vsel %vm77, %v35, 0
  %v154 = vsel %vm77, %v36, 0
  %v157 = vsel %vm77, %v37, 0
  %v160 = vsel %vm77, %v38, 0
  %v163 = vsel %vm77, %v39, 0
  %v166 = vsel %vm77, %v40, 0
  %v169 = vsel %vm77, %v41, 0
  %v172 = vsel %vm77, %v42, 0
  %v175 = vsel %vm77, %v43, 0
  %v178 = vsel %vm77, %v44, 0
  %v181 = vsel %vm77, %v45, 0
  %v184 = vsel %vm77, %v46, 0
  %v187 = vsel %vm77, %v47, 0
  %v190 = vsel %vm77, %v48, 0
  %v193 = vsel %vm77, %v49, 0
  %v196 = vsel %vm77, %v50, 0
  %v199 = vsel %vm77, %v51, 0
  %v202 = vsel %vm77, %v52, 0
  %v205 = vsel %vm77, %v53, 0
  %v208 = vsel %vm77, %v54, 0
  %v211 = vsel %vm77, %v55, 0
  %v214 = vsel %vm77, %v56, 0
  %v217 = vsel %vm77, %v57, 0
  %v220 = vsel %vm77, %v58, 0
  %v223 = vsel %vm77, %v59, 0
  %v226 = vsel %vm77, %v60, 0
  %v229 = vsel %vm77, %v61, 0
  %v232 = vsel %vm77, %v62, 0
  %v235 = vsel %vm77, %v63, 0
  %v238 = vsel %vm77, %v64, 0
  %v241 = vsel %vm77, %v65, 0
  %v244 = vsel %vm77, %v66, 0
  %v247 = vsel %vm77, %v67, 0
  %v250 = vsel %vm77, %v68, 0
  %v253 = vsel %vm77, %v69, 0
  %v256 = vsel %vm77, %v70, 0
  %v259 = vsel %vm77, %v71, 0
  %v262 = vsel %vm77, %v72, 0
  %v265 = vsel %vm77, %v73, 0
  %v268 = vsel %vm77, %v74, 0
  %vm270 = vcmask 1040384
  %v272 = vsel %vm270, %v76, 0
  %274 = vmatpush.msra.mxu0 0.0
  %275 = vmatpush.msra.mxu0 0.0
  %276 = vmatpush.msra.mxu0 0.0
  %277 = vmatpush.msra.mxu0 0.0
  %278 = vmatpush.msra.mxu0 0.0
  %279 = vmatpush.msra.mxu0 0.0
  %280 = vmatpush.msra.mxu0 0.0
  %281 = vmatpush.msra.mxu0 0.0
  %282 = vmatpush.msra.mxu0 0.0
  %283 = vmatpush.msra.mxu0 0.0
  %284 = vmatpush.msra.mxu0 0.0
  %285 = vmatpush.msra.mxu0 0.0
  %286 = vmatpush.msra.mxu0 0.0
  %287 = vmatpush.msra.mxu0 0.0
  %288 = vmatpush.msra.mxu0 %v272
  %289 = vmatpush.msra.mxu0 %v75
  %290 = vmatmul.f32.gmra.mxu0 %v79
  %v291 = vpop.f32.mrf.mxu0
  %v292 = vadd.f32 0.0, %v291
  %293 = vmatmul.f32.gmra.mxu0 %v82
  %v294 = vpop.f32.mrf.mxu0
  %v295 = vadd.f32 0.0, %v294
  %296 = vmatmul.f32.gmra.mxu0 %v85
  %v297 = vpop.f32.mrf.mxu0
  %v298 = vadd.f32 0.0, %v297
  %299 = vmatmul.f32.gmra.mxu0 %v88
  %v300 = vpop.f32.mrf.mxu0
  %v301 = vadd.f32 0.0, %v300
  %302 = vmatmul.f32.gmra.mxu0 %v91
  %v303 = vpop.f32.mrf.mxu0
  %v304 = vadd.f32 0.0, %v303
  %305 = vmatmul.f32.gmra.mxu0 %v94
  %v306 = vpop.f32.mrf.mxu0
  %v307 = vadd.f32 0.0, %v306
  %308 = vmatmul.f32.gmra.mxu0 %v97
  %v309 = vpop.f32.mrf.mxu0
  %v310 = vadd.f32 0.0, %v309
  %311 = vmatmul.f32.gmra.mxu0 %v100
  %v312 = vpop.f32.mrf.mxu0
  %v313 = vadd.f32 0.0, %v312
  %314 = vmatmul.f32.gmra.mxu0 %v103
  %v315 = vpop.f32.mrf.mxu0
  %v316 = vadd.f32 0.0, %v315
  %317 = vmatmul.f32.gmra.mxu0 %v106
  %v318 = vpop.f32.mrf.mxu0
  %v319 = vadd.f32 0.0, %v318
  %320 = vmatmul.f32.gmra.mxu0 %v109
  %v321 = vpop.f32.mrf.mxu0
  %v322 = vadd.f32 0.0, %v321
  %323 = vmatmul.f32.gmra.mxu0 %v112
  %v324 = vpop.f32.mrf.mxu0
  %v325 = vadd.f32 0.0, %v324
  %326 = vmatmul.f32.gmra.mxu0 %v115
  %v327 = vpop.f32.mrf.mxu0
  %v328 = vadd.f32 0.0, %v327
  %329 = vmatmul.f32.gmra.mxu0 %v118
  %v330 = vpop.f32.mrf.mxu0
  %v331 = vadd.f32 0.0, %v330
  %332 = vmatmul.f32.gmra.mxu0 %v121
  %v333 = vpop.f32.mrf.mxu0
  %v334 = vadd.f32 0.0, %v333
  %335 = vmatmul.f32.gmra.mxu0 %v124
  %v336 = vpop.f32.mrf.mxu0
  %v337 = vadd.f32 0.0, %v336
  %338 = vmatmul.f32.gmra.mxu0 %v127
  %v339 = vpop.f32.mrf.mxu0
  %v340 = vadd.f32 0.0, %v339
  %341 = vmatmul.f32.gmra.mxu0 %v130
  %v342 = vpop.f32.mrf.mxu0
  %v343 = vadd.f32 0.0, %v342
  %344 = vmatmul.f32.gmra.mxu0 %v133
  %v345 = vpop.f32.mrf.mxu0
  %v346 = vadd.f32 0.0, %v345
  %347 = vmatmul.f32.gmra.mxu0 %v136
  %v348 = vpop.f32.mrf.mxu0
  %v349 = vadd.f32 0.0, %v348
  %350 = vmatmul.f32.gmra.mxu0 %v139
  %v351 = vpop.f32.mrf.mxu0
  %v352 = vadd.f32 0.0, %v351
  %353 = vmatmul.f32.gmra.mxu0 %v142
  %v354 = vpop.f32.mrf.mxu0
  %v355 = vadd.f32 0.0, %v354
  %356 = vmatmul.f32.gmra.mxu0 %v145
  %v357 = vpop.f32.mrf.mxu0
  %v358 = vadd.f32 0.0, %v357
  %359 = vmatmul.f32.gmra.mxu0 %v148
  %v360 = vpop.f32.mrf.mxu0
  %v361 = vadd.f32 0.0, %v360
  %362 = vmatmul.f32.gmra.mxu0 %v151
  %v363 = vpop.f32.mrf.mxu0
  %v364 = vadd.f32 0.0, %v363
  %365 = vmatmul.f32.gmra.mxu0 %v154
  %v366 = vpop.f32.mrf.mxu0
  %v367 = vadd.f32 0.0, %v366
  %368 = vmatmul.f32.gmra.mxu0 %v157
  %v369 = vpop.f32.mrf.mxu0
  %v370 = vadd.f32 0.0, %v369
  %371 = vmatmul.f32.gmra.mxu0 %v160
  %v372 = vpop.f32.mrf.mxu0
  %v373 = vadd.f32 0.0, %v372
  %374 = vmatmul.f32.gmra.mxu0 %v163
  %v375 = vpop.f32.mrf.mxu0
  %v376 = vadd.f32 0.0, %v375
  %377 = vmatmul.f32.gmra.mxu0 %v166
  %v378 = vpop.f32.mrf.mxu0
  %v379 = vadd.f32 0.0, %v378
  %380 = vmatmul.f32.gmra.mxu0 %v169
  %v381 = vpop.f32.mrf.mxu0
  %v382 = vadd.f32 0.0, %v381
  %383 = vmatmul.f32.gmra.mxu0 %v172
  %v384 = vpop.f32.mrf.mxu0
  %v385 = vadd.f32 0.0, %v384
  %386 = vmatmul.f32.gmra.mxu0 %v175
  %v387 = vpop.f32.mrf.mxu0
  %v388 = vadd.f32 0.0, %v387
  %389 = vmatmul.f32.gmra.mxu0 %v178
  %v390 = vpop.f32.mrf.mxu0
  %v391 = vadd.f32 0.0, %v390
  %392 = vmatmul.f32.gmra.mxu0 %v181
  %v393 = vpop.f32.mrf.mxu0
  %v394 = vadd.f32 0.0, %v393
  %395 = vmatmul.f32.gmra.mxu0 %v184
  %v396 = vpop.f32.mrf.mxu0
  %v397 = vadd.f32 0.0, %v396
  %398 = vmatmul.f32.gmra.mxu0 %v187
  %v399 = vpop.f32.mrf.mxu0
  %v400 = vadd.f32 0.0, %v399
  %401 = vmatmul.f32.gmra.mxu0 %v190
  %v402 = vpop.f32.mrf.mxu0
  %v403 = vadd.f32 0.0, %v402
  %404 = vmatmul.f32.gmra.mxu0 %v193
  %v405 = vpop.f32.mrf.mxu0
  %v406 = vadd.f32 0.0, %v405
  %407 = vmatmul.f32.gmra.mxu0 %v196
  %v408 = vpop.f32.mrf.mxu0
  %v409 = vadd.f32 0.0, %v408
  %410 = vmatmul.f32.gmra.mxu0 %v199
  %v411 = vpop.f32.mrf.mxu0
  %v412 = vadd.f32 0.0, %v411
  %413 = vmatmul.f32.gmra.mxu0 %v202
  %v414 = vpop.f32.mrf.mxu0
  %v415 = vadd.f32 0.0, %v414
  %416 = vmatmul.f32.gmra.mxu0 %v205
  %v417 = vpop.f32.mrf.mxu0
  %v418 = vadd.f32 0.0, %v417
  %419 = vmatmul.f32.gmra.mxu0 %v208
  %v420 = vpop.f32.mrf.mxu0
  %v421 = vadd.f32 0.0, %v420
  %422 = vmatmul.f32.gmra.mxu0 %v211
  %v423 = vpop.f32.mrf.mxu0
  %v424 = vadd.f32 0.0, %v423
  %425 = vmatmul.f32.gmra.mxu0 %v214
  %v426 = vpop.f32.mrf.mxu0
  %v427 = vadd.f32 0.0, %v426
  %428 = vmatmul.f32.gmra.mxu0 %v217
  %v429 = vpop.f32.mrf.mxu0
  %v430 = vadd.f32 0.0, %v429
  %431 = vmatmul.f32.gmra.mxu0 %v220
  %v432 = vpop.f32.mrf.mxu0
  %v433 = vadd.f32 0.0, %v432
  %434 = vmatmul.f32.gmra.mxu0 %v223
  %v435 = vpop.f32.mrf.mxu0
  %v436 = vadd.f32 0.0, %v435
  %437 = vmatmul.f32.gmra.mxu0 %v226
  %v438 = vpop.f32.mrf.mxu0
  %v439 = vadd.f32 0.0, %v438
  %440 = vmatmul.f32.gmra.mxu0 %v229
  %v441 = vpop.f32.mrf.mxu0
  %v442 = vadd.f32 0.0, %v441
  %443 = vmatmul.f32.gmra.mxu0 %v232
  %v444 = vpop.f32.mrf.mxu0
  %v445 = vadd.f32 0.0, %v444
  %446 = vmatmul.f32.gmra.mxu0 %v235
  %v447 = vpop.f32.mrf.mxu0
  %v448 = vadd.f32 0.0, %v447
  %449 = vmatmul.f32.gmra.mxu0 %v238
  %v450 = vpop.f32.mrf.mxu0
  %v451 = vadd.f32 0.0, %v450
  %452 = vmatmul.f32.gmra.mxu0 %v241
  %v453 = vpop.f32.mrf.mxu0
  %v454 = vadd.f32 0.0, %v453
  %455 = vmatmul.f32.gmra.mxu0 %v244
  %v456 = vpop.f32.mrf.mxu0
  %v457 = vadd.f32 0.0, %v456
  %458 = vmatmul.f32.gmra.mxu0 %v247
  %v459 = vpop.f32.mrf.mxu0
  %v460 = vadd.f32 0.0, %v459
  %461 = vmatmul.f32.gmra.mxu0 %v250
  %v462 = vpop.f32.mrf.mxu0
  %v463 = vadd.f32 0.0, %v462
  %464 = vmatmul.f32.gmra.mxu0 %v253
  %v465 = vpop.f32.mrf.mxu0
  %v466 = vadd.f32 0.0, %v465
  %467 = vmatmul.f32.gmra.mxu0 %v256
  %v468 = vpop.f32.mrf.mxu0
  %v469 = vadd.f32 0.0, %v468
  %470 = vmatmul.f32.gmra.mxu0 %v259
  %v471 = vpop.f32.mrf.mxu0
  %v472 = vadd.f32 0.0, %v471
  %473 = vmatmul.f32.gmra.mxu0 %v262
  %v474 = vpop.f32.mrf.mxu0
  %v475 = vadd.f32 0.0, %v474
  %476 = vmatmul.f32.gmra.mxu0 %v265
  %v477 = vpop.f32.mrf.mxu0
  %v478 = vadd.f32 0.0, %v477
  %479 = vmatmul.f32.gmra.mxu0 %v268
  %v480 = vpop.f32.mrf.mxu0
  %v481 = vadd.f32 0.0, %v480
  %482 = vdwg.mxu0
  %vm483 = vcmask 261120
  %484 = vst.msk [vmem:[%s2] sm:$0xff] %vm483, %v292
  %485 = vst.msk [vmem:[%s2 + $0x8] sm:$0xff] %vm483, %v295
  %486 = vst.msk [vmem:[%s2 + $0x10] sm:$0xff] %vm483, %v298
  %487 = vst.msk [vmem:[%s2 + $0x18] sm:$0xff] %vm483, %v301
  %488 = vst.msk [vmem:[%s2 + $0x20] sm:$0xff] %vm483, %v304
  %489 = vst.msk [vmem:[%s2 + $0x28] sm:$0xff] %vm483, %v307
  %490 = vst.msk [vmem:[%s2 + $0x30] sm:$0xff] %vm483, %v310
  %491 = vst.msk [vmem:[%s2 + $0x38] sm:$0xff] %vm483, %v313
  %492 = vst.msk [vmem:[%s2 + $0x40] sm:$0xff] %vm483, %v316
  %493 = vst.msk [vmem:[%s2 + $0x48] sm:$0xff] %vm483, %v319
  %494 = vst.msk [vmem:[%s2 + $0x50] sm:$0xff] %vm483, %v322
  %495 = vst.msk [vmem:[%s2 + $0x58] sm:$0xff] %vm483, %v325
  %496 = vst.msk [vmem:[%s2 + $0x60] sm:$0xff] %vm483, %v328
  %497 = vst.msk [vmem:[%s2 + $0x68] sm:$0xff] %vm483, %v331
  %498 = vst.msk [vmem:[%s2 + $0x70] sm:$0xff] %vm483, %v334
  %499 = vst.msk [vmem:[%s2 + $0x78] sm:$0xff] %vm483, %v337
  %500 = vst.msk [vmem:[%s2 + $0x80] sm:$0xff] %vm483, %v340
  %501 = vst.msk [vmem:[%s2 + $0x88] sm:$0xff] %vm483, %v343
  %502 = vst.msk [vmem:[%s2 + $0x90] sm:$0xff] %vm483, %v346
  %503 = vst.msk [vmem:[%s2 + $0x98] sm:$0xff] %vm483, %v349
  %504 = vst.msk [vmem:[%s2 + $0xa0] sm:$0xff] %vm483, %v352
  %505 = vst.msk [vmem:[%s2 + $0xa8] sm:$0xff] %vm483, %v355
  %506 = vst.msk [vmem:[%s2 + $0xb0] sm:$0xff] %vm483, %v358
  %507 = vst.msk [vmem:[%s2 + $0xb8] sm:$0xff] %vm483, %v361
  %508 = vst.msk [vmem:[%s2 + $0xc0] sm:$0xff] %vm483, %v364
  %509 = vst.msk [vmem:[%s2 + $0xc8] sm:$0xff] %vm483, %v367
  %510 = vst.msk [vmem:[%s2 + $0xd0] sm:$0xff] %vm483, %v370
  %511 = vst.msk [vmem:[%s2 + $0xd8] sm:$0xff] %vm483, %v373
  %512 = vst.msk [vmem:[%s2 + $0xe0] sm:$0xff] %vm483, %v376
  %513 = vst.msk [vmem:[%s2 + $0xe8] sm:$0xff] %vm483, %v379
  %514 = vst.msk [vmem:[%s2 + $0xf0] sm:$0xff] %vm483, %v382
  %515 = vst.msk [vmem:[%s2 + $0xf8] sm:$0xff] %vm483, %v385
  %516 = vst.msk [vmem:[%s2 + $0x100] sm:$0xff] %vm483, %v388
  %517 = vst.msk [vmem:[%s2 + $0x108] sm:$0xff] %vm483, %v391
  %518 = vst.msk [vmem:[%s2 + $0x110] sm:$0xff] %vm483, %v394
  %519 = vst.msk [vmem:[%s2 + $0x118] sm:$0xff] %vm483, %v397
  %520 = vst.msk [vmem:[%s2 + $0x120] sm:$0xff] %vm483, %v400
  %521 = vst.msk [vmem:[%s2 + $0x128] sm:$0xff] %vm483, %v403
  %522 = vst.msk [vmem:[%s2 + $0x130] sm:$0xff] %vm483, %v406
  %523 = vst.msk [vmem:[%s2 + $0x138] sm:$0xff] %vm483, %v409
  %524 = vst.msk [vmem:[%s2 + $0x140] sm:$0xff] %vm483, %v412
  %525 = vst.msk [vmem:[%s2 + $0x148] sm:$0xff] %vm483, %v415
  %526 = vst.msk [vmem:[%s2 + $0x150] sm:$0xff] %vm483, %v418
  %527 = vst.msk [vmem:[%s2 + $0x158] sm:$0xff] %vm483, %v421
  %528 = vst.msk [vmem:[%s2 + $0x160] sm:$0xff] %vm483, %v424
  %529 = vst.msk [vmem:[%s2 + $0x168] sm:$0xff] %vm483, %v427
  %530 = vst.msk [vmem:[%s2 + $0x170] sm:$0xff] %vm483, %v430
  %531 = vst.msk [vmem:[%s2 + $0x178] sm:$0xff] %vm483, %v433
  %532 = vst.msk [vmem:[%s2 + $0x180] sm:$0xff] %vm483, %v436
  %533 = vst.msk [vmem:[%s2 + $0x188] sm:$0xff] %vm483, %v439
  %534 = vst.msk [vmem:[%s2 + $0x190] sm:$0xff] %vm483, %v442
  %535 = vst.msk [vmem:[%s2 + $0x198] sm:$0xff] %vm483, %v445
  %536 = vst.msk [vmem:[%s2 + $0x1a0] sm:$0xff] %vm483, %v448
  %537 = vst.msk [vmem:[%s2 + $0x1a8] sm:$0xff] %vm483, %v451
  %538 = vst.msk [vmem:[%s2 + $0x1b0] sm:$0xff] %vm483, %v454
  %539 = vst.msk [vmem:[%s2 + $0x1b8] sm:$0xff] %vm483, %v457
  %540 = vst.msk [vmem:[%s2 + $0x1c0] sm:$0xff] %vm483, %v460
  %541 = vst.msk [vmem:[%s2 + $0x1c8] sm:$0xff] %vm483, %v463
  %542 = vst.msk [vmem:[%s2 + $0x1d0] sm:$0xff] %vm483, %v466
  %543 = vst.msk [vmem:[%s2 + $0x1d8] sm:$0xff] %vm483, %v469
  %544 = vst.msk [vmem:[%s2 + $0x1e0] sm:$0xff] %vm483, %v472
  %545 = vst.msk [vmem:[%s2 + $0x1e8] sm:$0xff] %vm483, %v475
  %546 = vst.msk [vmem:[%s2 + $0x1f0] sm:$0xff] %vm483, %v478
  %547 = vst.msk [vmem:[%s2 + $0x1f8] sm:$0xff] %vm483, %v481
  // Predicated region
  $region10: #{phd_net_res_forward.30} parent=0 // pred_check
    _
  $region11: #{phd_net_res_forward.30} parent=0 // pred_check_branch
    %549 = sbr.rel (0) target = $region13
  $region12: #{phd_net_res_forward.30} parent=0 // pred_region
    _
  $region13: #{phd_net_res_forward.30} parent=0 // pred_fallthru
    _
  // Predicated region
  $region14: #{phd_net_res_forward.30} parent=0 // pred_check
    _
  $region15: #{phd_net_res_forward.30} parent=0 // pred_check_branch
    %551 = sbr.rel (0) target = $region17
  $region16: #{phd_net_res_forward.30} parent=0 // pred_region
    _
  $region17: #{phd_net_res_forward.30} parent=0 // pred_fallthru
    _

// kernel: phd_net_res_forward.31
$region0: #{phd_net_res_forward.31}
  #allocation0 [shape = 'u32[]', space=smem, size = 0x4, offset = 0x4, fixed_abs, tag = 'smem constant byte address 0x4 - core index']
  #allocation1 [shape = 'u32[72,128]{1,0:T(1,128)}', space=vmem, size = 0x9000, scoped, tag = 'internal scratch']
  %s0 = inlined_call_operand.vmem [shape: f32[32,128], index: 0, kind: input, shape index: {}]
  %s1 = inlined_call_operand.vmem [shape: f32[32,128], index: 1, kind: input, shape index: {}]
  %s2 = inlined_call_operand.vmem [shape: f32[32,128], index: 2, kind: input, shape index: {}]
  %s3 = inlined_call_operand.vmem [shape: f32[32,128], index: 3, kind: input, shape index: {}]
  %s4 = inlined_call_operand.vmem [shape: f32[32,128], index: 4, kind: output, shape index: {0}]
  %s5 = inlined_call_operand.vmem [shape: f32[1,128], index: 5, kind: output, shape index: {1}]
  %s6 = inlined_call_operand.vmem [shape: f32[1,128], index: 6, kind: output, shape index: {2}]
  %7 = xla_tuple %s4, %s5, %s6
  %s8 = sld [smem:[#allocation0]]
  $region46: #{phd_net_res_forward.31} parent=0
    _
  %s10 = ssub.s32 1, %s8
  %s11 = scalar_select 0, %s10, %s8
  // Predicated region
  $region2: #{phd_net_res_forward.31} parent=0 // pred_check
    _
  $region3: #{phd_net_res_forward.31} parent=0 // pred_check_branch
    %13 = sbr.rel (0) target = $region5
  $region4: #{phd_net_res_forward.31} parent=0 // pred_region
    _
  $region5: #{phd_net_res_forward.31} parent=0 // pred_fallthru
    _
  // Predicated region
  $region6: #{phd_net_res_forward.31} parent=0 // pred_check
    _
  $region7: #{phd_net_res_forward.31} parent=0 // pred_check_branch
    %15 = sbr.rel (0) target = $region9
  $region8: #{phd_net_res_forward.31} parent=0 // pred_region
    _
  $region9: #{phd_net_res_forward.31} parent=0 // pred_fallthru
    _
  // Predicated region
  $region10: #{phd_net_res_forward.31} parent=0 // pred_check
    _
  $region11: #{phd_net_res_forward.31} parent=0 // pred_check_branch
    %17 = sbr.rel (0) target = $region13
  $region12: #{phd_net_res_forward.31} parent=0 // pred_region
    _
  $region13: #{phd_net_res_forward.31} parent=0 // pred_fallthru
    _
  // Predicated region
  $region14: #{phd_net_res_forward.31} parent=0 // pred_check
    _
  $region15: #{phd_net_res_forward.31} parent=0 // pred_check_branch
    %19 = sbr.rel (0) target = $region17
  $region16: #{phd_net_res_forward.31} parent=0 // pred_region
    _
  $region17: #{phd_net_res_forward.31} parent=0 // pred_fallthru
    _
  %p20 = scmp.eq.s32.totalorder 0, 0
  // Predicated region
  $region18: #{phd_net_res_forward.31} parent=0 // pred_check
    %p21 = pneg %p20
  $region19: #{phd_net_res_forward.31} parent=0 // pred_check_branch
    %23 = sbr.rel (%p21) target = $region21
  $region20: #{phd_net_res_forward.31} parent=0 // pred_region
    %24 = vst [vmem:[%s5] sm:$0x1] 0.0
    %25 = vst [vmem:[%s6] sm:$0x1] 0.0
  $region21: #{phd_net_res_forward.31} parent=0 // pred_fallthru
    _
  %v26 = vld [vmem:[%s0] sm:$0xff]
  %v27 = vld [vmem:[%s0 + $0x8] sm:$0xff]
  %v28 = vld [vmem:[%s0 + $0x10] sm:$0xff]
  %v29 = vld [vmem:[%s0 + $0x18] sm:$0xff]
  %v30 = vld [vmem:[%s1] sm:$0xff]
  %v31 = vld [vmem:[%s1 + $0x8] sm:$0xff]
  %v32 = vld [vmem:[%s1 + $0x10] sm:$0xff]
  %v33 = vld [vmem:[%s1 + $0x18] sm:$0xff]
  %v34 = vmax.f32 %v26, %v30
  %v35 = vmax.f32 %v27, %v31
  %v36 = vmax.f32 %v28, %v32
  %v37 = vmax.f32 %v29, %v33
  %v38 = vld [vmem:[%s2] sm:$0xff]
  %v39 = vld [vmem:[%s2 + $0x8] sm:$0xff]
  %v40 = vld [vmem:[%s2 + $0x10] sm:$0xff]
  %v41 = vld [vmem:[%s2 + $0x18] sm:$0xff]
  %v42 = vld [vmem:[%s3] sm:$0xff]
  %v43 = vld [vmem:[%s3 + $0x8] sm:$0xff]
  %v44 = vld [vmem:[%s3 + $0x10] sm:$0xff]
  %v45 = vld [vmem:[%s3 + $0x18] sm:$0xff]
  %v46 = vmax.f32 %v38, %v42
  %v47 = vmax.f32 %v39, %v43
  %v48 = vmax.f32 %v40, %v44
  %v49 = vmax.f32 %v41, %v45
  %v50 = vmax.f32 %v34, %v46
  %v51 = vmax.f32 %v35, %v47
  %v52 = vmax.f32 %v36, %v48
  %v53 = vmax.f32 %v37, %v49
  %54 = vst [vmem:[%s4] sm:$0xff] %v50
  %55 = vst [vmem:[%s4 + $0x8] sm:$0xff] %v51
  %56 = vst [vmem:[%s4 + $0x10] sm:$0xff] %v52
  %57 = vst [vmem:[%s4 + $0x18] sm:$0xff] %v53
  %v58 = vld [vmem:[%s5] sm:$0x1]
  %v59 = vadd.f32 %v50, %v51
  %v60 = vadd.f32 %v59, %v52
  %v61 = vadd.f32 %v60, %v53
  %v62 = vrot.slane %v61, 4
  %v63 = vadd.f32 %v61, %v62
  %v64 = vrot.slane %v63, 2
  %v65 = vadd.f32 %v63, %v64
  %v66 = vrot.slane %v65, 1
  %v67 = vadd.f32 %v65, %v66
  %v68 = vadd.f32 %v58, %v67
  %69 = vst [vmem:[%s5] sm:$0x1] %v68
  %v70 = vld [vmem:[%s6] sm:$0x1]
  %v71 = vmul.f32 %v50, %v50
  %v72 = vmul.f32 %v51, %v51
  %v73 = vmul.f32 %v52, %v52
  %v74 = vmul.f32 %v53, %v53
  %v75 = vadd.f32 %v71, %v72
  %v76 = vadd.f32 %v75, %v73
  %v77 = vadd.f32 %v76, %v74
  %v78 = vrot.slane %v77, 4
  %v79 = vadd.f32 %v77, %v78
  %v80 = vrot.slane %v79, 2
  %v81 = vadd.f32 %v79, %v80
  %v82 = vrot.slane %v81, 1
  %v83 = vadd.f32 %v81, %v82
  %v84 = vadd.f32 %v70, %v83
  %85 = vst [vmem:[%s6] sm:$0x1] %v84
  // Predicated region
  $region22: #{phd_net_res_forward.31} parent=0 // pred_check
    _
  $region23: #{phd_net_res_forward.31} parent=0 // pred_check_branch
    %87 = sbr.rel (0) target = $region25
  $region24: #{phd_net_res_forward.31} parent=0 // pred_region
    _
  $region25: #{phd_net_res_forward.31} parent=0 // pred_fallthru
    _
  // Predicated region
  $region26: #{phd_net_res_forward.31} parent=0 // pred_check
    _
  $region27: #{phd_net_res_forward.31} parent=0 // pred_check_branch
    %89 = sbr.rel (0) target = $region29
  $region28: #{phd_net_res_forward.31} parent=0 // pred_region
    _
  $region29: #{phd_net_res_forward.31} parent=0 // pred_fallthru
    _
  // Predicated region
  $region30: #{phd_net_res_forward.31} parent=0 // pred_check
    _
  $region31: #{phd_net_res_forward.31} parent=0 // pred_check_branch
    %91 = sbr.rel (0) target = $region33
  $region32: #{phd_net_res_forward.31} parent=0 // pred_region
    _
  $region33: #{phd_net_res_forward.31} parent=0 // pred_fallthru
    _
  // Predicated region
  $region34: #{phd_net_res_forward.31} parent=0 // pred_check
    _
  $region35: #{phd_net_res_forward.31} parent=0 // pred_check_branch
    %93 = sbr.rel (0) target = $region37
  $region36: #{phd_net_res_forward.31} parent=0 // pred_region
    _
  $region37: #{phd_net_res_forward.31} parent=0 // pred_fallthru
    _
  // Predicated region
  $region38: #{phd_net_res_forward.31} parent=0 // pred_check
    _
  $region39: #{phd_net_res_forward.31} parent=0 // pred_check_branch
    %95 = sbr.rel (0) target = $region41
  $region40: #{phd_net_res_forward.31} parent=0 // pred_region
    _
  $region41: #{phd_net_res_forward.31} parent=0 // pred_fallthru
    _
  // Predicated region
  $region42: #{phd_net_res_forward.31} parent=0 // pred_check
    _
  $region43: #{phd_net_res_forward.31} parent=0 // pred_check_branch
    %97 = sbr.rel (0) target = $region45
  $region44: #{phd_net_res_forward.31} parent=0 // pred_region
    _
  $region45: #{phd_net_res_forward.31} parent=0 // pred_fallthru
    _

// kernel: phd_net_res_forward.32
$region0: #{phd_net_res_forward.32}
  #allocation0 [shape = 'u32[]', space=smem, size = 0x4, offset = 0x4, fixed_abs, tag = 'smem constant byte address 0x4 - core index']
  #allocation1 [shape = 'u32[72,128]{1,0:T(1,128)}', space=vmem, size = 0x9000, scoped, tag = 'internal scratch']
  %s0 = inlined_call_operand.vmem [shape: f32[32,128], index: 0, kind: input, shape index: {}]
  %s1 = inlined_call_operand.vmem [shape: f32[1,128], index: 1, kind: input, shape index: {}]
  %s2 = inlined_call_operand.vmem [shape: f32[1,128], index: 2, kind: input, shape index: {}]
  %s3 = inlined_call_operand.vmem [shape: f32[32,128], index: 3, kind: output, shape index: {}]
  %s4 = sld [smem:[#allocation0]]
  $region22: #{phd_net_res_forward.32} parent=0
    _
  %s6 = ssub.s32 1, %s4
  %s7 = scalar_select 0, %s6, %s4
  // Predicated region
  $region2: #{phd_net_res_forward.32} parent=0 // pred_check
    _
  $region3: #{phd_net_res_forward.32} parent=0 // pred_check_branch
    %9 = sbr.rel (0) target = $region5
  $region4: #{phd_net_res_forward.32} parent=0 // pred_region
    _
  $region5: #{phd_net_res_forward.32} parent=0 // pred_fallthru
    _
  // Predicated region
  $region6: #{phd_net_res_forward.32} parent=0 // pred_check
    _
  $region7: #{phd_net_res_forward.32} parent=0 // pred_check_branch
    %11 = sbr.rel (0) target = $region9
  $region8: #{phd_net_res_forward.32} parent=0 // pred_region
    _
  $region9: #{phd_net_res_forward.32} parent=0 // pred_fallthru
    _
  // Predicated region
  $region10: #{phd_net_res_forward.32} parent=0 // pred_check
    _
  $region11: #{phd_net_res_forward.32} parent=0 // pred_check_branch
    %13 = sbr.rel (0) target = $region13
  $region12: #{phd_net_res_forward.32} parent=0 // pred_region
    _
  $region13: #{phd_net_res_forward.32} parent=0 // pred_fallthru
    _
  %v14 = vld [vmem:[%s0] sm:$0xff]
  %v15 = vld [vmem:[%s0 + $0x8] sm:$0xff]
  %v16 = vld [vmem:[%s0 + $0x10] sm:$0xff]
  %v17 = vld [vmem:[%s0 + $0x18] sm:$0xff]
  %v18 = vld [vmem:[%s1] sm:$0x1]
  %v20 = vperm.slane %v18, 0
  %v22 = vmul.f32 %v14, %v20
  %v23 = vmul.f32 %v15, %v20
  %v24 = vmul.f32 %v16, %v20
  %v25 = vmul.f32 %v17, %v20
  %v26 = vld [vmem:[%s2] sm:$0x1]
  %v28 = vperm.slane %v26, 0
  %v30 = vadd.f32 %v22, %v28
  %v31 = vadd.f32 %v23, %v28
  %v32 = vadd.f32 %v24, %v28
  %v33 = vadd.f32 %v25, %v28
  %v34 = vmul.f32 %v30, 0.5
  %v35 = vmul.f32 %v31, 0.5
  %v36 = vmul.f32 %v32, 0.5
  %v37 = vmul.f32 %v33, 0.5
  %v38 = vmul.f32 %v30, 0.70710677
  %v39 = vmul.f32 %v31, 0.70710677
  %v40 = vmul.f32 %v32, 0.70710677
  %v41 = vmul.f32 %v33, 0.70710677
  %vm42 = vcmp.ge.f32.partialorder %v38, 0.0
  %vm43 = vcmp.ge.f32.partialorder %v39, 0.0
  %vm44 = vcmp.ge.f32.partialorder %v40, 0.0
  %vm45 = vcmp.ge.f32.partialorder %v41, 0.0
  %v46 = vsel %vm42, 1.0, -1.0
  %v47 = vsel %vm43, 1.0, -1.0
  %v48 = vsel %vm44, 1.0, -1.0
  %v49 = vsel %vm45, 1.0, -1.0
  %v50 = vand.u32 2147483647, %v38
  %v51 = vand.u32 2147483647, %v39
  %v52 = vand.u32 2147483647, %v40
  %v53 = vand.u32 2147483647, %v41
  %v54 = vmul.f32 %v50, 0.3275911
  %v55 = vmul.f32 %v51, 0.3275911
  %v56 = vmul.f32 %v52, 0.3275911
  %v57 = vmul.f32 %v53, 0.3275911
  %v58 = vadd.f32 %v54, 1.0
  %v59 = vadd.f32 %v55, 1.0
  %v60 = vadd.f32 %v56, 1.0
  %v61 = vadd.f32 %v57, 1.0
  %v62 = vrcp.pop %v58
  %v63 = vmul.f32 %v58, %v62
  %v64 = vsub.f32 1.0, %v63
  %v65 = vmul.f32 %v62, %v64
  %v66 = vadd.f32 %v62, %v65
  %vm67 = vweird.f32 %v58
  %vm68 = vweird.f32 %v62
  %vm69 = vmor %vm67, %vm68
  %v70 = vsel %vm69, %v62, %v66
  %v71 = vand.u32 2147483647, %v58
  %vm72 = vcmp.eq.f32.partialorder %v71, 8.507059e+37
  %v73 = vand.u32 %v58, 2147483648
  %v74 = vor.u32 1.1754944e-38, %v73
  %v75 = vsel %vm72, %v74, %v70
  %v76 = vrcp.pop %v59
  %v77 = vmul.f32 %v59, %v76
  %v78 = vsub.f32 1.0, %v77
  %v79 = vmul.f32 %v76, %v78
  %v80 = vadd.f32 %v76, %v79
  %vm81 = vweird.f32 %v59
  %vm82 = vweird.f32 %v76
  %vm83 = vmor %vm81, %vm82
  %v84 = vsel %vm83, %v76, %v80
  %v85 = vand.u32 2147483647, %v59
  %vm86 = vcmp.eq.f32.partialorder %v85, 8.507059e+37
  %v87 = vand.u32 %v59, 2147483648
  %v88 = vor.u32 1.1754944e-38, %v87
  %v89 = vsel %vm86, %v88, %v84
  %v90 = vrcp.pop %v60
  %v91 = vmul.f32 %v60, %v90
  %v92 = vsub.f32 1.0, %v91
  %v93 = vmul.f32 %v90, %v92
  %v94 = vadd.f32 %v90, %v93
  %vm95 = vweird.f32 %v60
  %vm96 = vweird.f32 %v90
  %vm97 = vmor %vm95, %vm96
  %v98 = vsel %vm97, %v90, %v94
  %v99 = vand.u32 2147483647, %v60
  %vm100 = vcmp.eq.f32.partialorder %v99, 8.507059e+37
  %v101 = vand.u32 %v60, 2147483648
  %v102 = vor.u32 1.1754944e-38, %v101
  %v103 = vsel %vm100, %v102, %v98
  %v104 = vrcp.pop %v61
  %v105 = vmul.f32 %v61, %v104
  %v106 = vsub.f32 1.0, %v105
  %v107 = vmul.f32 %v104, %v106
  %v108 = vadd.f32 %v104, %v107
  %vm109 = vweird.f32 %v61
  %vm110 = vweird.f32 %v104
  %vm111 = vmor %vm109, %vm110
  %v112 = vsel %vm111, %v104, %v108
  %v113 = vand.u32 2147483647, %v61
  %vm114 = vcmp.eq.f32.partialorder %v113, 8.507059e+37
  %v115 = vand.u32 %v61, 2147483648
  %v116 = vor.u32 1.1754944e-38, %v115
  %v117 = vsel %vm114, %v116, %v112
  %v118 = vmul.f32 %v75, 1.0614054
  %v119 = vmul.f32 %v89, 1.0614054
  %v120 = vmul.f32 %v103, 1.0614054
  %v121 = vmul.f32 %v117, 1.0614054
  %v122 = vadd.f32 %v118, -1.4531521
  %v123 = vadd.f32 %v119, -1.4531521
  %v124 = vadd.f32 %v120, -1.4531521
  %v125 = vadd.f32 %v121, -1.4531521
  %v126 = vmul.f32 %v122, %v75
  %v127 = vmul.f32 %v123, %v89
  %v128 = vmul.f32 %v124, %v103
  %v129 = vmul.f32 %v125, %v117
  %v130 = vadd.f32 %v126, 1.4214138
  %v131 = vadd.f32 %v127, 1.4214138
  %v132 = vadd.f32 %v128, 1.4214138
  %v133 = vadd.f32 %v129, 1.4214138
  %v134 = vmul.f32 %v130, %v75
  %v135 = vmul.f32 %v131, %v89
  %v136 = vmul.f32 %v132, %v103
  %v137 = vmul.f32 %v133, %v117
  %v138 = vadd.f32 %v134, -0.28449672
  %v139 = vadd.f32 %v135, -0.28449672
  %v140 = vadd.f32 %v136, -0.28449672
  %v141 = vadd.f32 %v137, -0.28449672
  %v142 = vmul.f32 %v138, %v75
  %v143 = vmul.f32 %v139, %v89
  %v144 = vmul.f32 %v140, %v103
  %v145 = vmul.f32 %v141, %v117
  %v146 = vadd.f32 %v142, 0.2548296
  %v147 = vadd.f32 %v143, 0.2548296
  %v148 = vadd.f32 %v144, 0.2548296
  %v149 = vadd.f32 %v145, 0.2548296
  %v150 = vmul.f32 %v146, %v75
  %v151 = vmul.f32 %v147, %v89
  %v152 = vmul.f32 %v148, %v103
  %v153 = vmul.f32 %v149, %v117
  %v154 = vsub.f32 0.0, %v50
  %v155 = vsub.f32 0.0, %v51
  %v156 = vsub.f32 0.0, %v52
  %v157 = vsub.f32 0.0, %v53
  %v158 = vmul.f32 %v154, %v50
  %v159 = vmul.f32 %v155, %v51
  %v160 = vmul.f32 %v156, %v52
  %v161 = vmul.f32 %v157, %v53
  %v162 = vmul.f32 %v158, 1.442695
  %v163 = vpow.pop %v162
  %v164 = vmul.f32 %v159, 1.442695
  %v165 = vpow.pop %v164
  %v166 = vmul.f32 %v160, 1.442695
  %v167 = vpow.pop %v166
  %v168 = vmul.f32 %v161, 1.442695
  %v169 = vpow.pop %v168
  %v170 = vmul.f32 %v150, %v163
  %v171 = vmul.f32 %v151, %v165
  %v172 = vmul.f32 %v152, %v167
  %v173 = vmul.f32 %v153, %v169
  %v174 = vsub.f32 1.0, %v170
  %v175 = vsub.f32 1.0, %v171
  %v176 = vsub.f32 1.0, %v172
  %v177 = vsub.f32 1.0, %v173
  %v178 = vmul.f32 %v46, %v174
  %v179 = vmul.f32 %v47, %v175
  %v180 = vmul.f32 %v48, %v176
  %v181 = vmul.f32 %v49, %v177
  %v182 = vadd.f32 %v178, 1.0
  %v183 = vadd.f32 %v179, 1.0
  %v184 = vadd.f32 %v180, 1.0
  %v185 = vadd.f32 %v181, 1.0
  %v186 = vmul.f32 %v34, %v182
  %v187 = vmul.f32 %v35, %v183
  %v188 = vmul.f32 %v36, %v184
  %v189 = vmul.f32 %v37, %v185
  %190 = vst [vmem:[%s3] sm:$0xff] %v186
  %191 = vst [vmem:[%s3 + $0x8] sm:$0xff] %v187
  %192 = vst [vmem:[%s3 + $0x10] sm:$0xff] %v188
  %193 = vst [vmem:[%s3 + $0x18] sm:$0xff] %v189
  // Predicated region
  $region14: #{phd_net_res_forward.32} parent=0 // pred_check
    _
  $region15: #{phd_net_res_forward.32} parent=0 // pred_check_branch
    %195 = sbr.rel (0) target = $region17
  $region16: #{phd_net_res_forward.32} parent=0 // pred_region
    _
  $region17: #{phd_net_res_forward.32} parent=0 // pred_fallthru
    _
  // Predicated region
  $region18: #{phd_net_res_forward.32} parent=0 // pred_check
    _
  $region19: #{phd_net_res_forward.32} parent=0 // pred_check_branch
    %197 = sbr.rel (0) target = $region21
  $region20: #{phd_net_res_forward.32} parent=0 // pred_region
    _
  $region21: #{phd_net_res_forward.32} parent=0 // pred_fallthru
    _

// kernel: phd_net_res_forward.33
$region0: #{phd_net_res_forward.33}
  #allocation0 [shape = 'u32[]', space=smem, size = 0x4, offset = 0x4, fixed_abs, tag = 'smem constant byte address 0x4 - core index']
  #allocation1 [shape = 'u32[72,128]{1,0:T(1,128)}', space=vmem, size = 0x9000, scoped, tag = 'internal scratch']
  %s0 = inlined_call_operand.vmem [shape: f32[128,288], index: 0, kind: input, shape index: {}]
  %s1 = inlined_call_operand.vmem [shape: f32[288,32], index: 1, kind: input, shape index: {}]
  %s2 = inlined_call_operand.vmem [shape: f32[128,32], index: 2, kind: output, shape index: {0}]
  %s3 = inlined_call_operand.vmem [shape: f32[1,32], index: 3, kind: output, shape index: {1}]
  %s4 = inlined_call_operand.vmem [shape: f32[1,32], index: 4, kind: output, shape index: {2}]
  %5 = xla_tuple %s2, %s3, %s4
  %s6 = sld [smem:[#allocation0]]
  $region38: #{phd_net_res_forward.33} parent=0
    _
  %s8 = ssub.s32 1, %s6
  %s9 = scalar_select 0, %s8, %s6
  // Predicated region
  $region2: #{phd_net_res_forward.33} parent=0 // pred_check
    _
  $region3: #{phd_net_res_forward.33} parent=0 // pred_check_branch
    %11 = sbr.rel (0) target = $region5
  $region4: #{phd_net_res_forward.33} parent=0 // pred_region
    _
  $region5: #{phd_net_res_forward.33} parent=0 // pred_fallthru
    _
  // Predicated region
  $region6: #{phd_net_res_forward.33} parent=0 // pred_check
    _
  $region7: #{phd_net_res_forward.33} parent=0 // pred_check_branch
    %13 = sbr.rel (0) target = $region9
  $region8: #{phd_net_res_forward.33} parent=0 // pred_region
    _
  $region9: #{phd_net_res_forward.33} parent=0 // pred_fallthru
    _
  %p14 = scmp.eq.s32.totalorder 0, 0
  // Predicated region
  $region10: #{phd_net_res_forward.33} parent=0 // pred_check
    %p15 = pneg %p14
  $region11: #{phd_net_res_forward.33} parent=0 // pred_check_branch
    %17 = sbr.rel (%p15) target = $region13
  $region12: #{phd_net_res_forward.33} parent=0 // pred_region
    %vm18 = vcmask 253952
    %19 = vst.msk [vmem:[%s3] sm:$0x1] %vm18, 0.0
    %20 = vst.msk [vmem:[%s4] sm:$0x1] %vm18, 0.0
  $region13: #{phd_net_res_forward.33} parent=0 // pred_fallthru
    _
  %v21 = vld [vmem:[%s0] sm:$0xff]
  %v22 = vld [vmem:[%s0 + $0x8] sm:$0xff]
  %v23 = vld [vmem:[%s0 + $0x10] sm:$0xff]
  %v24 = vld [vmem:[%s0 + $0x18] sm:$0xff]
  %v25 = vld [vmem:[%s0 + $0x20] sm:$0xff]
  %v26 = vld [vmem:[%s0 + $0x28] sm:$0xff]
  %v27 = vld [vmem:[%s0 + $0x30] sm:$0xff]
  %v28 = vld [vmem:[%s0 + $0x38] sm:$0xff]
  %v29 = vld [vmem:[%s0 + $0x40] sm:$0xff]
  %v30 = vld [vmem:[%s0 + $0x48] sm:$0xff]
  %v31 = vld [vmem:[%s0 + $0x50] sm:$0xff]
  %v32 = vld [vmem:[%s0 + $0x58] sm:$0xff]
  %v33 = vld [vmem:[%s0 + $0x60] sm:$0xff]
  %v34 = vld [vmem:[%s0 + $0x68] sm:$0xff]
  %v35 = vld [vmem:[%s0 + $0x70] sm:$0xff]
  %v36 = vld [vmem:[%s0 + $0x78] sm:$0xff]
  %v37 = vld [vmem:[%s0 + $0x80] sm:$0xff]
  %v38 = vld [vmem:[%s0 + $0x88] sm:$0xff]
  %v39 = vld [vmem:[%s0 + $0x90] sm:$0xff]
  %v40 = vld [vmem:[%s0 + $0x98] sm:$0xff]
  %v41 = vld [vmem:[%s0 + $0xa0] sm:$0xff]
  %v42 = vld [vmem:[%s0 + $0xa8] sm:$0xff]
  %v43 = vld [vmem:[%s0 + $0xb0] sm:$0xff]
  %v44 = vld [vmem:[%s0 + $0xb8] sm:$0xff]
  %v45 = vld [vmem:[%s0 + $0xc0] sm:$0xff]
  %v46 = vld [vmem:[%s0 + $0xc8] sm:$0xff]
  %v47 = vld [vmem:[%s0 + $0xd0] sm:$0xff]
  %v48 = vld [vmem:[%s0 + $0xd8] sm:$0xff]
  %v49 = vld [vmem:[%s0 + $0xe0] sm:$0xff]
  %v50 = vld [vmem:[%s0 + $0xe8] sm:$0xff]
  %v51 = vld [vmem:[%s0 + $0xf0] sm:$0xff]
  %v52 = vld [vmem:[%s0 + $0xf8] sm:$0xff]
  %v53 = vld [vmem:[%s0 + $0x100] sm:$0xff]
  %v54 = vld [vmem:[%s0 + $0x108] sm:$0xff]
  %v55 = vld [vmem:[%s0 + $0x110] sm:$0xff]
  %v56 = vld [vmem:[%s0 + $0x118] sm:$0xff]
  %v57 = vld [vmem:[%s0 + $0x120] sm:$0xff]
  %v58 = vld [vmem:[%s0 + $0x128] sm:$0xff]
  %v59 = vld [vmem:[%s0 + $0x130] sm:$0xff]
  %v60 = vld [vmem:[%s0 + $0x138] sm:$0xff]
  %v61 = vld [vmem:[%s0 + $0x140] sm:$0xff]
  %v62 = vld [vmem:[%s0 + $0x148] sm:$0xff]
  %v63 = vld [vmem:[%s0 + $0x150] sm:$0xff]
  %v64 = vld [vmem:[%s0 + $0x158] sm:$0xff]
  %v65 = vld [vmem:[%s0 + $0x160] sm:$0xff]
  %v66 = vld [vmem:[%s0 + $0x168] sm:$0xff]
  %v67 = vld [vmem:[%s0 + $0x170] sm:$0xff]
  %v68 = vld [vmem:[%s0 + $0x178] sm:$0xff]
  %v69 = vld [vmem:[%s1] sm:$0xff]
  %v70 = vld [vmem:[%s1 + $0x8] sm:$0xff]
  %v71 = vld [vmem:[%s1 + $0x10] sm:$0xff]
  %v72 = vld [vmem:[%s1 + $0x18] sm:$0xff]
  %v73 = vld [vmem:[%s1 + $0x20] sm:$0xff]
  %v74 = vld [vmem:[%s1 + $0x28] sm:$0xff]
  %v75 = vld [vmem:[%s1 + $0x30] sm:$0xff]
  %v76 = vld [vmem:[%s1 + $0x38] sm:$0xff]
  %v77 = vld [vmem:[%s1 + $0x40] sm:$0xff]
  %v78 = vld [vmem:[%s1 + $0x48] sm:$0xff]
  %v79 = vld [vmem:[%s1 + $0x50] sm:$0xff]
  %v80 = vld [vmem:[%s1 + $0x58] sm:$0xff]
  %v81 = vld [vmem:[%s1 + $0x60] sm:$0xff]
  %v82 = vld [vmem:[%s1 + $0x68] sm:$0xff]
  %v83 = vld [vmem:[%s1 + $0x70] sm:$0xff]
  %v84 = vld [vmem:[%s1 + $0x78] sm:$0xff]
  %v85 = vld [vmem:[%s1 + $0x80] sm:$0xff]
  %v86 = vld [vmem:[%s1 + $0x88] sm:$0xff]
  %v87 = vld [vmem:[%s1 + $0x90] sm:$0xff]
  %v88 = vld [vmem:[%s1 + $0x98] sm:$0xff]
  %v89 = vld [vmem:[%s1 + $0xa0] sm:$0xff]
  %v90 = vld [vmem:[%s1 + $0xa8] sm:$0xff]
  %v91 = vld [vmem:[%s1 + $0xb0] sm:$0xff]
  %v92 = vld [vmem:[%s1 + $0xb8] sm:$0xff]
  %v93 = vld [vmem:[%s1 + $0xc0] sm:$0xff]
  %v94 = vld [vmem:[%s1 + $0xc8] sm:$0xff]
  %v95 = vld [vmem:[%s1 + $0xd0] sm:$0xff]
  %v96 = vld [vmem:[%s1 + $0xd8] sm:$0xff]
  %v97 = vld [vmem:[%s1 + $0xe0] sm:$0xff]
  %v98 = vld [vmem:[%s1 + $0xe8] sm:$0xff]
  %v99 = vld [vmem:[%s1 + $0xf0] sm:$0xff]
  %v100 = vld [vmem:[%s1 + $0xf8] sm:$0xff]
  %v101 = vld [vmem:[%s1 + $0x100] sm:$0xff]
  %v102 = vld [vmem:[%s1 + $0x108] sm:$0xff]
  %v103 = vld [vmem:[%s1 + $0x110] sm:$0xff]
  %v104 = vld [vmem:[%s1 + $0x118] sm:$0xff]
  %vm105 = vcmask 261120
  %v107 = vsel %vm105, %v23, 0
  %v110 = vsel %vm105, %v26, 0
  %v113 = vsel %vm105, %v29, 0
  %v116 = vsel %vm105, %v32, 0
  %v119 = vsel %vm105, %v35, 0
  %v122 = vsel %vm105, %v38, 0
  %v125 = vsel %vm105, %v41, 0
  %v128 = vsel %vm105, %v44, 0
  %v131 = vsel %vm105, %v47, 0
  %v134 = vsel %vm105, %v50, 0
  %v137 = vsel %vm105, %v53, 0
  %v140 = vsel %vm105, %v56, 0
  %v143 = vsel %vm105, %v59, 0
  %v146 = vsel %vm105, %v62, 0
  %v149 = vsel %vm105, %v65, 0
  %v152 = vsel %vm105, %v68, 0
  %154 = vmatpush.msra.mxu0 %v84
  %155 = vmatpush.msra.mxu0 %v83
  %156 = vmatpush.msra.mxu0 %v82
  %157 = vmatpush.msra.mxu0 %v81
  %158 = vmatpush.msra.mxu0 %v80
  %159 = vmatpush.msra.mxu0 %v79
  %160 = vmatpush.msra.mxu0 %v78
  %161 = vmatpush.msra.mxu0 %v77
  %162 = vmatpush.msra.mxu0 %v76
  %163 = vmatpush.msra.mxu0 %v75
  %164 = vmatpush.msra.mxu0 %v74
  %165 = vmatpush.msra.mxu0 %v73
  %166 = vmatpush.msra.mxu0 %v72
  %167 = vmatpush.msra.mxu0 %v71
  %168 = vmatpush.msra.mxu0 %v70
  %169 = vmatpush.msra.mxu0 %v69
  %170 = vmatmul.f32.gmra.mxu0 %v21
  %v171 = vpop.f32.mrf.mxu0
  %v172 = vadd.f32 0.0, %v171
  %173 = vmatmul.f32.gmra.mxu0 %v24
  %v174 = vpop.f32.mrf.mxu0
  %v175 = vadd.f32 0.0, %v174
  %176 = vmatmul.f32.gmra.mxu0 %v27
  %v177 = vpop.f32.mrf.mxu0
  %v178 = vadd.f32 0.0, %v177
  %179 = vmatmul.f32.gmra.mxu0 %v30
  %v180 = vpop.f32.mrf.mxu0
  %v181 = vadd.f32 0.0, %v180
  %182 = vmatmul.f32.gmra.mxu0 %v33
  %v183 = vpop.f32.mrf.mxu0
  %v184 = vadd.f32 0.0, %v183
  %185 = vmatmul.f32.gmra.mxu0 %v36
  %v186 = vpop.f32.mrf.mxu0
  %v187 = vadd.f32 0.0, %v186
  %188 = vmatmul.f32.gmra.mxu0 %v39
  %v189 = vpop.f32.mrf.mxu0
  %v190 = vadd.f32 0.0, %v189
  %191 = vmatmul.f32.gmra.mxu0 %v42
  %v192 = vpop.f32.mrf.mxu0
  %v193 = vadd.f32 0.0, %v192
  %194 = vmatmul.f32.gmra.mxu0 %v45
  %v195 = vpop.f32.mrf.mxu0
  %v196 = vadd.f32 0.0, %v195
  %197 = vmatmul.f32.gmra.mxu0 %v48
  %v198 = vpop.f32.mrf.mxu0
  %v199 = vadd.f32 0.0, %v198
  %200 = vmatmul.f32.gmra.mxu0 %v51
  %v201 = vpop.f32.mrf.mxu0
  %v202 = vadd.f32 0.0, %v201
  %203 = vmatmul.f32.gmra.mxu0 %v54
  %v204 = vpop.f32.mrf.mxu0
  %v205 = vadd.f32 0.0, %v204
  %206 = vmatmul.f32.gmra.mxu0 %v57
  %v207 = vpop.f32.mrf.mxu0
  %v208 = vadd.f32 0.0, %v207
  %209 = vmatmul.f32.gmra.mxu0 %v60
  %v210 = vpop.f32.mrf.mxu0
  %v211 = vadd.f32 0.0, %v210
  %212 = vmatmul.f32.gmra.mxu0 %v63
  %v213 = vpop.f32.mrf.mxu0
  %v214 = vadd.f32 0.0, %v213
  %215 = vmatmul.f32.gmra.mxu0 %v66
  %v216 = vpop.f32.mrf.mxu0
  %v217 = vadd.f32 0.0, %v216
  %218 = vdwg.mxu0
  %219 = vmatpush.msra.mxu0 %v100
  %220 = vmatpush.msra.mxu0 %v99
  %221 = vmatpush.msra.mxu0 %v98
  %222 = vmatpush.msra.mxu0 %v97
  %223 = vmatpush.msra.mxu0 %v96
  %224 = vmatpush.msra.mxu0 %v95
  %225 = vmatpush.msra.mxu0 %v94
  %226 = vmatpush.msra.mxu0 %v93
  %227 = vmatpush.msra.mxu0 %v92
  %228 = vmatpush.msra.mxu0 %v91
  %229 = vmatpush.msra.mxu0 %v90
  %230 = vmatpush.msra.mxu0 %v89
  %231 = vmatpush.msra.mxu0 %v88
  %232 = vmatpush.msra.mxu0 %v87
  %233 = vmatpush.msra.mxu0 %v86
  %234 = vmatpush.msra.mxu0 %v85
  %235 = vmatmul.f32.gmra.mxu0 %v22
  %v236 = vpop.f32.mrf.mxu0
  %v237 = vadd.f32 %v172, %v236
  %238 = vmatmul.f32.gmra.mxu0 %v25
  %v239 = vpop.f32.mrf.mxu0
  %v240 = vadd.f32 %v175, %v239
  %241 = vmatmul.f32.gmra.mxu0 %v28
  %v242 = vpop.f32.mrf.mxu0
  %v243 = vadd.f32 %v178, %v242
  %244 = vmatmul.f32.gmra.mxu0 %v31
  %v245 = vpop.f32.mrf.mxu0
  %v246 = vadd.f32 %v181, %v245
  %247 = vmatmul.f32.gmra.mxu0 %v34
  %v248 = vpop.f32.mrf.mxu0
  %v249 = vadd.f32 %v184, %v248
  %250 = vmatmul.f32.gmra.mxu0 %v37
  %v251 = vpop.f32.mrf.mxu0
  %v252 = vadd.f32 %v187, %v251
  %253 = vmatmul.f32.gmra.mxu0 %v40
  %v254 = vpop.f32.mrf.mxu0
  %v255 = vadd.f32 %v190, %v254
  %256 = vmatmul.f32.gmra.mxu0 %v43
  %v257 = vpop.f32.mrf.mxu0
  %v258 = vadd.f32 %v193, %v257
  %259 = vmatmul.f32.gmra.mxu0 %v46
  %v260 = vpop.f32.mrf.mxu0
  %v261 = vadd.f32 %v196, %v260
  %262 = vmatmul.f32.gmra.mxu0 %v49
  %v263 = vpop.f32.mrf.mxu0
  %v264 = vadd.f32 %v199, %v263
  %265 = vmatmul.f32.gmra.mxu0 %v52
  %v266 = vpop.f32.mrf.mxu0
  %v267 = vadd.f32 %v202, %v266
  %268 = vmatmul.f32.gmra.mxu0 %v55
  %v269 = vpop.f32.mrf.mxu0
  %v270 = vadd.f32 %v205, %v269
  %271 = vmatmul.f32.gmra.mxu0 %v58
  %v272 = vpop.f32.mrf.mxu0
  %v273 = vadd.f32 %v208, %v272
  %274 = vmatmul.f32.gmra.mxu0 %v61
  %v275 = vpop.f32.mrf.mxu0
  %v276 = vadd.f32 %v211, %v275
  %277 = vmatmul.f32.gmra.mxu0 %v64
  %v278 = vpop.f32.mrf.mxu0
  %v279 = vadd.f32 %v214, %v278
  %280 = vmatmul.f32.gmra.mxu0 %v67
  %v281 = vpop.f32.mrf.mxu0
  %v282 = vadd.f32 %v217, %v281
  %283 = vdwg.mxu0
  %284 = vmatpush.msra.mxu0 0.0
  %285 = vmatpush.msra.mxu0 0.0
  %286 = vmatpush.msra.mxu0 0.0
  %287 = vmatpush.msra.mxu0 0.0
  %288 = vmatpush.msra.mxu0 0.0
  %289 = vmatpush.msra.mxu0 0.0
  %290 = vmatpush.msra.mxu0 0.0
  %291 = vmatpush.msra.mxu0 0.0
  %292 = vmatpush.msra.mxu0 0.0
  %293 = vmatpush.msra.mxu0 0.0
  %294 = vmatpush.msra.mxu0 0.0
  %295 = vmatpush.msra.mxu0 0.0
  %296 = vmatpush.msra.mxu0 %v104
  %297 = vmatpush.msra.mxu0 %v103
  %298 = vmatpush.msra.mxu0 %v102
  %299 = vmatpush.msra.mxu0 %v101
  %300 = vmatmul.f32.gmra.mxu0 %v107
  %v301 = vpop.f32.mrf.mxu0
  %v302 = vadd.f32 %v237, %v301
  %303 = vmatmul.f32.gmra.mxu0 %v110
  %v304 = vpop.f32.mrf.mxu0
  %v305 = vadd.f32 %v240, %v304
  %306 = vmatmul.f32.gmra.mxu0 %v113
  %v307 = vpop.f32.mrf.mxu0
  %v308 = vadd.f32 %v243, %v307
  %309 = vmatmul.f32.gmra.mxu0 %v116
  %v310 = vpop.f32.mrf.mxu0
  %v311 = vadd.f32 %v246, %v310
  %312 = vmatmul.f32.gmra.mxu0 %v119
  %v313 = vpop.f32.mrf.mxu0
  %v314 = vadd.f32 %v249, %v313
  %315 = vmatmul.f32.gmra.mxu0 %v122
  %v316 = vpop.f32.mrf.mxu0
  %v317 = vadd.f32 %v252, %v316
  %318 = vmatmul.f32.gmra.mxu0 %v125
  %v319 = vpop.f32.mrf.mxu0
  %v320 = vadd.f32 %v255, %v319
  %321 = vmatmul.f32.gmra.mxu0 %v128
  %v322 = vpop.f32.mrf.mxu0
  %v323 = vadd.f32 %v258, %v322
  %324 = vmatmul.f32.gmra.mxu0 %v131
  %v325 = vpop.f32.mrf.mxu0
  %v326 = vadd.f32 %v261, %v325
  %327 = vmatmul.f32.gmra.mxu0 %v134
  %v328 = vpop.f32.mrf.mxu0
  %v329 = vadd.f32 %v264, %v328
  %330 = vmatmul.f32.gmra.mxu0 %v137
  %v331 = vpop.f32.mrf.mxu0
  %v332 = vadd.f32 %v267, %v331
  %333 = vmatmul.f32.gmra.mxu0 %v140
  %v334 = vpop.f32.mrf.mxu0
  %v335 = vadd.f32 %v270, %v334
  %336 = vmatmul.f32.gmra.mxu0 %v143
  %v337 = vpop.f32.mrf.mxu0
  %v338 = vadd.f32 %v273, %v337
  %339 = vmatmul.f32.gmra.mxu0 %v146
  %v340 = vpop.f32.mrf.mxu0
  %v341 = vadd.f32 %v276, %v340
  %342 = vmatmul.f32.gmra.mxu0 %v149
  %v343 = vpop.f32.mrf.mxu0
  %v344 = vadd.f32 %v279, %v343
  %345 = vmatmul.f32.gmra.mxu0 %v152
  %v346 = vpop.f32.mrf.mxu0
  %v347 = vadd.f32 %v282, %v346
  %348 = vdwg.mxu0
  %349 = vst.msk [vmem:[%s2] sm:$0xff] %vm105, %v302
  %350 = vst.msk [vmem:[%s2 + $0x8] sm:$0xff] %vm105, %v305
  %351 = vst.msk [vmem:[%s2 + $0x10] sm:$0xff] %vm105, %v308
  %352 = vst.msk [vmem:[%s2 + $0x18] sm:$0xff] %vm105, %v311
  %353 = vst.msk [vmem:[%s2 + $0x20] sm:$0xff] %vm105, %v314
  %354 = vst.msk [vmem:[%s2 + $0x28] sm:$0xff] %vm105, %v317
  %355 = vst.msk [vmem:[%s2 + $0x30] sm:$0xff] %vm105, %v320
  %356 = vst.msk [vmem:[%s2 + $0x38] sm:$0xff] %vm105, %v323
  %357 = vst.msk [vmem:[%s2 + $0x40] sm:$0xff] %vm105, %v326
  %358 = vst.msk [vmem:[%s2 + $0x48] sm:$0xff] %vm105, %v329
  %359 = vst.msk [vmem:[%s2 + $0x50] sm:$0xff] %vm105, %v332
  %360 = vst.msk [vmem:[%s2 + $0x58] sm:$0xff] %vm105, %v335
  %361 = vst.msk [vmem:[%s2 + $0x60] sm:$0xff] %vm105, %v338
  %362 = vst.msk [vmem:[%s2 + $0x68] sm:$0xff] %vm105, %v341
  %363 = vst.msk [vmem:[%s2 + $0x70] sm:$0xff] %vm105, %v344
  %364 = vst.msk [vmem:[%s2 + $0x78] sm:$0xff] %vm105, %v347
  %v365 = vld [vmem:[%s3] sm:$0x1]
  %v366 = vsel %vm105, %v302, 0.0
  %v367 = vsel %vm105, %v305, 0.0
  %v368 = vadd.f32 %v366, %v367
  %v369 = vsel %vm105, %v308, 0.0
  %v370 = vadd.f32 %v368, %v369
  %v371 = vsel %vm105, %v311, 0.0
  %v372 = vadd.f32 %v370, %v371
  %v373 = vsel %vm105, %v314, 0.0
  %v374 = vadd.f32 %v372, %v373
  %v375 = vsel %vm105, %v317, 0.0
  %v376 = vadd.f32 %v374, %v375
  %v377 = vsel %vm105, %v320, 0.0
  %v378 = vadd.f32 %v376, %v377
  %v379 = vsel %vm105, %v323, 0.0
  %v380 = vadd.f32 %v378, %v379
  %v381 = vsel %vm105, %v326, 0.0
  %v382 = vadd.f32 %v380, %v381
  %v383 = vsel %vm105, %v329, 0.0
  %v384 = vadd.f32 %v382, %v383
  %v385 = vsel %vm105, %v332, 0.0
  %v386 = vadd.f32 %v384, %v385
  %v387 = vsel %vm105, %v335, 0.0
  %v388 = vadd.f32 %v386, %v387
  %v389 = vsel %vm105, %v338, 0.0
  %v390 = vadd.f32 %v388, %v389
  %v391 = vsel %vm105, %v341, 0.0
  %v392 = vadd.f32 %v390, %v391
  %v393 = vsel %vm105, %v344, 0.0
  %v394 = vadd.f32 %v392, %v393
  %v395 = vsel %vm105, %v347, 0.0
  %v396 = vadd.f32 %v394, %v395
  %v397 = vrot.slane %v396, 4
  %v398 = vadd.f32 %v396, %v397
  %v399 = vrot.slane %v398, 2
  %v400 = vadd.f32 %v398, %v399
  %v401 = vrot.slane %v400, 1
  %v402 = vadd.f32 %v400, %v401
  %v403 = vadd.f32 %v365, %v402
  %vm404 = vcmask 253952
  %405 = vst.msk [vmem:[%s3] sm:$0x1] %vm404, %v403
  %v406 = vld [vmem:[%s4] sm:$0x1]
  %v407 = vmul.f32 %v302, %v302
  %v408 = vmul.f32 %v305, %v305
  %v409 = vmul.f32 %v308, %v308
  %v410 = vmul.f32 %v311, %v311
  %v411 = vmul.f32 %v314, %v314
  %v412 = vmul.f32 %v317, %v317
  %v413 = vmul.f32 %v320, %v320
  %v414 = vmul.f32 %v323, %v323
  %v415 = vmul.f32 %v326, %v326
  %v416 = vmul.f32 %v329, %v329
  %v417 = vmul.f32 %v332, %v332
  %v418 = vmul.f32 %v335, %v335
  %v419 = vmul.f32 %v338, %v338
  %v420 = vmul.f32 %v341, %v341
  %v421 = vmul.f32 %v344, %v344
  %v422 = vmul.f32 %v347, %v347
  %v423 = vsel %vm105, %v407, 0.0
  %v424 = vsel %vm105, %v408, 0.0
  %v425 = vadd.f32 %v423, %v424
  %v426 = vsel %vm105, %v409, 0.0
  %v427 = vadd.f32 %v425, %v426
  %v428 = vsel %vm105, %v410, 0.0
  %v429 = vadd.f32 %v427, %v428
  %v430 = vsel %vm105, %v411, 0.0
  %v431 = vadd.f32 %v429, %v430
  %v432 = vsel %vm105, %v412, 0.0
  %v433 = vadd.f32 %v431, %v432
  %v434 = vsel %vm105, %v413, 0.0
  %v435 = vadd.f32 %v433, %v434
  %v436 = vsel %vm105, %v414, 0.0
  %v437 = vadd.f32 %v435, %v436
  %v438 = vsel %vm105, %v415, 0.0
  %v439 = vadd.f32 %v437, %v438
  %v440 = vsel %vm105, %v416, 0.0
  %v441 = vadd.f32 %v439, %v440
  %v442 = vsel %vm105, %v417, 0.0
  %v443 = vadd.f32 %v441, %v442
  %v444 = vsel %vm105, %v418, 0.0
  %v445 = vadd.f32 %v443, %v444
  %v446 = vsel %vm105, %v419, 0.0
  %v447 = vadd.f32 %v445, %v446
  %v448 = vsel %vm105, %v420, 0.0
  %v449 = vadd.f32 %v447, %v448
  %v450 = vsel %vm105, %v421, 0.0
  %v451 = vadd.f32 %v449, %v450
  %v452 = vsel %vm105, %v422, 0.0
  %v453 = vadd.f32 %v451, %v452
  %v454 = vrot.slane %v453, 4
  %v455 = vadd.f32 %v453, %v454
  %v456 = vrot.slane %v455, 2
  %v457 = vadd.f32 %v455, %v456
  %v458 = vrot.slane %v457, 1
  %v459 = vadd.f32 %v457, %v458
  %v460 = vadd.f32 %v406, %v459
  %461 = vst.msk [vmem:[%s4] sm:$0x1] %vm404, %v460
  // Predicated region
  $region14: #{phd_net_res_forward.33} parent=0 // pred_check
    _
  $region15: #{phd_net_res_forward.33} parent=0 // pred_check_branch
    %463 = sbr.rel (0) target = $region17
  $region16: #{phd_net_res_forward.33} parent=0 // pred_region
    _
  $region17: #{phd_net_res_forward.33} parent=0 // pred_fallthru
    _
  // Predicated region
  $region18: #{phd_net_res_forward.33} parent=0 // pred_check
    _
  $region19: #{phd_net_res_forward.33} parent=0 // pred_check_branch
    %465 = sbr.rel (0) target = $region21
  $region20: #{phd_net_res_forward.33} parent=0 // pred_region
    _
  $region21: #{phd_net_res_forward.33} parent=0 // pred_fallthru
    _
  // Predicated region
  $region22: #{phd_net_res_forward.33} parent=0 // pred_check
    _
  $region23: #{phd_net_res_forward.33} parent=0 // pred_check_branch
    %467 = sbr.rel (0) target = $region25
  $region24: #{phd_net_res_forward.33} parent=0 // pred_region
    _
  $region25: #{phd_net_res_forward.33} parent=0 // pred_fallthru
    _
  // Predicated region
  $region26: #{phd_net_res_forward.33} parent=0 // pred_check
    _
  $region27: #{phd_net_res_forward.33} parent=0 // pred_check_branch
    %469 = sbr.rel (0) target = $region29
  $region28: #{phd_net_res_forward.33} parent=0 // pred_region
    _
  $region29: #{phd_net_res_forward.33} parent=0 // pred_fallthru
    _
  // Predicated region
  $region30: #{phd_net_res_forward.33} parent=0 // pred_check
    _
  $region31: #{phd_net_res_forward.33} parent=0 // pred_check_branch
    %471 = sbr.rel (0) target = $region33
  $region32: #{phd_net_res_forward.33} parent=0 // pred_region
    _
  $region33: #{phd_net_res_forward.33} parent=0 // pred_fallthru
    _
  // Predicated region
  $region34: #{phd_net_res_forward.33} parent=0 // pred_check
    _
  $region35: #{phd_net_res_forward.33} parent=0 // pred_check_branch
    %473 = sbr.rel (0) target = $region37
  $region36: #{phd_net_res_forward.33} parent=0 // pred_region
    _
  $region37: #{phd_net_res_forward.33} parent=0 // pred_fallthru
    _

// kernel: phd_net_res_forward.37
$region0: #{phd_net_res_forward.37}
  #allocation0 [shape = 'u32[]', space=smem, size = 0x4, offset = 0x4, fixed_abs, tag = 'smem constant byte address 0x4 - core index']
  #allocation1 [shape = 'u32[72,128]{1,0:T(1,128)}', space=vmem, size = 0x9000, scoped, tag = 'internal scratch']
  %s0 = inlined_call_operand.vmem [shape: f32[128,288], index: 0, kind: input, shape index: {}]
  %s1 = inlined_call_operand.vmem [shape: f32[288,64], index: 1, kind: input, shape index: {}]
  %s2 = inlined_call_operand.vmem [shape: f32[128,64], index: 2, kind: output, shape index: {}]
  %s3 = sld [smem:[#allocation0]]
  $region18: #{phd_net_res_forward.37} parent=0
    _
  %s5 = ssub.s32 1, %s3
  %s6 = scalar_select 0, %s5, %s3
  // Predicated region
  $region2: #{phd_net_res_forward.37} parent=0 // pred_check
    _
  $region3: #{phd_net_res_forward.37} parent=0 // pred_check_branch
    %8 = sbr.rel (0) target = $region5
  $region4: #{phd_net_res_forward.37} parent=0 // pred_region
    _
  $region5: #{phd_net_res_forward.37} parent=0 // pred_fallthru
    _
  // Predicated region
  $region6: #{phd_net_res_forward.37} parent=0 // pred_check
    _
  $region7: #{phd_net_res_forward.37} parent=0 // pred_check_branch
    %10 = sbr.rel (0) target = $region9
  $region8: #{phd_net_res_forward.37} parent=0 // pred_region
    _
  $region9: #{phd_net_res_forward.37} parent=0 // pred_fallthru
    _
  %v11 = vld [vmem:[%s0] sm:$0xff]
  %v12 = vld [vmem:[%s0 + $0x8] sm:$0xff]
  %v13 = vld [vmem:[%s0 + $0x10] sm:$0xff]
  %v14 = vld [vmem:[%s0 + $0x18] sm:$0xff]
  %v15 = vld [vmem:[%s0 + $0x20] sm:$0xff]
  %v16 = vld [vmem:[%s0 + $0x28] sm:$0xff]
  %v17 = vld [vmem:[%s0 + $0x30] sm:$0xff]
  %v18 = vld [vmem:[%s0 + $0x38] sm:$0xff]
  %v19 = vld [vmem:[%s0 + $0x40] sm:$0xff]
  %v20 = vld [vmem:[%s0 + $0x48] sm:$0xff]
  %v21 = vld [vmem:[%s0 + $0x50] sm:$0xff]
  %v22 = vld [vmem:[%s0 + $0x58] sm:$0xff]
  %v23 = vld [vmem:[%s0 + $0x60] sm:$0xff]
  %v24 = vld [vmem:[%s0 + $0x68] sm:$0xff]
  %v25 = vld [vmem:[%s0 + $0x70] sm:$0xff]
  %v26 = vld [vmem:[%s0 + $0x78] sm:$0xff]
  %v27 = vld [vmem:[%s0 + $0x80] sm:$0xff]
  %v28 = vld [vmem:[%s0 + $0x88] sm:$0xff]
  %v29 = vld [vmem:[%s0 + $0x90] sm:$0xff]
  %v30 = vld [vmem:[%s0 + $0x98] sm:$0xff]
  %v31 = vld [vmem:[%s0 + $0xa0] sm:$0xff]
  %v32 = vld [vmem:[%s0 + $0xa8] sm:$0xff]
  %v33 = vld [vmem:[%s0 + $0xb0] sm:$0xff]
  %v34 = vld [vmem:[%s0 + $0xb8] sm:$0xff]
  %v35 = vld [vmem:[%s0 + $0xc0] sm:$0xff]
  %v36 = vld [vmem:[%s0 + $0xc8] sm:$0xff]
  %v37 = vld [vmem:[%s0 + $0xd0] sm:$0xff]
  %v38 = vld [vmem:[%s0 + $0xd8] sm:$0xff]
  %v39 = vld [vmem:[%s0 + $0xe0] sm:$0xff]
  %v40 = vld [vmem:[%s0 + $0xe8] sm:$0xff]
  %v41 = vld [vmem:[%s0 + $0xf0] sm:$0xff]
  %v42 = vld [vmem:[%s0 + $0xf8] sm:$0xff]
  %v43 = vld [vmem:[%s0 + $0x100] sm:$0xff]
  %v44 = vld [vmem:[%s0 + $0x108] sm:$0xff]
  %v45 = vld [vmem:[%s0 + $0x110] sm:$0xff]
  %v46 = vld [vmem:[%s0 + $0x118] sm:$0xff]
  %v47 = vld [vmem:[%s0 + $0x120] sm:$0xff]
  %v48 = vld [vmem:[%s0 + $0x128] sm:$0xff]
  %v49 = vld [vmem:[%s0 + $0x130] sm:$0xff]
  %v50 = vld [vmem:[%s0 + $0x138] sm:$0xff]
  %v51 = vld [vmem:[%s0 + $0x140] sm:$0xff]
  %v52 = vld [vmem:[%s0 + $0x148] sm:$0xff]
  %v53 = vld [vmem:[%s0 + $0x150] sm:$0xff]
  %v54 = vld [vmem:[%s0 + $0x158] sm:$0xff]
  %v55 = vld [vmem:[%s0 + $0x160] sm:$0xff]
  %v56 = vld [vmem:[%s0 + $0x168] sm:$0xff]
  %v57 = vld [vmem:[%s0 + $0x170] sm:$0xff]
  %v58 = vld [vmem:[%s0 + $0x178] sm:$0xff]
  %v59 = vld [vmem:[%s1] sm:$0xff]
  %v60 = vld [vmem:[%s1 + $0x8] sm:$0xff]
  %v61 = vld [vmem:[%s1 + $0x10] sm:$0xff]
  %v62 = vld [vmem:[%s1 + $0x18] sm:$0xff]
  %v63 = vld [vmem:[%s1 + $0x20] sm:$0xff]
  %v64 = vld [vmem:[%s1 + $0x28] sm:$0xff]
  %v65 = vld [vmem:[%s1 + $0x30] sm:$0xff]
  %v66 = vld [vmem:[%s1 + $0x38] sm:$0xff]
  %v67 = vld [vmem:[%s1 + $0x40] sm:$0xff]
  %v68 = vld [vmem:[%s1 + $0x48] sm:$0xff]
  %v69 = vld [vmem:[%s1 + $0x50] sm:$0xff]
  %v70 = vld [vmem:[%s1 + $0x58] sm:$0xff]
  %v71 = vld [vmem:[%s1 + $0x60] sm:$0xff]
  %v72 = vld [vmem:[%s1 + $0x68] sm:$0xff]
  %v73 = vld [vmem:[%s1 + $0x70] sm:$0xff]
  %v74 = vld [vmem:[%s1 + $0x78] sm:$0xff]
  %v75 = vld [vmem:[%s1 + $0x80] sm:$0xff]
  %v76 = vld [vmem:[%s1 + $0x88] sm:$0xff]
  %v77 = vld [vmem:[%s1 + $0x90] sm:$0xff]
  %v78 = vld [vmem:[%s1 + $0x98] sm:$0xff]
  %v79 = vld [vmem:[%s1 + $0xa0] sm:$0xff]
  %v80 = vld [vmem:[%s1 + $0xa8] sm:$0xff]
  %v81 = vld [vmem:[%s1 + $0xb0] sm:$0xff]
  %v82 = vld [vmem:[%s1 + $0xb8] sm:$0xff]
  %v83 = vld [vmem:[%s1 + $0xc0] sm:$0xff]
  %v84 = vld [vmem:[%s1 + $0xc8] sm:$0xff]
  %v85 = vld [vmem:[%s1 + $0xd0] sm:$0xff]
  %v86 = vld [vmem:[%s1 + $0xd8] sm:$0xff]
  %v87 = vld [vmem:[%s1 + $0xe0] sm:$0xff]
  %v88 = vld [vmem:[%s1 + $0xe8] sm:$0xff]
  %v89 = vld [vmem:[%s1 + $0xf0] sm:$0xff]
  %v90 = vld [vmem:[%s1 + $0xf8] sm:$0xff]
  %v91 = vld [vmem:[%s1 + $0x100] sm:$0xff]
  %v92 = vld [vmem:[%s1 + $0x108] sm:$0xff]
  %v93 = vld [vmem:[%s1 + $0x110] sm:$0xff]
  %v94 = vld [vmem:[%s1 + $0x118] sm:$0xff]
  %vm95 = vcmask 261120
  %v97 = vsel %vm95, %v13, 0
  %v100 = vsel %vm95, %v16, 0
  %v103 = vsel %vm95, %v19, 0
  %v106 = vsel %vm95, %v22, 0
  %v109 = vsel %vm95, %v25, 0
  %v112 = vsel %vm95, %v28, 0
  %v115 = vsel %vm95, %v31, 0
  %v118 = vsel %vm95, %v34, 0
  %v121 = vsel %vm95, %v37, 0
  %v124 = vsel %vm95, %v40, 0
  %v127 = vsel %vm95, %v43, 0
  %v130 = vsel %vm95, %v46, 0
  %v133 = vsel %vm95, %v49, 0
  %v136 = vsel %vm95, %v52, 0
  %v139 = vsel %vm95, %v55, 0
  %v142 = vsel %vm95, %v58, 0
  %144 = vmatpush.msra.mxu0 %v74
  %145 = vmatpush.msra.mxu0 %v73
  %146 = vmatpush.msra.mxu0 %v72
  %147 = vmatpush.msra.mxu0 %v71
  %148 = vmatpush.msra.mxu0 %v70
  %149 = vmatpush.msra.mxu0 %v69
  %150 = vmatpush.msra.mxu0 %v68
  %151 = vmatpush.msra.mxu0 %v67
  %152 = vmatpush.msra.mxu0 %v66
  %153 = vmatpush.msra.mxu0 %v65
  %154 = vmatpush.msra.mxu0 %v64
  %155 = vmatpush.msra.mxu0 %v63
  %156 = vmatpush.msra.mxu0 %v62
  %157 = vmatpush.msra.mxu0 %v61
  %158 = vmatpush.msra.mxu0 %v60
  %159 = vmatpush.msra.mxu0 %v59
  %160 = vmatmul.f32.gmra.mxu0 %v11
  %v161 = vpop.f32.mrf.mxu0
  %v162 = vadd.f32 0.0, %v161
  %163 = vmatmul.f32.gmra.mxu0 %v14
  %v164 = vpop.f32.mrf.mxu0
  %v165 = vadd.f32 0.0, %v164
  %166 = vmatmul.f32.gmra.mxu0 %v17
  %v167 = vpop.f32.mrf.mxu0
  %v168 = vadd.f32 0.0, %v167
  %169 = vmatmul.f32.gmra.mxu0 %v20
  %v170 = vpop.f32.mrf.mxu0
  %v171 = vadd.f32 0.0, %v170
  %172 = vmatmul.f32.gmra.mxu0 %v23
  %v173 = vpop.f32.mrf.mxu0
  %v174 = vadd.f32 0.0, %v173
  %175 = vmatmul.f32.gmra.mxu0 %v26
  %v176 = vpop.f32.mrf.mxu0
  %v177 = vadd.f32 0.0, %v176
  %178 = vmatmul.f32.gmra.mxu0 %v29
  %v179 = vpop.f32.mrf.mxu0
  %v180 = vadd.f32 0.0, %v179
  %181 = vmatmul.f32.gmra.mxu0 %v32
  %v182 = vpop.f32.mrf.mxu0
  %v183 = vadd.f32 0.0, %v182
  %184 = vmatmul.f32.gmra.mxu0 %v35
  %v185 = vpop.f32.mrf.mxu0
  %v186 = vadd.f32 0.0, %v185
  %187 = vmatmul.f32.gmra.mxu0 %v38
  %v188 = vpop.f32.mrf.mxu0
  %v189 = vadd.f32 0.0, %v188
  %190 = vmatmul.f32.gmra.mxu0 %v41
  %v191 = vpop.f32.mrf.mxu0
  %v192 = vadd.f32 0.0, %v191
  %193 = vmatmul.f32.gmra.mxu0 %v44
  %v194 = vpop.f32.mrf.mxu0
  %v195 = vadd.f32 0.0, %v194
  %196 = vmatmul.f32.gmra.mxu0 %v47
  %v197 = vpop.f32.mrf.mxu0
  %v198 = vadd.f32 0.0, %v197
  %199 = vmatmul.f32.gmra.mxu0 %v50
  %v200 = vpop.f32.mrf.mxu0
  %v201 = vadd.f32 0.0, %v200
  %202 = vmatmul.f32.gmra.mxu0 %v53
  %v203 = vpop.f32.mrf.mxu0
  %v204 = vadd.f32 0.0, %v203
  %205 = vmatmul.f32.gmra.mxu0 %v56
  %v206 = vpop.f32.mrf.mxu0
  %v207 = vadd.f32 0.0, %v206
  %208 = vdwg.mxu0
  %209 = vmatpush.msra.mxu0 %v90
  %210 = vmatpush.msra.mxu0 %v89
  %211 = vmatpush.msra.mxu0 %v88
  %212 = vmatpush.msra.mxu0 %v87
  %213 = vmatpush.msra.mxu0 %v86
  %214 = vmatpush.msra.mxu0 %v85
  %215 = vmatpush.msra.mxu0 %v84
  %216 = vmatpush.msra.mxu0 %v83
  %217 = vmatpush.msra.mxu0 %v82
  %218 = vmatpush.msra.mxu0 %v81
  %219 = vmatpush.msra.mxu0 %v80
  %220 = vmatpush.msra.mxu0 %v79
  %221 = vmatpush.msra.mxu0 %v78
  %222 = vmatpush.msra.mxu0 %v77
  %223 = vmatpush.msra.mxu0 %v76
  %224 = vmatpush.msra.mxu0 %v75
  %225 = vmatmul.f32.gmra.mxu0 %v12
  %v226 = vpop.f32.mrf.mxu0
  %v227 = vadd.f32 %v162, %v226
  %228 = vmatmul.f32.gmra.mxu0 %v15
  %v229 = vpop.f32.mrf.mxu0
  %v230 = vadd.f32 %v165, %v229
  %231 = vmatmul.f32.gmra.mxu0 %v18
  %v232 = vpop.f32.mrf.mxu0
  %v233 = vadd.f32 %v168, %v232
  %234 = vmatmul.f32.gmra.mxu0 %v21
  %v235 = vpop.f32.mrf.mxu0
  %v236 = vadd.f32 %v171, %v235
  %237 = vmatmul.f32.gmra.mxu0 %v24
  %v238 = vpop.f32.mrf.mxu0
  %v239 = vadd.f32 %v174, %v238
  %240 = vmatmul.f32.gmra.mxu0 %v27
  %v241 = vpop.f32.mrf.mxu0
  %v242 = vadd.f32 %v177, %v241
  %243 = vmatmul.f32.gmra.mxu0 %v30
  %v244 = vpop.f32.mrf.mxu0
  %v245 = vadd.f32 %v180, %v244
  %246 = vmatmul.f32.gmra.mxu0 %v33
  %v247 = vpop.f32.mrf.mxu0
  %v248 = vadd.f32 %v183, %v247
  %249 = vmatmul.f32.gmra.mxu0 %v36
  %v250 = vpop.f32.mrf.mxu0
  %v251 = vadd.f32 %v186, %v250
  %252 = vmatmul.f32.gmra.mxu0 %v39
  %v253 = vpop.f32.mrf.mxu0
  %v254 = vadd.f32 %v189, %v253
  %255 = vmatmul.f32.gmra.mxu0 %v42
  %v256 = vpop.f32.mrf.mxu0
  %v257 = vadd.f32 %v192, %v256
  %258 = vmatmul.f32.gmra.mxu0 %v45
  %v259 = vpop.f32.mrf.mxu0
  %v260 = vadd.f32 %v195, %v259
  %261 = vmatmul.f32.gmra.mxu0 %v48
  %v262 = vpop.f32.mrf.mxu0
  %v263 = vadd.f32 %v198, %v262
  %264 = vmatmul.f32.gmra.mxu0 %v51
  %v265 = vpop.f32.mrf.mxu0
  %v266 = vadd.f32 %v201, %v265
  %267 = vmatmul.f32.gmra.mxu0 %v54
  %v268 = vpop.f32.mrf.mxu0
  %v269 = vadd.f32 %v204, %v268
  %270 = vmatmul.f32.gmra.mxu0 %v57
  %v271 = vpop.f32.mrf.mxu0
  %v272 = vadd.f32 %v207, %v271
  %273 = vdwg.mxu0
  %274 = vmatpush.msra.mxu0 0.0
  %275 = vmatpush.msra.mxu0 0.0
  %276 = vmatpush.msra.mxu0 0.0
  %277 = vmatpush.msra.mxu0 0.0
  %278 = vmatpush.msra.mxu0 0.0
  %279 = vmatpush.msra.mxu0 0.0
  %280 = vmatpush.msra.mxu0 0.0
  %281 = vmatpush.msra.mxu0 0.0
  %282 = vmatpush.msra.mxu0 0.0
  %283 = vmatpush.msra.mxu0 0.0
  %284 = vmatpush.msra.mxu0 0.0
  %285 = vmatpush.msra.mxu0 0.0
  %286 = vmatpush.msra.mxu0 %v94
  %287 = vmatpush.msra.mxu0 %v93
  %288 = vmatpush.msra.mxu0 %v92
  %289 = vmatpush.msra.mxu0 %v91
  %290 = vmatmul.f32.gmra.mxu0 %v97
  %v291 = vpop.f32.mrf.mxu0
  %v292 = vadd.f32 %v227, %v291
  %293 = vmatmul.f32.gmra.mxu0 %v100
  %v294 = vpop.f32.mrf.mxu0
  %v295 = vadd.f32 %v230, %v294
  %296 = vmatmul.f32.gmra.mxu0 %v103
  %v297 = vpop.f32.mrf.mxu0
  %v298 = vadd.f32 %v233, %v297
  %299 = vmatmul.f32.gmra.mxu0 %v106
  %v300 = vpop.f32.mrf.mxu0
  %v301 = vadd.f32 %v236, %v300
  %302 = vmatmul.f32.gmra.mxu0 %v109
  %v303 = vpop.f32.mrf.mxu0
  %v304 = vadd.f32 %v239, %v303
  %305 = vmatmul.f32.gmra.mxu0 %v112
  %v306 = vpop.f32.mrf.mxu0
  %v307 = vadd.f32 %v242, %v306
  %308 = vmatmul.f32.gmra.mxu0 %v115
  %v309 = vpop.f32.mrf.mxu0
  %v310 = vadd.f32 %v245, %v309
  %311 = vmatmul.f32.gmra.mxu0 %v118
  %v312 = vpop.f32.mrf.mxu0
  %v313 = vadd.f32 %v248, %v312
  %314 = vmatmul.f32.gmra.mxu0 %v121
  %v315 = vpop.f32.mrf.mxu0
  %v316 = vadd.f32 %v251, %v315
  %317 = vmatmul.f32.gmra.mxu0 %v124
  %v318 = vpop.f32.mrf.mxu0
  %v319 = vadd.f32 %v254, %v318
  %320 = vmatmul.f32.gmra.mxu0 %v127
  %v321 = vpop.f32.mrf.mxu0
  %v322 = vadd.f32 %v257, %v321
  %323 = vmatmul.f32.gmra.mxu0 %v130
  %v324 = vpop.f32.mrf.mxu0
  %v325 = vadd.f32 %v260, %v324
  %326 = vmatmul.f32.gmra.mxu0 %v133
  %v327 = vpop.f32.mrf.mxu0
  %v328 = vadd.f32 %v263, %v327
  %329 = vmatmul.f32.gmra.mxu0 %v136
  %v330 = vpop.f32.mrf.mxu0
  %v331 = vadd.f32 %v266, %v330
  %332 = vmatmul.f32.gmra.mxu0 %v139
  %v333 = vpop.f32.mrf.mxu0
  %v334 = vadd.f32 %v269, %v333
  %335 = vmatmul.f32.gmra.mxu0 %v142
  %v336 = vpop.f32.mrf.mxu0
  %v337 = vadd.f32 %v272, %v336
  %338 = vdwg.mxu0
  %vm339 = vcmask 523264
  %340 = vst.msk [vmem:[%s2] sm:$0xff] %vm339, %v292
  %341 = vst.msk [vmem:[%s2 + $0x8] sm:$0xff] %vm339, %v295
  %342 = vst.msk [vmem:[%s2 + $0x10] sm:$0xff] %vm339, %v298
  %343 = vst.msk [vmem:[%s2 + $0x18] sm:$0xff] %vm339, %v301
  %344 = vst.msk [vmem:[%s2 + $0x20] sm:$0xff] %vm339, %v304
  %345 = vst.msk [vmem:[%s2 + $0x28] sm:$0xff] %vm339, %v307
  %346 = vst.msk [vmem:[%s2 + $0x30] sm:$0xff] %vm339, %v310
  %347 = vst.msk [vmem:[%s2 + $0x38] sm:$0xff] %vm339, %v313
  %348 = vst.msk [vmem:[%s2 + $0x40] sm:$0xff] %vm339, %v316
  %349 = vst.msk [vmem:[%s2 + $0x48] sm:$0xff] %vm339, %v319
  %350 = vst.msk [vmem:[%s2 + $0x50] sm:$0xff] %vm339, %v322
  %351 = vst.msk [vmem:[%s2 + $0x58] sm:$0xff] %vm339, %v325
  %352 = vst.msk [vmem:[%s2 + $0x60] sm:$0xff] %vm339, %v328
  %353 = vst.msk [vmem:[%s2 + $0x68] sm:$0xff] %vm339, %v331
  %354 = vst.msk [vmem:[%s2 + $0x70] sm:$0xff] %vm339, %v334
  %355 = vst.msk [vmem:[%s2 + $0x78] sm:$0xff] %vm339, %v337
  // Predicated region
  $region10: #{phd_net_res_forward.37} parent=0 // pred_check
    _
  $region11: #{phd_net_res_forward.37} parent=0 // pred_check_branch
    %357 = sbr.rel (0) target = $region13
  $region12: #{phd_net_res_forward.37} parent=0 // pred_region
    _
  $region13: #{phd_net_res_forward.37} parent=0 // pred_fallthru
    _
  // Predicated region
  $region14: #{phd_net_res_forward.37} parent=0 // pred_check
    _
  $region15: #{phd_net_res_forward.37} parent=0 // pred_check_branch
    %359 = sbr.rel (0) target = $region17
  $region16: #{phd_net_res_forward.37} parent=0 // pred_region
    _
  $region17: #{phd_net_res_forward.37} parent=0 // pred_fallthru
    _

// kernel: phd_net_res_forward.36
$region0: #{phd_net_res_forward.36}
  #allocation0 [shape = 'u32[]', space=smem, size = 0x4, offset = 0x4, fixed_abs, tag = 'smem constant byte address 0x4 - core index']
  #allocation1 [shape = 'u32[72,128]{1,0:T(1,128)}', space=vmem, size = 0x9000, scoped, tag = 'internal scratch']
  %s0 = inlined_call_operand.vmem [shape: f32[32,128], index: 0, kind: input, shape index: {}]
  %s1 = inlined_call_operand.vmem [shape: f32[1,128], index: 1, kind: input, shape index: {}]
  %s2 = inlined_call_operand.vmem [shape: f32[1,128], index: 2, kind: input, shape index: {}]
  %s3 = inlined_call_operand.vmem [shape: f32[32,128], index: 3, kind: input, shape index: {}]
  %s4 = inlined_call_operand.vmem [shape: f32[32,128], index: 4, kind: output, shape index: {}]
  %s5 = sld [smem:[#allocation0]]
  $region26: #{phd_net_res_forward.36} parent=0
    _
  %s7 = ssub.s32 1, %s5
  %s8 = scalar_select 0, %s7, %s5
  // Predicated region
  $region2: #{phd_net_res_forward.36} parent=0 // pred_check
    _
  $region3: #{phd_net_res_forward.36} parent=0 // pred_check_branch
    %10 = sbr.rel (0) target = $region5
  $region4: #{phd_net_res_forward.36} parent=0 // pred_region
    _
  $region5: #{phd_net_res_forward.36} parent=0 // pred_fallthru
    _
  // Predicated region
  $region6: #{phd_net_res_forward.36} parent=0 // pred_check
    _
  $region7: #{phd_net_res_forward.36} parent=0 // pred_check_branch
    %12 = sbr.rel (0) target = $region9
  $region8: #{phd_net_res_forward.36} parent=0 // pred_region
    _
  $region9: #{phd_net_res_forward.36} parent=0 // pred_fallthru
    _
  // Predicated region
  $region10: #{phd_net_res_forward.36} parent=0 // pred_check
    _
  $region11: #{phd_net_res_forward.36} parent=0 // pred_check_branch
    %14 = sbr.rel (0) target = $region13
  $region12: #{phd_net_res_forward.36} parent=0 // pred_region
    _
  $region13: #{phd_net_res_forward.36} parent=0 // pred_fallthru
    _
  // Predicated region
  $region14: #{phd_net_res_forward.36} parent=0 // pred_check
    _
  $region15: #{phd_net_res_forward.36} parent=0 // pred_check_branch
    %16 = sbr.rel (0) target = $region17
  $region16: #{phd_net_res_forward.36} parent=0 // pred_region
    _
  $region17: #{phd_net_res_forward.36} parent=0 // pred_fallthru
    _
  %v17 = vld [vmem:[%s0] sm:$0xff]
  %v18 = vld [vmem:[%s0 + $0x8] sm:$0xff]
  %v19 = vld [vmem:[%s0 + $0x10] sm:$0xff]
  %v20 = vld [vmem:[%s0 + $0x18] sm:$0xff]
  %v21 = vld [vmem:[%s1] sm:$0x1]
  %v23 = vperm.slane %v21, 0
  %v25 = vmul.f32 %v17, %v23
  %v26 = vmul.f32 %v18, %v23
  %v27 = vmul.f32 %v19, %v23
  %v28 = vmul.f32 %v20, %v23
  %v29 = vld [vmem:[%s2] sm:$0x1]
  %v31 = vperm.slane %v29, 0
  %v33 = vadd.f32 %v25, %v31
  %v34 = vadd.f32 %v26, %v31
  %v35 = vadd.f32 %v27, %v31
  %v36 = vadd.f32 %v28, %v31
  %v37 = vmul.f32 %v33, 0.5
  %v38 = vmul.f32 %v34, 0.5
  %v39 = vmul.f32 %v35, 0.5
  %v40 = vmul.f32 %v36, 0.5
  %v41 = vmul.f32 %v33, 0.70710677
  %v42 = vmul.f32 %v34, 0.70710677
  %v43 = vmul.f32 %v35, 0.70710677
  %v44 = vmul.f32 %v36, 0.70710677
  %vm45 = vcmp.ge.f32.partialorder %v41, 0.0
  %vm46 = vcmp.ge.f32.partialorder %v42, 0.0
  %vm47 = vcmp.ge.f32.partialorder %v43, 0.0
  %vm48 = vcmp.ge.f32.partialorder %v44, 0.0
  %v49 = vsel %vm45, 1.0, -1.0
  %v50 = vsel %vm46, 1.0, -1.0
  %v51 = vsel %vm47, 1.0, -1.0
  %v52 = vsel %vm48, 1.0, -1.0
  %v53 = vand.u32 2147483647, %v41
  %v54 = vand.u32 2147483647, %v42
  %v55 = vand.u32 2147483647, %v43
  %v56 = vand.u32 2147483647, %v44
  %v57 = vmul.f32 %v53, 0.3275911
  %v58 = vmul.f32 %v54, 0.3275911
  %v59 = vmul.f32 %v55, 0.3275911
  %v60 = vmul.f32 %v56, 0.3275911
  %v61 = vadd.f32 %v57, 1.0
  %v62 = vadd.f32 %v58, 1.0
  %v63 = vadd.f32 %v59, 1.0
  %v64 = vadd.f32 %v60, 1.0
  %v65 = vrcp.pop %v61
  %v66 = vmul.f32 %v61, %v65
  %v67 = vsub.f32 1.0, %v66
  %v68 = vmul.f32 %v65, %v67
  %v69 = vadd.f32 %v65, %v68
  %vm70 = vweird.f32 %v61
  %vm71 = vweird.f32 %v65
  %vm72 = vmor %vm70, %vm71
  %v73 = vsel %vm72, %v65, %v69
  %v74 = vand.u32 2147483647, %v61
  %vm75 = vcmp.eq.f32.partialorder %v74, 8.507059e+37
  %v76 = vand.u32 %v61, 2147483648
  %v77 = vor.u32 1.1754944e-38, %v76
  %v78 = vsel %vm75, %v77, %v73
  %v79 = vrcp.pop %v62
  %v80 = vmul.f32 %v62, %v79
  %v81 = vsub.f32 1.0, %v80
  %v82 = vmul.f32 %v79, %v81
  %v83 = vadd.f32 %v79, %v82
  %vm84 = vweird.f32 %v62
  %vm85 = vweird.f32 %v79
  %vm86 = vmor %vm84, %vm85
  %v87 = vsel %vm86, %v79, %v83
  %v88 = vand.u32 2147483647, %v62
  %vm89 = vcmp.eq.f32.partialorder %v88, 8.507059e+37
  %v90 = vand.u32 %v62, 2147483648
  %v91 = vor.u32 1.1754944e-38, %v90
  %v92 = vsel %vm89, %v91, %v87
  %v93 = vrcp.pop %v63
  %v94 = vmul.f32 %v63, %v93
  %v95 = vsub.f32 1.0, %v94
  %v96 = vmul.f32 %v93, %v95
  %v97 = vadd.f32 %v93, %v96
  %vm98 = vweird.f32 %v63
  %vm99 = vweird.f32 %v93
  %vm100 = vmor %vm98, %vm99
  %v101 = vsel %vm100, %v93, %v97
  %v102 = vand.u32 2147483647, %v63
  %vm103 = vcmp.eq.f32.partialorder %v102, 8.507059e+37
  %v104 = vand.u32 %v63, 2147483648
  %v105 = vor.u32 1.1754944e-38, %v104
  %v106 = vsel %vm103, %v105, %v101
  %v107 = vrcp.pop %v64
  %v108 = vmul.f32 %v64, %v107
  %v109 = vsub.f32 1.0, %v108
  %v110 = vmul.f32 %v107, %v109
  %v111 = vadd.f32 %v107, %v110
  %vm112 = vweird.f32 %v64
  %vm113 = vweird.f32 %v107
  %vm114 = vmor %vm112, %vm113
  %v115 = vsel %vm114, %v107, %v111
  %v116 = vand.u32 2147483647, %v64
  %vm117 = vcmp.eq.f32.partialorder %v116, 8.507059e+37
  %v118 = vand.u32 %v64, 2147483648
  %v119 = vor.u32 1.1754944e-38, %v118
  %v120 = vsel %vm117, %v119, %v115
  %v121 = vmul.f32 %v78, 1.0614054
  %v122 = vmul.f32 %v92, 1.0614054
  %v123 = vmul.f32 %v106, 1.0614054
  %v124 = vmul.f32 %v120, 1.0614054
  %v125 = vadd.f32 %v121, -1.4531521
  %v126 = vadd.f32 %v122, -1.4531521
  %v127 = vadd.f32 %v123, -1.4531521
  %v128 = vadd.f32 %v124, -1.4531521
  %v129 = vmul.f32 %v125, %v78
  %v130 = vmul.f32 %v126, %v92
  %v131 = vmul.f32 %v127, %v106
  %v132 = vmul.f32 %v128, %v120
  %v133 = vadd.f32 %v129, 1.4214138
  %v134 = vadd.f32 %v130, 1.4214138
  %v135 = vadd.f32 %v131, 1.4214138
  %v136 = vadd.f32 %v132, 1.4214138
  %v137 = vmul.f32 %v133, %v78
  %v138 = vmul.f32 %v134, %v92
  %v139 = vmul.f32 %v135, %v106
  %v140 = vmul.f32 %v136, %v120
  %v141 = vadd.f32 %v137, -0.28449672
  %v142 = vadd.f32 %v138, -0.28449672
  %v143 = vadd.f32 %v139, -0.28449672
  %v144 = vadd.f32 %v140, -0.28449672
  %v145 = vmul.f32 %v141, %v78
  %v146 = vmul.f32 %v142, %v92
  %v147 = vmul.f32 %v143, %v106
  %v148 = vmul.f32 %v144, %v120
  %v149 = vadd.f32 %v145, 0.2548296
  %v150 = vadd.f32 %v146, 0.2548296
  %v151 = vadd.f32 %v147, 0.2548296
  %v152 = vadd.f32 %v148, 0.2548296
  %v153 = vmul.f32 %v149, %v78
  %v154 = vmul.f32 %v150, %v92
  %v155 = vmul.f32 %v151, %v106
  %v156 = vmul.f32 %v152, %v120
  %v157 = vsub.f32 0.0, %v53
  %v158 = vsub.f32 0.0, %v54
  %v159 = vsub.f32 0.0, %v55
  %v160 = vsub.f32 0.0, %v56
  %v161 = vmul.f32 %v157, %v53
  %v162 = vmul.f32 %v158, %v54
  %v163 = vmul.f32 %v159, %v55
  %v164 = vmul.f32 %v160, %v56
  %v165 = vmul.f32 %v161, 1.442695
  %v166 = vpow.pop %v165
  %v167 = vmul.f32 %v162, 1.442695
  %v168 = vpow.pop %v167
  %v169 = vmul.f32 %v163, 1.442695
  %v170 = vpow.pop %v169
  %v171 = vmul.f32 %v164, 1.442695
  %v172 = vpow.pop %v171
  %v173 = vmul.f32 %v153, %v166
  %v174 = vmul.f32 %v154, %v168
  %v175 = vmul.f32 %v155, %v170
  %v176 = vmul.f32 %v156, %v172
  %v177 = vsub.f32 1.0, %v173
  %v178 = vsub.f32 1.0, %v174
  %v179 = vsub.f32 1.0, %v175
  %v180 = vsub.f32 1.0, %v176
  %v181 = vmul.f32 %v49, %v177
  %v182 = vmul.f32 %v50, %v178
  %v183 = vmul.f32 %v51, %v179
  %v184 = vmul.f32 %v52, %v180
  %v185 = vadd.f32 %v181, 1.0
  %v186 = vadd.f32 %v182, 1.0
  %v187 = vadd.f32 %v183, 1.0
  %v188 = vadd.f32 %v184, 1.0
  %v189 = vmul.f32 %v37, %v185
  %v190 = vmul.f32 %v38, %v186
  %v191 = vmul.f32 %v39, %v187
  %v192 = vmul.f32 %v40, %v188
  %v193 = vld [vmem:[%s3] sm:$0xff]
  %v194 = vld [vmem:[%s3 + $0x8] sm:$0xff]
  %v195 = vld [vmem:[%s3 + $0x10] sm:$0xff]
  %v196 = vld [vmem:[%s3 + $0x18] sm:$0xff]
  %v197 = vadd.f32 %v189, %v193
  %v198 = vadd.f32 %v190, %v194
  %v199 = vadd.f32 %v191, %v195
  %v200 = vadd.f32 %v192, %v196
  %201 = vst [vmem:[%s4] sm:$0xff] %v197
  %202 = vst [vmem:[%s4 + $0x8] sm:$0xff] %v198
  %203 = vst [vmem:[%s4 + $0x10] sm:$0xff] %v199
  %204 = vst [vmem:[%s4 + $0x18] sm:$0xff] %v200
  // Predicated region
  $region18: #{phd_net_res_forward.36} parent=0 // pred_check
    _
  $region19: #{phd_net_res_forward.36} parent=0 // pred_check_branch
    %206 = sbr.rel (0) target = $region21
  $region20: #{phd_net_res_forward.36} parent=0 // pred_region
    _
  $region21: #{phd_net_res_forward.36} parent=0 // pred_fallthru
    _
  // Predicated region
  $region22: #{phd_net_res_forward.36} parent=0 // pred_check
    _
  $region23: #{phd_net_res_forward.36} parent=0 // pred_check_branch
    %208 = sbr.rel (0) target = $region25
  $region24: #{phd_net_res_forward.36} parent=0 // pred_region
    _
  $region25: #{phd_net_res_forward.36} parent=0 // pred_fallthru
    _

// kernel: phd_net_res_forward.38
$region0: #{phd_net_res_forward.38}
  #allocation0 [shape = 'u32[]', space=smem, size = 0x4, offset = 0x4, fixed_abs, tag = 'smem constant byte address 0x4 - core index']
  #allocation1 [shape = 'u32[72,128]{1,0:T(1,128)}', space=vmem, size = 0x9000, scoped, tag = 'internal scratch']
  %s0 = inlined_call_operand.vmem [shape: f32[16,128], index: 0, kind: input, shape index: {}]
  %s1 = inlined_call_operand.vmem [shape: f32[16,128], index: 1, kind: input, shape index: {}]
  %s2 = inlined_call_operand.vmem [shape: f32[16,128], index: 2, kind: input, shape index: {}]
  %s3 = inlined_call_operand.vmem [shape: f32[16,128], index: 3, kind: input, shape index: {}]
  %s4 = inlined_call_operand.vmem [shape: f32[16,128], index: 4, kind: output, shape index: {0}]
  %s5 = inlined_call_operand.vmem [shape: f32[1,128], index: 5, kind: output, shape index: {1}]
  %s6 = inlined_call_operand.vmem [shape: f32[1,128], index: 6, kind: output, shape index: {2}]
  %7 = xla_tuple %s4, %s5, %s6
  %s8 = sld [smem:[#allocation0]]
  $region46: #{phd_net_res_forward.38} parent=0
    _
  %s10 = ssub.s32 1, %s8
  %s11 = scalar_select 0, %s10, %s8
  // Predicated region
  $region2: #{phd_net_res_forward.38} parent=0 // pred_check
    _
  $region3: #{phd_net_res_forward.38} parent=0 // pred_check_branch
    %13 = sbr.rel (0) target = $region5
  $region4: #{phd_net_res_forward.38} parent=0 // pred_region
    _
  $region5: #{phd_net_res_forward.38} parent=0 // pred_fallthru
    _
  // Predicated region
  $region6: #{phd_net_res_forward.38} parent=0 // pred_check
    _
  $region7: #{phd_net_res_forward.38} parent=0 // pred_check_branch
    %15 = sbr.rel (0) target = $region9
  $region8: #{phd_net_res_forward.38} parent=0 // pred_region
    _
  $region9: #{phd_net_res_forward.38} parent=0 // pred_fallthru
    _
  // Predicated region
  $region10: #{phd_net_res_forward.38} parent=0 // pred_check
    _
  $region11: #{phd_net_res_forward.38} parent=0 // pred_check_branch
    %17 = sbr.rel (0) target = $region13
  $region12: #{phd_net_res_forward.38} parent=0 // pred_region
    _
  $region13: #{phd_net_res_forward.38} parent=0 // pred_fallthru
    _
  // Predicated region
  $region14: #{phd_net_res_forward.38} parent=0 // pred_check
    _
  $region15: #{phd_net_res_forward.38} parent=0 // pred_check_branch
    %19 = sbr.rel (0) target = $region17
  $region16: #{phd_net_res_forward.38} parent=0 // pred_region
    _
  $region17: #{phd_net_res_forward.38} parent=0 // pred_fallthru
    _
  %p20 = scmp.eq.s32.totalorder 0, 0
  // Predicated region
  $region18: #{phd_net_res_forward.38} parent=0 // pred_check
    %p21 = pneg %p20
  $region19: #{phd_net_res_forward.38} parent=0 // pred_check_branch
    %23 = sbr.rel (%p21) target = $region21
  $region20: #{phd_net_res_forward.38} parent=0 // pred_region
    %24 = vst [vmem:[%s5] sm:$0x1] 0.0
    %25 = vst [vmem:[%s6] sm:$0x1] 0.0
  $region21: #{phd_net_res_forward.38} parent=0 // pred_fallthru
    _
  %v26 = vld [vmem:[%s0] sm:$0xff]
  %v27 = vld [vmem:[%s0 + $0x8] sm:$0xff]
  %v28 = vld [vmem:[%s1] sm:$0xff]
  %v29 = vld [vmem:[%s1 + $0x8] sm:$0xff]
  %v30 = vmax.f32 %v26, %v28
  %v31 = vmax.f32 %v27, %v29
  %v32 = vld [vmem:[%s2] sm:$0xff]
  %v33 = vld [vmem:[%s2 + $0x8] sm:$0xff]
  %v34 = vld [vmem:[%s3] sm:$0xff]
  %v35 = vld [vmem:[%s3 + $0x8] sm:$0xff]
  %v36 = vmax.f32 %v32, %v34
  %v37 = vmax.f32 %v33, %v35
  %v38 = vmax.f32 %v30, %v36
  %v39 = vmax.f32 %v31, %v37
  %40 = vst [vmem:[%s4] sm:$0xff] %v38
  %41 = vst [vmem:[%s4 + $0x8] sm:$0xff] %v39
  %v42 = vld [vmem:[%s5] sm:$0x1]
  %v43 = vadd.f32 %v38, %v39
  %v44 = vrot.slane %v43, 4
  %v45 = vadd.f32 %v43, %v44
  %v46 = vrot.slane %v45, 2
  %v47 = vadd.f32 %v45, %v46
  %v48 = vrot.slane %v47, 1
  %v49 = vadd.f32 %v47, %v48
  %v50 = vadd.f32 %v42, %v49
  %51 = vst [vmem:[%s5] sm:$0x1] %v50
  %v52 = vld [vmem:[%s6] sm:$0x1]
  %v53 = vmul.f32 %v38, %v38
  %v54 = vmul.f32 %v39, %v39
  %v55 = vadd.f32 %v53, %v54
  %v56 = vrot.slane %v55, 4
  %v57 = vadd.f32 %v55, %v56
  %v58 = vrot.slane %v57, 2
  %v59 = vadd.f32 %v57, %v58
  %v60 = vrot.slane %v59, 1
  %v61 = vadd.f32 %v59, %v60
  %v62 = vadd.f32 %v52, %v61
  %63 = vst [vmem:[%s6] sm:$0x1] %v62
  // Predicated region
  $region22: #{phd_net_res_forward.38} parent=0 // pred_check
    _
  $region23: #{phd_net_res_forward.38} parent=0 // pred_check_branch
    %65 = sbr.rel (0) target = $region25
  $region24: #{phd_net_res_forward.38} parent=0 // pred_region
    _
  $region25: #{phd_net_res_forward.38} parent=0 // pred_fallthru
    _
  // Predicated region
  $region26: #{phd_net_res_forward.38} parent=0 // pred_check
    _
  $region27: #{phd_net_res_forward.38} parent=0 // pred_check_branch
    %67 = sbr.rel (0) target = $region29
  $region28: #{phd_net_res_forward.38} parent=0 // pred_region
    _
  $region29: #{phd_net_res_forward.38} parent=0 // pred_fallthru
    _
  // Predicated region
  $region30: #{phd_net_res_forward.38} parent=0 // pred_check
    _
  $region31: #{phd_net_res_forward.38} parent=0 // pred_check_branch
    %69 = sbr.rel (0) target = $region33
  $region32: #{phd_net_res_forward.38} parent=0 // pred_region
    _
  $region33: #{phd_net_res_forward.38} parent=0 // pred_fallthru
    _
  // Predicated region
  $region34: #{phd_net_res_forward.38} parent=0 // pred_check
    _
  $region35: #{phd_net_res_forward.38} parent=0 // pred_check_branch
    %71 = sbr.rel (0) target = $region37
  $region36: #{phd_net_res_forward.38} parent=0 // pred_region
    _
  $region37: #{phd_net_res_forward.38} parent=0 // pred_fallthru
    _
  // Predicated region
  $region38: #{phd_net_res_forward.38} parent=0 // pred_check
    _
  $region39: #{phd_net_res_forward.38} parent=0 // pred_check_branch
    %73 = sbr.rel (0) target = $region41
  $region40: #{phd_net_res_forward.38} parent=0 // pred_region
    _
  $region41: #{phd_net_res_forward.38} parent=0 // pred_fallthru
    _
  // Predicated region
  $region42: #{phd_net_res_forward.38} parent=0 // pred_check
    _
  $region43: #{phd_net_res_forward.38} parent=0 // pred_check_branch
    %75 = sbr.rel (0) target = $region45
  $region44: #{phd_net_res_forward.38} parent=0 // pred_region
    _
  $region45: #{phd_net_res_forward.38} parent=0 // pred_fallthru
    _

// kernel: phd_net_res_forward.39
$region0: #{phd_net_res_forward.39}
  #allocation0 [shape = 'u32[]', space=smem, size = 0x4, offset = 0x4, fixed_abs, tag = 'smem constant byte address 0x4 - core index']
  #allocation1 [shape = 'u32[72,128]{1,0:T(1,128)}', space=vmem, size = 0x9000, scoped, tag = 'internal scratch']
  %s0 = inlined_call_operand.vmem [shape: f32[16,128], index: 0, kind: input, shape index: {}]
  %s1 = inlined_call_operand.vmem [shape: f32[1,128], index: 1, kind: input, shape index: {}]
  %s2 = inlined_call_operand.vmem [shape: f32[1,128], index: 2, kind: input, shape index: {}]
  %s3 = inlined_call_operand.vmem [shape: f32[16,128], index: 3, kind: output, shape index: {}]
  %s4 = sld [smem:[#allocation0]]
  $region22: #{phd_net_res_forward.39} parent=0
    _
  %s6 = ssub.s32 1, %s4
  %s7 = scalar_select 0, %s6, %s4
  // Predicated region
  $region2: #{phd_net_res_forward.39} parent=0 // pred_check
    _
  $region3: #{phd_net_res_forward.39} parent=0 // pred_check_branch
    %9 = sbr.rel (0) target = $region5
  $region4: #{phd_net_res_forward.39} parent=0 // pred_region
    _
  $region5: #{phd_net_res_forward.39} parent=0 // pred_fallthru
    _
  // Predicated region
  $region6: #{phd_net_res_forward.39} parent=0 // pred_check
    _
  $region7: #{phd_net_res_forward.39} parent=0 // pred_check_branch
    %11 = sbr.rel (0) target = $region9
  $region8: #{phd_net_res_forward.39} parent=0 // pred_region
    _
  $region9: #{phd_net_res_forward.39} parent=0 // pred_fallthru
    _
  // Predicated region
  $region10: #{phd_net_res_forward.39} parent=0 // pred_check
    _
  $region11: #{phd_net_res_forward.39} parent=0 // pred_check_branch
    %13 = sbr.rel (0) target = $region13
  $region12: #{phd_net_res_forward.39} parent=0 // pred_region
    _
  $region13: #{phd_net_res_forward.39} parent=0 // pred_fallthru
    _
  %v14 = vld [vmem:[%s0] sm:$0xff]
  %v15 = vld [vmem:[%s0 + $0x8] sm:$0xff]
  %v16 = vld [vmem:[%s1] sm:$0x1]
  %v18 = vperm.slane %v16, 0
  %v20 = vmul.f32 %v14, %v18
  %v21 = vmul.f32 %v15, %v18
  %v22 = vld [vmem:[%s2] sm:$0x1]
  %v24 = vperm.slane %v22, 0
  %v26 = vadd.f32 %v20, %v24
  %v27 = vadd.f32 %v21, %v24
  %v28 = vmul.f32 %v26, 0.5
  %v29 = vmul.f32 %v27, 0.5
  %v30 = vmul.f32 %v26, 0.70710677
  %v31 = vmul.f32 %v27, 0.70710677
  %vm32 = vcmp.ge.f32.partialorder %v30, 0.0
  %vm33 = vcmp.ge.f32.partialorder %v31, 0.0
  %v34 = vsel %vm32, 1.0, -1.0
  %v35 = vsel %vm33, 1.0, -1.0
  %v36 = vand.u32 2147483647, %v30
  %v37 = vand.u32 2147483647, %v31
  %v38 = vmul.f32 %v36, 0.3275911
  %v39 = vmul.f32 %v37, 0.3275911
  %v40 = vadd.f32 %v38, 1.0
  %v41 = vadd.f32 %v39, 1.0
  %v42 = vrcp.pop %v40
  %v43 = vmul.f32 %v40, %v42
  %v44 = vsub.f32 1.0, %v43
  %v45 = vmul.f32 %v42, %v44
  %v46 = vadd.f32 %v42, %v45
  %vm47 = vweird.f32 %v40
  %vm48 = vweird.f32 %v42
  %vm49 = vmor %vm47, %vm48
  %v50 = vsel %vm49, %v42, %v46
  %v51 = vand.u32 2147483647, %v40
  %vm52 = vcmp.eq.f32.partialorder %v51, 8.507059e+37
  %v53 = vand.u32 %v40, 2147483648
  %v54 = vor.u32 1.1754944e-38, %v53
  %v55 = vsel %vm52, %v54, %v50
  %v56 = vrcp.pop %v41
  %v57 = vmul.f32 %v41, %v56
  %v58 = vsub.f32 1.0, %v57
  %v59 = vmul.f32 %v56, %v58
  %v60 = vadd.f32 %v56, %v59
  %vm61 = vweird.f32 %v41
  %vm62 = vweird.f32 %v56
  %vm63 = vmor %vm61, %vm62
  %v64 = vsel %vm63, %v56, %v60
  %v65 = vand.u32 2147483647, %v41
  %vm66 = vcmp.eq.f32.partialorder %v65, 8.507059e+37
  %v67 = vand.u32 %v41, 2147483648
  %v68 = vor.u32 1.1754944e-38, %v67
  %v69 = vsel %vm66, %v68, %v64
  %v70 = vmul.f32 %v55, 1.0614054
  %v71 = vmul.f32 %v69, 1.0614054
  %v72 = vadd.f32 %v70, -1.4531521
  %v73 = vadd.f32 %v71, -1.4531521
  %v74 = vmul.f32 %v72, %v55
  %v75 = vmul.f32 %v73, %v69
  %v76 = vadd.f32 %v74, 1.4214138
  %v77 = vadd.f32 %v75, 1.4214138
  %v78 = vmul.f32 %v76, %v55
  %v79 = vmul.f32 %v77, %v69
  %v80 = vadd.f32 %v78, -0.28449672
  %v81 = vadd.f32 %v79, -0.28449672
  %v82 = vmul.f32 %v80, %v55
  %v83 = vmul.f32 %v81, %v69
  %v84 = vadd.f32 %v82, 0.2548296
  %v85 = vadd.f32 %v83, 0.2548296
  %v86 = vmul.f32 %v84, %v55
  %v87 = vmul.f32 %v85, %v69
  %v88 = vsub.f32 0.0, %v36
  %v89 = vsub.f32 0.0, %v37
  %v90 = vmul.f32 %v88, %v36
  %v91 = vmul.f32 %v89, %v37
  %v92 = vmul.f32 %v90, 1.442695
  %v93 = vpow.pop %v92
  %v94 = vmul.f32 %v91, 1.442695
  %v95 = vpow.pop %v94
  %v96 = vmul.f32 %v86, %v93
  %v97 = vmul.f32 %v87, %v95
  %v98 = vsub.f32 1.0, %v96
  %v99 = vsub.f32 1.0, %v97
  %v100 = vmul.f32 %v34, %v98
  %v101 = vmul.f32 %v35, %v99
  %v102 = vadd.f32 %v100, 1.0
  %v103 = vadd.f32 %v101, 1.0
  %v104 = vmul.f32 %v28, %v102
  %v105 = vmul.f32 %v29, %v103
  %106 = vst [vmem:[%s3] sm:$0xff] %v104
  %107 = vst [vmem:[%s3 + $0x8] sm:$0xff] %v105
  // Predicated region
  $region14: #{phd_net_res_forward.39} parent=0 // pred_check
    _
  $region15: #{phd_net_res_forward.39} parent=0 // pred_check_branch
    %109 = sbr.rel (0) target = $region17
  $region16: #{phd_net_res_forward.39} parent=0 // pred_region
    _
  $region17: #{phd_net_res_forward.39} parent=0 // pred_fallthru
    _
  // Predicated region
  $region18: #{phd_net_res_forward.39} parent=0 // pred_check
    _
  $region19: #{phd_net_res_forward.39} parent=0 // pred_check_branch
    %111 = sbr.rel (0) target = $region21
  $region20: #{phd_net_res_forward.39} parent=0 // pred_region
    _
  $region21: #{phd_net_res_forward.39} parent=0 // pred_fallthru
    _

// kernel: phd_net_res_forward.44
$region0: #{phd_net_res_forward.44}
  #allocation0 [shape = 'u32[]', space=smem, size = 0x4, offset = 0x4, fixed_abs, tag = 'smem constant byte address 0x4 - core index']
  #allocation1 [shape = 'u32[72,128]{1,0:T(1,128)}', space=vmem, size = 0x9000, scoped, tag = 'internal scratch']
  %s0 = inlined_call_operand.vmem [shape: f32[32,576], index: 0, kind: input, shape index: {}]
  %s1 = inlined_call_operand.vmem [shape: f32[576,128], index: 1, kind: input, shape index: {}]
  %s2 = inlined_call_operand.vmem [shape: f32[32,128], index: 2, kind: output, shape index: {}]
  %s3 = sld [smem:[#allocation0]]
  $region18: #{phd_net_res_forward.44} parent=0
    _
  %s5 = ssub.s32 1, %s3
  %s6 = scalar_select 0, %s5, %s3
  // Predicated region
  $region2: #{phd_net_res_forward.44} parent=0 // pred_check
    _
  $region3: #{phd_net_res_forward.44} parent=0 // pred_check_branch
    %8 = sbr.rel (0) target = $region5
  $region4: #{phd_net_res_forward.44} parent=0 // pred_region
    _
  $region5: #{phd_net_res_forward.44} parent=0 // pred_fallthru
    _
  // Predicated region
  $region6: #{phd_net_res_forward.44} parent=0 // pred_check
    _
  $region7: #{phd_net_res_forward.44} parent=0 // pred_check_branch
    %10 = sbr.rel (0) target = $region9
  $region8: #{phd_net_res_forward.44} parent=0 // pred_region
    _
  $region9: #{phd_net_res_forward.44} parent=0 // pred_fallthru
    _
  %v11 = vld [vmem:[%s0] sm:$0xff]
  %v12 = vld [vmem:[%s0 + $0x8] sm:$0xff]
  %v13 = vld [vmem:[%s0 + $0x10] sm:$0xff]
  %v14 = vld [vmem:[%s0 + $0x18] sm:$0xff]
  %v15 = vld [vmem:[%s0 + $0x20] sm:$0xff]
  %v16 = vld [vmem:[%s0 + $0x28] sm:$0xff]
  %v17 = vld [vmem:[%s0 + $0x30] sm:$0xff]
  %v18 = vld [vmem:[%s0 + $0x38] sm:$0xff]
  %v19 = vld [vmem:[%s0 + $0x40] sm:$0xff]
  %v20 = vld [vmem:[%s0 + $0x48] sm:$0xff]
  %v21 = vld [vmem:[%s0 + $0x50] sm:$0xff]
  %v22 = vld [vmem:[%s0 + $0x58] sm:$0xff]
  %v23 = vld [vmem:[%s0 + $0x60] sm:$0xff]
  %v24 = vld [vmem:[%s0 + $0x68] sm:$0xff]
  %v25 = vld [vmem:[%s0 + $0x70] sm:$0xff]
  %v26 = vld [vmem:[%s0 + $0x78] sm:$0xff]
  %v27 = vld [vmem:[%s0 + $0x80] sm:$0xff]
  %v28 = vld [vmem:[%s0 + $0x88] sm:$0xff]
  %v29 = vld [vmem:[%s0 + $0x90] sm:$0xff]
  %v30 = vld [vmem:[%s0 + $0x98] sm:$0xff]
  %v31 = vld [vmem:[%s1] sm:$0xff]
  %v32 = vld [vmem:[%s1 + $0x8] sm:$0xff]
  %v33 = vld [vmem:[%s1 + $0x10] sm:$0xff]
  %v34 = vld [vmem:[%s1 + $0x18] sm:$0xff]
  %v35 = vld [vmem:[%s1 + $0x20] sm:$0xff]
  %v36 = vld [vmem:[%s1 + $0x28] sm:$0xff]
  %v37 = vld [vmem:[%s1 + $0x30] sm:$0xff]
  %v38 = vld [vmem:[%s1 + $0x38] sm:$0xff]
  %v39 = vld [vmem:[%s1 + $0x40] sm:$0xff]
  %v40 = vld [vmem:[%s1 + $0x48] sm:$0xff]
  %v41 = vld [vmem:[%s1 + $0x50] sm:$0xff]
  %v42 = vld [vmem:[%s1 + $0x58] sm:$0xff]
  %v43 = vld [vmem:[%s1 + $0x60] sm:$0xff]
  %v44 = vld [vmem:[%s1 + $0x68] sm:$0xff]
  %v45 = vld [vmem:[%s1 + $0x70] sm:$0xff]
  %v46 = vld [vmem:[%s1 + $0x78] sm:$0xff]
  %v47 = vld [vmem:[%s1 + $0x80] sm:$0xff]
  %v48 = vld [vmem:[%s1 + $0x88] sm:$0xff]
  %v49 = vld [vmem:[%s1 + $0x90] sm:$0xff]
  %v50 = vld [vmem:[%s1 + $0x98] sm:$0xff]
  %v51 = vld [vmem:[%s1 + $0xa0] sm:$0xff]
  %v52 = vld [vmem:[%s1 + $0xa8] sm:$0xff]
  %v53 = vld [vmem:[%s1 + $0xb0] sm:$0xff]
  %v54 = vld [vmem:[%s1 + $0xb8] sm:$0xff]
  %v55 = vld [vmem:[%s1 + $0xc0] sm:$0xff]
  %v56 = vld [vmem:[%s1 + $0xc8] sm:$0xff]
  %v57 = vld [vmem:[%s1 + $0xd0] sm:$0xff]
  %v58 = vld [vmem:[%s1 + $0xd8] sm:$0xff]
  %v59 = vld [vmem:[%s1 + $0xe0] sm:$0xff]
  %v60 = vld [vmem:[%s1 + $0xe8] sm:$0xff]
  %v61 = vld [vmem:[%s1 + $0xf0] sm:$0xff]
  %v62 = vld [vmem:[%s1 + $0xf8] sm:$0xff]
  %v63 = vld [vmem:[%s1 + $0x100] sm:$0xff]
  %v64 = vld [vmem:[%s1 + $0x108] sm:$0xff]
  %v65 = vld [vmem:[%s1 + $0x110] sm:$0xff]
  %v66 = vld [vmem:[%s1 + $0x118] sm:$0xff]
  %v67 = vld [vmem:[%s1 + $0x120] sm:$0xff]
  %v68 = vld [vmem:[%s1 + $0x128] sm:$0xff]
  %v69 = vld [vmem:[%s1 + $0x130] sm:$0xff]
  %v70 = vld [vmem:[%s1 + $0x138] sm:$0xff]
  %v71 = vld [vmem:[%s1 + $0x140] sm:$0xff]
  %v72 = vld [vmem:[%s1 + $0x148] sm:$0xff]
  %v73 = vld [vmem:[%s1 + $0x150] sm:$0xff]
  %v74 = vld [vmem:[%s1 + $0x158] sm:$0xff]
  %v75 = vld [vmem:[%s1 + $0x160] sm:$0xff]
  %v76 = vld [vmem:[%s1 + $0x168] sm:$0xff]
  %v77 = vld [vmem:[%s1 + $0x170] sm:$0xff]
  %v78 = vld [vmem:[%s1 + $0x178] sm:$0xff]
  %v79 = vld [vmem:[%s1 + $0x180] sm:$0xff]
  %v80 = vld [vmem:[%s1 + $0x188] sm:$0xff]
  %v81 = vld [vmem:[%s1 + $0x190] sm:$0xff]
  %v82 = vld [vmem:[%s1 + $0x198] sm:$0xff]
  %v83 = vld [vmem:[%s1 + $0x1a0] sm:$0xff]
  %v84 = vld [vmem:[%s1 + $0x1a8] sm:$0xff]
  %v85 = vld [vmem:[%s1 + $0x1b0] sm:$0xff]
  %v86 = vld [vmem:[%s1 + $0x1b8] sm:$0xff]
  %v87 = vld [vmem:[%s1 + $0x1c0] sm:$0xff]
  %v88 = vld [vmem:[%s1 + $0x1c8] sm:$0xff]
  %v89 = vld [vmem:[%s1 + $0x1d0] sm:$0xff]
  %v90 = vld [vmem:[%s1 + $0x1d8] sm:$0xff]
  %v91 = vld [vmem:[%s1 + $0x1e0] sm:$0xff]
  %v92 = vld [vmem:[%s1 + $0x1e8] sm:$0xff]
  %v93 = vld [vmem:[%s1 + $0x1f0] sm:$0xff]
  %v94 = vld [vmem:[%s1 + $0x1f8] sm:$0xff]
  %v95 = vld [vmem:[%s1 + $0x200] sm:$0xff]
  %v96 = vld [vmem:[%s1 + $0x208] sm:$0xff]
  %v97 = vld [vmem:[%s1 + $0x210] sm:$0xff]
  %v98 = vld [vmem:[%s1 + $0x218] sm:$0xff]
  %v99 = vld [vmem:[%s1 + $0x220] sm:$0xff]
  %v100 = vld [vmem:[%s1 + $0x228] sm:$0xff]
  %v101 = vld [vmem:[%s1 + $0x230] sm:$0xff]
  %v102 = vld [vmem:[%s1 + $0x238] sm:$0xff]
  %vm103 = vcmask 523264
  %v105 = vsel %vm103, %v15, 0
  %v108 = vsel %vm103, %v20, 0
  %v111 = vsel %vm103, %v25, 0
  %v114 = vsel %vm103, %v30, 0
  %116 = vmatpush.msra.mxu0 %v46
  %117 = vmatpush.msra.mxu0 %v45
  %118 = vmatpush.msra.mxu0 %v44
  %119 = vmatpush.msra.mxu0 %v43
  %120 = vmatpush.msra.mxu0 %v42
  %121 = vmatpush.msra.mxu0 %v41
  %122 = vmatpush.msra.mxu0 %v40
  %123 = vmatpush.msra.mxu0 %v39
  %124 = vmatpush.msra.mxu0 %v38
  %125 = vmatpush.msra.mxu0 %v37
  %126 = vmatpush.msra.mxu0 %v36
  %127 = vmatpush.msra.mxu0 %v35
  %128 = vmatpush.msra.mxu0 %v34
  %129 = vmatpush.msra.mxu0 %v33
  %130 = vmatpush.msra.mxu0 %v32
  %131 = vmatpush.msra.mxu0 %v31
  %132 = vmatmul.f32.gmra.mxu0 %v11
  %v133 = vpop.f32.mrf.mxu0
  %v134 = vadd.f32 0.0, %v133
  %135 = vmatmul.f32.gmra.mxu0 %v16
  %v136 = vpop.f32.mrf.mxu0
  %v137 = vadd.f32 0.0, %v136
  %138 = vmatmul.f32.gmra.mxu0 %v21
  %v139 = vpop.f32.mrf.mxu0
  %v140 = vadd.f32 0.0, %v139
  %141 = vmatmul.f32.gmra.mxu0 %v26
  %v142 = vpop.f32.mrf.mxu0
  %v143 = vadd.f32 0.0, %v142
  %144 = vdwg.mxu0
  %145 = vmatpush.msra.mxu0 %v62
  %146 = vmatpush.msra.mxu0 %v61
  %147 = vmatpush.msra.mxu0 %v60
  %148 = vmatpush.msra.mxu0 %v59
  %149 = vmatpush.msra.mxu0 %v58
  %150 = vmatpush.msra.mxu0 %v57
  %151 = vmatpush.msra.mxu0 %v56
  %152 = vmatpush.msra.mxu0 %v55
  %153 = vmatpush.msra.mxu0 %v54
  %154 = vmatpush.msra.mxu0 %v53
  %155 = vmatpush.msra.mxu0 %v52
  %156 = vmatpush.msra.mxu0 %v51
  %157 = vmatpush.msra.mxu0 %v50
  %158 = vmatpush.msra.mxu0 %v49
  %159 = vmatpush.msra.mxu0 %v48
  %160 = vmatpush.msra.mxu0 %v47
  %161 = vmatmul.f32.gmra.mxu0 %v12
  %v162 = vpop.f32.mrf.mxu0
  %v163 = vadd.f32 %v134, %v162
  %164 = vmatmul.f32.gmra.mxu0 %v17
  %v165 = vpop.f32.mrf.mxu0
  %v166 = vadd.f32 %v137, %v165
  %167 = vmatmul.f32.gmra.mxu0 %v22
  %v168 = vpop.f32.mrf.mxu0
  %v169 = vadd.f32 %v140, %v168
  %170 = vmatmul.f32.gmra.mxu0 %v27
  %v171 = vpop.f32.mrf.mxu0
  %v172 = vadd.f32 %v143, %v171
  %173 = vdwg.mxu0
  %174 = vmatpush.msra.mxu0 %v78
  %175 = vmatpush.msra.mxu0 %v77
  %176 = vmatpush.msra.mxu0 %v76
  %177 = vmatpush.msra.mxu0 %v75
  %178 = vmatpush.msra.mxu0 %v74
  %179 = vmatpush.msra.mxu0 %v73
  %180 = vmatpush.msra.mxu0 %v72
  %181 = vmatpush.msra.mxu0 %v71
  %182 = vmatpush.msra.mxu0 %v70
  %183 = vmatpush.msra.mxu0 %v69
  %184 = vmatpush.msra.mxu0 %v68
  %185 = vmatpush.msra.mxu0 %v67
  %186 = vmatpush.msra.mxu0 %v66
  %187 = vmatpush.msra.mxu0 %v65
  %188 = vmatpush.msra.mxu0 %v64
  %189 = vmatpush.msra.mxu0 %v63
  %190 = vmatmul.f32.gmra.mxu0 %v13
  %v191 = vpop.f32.mrf.mxu0
  %v192 = vadd.f32 %v163, %v191
  %193 = vmatmul.f32.gmra.mxu0 %v18
  %v194 = vpop.f32.mrf.mxu0
  %v195 = vadd.f32 %v166, %v194
  %196 = vmatmul.f32.gmra.mxu0 %v23
  %v197 = vpop.f32.mrf.mxu0
  %v198 = vadd.f32 %v169, %v197
  %199 = vmatmul.f32.gmra.mxu0 %v28
  %v200 = vpop.f32.mrf.mxu0
  %v201 = vadd.f32 %v172, %v200
  %202 = vdwg.mxu0
  %203 = vmatpush.msra.mxu0 %v94
  %204 = vmatpush.msra.mxu0 %v93
  %205 = vmatpush.msra.mxu0 %v92
  %206 = vmatpush.msra.mxu0 %v91
  %207 = vmatpush.msra.mxu0 %v90
  %208 = vmatpush.msra.mxu0 %v89
  %209 = vmatpush.msra.mxu0 %v88
  %210 = vmatpush.msra.mxu0 %v87
  %211 = vmatpush.msra.mxu0 %v86
  %212 = vmatpush.msra.mxu0 %v85
  %213 = vmatpush.msra.mxu0 %v84
  %214 = vmatpush.msra.mxu0 %v83
  %215 = vmatpush.msra.mxu0 %v82
  %216 = vmatpush.msra.mxu0 %v81
  %217 = vmatpush.msra.mxu0 %v80
  %218 = vmatpush.msra.mxu0 %v79
  %219 = vmatmul.f32.gmra.mxu0 %v14
  %v220 = vpop.f32.mrf.mxu0
  %v221 = vadd.f32 %v192, %v220
  %222 = vmatmul.f32.gmra.mxu0 %v19
  %v223 = vpop.f32.mrf.mxu0
  %v224 = vadd.f32 %v195, %v223
  %225 = vmatmul.f32.gmra.mxu0 %v24
  %v226 = vpop.f32.mrf.mxu0
  %v227 = vadd.f32 %v198, %v226
  %228 = vmatmul.f32.gmra.mxu0 %v29
  %v229 = vpop.f32.mrf.mxu0
  %v230 = vadd.f32 %v201, %v229
  %231 = vdwg.mxu0
  %232 = vmatpush.msra.mxu0 0.0
  %233 = vmatpush.msra.mxu0 0.0
  %234 = vmatpush.msra.mxu0 0.0
  %235 = vmatpush.msra.mxu0 0.0
  %236 = vmatpush.msra.mxu0 0.0
  %237 = vmatpush.msra.mxu0 0.0
  %238 = vmatpush.msra.mxu0 0.0
  %239 = vmatpush.msra.mxu0 0.0
  %240 = vmatpush.msra.mxu0 %v102
  %241 = vmatpush.msra.mxu0 %v101
  %242 = vmatpush.msra.mxu0 %v100
  %243 = vmatpush.msra.mxu0 %v99
  %244 = vmatpush.msra.mxu0 %v98
  %245 = vmatpush.msra.mxu0 %v97
  %246 = vmatpush.msra.mxu0 %v96
  %247 = vmatpush.msra.mxu0 %v95
  %248 = vmatmul.f32.gmra.mxu0 %v105
  %v249 = vpop.f32.mrf.mxu0
  %v250 = vadd.f32 %v221, %v249
  %251 = vmatmul.f32.gmra.mxu0 %v108
  %v252 = vpop.f32.mrf.mxu0
  %v253 = vadd.f32 %v224, %v252
  %254 = vmatmul.f32.gmra.mxu0 %v111
  %v255 = vpop.f32.mrf.mxu0
  %v256 = vadd.f32 %v227, %v255
  %257 = vmatmul.f32.gmra.mxu0 %v114
  %v258 = vpop.f32.mrf.mxu0
  %v259 = vadd.f32 %v230, %v258
  %260 = vdwg.mxu0
  %261 = vst [vmem:[%s2] sm:$0xff] %v250
  %262 = vst [vmem:[%s2 + $0x8] sm:$0xff] %v253
  %263 = vst [vmem:[%s2 + $0x10] sm:$0xff] %v256
  %264 = vst [vmem:[%s2 + $0x18] sm:$0xff] %v259
  // Predicated region
  $region10: #{phd_net_res_forward.44} parent=0 // pred_check
    _
  $region11: #{phd_net_res_forward.44} parent=0 // pred_check_branch
    %266 = sbr.rel (0) target = $region13
  $region12: #{phd_net_res_forward.44} parent=0 // pred_region
    _
  $region13: #{phd_net_res_forward.44} parent=0 // pred_fallthru
    _
  // Predicated region
  $region14: #{phd_net_res_forward.44} parent=0 // pred_check
    _
  $region15: #{phd_net_res_forward.44} parent=0 // pred_check_branch
    %268 = sbr.rel (0) target = $region17
  $region16: #{phd_net_res_forward.44} parent=0 // pred_region
    _
  $region17: #{phd_net_res_forward.44} parent=0 // pred_fallthru
    _

// kernel: phd_net_res_forward.43
$region0: #{phd_net_res_forward.43}
  #allocation0 [shape = 'u32[]', space=smem, size = 0x4, offset = 0x4, fixed_abs, tag = 'smem constant byte address 0x4 - core index']
  #allocation1 [shape = 'u32[72,128]{1,0:T(1,128)}', space=vmem, size = 0x9000, scoped, tag = 'internal scratch']
  %s0 = inlined_call_operand.vmem [shape: f32[16,128], index: 0, kind: input, shape index: {}]
  %s1 = inlined_call_operand.vmem [shape: f32[1,128], index: 1, kind: input, shape index: {}]
  %s2 = inlined_call_operand.vmem [shape: f32[1,128], index: 2, kind: input, shape index: {}]
  %s3 = inlined_call_operand.vmem [shape: f32[16,128], index: 3, kind: input, shape index: {}]
  %s4 = inlined_call_operand.vmem [shape: f32[16,128], index: 4, kind: output, shape index: {}]
  %s5 = sld [smem:[#allocation0]]
  $region26: #{phd_net_res_forward.43} parent=0
    _
  %s7 = ssub.s32 1, %s5
  %s8 = scalar_select 0, %s7, %s5
  // Predicated region
  $region2: #{phd_net_res_forward.43} parent=0 // pred_check
    _
  $region3: #{phd_net_res_forward.43} parent=0 // pred_check_branch
    %10 = sbr.rel (0) target = $region5
  $region4: #{phd_net_res_forward.43} parent=0 // pred_region
    _
  $region5: #{phd_net_res_forward.43} parent=0 // pred_fallthru
    _
  // Predicated region
  $region6: #{phd_net_res_forward.43} parent=0 // pred_check
    _
  $region7: #{phd_net_res_forward.43} parent=0 // pred_check_branch
    %12 = sbr.rel (0) target = $region9
  $region8: #{phd_net_res_forward.43} parent=0 // pred_region
    _
  $region9: #{phd_net_res_forward.43} parent=0 // pred_fallthru
    _
  // Predicated region
  $region10: #{phd_net_res_forward.43} parent=0 // pred_check
    _
  $region11: #{phd_net_res_forward.43} parent=0 // pred_check_branch
    %14 = sbr.rel (0) target = $region13
  $region12: #{phd_net_res_forward.43} parent=0 // pred_region
    _
  $region13: #{phd_net_res_forward.43} parent=0 // pred_fallthru
    _
  // Predicated region
  $region14: #{phd_net_res_forward.43} parent=0 // pred_check
    _
  $region15: #{phd_net_res_forward.43} parent=0 // pred_check_branch
    %16 = sbr.rel (0) target = $region17
  $region16: #{phd_net_res_forward.43} parent=0 // pred_region
    _
  $region17: #{phd_net_res_forward.43} parent=0 // pred_fallthru
    _
  %v17 = vld [vmem:[%s0] sm:$0xff]
  %v18 = vld [vmem:[%s0 + $0x8] sm:$0xff]
  %v19 = vld [vmem:[%s1] sm:$0x1]
  %v21 = vperm.slane %v19, 0
  %v23 = vmul.f32 %v17, %v21
  %v24 = vmul.f32 %v18, %v21
  %v25 = vld [vmem:[%s2] sm:$0x1]
  %v27 = vperm.slane %v25, 0
  %v29 = vadd.f32 %v23, %v27
  %v30 = vadd.f32 %v24, %v27
  %v31 = vmul.f32 %v29, 0.5
  %v32 = vmul.f32 %v30, 0.5
  %v33 = vmul.f32 %v29, 0.70710677
  %v34 = vmul.f32 %v30, 0.70710677
  %vm35 = vcmp.ge.f32.partialorder %v33, 0.0
  %vm36 = vcmp.ge.f32.partialorder %v34, 0.0
  %v37 = vsel %vm35, 1.0, -1.0
  %v38 = vsel %vm36, 1.0, -1.0
  %v39 = vand.u32 2147483647, %v33
  %v40 = vand.u32 2147483647, %v34
  %v41 = vmul.f32 %v39, 0.3275911
  %v42 = vmul.f32 %v40, 0.3275911
  %v43 = vadd.f32 %v41, 1.0
  %v44 = vadd.f32 %v42, 1.0
  %v45 = vrcp.pop %v43
  %v46 = vmul.f32 %v43, %v45
  %v47 = vsub.f32 1.0, %v46
  %v48 = vmul.f32 %v45, %v47
  %v49 = vadd.f32 %v45, %v48
  %vm50 = vweird.f32 %v43
  %vm51 = vweird.f32 %v45
  %vm52 = vmor %vm50, %vm51
  %v53 = vsel %vm52, %v45, %v49
  %v54 = vand.u32 2147483647, %v43
  %vm55 = vcmp.eq.f32.partialorder %v54, 8.507059e+37
  %v56 = vand.u32 %v43, 2147483648
  %v57 = vor.u32 1.1754944e-38, %v56
  %v58 = vsel %vm55, %v57, %v53
  %v59 = vrcp.pop %v44
  %v60 = vmul.f32 %v44, %v59
  %v61 = vsub.f32 1.0, %v60
  %v62 = vmul.f32 %v59, %v61
  %v63 = vadd.f32 %v59, %v62
  %vm64 = vweird.f32 %v44
  %vm65 = vweird.f32 %v59
  %vm66 = vmor %vm64, %vm65
  %v67 = vsel %vm66, %v59, %v63
  %v68 = vand.u32 2147483647, %v44
  %vm69 = vcmp.eq.f32.partialorder %v68, 8.507059e+37
  %v70 = vand.u32 %v44, 2147483648
  %v71 = vor.u32 1.1754944e-38, %v70
  %v72 = vsel %vm69, %v71, %v67
  %v73 = vmul.f32 %v58, 1.0614054
  %v74 = vmul.f32 %v72, 1.0614054
  %v75 = vadd.f32 %v73, -1.4531521
  %v76 = vadd.f32 %v74, -1.4531521
  %v77 = vmul.f32 %v75, %v58
  %v78 = vmul.f32 %v76, %v72
  %v79 = vadd.f32 %v77, 1.4214138
  %v80 = vadd.f32 %v78, 1.4214138
  %v81 = vmul.f32 %v79, %v58
  %v82 = vmul.f32 %v80, %v72
  %v83 = vadd.f32 %v81, -0.28449672
  %v84 = vadd.f32 %v82, -0.28449672
  %v85 = vmul.f32 %v83, %v58
  %v86 = vmul.f32 %v84, %v72
  %v87 = vadd.f32 %v85, 0.2548296
  %v88 = vadd.f32 %v86, 0.2548296
  %v89 = vmul.f32 %v87, %v58
  %v90 = vmul.f32 %v88, %v72
  %v91 = vsub.f32 0.0, %v39
  %v92 = vsub.f32 0.0, %v40
  %v93 = vmul.f32 %v91, %v39
  %v94 = vmul.f32 %v92, %v40
  %v95 = vmul.f32 %v93, 1.442695
  %v96 = vpow.pop %v95
  %v97 = vmul.f32 %v94, 1.442695
  %v98 = vpow.pop %v97
  %v99 = vmul.f32 %v89, %v96
  %v100 = vmul.f32 %v90, %v98
  %v101 = vsub.f32 1.0, %v99
  %v102 = vsub.f32 1.0, %v100
  %v103 = vmul.f32 %v37, %v101
  %v104 = vmul.f32 %v38, %v102
  %v105 = vadd.f32 %v103, 1.0
  %v106 = vadd.f32 %v104, 1.0
  %v107 = vmul.f32 %v31, %v105
  %v108 = vmul.f32 %v32, %v106
  %v109 = vld [vmem:[%s3] sm:$0xff]
  %v110 = vld [vmem:[%s3 + $0x8] sm:$0xff]
  %v111 = vadd.f32 %v107, %v109
  %v112 = vadd.f32 %v108, %v110
  %113 = vst [vmem:[%s4] sm:$0xff] %v111
  %114 = vst [vmem:[%s4 + $0x8] sm:$0xff] %v112
  // Predicated region
  $region18: #{phd_net_res_forward.43} parent=0 // pred_check
    _
  $region19: #{phd_net_res_forward.43} parent=0 // pred_check_branch
    %116 = sbr.rel (0) target = $region21
  $region20: #{phd_net_res_forward.43} parent=0 // pred_region
    _
  $region21: #{phd_net_res_forward.43} parent=0 // pred_fallthru
    _
  // Predicated region
  $region22: #{phd_net_res_forward.43} parent=0 // pred_check
    _
  $region23: #{phd_net_res_forward.43} parent=0 // pred_check_branch
    %118 = sbr.rel (0) target = $region25
  $region24: #{phd_net_res_forward.43} parent=0 // pred_region
    _
  $region25: #{phd_net_res_forward.43} parent=0 // pred_fallthru
    _

// kernel: phd_net_res_forward.40
$region0: #{phd_net_res_forward.40}
  #allocation0 [shape = 'u32[]', space=smem, size = 0x4, offset = 0x4, fixed_abs, tag = 'smem constant byte address 0x4 - core index']
  #allocation1 [shape = 'u32[72,128]{1,0:T(1,128)}', space=vmem, size = 0x9000, scoped, tag = 'internal scratch']
  %s0 = inlined_call_operand.vmem [shape: f32[32,576], index: 0, kind: input, shape index: {}]
  %s1 = inlined_call_operand.vmem [shape: f32[576,64], index: 1, kind: input, shape index: {}]
  %s2 = inlined_call_operand.vmem [shape: f32[32,64], index: 2, kind: output, shape index: {0}]
  %s3 = inlined_call_operand.vmem [shape: f32[1,64], index: 3, kind: output, shape index: {1}]
  %s4 = inlined_call_operand.vmem [shape: f32[1,64], index: 4, kind: output, shape index: {2}]
  %5 = xla_tuple %s2, %s3, %s4
  %s6 = sld [smem:[#allocation0]]
  $region38: #{phd_net_res_forward.40} parent=0
    _
  %s8 = ssub.s32 1, %s6
  %s9 = scalar_select 0, %s8, %s6
  // Predicated region
  $region2: #{phd_net_res_forward.40} parent=0 // pred_check
    _
  $region3: #{phd_net_res_forward.40} parent=0 // pred_check_branch
    %11 = sbr.rel (0) target = $region5
  $region4: #{phd_net_res_forward.40} parent=0 // pred_region
    _
  $region5: #{phd_net_res_forward.40} parent=0 // pred_fallthru
    _
  // Predicated region
  $region6: #{phd_net_res_forward.40} parent=0 // pred_check
    _
  $region7: #{phd_net_res_forward.40} parent=0 // pred_check_branch
    %13 = sbr.rel (0) target = $region9
  $region8: #{phd_net_res_forward.40} parent=0 // pred_region
    _
  $region9: #{phd_net_res_forward.40} parent=0 // pred_fallthru
    _
  %p14 = scmp.eq.s32.totalorder 0, 0
  // Predicated region
  $region10: #{phd_net_res_forward.40} parent=0 // pred_check
    %p15 = pneg %p14
  $region11: #{phd_net_res_forward.40} parent=0 // pred_check_branch
    %17 = sbr.rel (%p15) target = $region13
  $region12: #{phd_net_res_forward.40} parent=0 // pred_region
    %vm18 = vcmask 516096
    %19 = vst.msk [vmem:[%s3] sm:$0x1] %vm18, 0.0
    %20 = vst.msk [vmem:[%s4] sm:$0x1] %vm18, 0.0
  $region13: #{phd_net_res_forward.40} parent=0 // pred_fallthru
    _
  %v21 = vld [vmem:[%s0] sm:$0xff]
  %v22 = vld [vmem:[%s0 + $0x8] sm:$0xff]
  %v23 = vld [vmem:[%s0 + $0x10] sm:$0xff]
  %v24 = vld [vmem:[%s0 + $0x18] sm:$0xff]
  %v25 = vld [vmem:[%s0 + $0x20] sm:$0xff]
  %v26 = vld [vmem:[%s0 + $0x28] sm:$0xff]
  %v27 = vld [vmem:[%s0 + $0x30] sm:$0xff]
  %v28 = vld [vmem:[%s0 + $0x38] sm:$0xff]
  %v29 = vld [vmem:[%s0 + $0x40] sm:$0xff]
  %v30 = vld [vmem:[%s0 + $0x48] sm:$0xff]
  %v31 = vld [vmem:[%s0 + $0x50] sm:$0xff]
  %v32 = vld [vmem:[%s0 + $0x58] sm:$0xff]
  %v33 = vld [vmem:[%s0 + $0x60] sm:$0xff]
  %v34 = vld [vmem:[%s0 + $0x68] sm:$0xff]
  %v35 = vld [vmem:[%s0 + $0x70] sm:$0xff]
  %v36 = vld [vmem:[%s0 + $0x78] sm:$0xff]
  %v37 = vld [vmem:[%s0 + $0x80] sm:$0xff]
  %v38 = vld [vmem:[%s0 + $0x88] sm:$0xff]
  %v39 = vld [vmem:[%s0 + $0x90] sm:$0xff]
  %v40 = vld [vmem:[%s0 + $0x98] sm:$0xff]
  %v41 = vld [vmem:[%s1] sm:$0xff]
  %v42 = vld [vmem:[%s1 + $0x8] sm:$0xff]
  %v43 = vld [vmem:[%s1 + $0x10] sm:$0xff]
  %v44 = vld [vmem:[%s1 + $0x18] sm:$0xff]
  %v45 = vld [vmem:[%s1 + $0x20] sm:$0xff]
  %v46 = vld [vmem:[%s1 + $0x28] sm:$0xff]
  %v47 = vld [vmem:[%s1 + $0x30] sm:$0xff]
  %v48 = vld [vmem:[%s1 + $0x38] sm:$0xff]
  %v49 = vld [vmem:[%s1 + $0x40] sm:$0xff]
  %v50 = vld [vmem:[%s1 + $0x48] sm:$0xff]
  %v51 = vld [vmem:[%s1 + $0x50] sm:$0xff]
  %v52 = vld [vmem:[%s1 + $0x58] sm:$0xff]
  %v53 = vld [vmem:[%s1 + $0x60] sm:$0xff]
  %v54 = vld [vmem:[%s1 + $0x68] sm:$0xff]
  %v55 = vld [vmem:[%s1 + $0x70] sm:$0xff]
  %v56 = vld [vmem:[%s1 + $0x78] sm:$0xff]
  %v57 = vld [vmem:[%s1 + $0x80] sm:$0xff]
  %v58 = vld [vmem:[%s1 + $0x88] sm:$0xff]
  %v59 = vld [vmem:[%s1 + $0x90] sm:$0xff]
  %v60 = vld [vmem:[%s1 + $0x98] sm:$0xff]
  %v61 = vld [vmem:[%s1 + $0xa0] sm:$0xff]
  %v62 = vld [vmem:[%s1 + $0xa8] sm:$0xff]
  %v63 = vld [vmem:[%s1 + $0xb0] sm:$0xff]
  %v64 = vld [vmem:[%s1 + $0xb8] sm:$0xff]
  %v65 = vld [vmem:[%s1 + $0xc0] sm:$0xff]
  %v66 = vld [vmem:[%s1 + $0xc8] sm:$0xff]
  %v67 = vld [vmem:[%s1 + $0xd0] sm:$0xff]
  %v68 = vld [vmem:[%s1 + $0xd8] sm:$0xff]
  %v69 = vld [vmem:[%s1 + $0xe0] sm:$0xff]
  %v70 = vld [vmem:[%s1 + $0xe8] sm:$0xff]
  %v71 = vld [vmem:[%s1 + $0xf0] sm:$0xff]
  %v72 = vld [vmem:[%s1 + $0xf8] sm:$0xff]
  %v73 = vld [vmem:[%s1 + $0x100] sm:$0xff]
  %v74 = vld [vmem:[%s1 + $0x108] sm:$0xff]
  %v75 = vld [vmem:[%s1 + $0x110] sm:$0xff]
  %v76 = vld [vmem:[%s1 + $0x118] sm:$0xff]
  %v77 = vld [vmem:[%s1 + $0x120] sm:$0xff]
  %v78 = vld [vmem:[%s1 + $0x128] sm:$0xff]
  %v79 = vld [vmem:[%s1 + $0x130] sm:$0xff]
  %v80 = vld [vmem:[%s1 + $0x138] sm:$0xff]
  %v81 = vld [vmem:[%s1 + $0x140] sm:$0xff]
  %v82 = vld [vmem:[%s1 + $0x148] sm:$0xff]
  %v83 = vld [vmem:[%s1 + $0x150] sm:$0xff]
  %v84 = vld [vmem:[%s1 + $0x158] sm:$0xff]
  %v85 = vld [vmem:[%s1 + $0x160] sm:$0xff]
  %v86 = vld [vmem:[%s1 + $0x168] sm:$0xff]
  %v87 = vld [vmem:[%s1 + $0x170] sm:$0xff]
  %v88 = vld [vmem:[%s1 + $0x178] sm:$0xff]
  %v89 = vld [vmem:[%s1 + $0x180] sm:$0xff]
  %v90 = vld [vmem:[%s1 + $0x188] sm:$0xff]
  %v91 = vld [vmem:[%s1 + $0x190] sm:$0xff]
  %v92 = vld [vmem:[%s1 + $0x198] sm:$0xff]
  %v93 = vld [vmem:[%s1 + $0x1a0] sm:$0xff]
  %v94 = vld [vmem:[%s1 + $0x1a8] sm:$0xff]
  %v95 = vld [vmem:[%s1 + $0x1b0] sm:$0xff]
  %v96 = vld [vmem:[%s1 + $0x1b8] sm:$0xff]
  %v97 = vld [vmem:[%s1 + $0x1c0] sm:$0xff]
  %v98 = vld [vmem:[%s1 + $0x1c8] sm:$0xff]
  %v99 = vld [vmem:[%s1 + $0x1d0] sm:$0xff]
  %v100 = vld [vmem:[%s1 + $0x1d8] sm:$0xff]
  %v101 = vld [vmem:[%s1 + $0x1e0] sm:$0xff]
  %v102 = vld [vmem:[%s1 + $0x1e8] sm:$0xff]
  %v103 = vld [vmem:[%s1 + $0x1f0] sm:$0xff]
  %v104 = vld [vmem:[%s1 + $0x1f8] sm:$0xff]
  %v105 = vld [vmem:[%s1 + $0x200] sm:$0xff]
  %v106 = vld [vmem:[%s1 + $0x208] sm:$0xff]
  %v107 = vld [vmem:[%s1 + $0x210] sm:$0xff]
  %v108 = vld [vmem:[%s1 + $0x218] sm:$0xff]
  %v109 = vld [vmem:[%s1 + $0x220] sm:$0xff]
  %v110 = vld [vmem:[%s1 + $0x228] sm:$0xff]
  %v111 = vld [vmem:[%s1 + $0x230] sm:$0xff]
  %v112 = vld [vmem:[%s1 + $0x238] sm:$0xff]
  %vm113 = vcmask 523264
  %v115 = vsel %vm113, %v25, 0
  %v118 = vsel %vm113, %v30, 0
  %v121 = vsel %vm113, %v35, 0
  %v124 = vsel %vm113, %v40, 0
  %126 = vmatpush.msra.mxu0 %v56
  %127 = vmatpush.msra.mxu0 %v55
  %128 = vmatpush.msra.mxu0 %v54
  %129 = vmatpush.msra.mxu0 %v53
  %130 = vmatpush.msra.mxu0 %v52
  %131 = vmatpush.msra.mxu0 %v51
  %132 = vmatpush.msra.mxu0 %v50
  %133 = vmatpush.msra.mxu0 %v49
  %134 = vmatpush.msra.mxu0 %v48
  %135 = vmatpush.msra.mxu0 %v47
  %136 = vmatpush.msra.mxu0 %v46
  %137 = vmatpush.msra.mxu0 %v45
  %138 = vmatpush.msra.mxu0 %v44
  %139 = vmatpush.msra.mxu0 %v43
  %140 = vmatpush.msra.mxu0 %v42
  %141 = vmatpush.msra.mxu0 %v41
  %142 = vmatmul.f32.gmra.mxu0 %v21
  %v143 = vpop.f32.mrf.mxu0
  %v144 = vadd.f32 0.0, %v143
  %145 = vmatmul.f32.gmra.mxu0 %v26
  %v146 = vpop.f32.mrf.mxu0
  %v147 = vadd.f32 0.0, %v146
  %148 = vmatmul.f32.gmra.mxu0 %v31
  %v149 = vpop.f32.mrf.mxu0
  %v150 = vadd.f32 0.0, %v149
  %151 = vmatmul.f32.gmra.mxu0 %v36
  %v152 = vpop.f32.mrf.mxu0
  %v153 = vadd.f32 0.0, %v152
  %154 = vdwg.mxu0
  %155 = vmatpush.msra.mxu0 %v72
  %156 = vmatpush.msra.mxu0 %v71
  %157 = vmatpush.msra.mxu0 %v70
  %158 = vmatpush.msra.mxu0 %v69
  %159 = vmatpush.msra.mxu0 %v68
  %160 = vmatpush.msra.mxu0 %v67
  %161 = vmatpush.msra.mxu0 %v66
  %162 = vmatpush.msra.mxu0 %v65
  %163 = vmatpush.msra.mxu0 %v64
  %164 = vmatpush.msra.mxu0 %v63
  %165 = vmatpush.msra.mxu0 %v62
  %166 = vmatpush.msra.mxu0 %v61
  %167 = vmatpush.msra.mxu0 %v60
  %168 = vmatpush.msra.mxu0 %v59
  %169 = vmatpush.msra.mxu0 %v58
  %170 = vmatpush.msra.mxu0 %v57
  %171 = vmatmul.f32.gmra.mxu0 %v22
  %v172 = vpop.f32.mrf.mxu0
  %v173 = vadd.f32 %v144, %v172
  %174 = vmatmul.f32.gmra.mxu0 %v27
  %v175 = vpop.f32.mrf.mxu0
  %v176 = vadd.f32 %v147, %v175
  %177 = vmatmul.f32.gmra.mxu0 %v32
  %v178 = vpop.f32.mrf.mxu0
  %v179 = vadd.f32 %v150, %v178
  %180 = vmatmul.f32.gmra.mxu0 %v37
  %v181 = vpop.f32.mrf.mxu0
  %v182 = vadd.f32 %v153, %v181
  %183 = vdwg.mxu0
  %184 = vmatpush.msra.mxu0 %v88
  %185 = vmatpush.msra.mxu0 %v87
  %186 = vmatpush.msra.mxu0 %v86
  %187 = vmatpush.msra.mxu0 %v85
  %188 = vmatpush.msra.mxu0 %v84
  %189 = vmatpush.msra.mxu0 %v83
  %190 = vmatpush.msra.mxu0 %v82
  %191 = vmatpush.msra.mxu0 %v81
  %192 = vmatpush.msra.mxu0 %v80
  %193 = vmatpush.msra.mxu0 %v79
  %194 = vmatpush.msra.mxu0 %v78
  %195 = vmatpush.msra.mxu0 %v77
  %196 = vmatpush.msra.mxu0 %v76
  %197 = vmatpush.msra.mxu0 %v75
  %198 = vmatpush.msra.mxu0 %v74
  %199 = vmatpush.msra.mxu0 %v73
  %200 = vmatmul.f32.gmra.mxu0 %v23
  %v201 = vpop.f32.mrf.mxu0
  %v202 = vadd.f32 %v173, %v201
  %203 = vmatmul.f32.gmra.mxu0 %v28
  %v204 = vpop.f32.mrf.mxu0
  %v205 = vadd.f32 %v176, %v204
  %206 = vmatmul.f32.gmra.mxu0 %v33
  %v207 = vpop.f32.mrf.mxu0
  %v208 = vadd.f32 %v179, %v207
  %209 = vmatmul.f32.gmra.mxu0 %v38
  %v210 = vpop.f32.mrf.mxu0
  %v211 = vadd.f32 %v182, %v210
  %212 = vdwg.mxu0
  %213 = vmatpush.msra.mxu0 %v104
  %214 = vmatpush.msra.mxu0 %v103
  %215 = vmatpush.msra.mxu0 %v102
  %216 = vmatpush.msra.mxu0 %v101
  %217 = vmatpush.msra.mxu0 %v100
  %218 = vmatpush.msra.mxu0 %v99
  %219 = vmatpush.msra.mxu0 %v98
  %220 = vmatpush.msra.mxu0 %v97
  %221 = vmatpush.msra.mxu0 %v96
  %222 = vmatpush.msra.mxu0 %v95
  %223 = vmatpush.msra.mxu0 %v94
  %224 = vmatpush.msra.mxu0 %v93
  %225 = vmatpush.msra.mxu0 %v92
  %226 = vmatpush.msra.mxu0 %v91
  %227 = vmatpush.msra.mxu0 %v90
  %228 = vmatpush.msra.mxu0 %v89
  %229 = vmatmul.f32.gmra.mxu0 %v24
  %v230 = vpop.f32.mrf.mxu0
  %v231 = vadd.f32 %v202, %v230
  %232 = vmatmul.f32.gmra.mxu0 %v29
  %v233 = vpop.f32.mrf.mxu0
  %v234 = vadd.f32 %v205, %v233
  %235 = vmatmul.f32.gmra.mxu0 %v34
  %v236 = vpop.f32.mrf.mxu0
  %v237 = vadd.f32 %v208, %v236
  %238 = vmatmul.f32.gmra.mxu0 %v39
  %v239 = vpop.f32.mrf.mxu0
  %v240 = vadd.f32 %v211, %v239
  %241 = vdwg.mxu0
  %242 = vmatpush.msra.mxu0 0.0
  %243 = vmatpush.msra.mxu0 0.0
  %244 = vmatpush.msra.mxu0 0.0
  %245 = vmatpush.msra.mxu0 0.0
  %246 = vmatpush.msra.mxu0 0.0
  %247 = vmatpush.msra.mxu0 0.0
  %248 = vmatpush.msra.mxu0 0.0
  %249 = vmatpush.msra.mxu0 0.0
  %250 = vmatpush.msra.mxu0 %v112
  %251 = vmatpush.msra.mxu0 %v111
  %252 = vmatpush.msra.mxu0 %v110
  %253 = vmatpush.msra.mxu0 %v109
  %254 = vmatpush.msra.mxu0 %v108
  %255 = vmatpush.msra.mxu0 %v107
  %256 = vmatpush.msra.mxu0 %v106
  %257 = vmatpush.msra.mxu0 %v105
  %258 = vmatmul.f32.gmra.mxu0 %v115
  %v259 = vpop.f32.mrf.mxu0
  %v260 = vadd.f32 %v231, %v259
  %261 = vmatmul.f32.gmra.mxu0 %v118
  %v262 = vpop.f32.mrf.mxu0
  %v263 = vadd.f32 %v234, %v262
  %264 = vmatmul.f32.gmra.mxu0 %v121
  %v265 = vpop.f32.mrf.mxu0
  %v266 = vadd.f32 %v237, %v265
  %267 = vmatmul.f32.gmra.mxu0 %v124
  %v268 = vpop.f32.mrf.mxu0
  %v269 = vadd.f32 %v240, %v268
  %270 = vdwg.mxu0
  %271 = vst.msk [vmem:[%s2] sm:$0xff] %vm113, %v260
  %272 = vst.msk [vmem:[%s2 + $0x8] sm:$0xff] %vm113, %v263
  %273 = vst.msk [vmem:[%s2 + $0x10] sm:$0xff] %vm113, %v266
  %274 = vst.msk [vmem:[%s2 + $0x18] sm:$0xff] %vm113, %v269
  %v275 = vld [vmem:[%s3] sm:$0x1]
  %v276 = vsel %vm113, %v260, 0.0
  %v277 = vsel %vm113, %v263, 0.0
  %v278 = vadd.f32 %v276, %v277
  %v279 = vsel %vm113, %v266, 0.0
  %v280 = vadd.f32 %v278, %v279
  %v281 = vsel %vm113, %v269, 0.0
  %v282 = vadd.f32 %v280, %v281
  %v283 = vrot.slane %v282, 4
  %v284 = vadd.f32 %v282, %v283
  %v285 = vrot.slane %v284, 2
  %v286 = vadd.f32 %v284, %v285
  %v287 = vrot.slane %v286, 1
  %v288 = vadd.f32 %v286, %v287
  %v289 = vadd.f32 %v275, %v288
  %vm290 = vcmask 516096
  %291 = vst.msk [vmem:[%s3] sm:$0x1] %vm290, %v289
  %v292 = vld [vmem:[%s4] sm:$0x1]
  %v293 = vmul.f32 %v260, %v260
  %v294 = vmul.f32 %v263, %v263
  %v295 = vmul.f32 %v266, %v266
  %v296 = vmul.f32 %v269, %v269
  %v297 = vsel %vm113, %v293, 0.0
  %v298 = vsel %vm113, %v294, 0.0
  %v299 = vadd.f32 %v297, %v298
  %v300 = vsel %vm113, %v295, 0.0
  %v301 = vadd.f32 %v299, %v300
  %v302 = vsel %vm113, %v296, 0.0
  %v303 = vadd.f32 %v301, %v302
  %v304 = vrot.slane %v303, 4
  %v305 = vadd.f32 %v303, %v304
  %v306 = vrot.slane %v305, 2
  %v307 = vadd.f32 %v305, %v306
  %v308 = vrot.slane %v307, 1
  %v309 = vadd.f32 %v307, %v308
  %v310 = vadd.f32 %v292, %v309
  %311 = vst.msk [vmem:[%s4] sm:$0x1] %vm290, %v310
  // Predicated region
  $region14: #{phd_net_res_forward.40} parent=0 // pred_check
    _
  $region15: #{phd_net_res_forward.40} parent=0 // pred_check_branch
    %313 = sbr.rel (0) target = $region17
  $region16: #{phd_net_res_forward.40} parent=0 // pred_region
    _
  $region17: #{phd_net_res_forward.40} parent=0 // pred_fallthru
    _
  // Predicated region
  $region18: #{phd_net_res_forward.40} parent=0 // pred_check
    _
  $region19: #{phd_net_res_forward.40} parent=0 // pred_check_branch
    %315 = sbr.rel (0) target = $region21
  $region20: #{phd_net_res_forward.40} parent=0 // pred_region
    _
  $region21: #{phd_net_res_forward.40} parent=0 // pred_fallthru
    _
  // Predicated region
  $region22: #{phd_net_res_forward.40} parent=0 // pred_check
    _
  $region23: #{phd_net_res_forward.40} parent=0 // pred_check_branch
    %317 = sbr.rel (0) target = $region25
  $region24: #{phd_net_res_forward.40} parent=0 // pred_region
    _
  $region25: #{phd_net_res_forward.40} parent=0 // pred_fallthru
    _
  // Predicated region
  $region26: #{phd_net_res_forward.40} parent=0 // pred_check
    _
  $region27: #{phd_net_res_forward.40} parent=0 // pred_check_branch
    %319 = sbr.rel (0) target = $region29
  $region28: #{phd_net_res_forward.40} parent=0 // pred_region
    _
  $region29: #{phd_net_res_forward.40} parent=0 // pred_fallthru
    _
  // Predicated region
  $region30: #{phd_net_res_forward.40} parent=0 // pred_check
    _
  $region31: #{phd_net_res_forward.40} parent=0 // pred_check_branch
    %321 = sbr.rel (0) target = $region33
  $region32: #{phd_net_res_forward.40} parent=0 // pred_region
    _
  $region33: #{phd_net_res_forward.40} parent=0 // pred_fallthru
    _
  // Predicated region
  $region34: #{phd_net_res_forward.40} parent=0 // pred_check
    _
  $region35: #{phd_net_res_forward.40} parent=0 // pred_check_branch
    %323 = sbr.rel (0) target = $region37
  $region36: #{phd_net_res_forward.40} parent=0 // pred_region
    _
  $region37: #{phd_net_res_forward.40} parent=0 // pred_fallthru
    _

// kernel: phd_net_res_forward.45
$region0: #{phd_net_res_forward.45}
  #allocation0 [shape = 'u32[]', space=smem, size = 0x4, offset = 0x4, fixed_abs, tag = 'smem constant byte address 0x4 - core index']
  #allocation1 [shape = 'u32[72,128]{1,0:T(1,128)}', space=vmem, size = 0x9000, scoped, tag = 'internal scratch']
  %s0 = inlined_call_operand.vmem [shape: f32[8,128], index: 0, kind: input, shape index: {}]
  %s1 = inlined_call_operand.vmem [shape: f32[8,128], index: 1, kind: input, shape index: {}]
  %s2 = inlined_call_operand.vmem [shape: f32[8,128], index: 2, kind: input, shape index: {}]
  %s3 = inlined_call_operand.vmem [shape: f32[8,128], index: 3, kind: input, shape index: {}]
  %s4 = inlined_call_operand.vmem [shape: f32[8,128], index: 4, kind: output, shape index: {0}]
  %s5 = inlined_call_operand.vmem [shape: f32[1,128], index: 5, kind: output, shape index: {1}]
  %s6 = inlined_call_operand.vmem [shape: f32[1,128], index: 6, kind: output, shape index: {2}]
  %7 = xla_tuple %s4, %s5, %s6
  %s8 = sld [smem:[#allocation0]]
  $region46: #{phd_net_res_forward.45} parent=0
    _
  %s10 = ssub.s32 1, %s8
  %s11 = scalar_select 0, %s10, %s8
  // Predicated region
  $region2: #{phd_net_res_forward.45} parent=0 // pred_check
    _
  $region3: #{phd_net_res_forward.45} parent=0 // pred_check_branch
    %13 = sbr.rel (0) target = $region5
  $region4: #{phd_net_res_forward.45} parent=0 // pred_region
    _
  $region5: #{phd_net_res_forward.45} parent=0 // pred_fallthru
    _
  // Predicated region
  $region6: #{phd_net_res_forward.45} parent=0 // pred_check
    _
  $region7: #{phd_net_res_forward.45} parent=0 // pred_check_branch
    %15 = sbr.rel (0) target = $region9
  $region8: #{phd_net_res_forward.45} parent=0 // pred_region
    _
  $region9: #{phd_net_res_forward.45} parent=0 // pred_fallthru
    _
  // Predicated region
  $region10: #{phd_net_res_forward.45} parent=0 // pred_check
    _
  $region11: #{phd_net_res_forward.45} parent=0 // pred_check_branch
    %17 = sbr.rel (0) target = $region13
  $region12: #{phd_net_res_forward.45} parent=0 // pred_region
    _
  $region13: #{phd_net_res_forward.45} parent=0 // pred_fallthru
    _
  // Predicated region
  $region14: #{phd_net_res_forward.45} parent=0 // pred_check
    _
  $region15: #{phd_net_res_forward.45} parent=0 // pred_check_branch
    %19 = sbr.rel (0) target = $region17
  $region16: #{phd_net_res_forward.45} parent=0 // pred_region
    _
  $region17: #{phd_net_res_forward.45} parent=0 // pred_fallthru
    _
  %p20 = scmp.eq.s32.totalorder 0, 0
  // Predicated region
  $region18: #{phd_net_res_forward.45} parent=0 // pred_check
    %p21 = pneg %p20
  $region19: #{phd_net_res_forward.45} parent=0 // pred_check_branch
    %23 = sbr.rel (%p21) target = $region21
  $region20: #{phd_net_res_forward.45} parent=0 // pred_region
    %24 = vst [vmem:[%s5] sm:$0x1] 0.0
    %25 = vst [vmem:[%s6] sm:$0x1] 0.0
  $region21: #{phd_net_res_forward.45} parent=0 // pred_fallthru
    _
  %v26 = vld [vmem:[%s0] sm:$0xff]
  %v27 = vld [vmem:[%s1] sm:$0xff]
  %v28 = vmax.f32 %v26, %v27
  %v29 = vld [vmem:[%s2] sm:$0xff]
  %v30 = vld [vmem:[%s3] sm:$0xff]
  %v31 = vmax.f32 %v29, %v30
  %v32 = vmax.f32 %v28, %v31
  %33 = vst [vmem:[%s4] sm:$0xff] %v32
  %v34 = vld [vmem:[%s5] sm:$0x1]
  %v35 = vrot.slane %v32, 4
  %v36 = vadd.f32 %v32, %v35
  %v37 = vrot.slane %v36, 2
  %v38 = vadd.f32 %v36, %v37
  %v39 = vrot.slane %v38, 1
  %v40 = vadd.f32 %v38, %v39
  %v41 = vadd.f32 %v34, %v40
  %42 = vst [vmem:[%s5] sm:$0x1] %v41
  %v43 = vld [vmem:[%s6] sm:$0x1]
  %v44 = vmul.f32 %v32, %v32
  %v45 = vrot.slane %v44, 4
  %v46 = vadd.f32 %v44, %v45
  %v47 = vrot.slane %v46, 2
  %v48 = vadd.f32 %v46, %v47
  %v49 = vrot.slane %v48, 1
  %v50 = vadd.f32 %v48, %v49
  %v51 = vadd.f32 %v43, %v50
  %52 = vst [vmem:[%s6] sm:$0x1] %v51
  // Predicated region
  $region22: #{phd_net_res_forward.45} parent=0 // pred_check
    _
  $region23: #{phd_net_res_forward.45} parent=0 // pred_check_branch
    %54 = sbr.rel (0) target = $region25
  $region24: #{phd_net_res_forward.45} parent=0 // pred_region
    _
  $region25: #{phd_net_res_forward.45} parent=0 // pred_fallthru
    _
  // Predicated region
  $region26: #{phd_net_res_forward.45} parent=0 // pred_check
    _
  $region27: #{phd_net_res_forward.45} parent=0 // pred_check_branch
    %56 = sbr.rel (0) target = $region29
  $region28: #{phd_net_res_forward.45} parent=0 // pred_region
    _
  $region29: #{phd_net_res_forward.45} parent=0 // pred_fallthru
    _
  // Predicated region
  $region30: #{phd_net_res_forward.45} parent=0 // pred_check
    _
  $region31: #{phd_net_res_forward.45} parent=0 // pred_check_branch
    %58 = sbr.rel (0) target = $region33
  $region32: #{phd_net_res_forward.45} parent=0 // pred_region
    _
  $region33: #{phd_net_res_forward.45} parent=0 // pred_fallthru
    _
  // Predicated region
  $region34: #{phd_net_res_forward.45} parent=0 // pred_check
    _
  $region35: #{phd_net_res_forward.45} parent=0 // pred_check_branch
    %60 = sbr.rel (0) target = $region37
  $region36: #{phd_net_res_forward.45} parent=0 // pred_region
    _
  $region37: #{phd_net_res_forward.45} parent=0 // pred_fallthru
    _
  // Predicated region
  $region38: #{phd_net_res_forward.45} parent=0 // pred_check
    _
  $region39: #{phd_net_res_forward.45} parent=0 // pred_check_branch
    %62 = sbr.rel (0) target = $region41
  $region40: #{phd_net_res_forward.45} parent=0 // pred_region
    _
  $region41: #{phd_net_res_forward.45} parent=0 // pred_fallthru
    _
  // Predicated region
  $region42: #{phd_net_res_forward.45} parent=0 // pred_check
    _
  $region43: #{phd_net_res_forward.45} parent=0 // pred_check_branch
    %64 = sbr.rel (0) target = $region45
  $region44: #{phd_net_res_forward.45} parent=0 // pred_region
    _
  $region45: #{phd_net_res_forward.45} parent=0 // pred_fallthru
    _

// kernel: phd_net_res_forward.46
$region0: #{phd_net_res_forward.46}
  #allocation0 [shape = 'u32[]', space=smem, size = 0x4, offset = 0x4, fixed_abs, tag = 'smem constant byte address 0x4 - core index']
  #allocation1 [shape = 'u32[72,128]{1,0:T(1,128)}', space=vmem, size = 0x9000, scoped, tag = 'internal scratch']
  %s0 = inlined_call_operand.vmem [shape: f32[8,128], index: 0, kind: input, shape index: {}]
  %s1 = inlined_call_operand.vmem [shape: f32[1,128], index: 1, kind: input, shape index: {}]
  %s2 = inlined_call_operand.vmem [shape: f32[1,128], index: 2, kind: input, shape index: {}]
  %s3 = inlined_call_operand.vmem [shape: f32[8,128], index: 3, kind: output, shape index: {}]
  %s4 = sld [smem:[#allocation0]]
  $region22: #{phd_net_res_forward.46} parent=0
    _
  %s6 = ssub.s32 1, %s4
  %s7 = scalar_select 0, %s6, %s4
  // Predicated region
  $region2: #{phd_net_res_forward.46} parent=0 // pred_check
    _
  $region3: #{phd_net_res_forward.46} parent=0 // pred_check_branch
    %9 = sbr.rel (0) target = $region5
  $region4: #{phd_net_res_forward.46} parent=0 // pred_region
    _
  $region5: #{phd_net_res_forward.46} parent=0 // pred_fallthru
    _
  // Predicated region
  $region6: #{phd_net_res_forward.46} parent=0 // pred_check
    _
  $region7: #{phd_net_res_forward.46} parent=0 // pred_check_branch
    %11 = sbr.rel (0) target = $region9
  $region8: #{phd_net_res_forward.46} parent=0 // pred_region
    _
  $region9: #{phd_net_res_forward.46} parent=0 // pred_fallthru
    _
  // Predicated region
  $region10: #{phd_net_res_forward.46} parent=0 // pred_check
    _
  $region11: #{phd_net_res_forward.46} parent=0 // pred_check_branch
    %13 = sbr.rel (0) target = $region13
  $region12: #{phd_net_res_forward.46} parent=0 // pred_region
    _
  $region13: #{phd_net_res_forward.46} parent=0 // pred_fallthru
    _
  %v14 = vld [vmem:[%s0] sm:$0xff]
  %v15 = vld [vmem:[%s1] sm:$0x1]
  %v17 = vperm.slane %v15, 0
  %v19 = vmul.f32 %v14, %v17
  %v20 = vld [vmem:[%s2] sm:$0x1]
  %v22 = vperm.slane %v20, 0
  %v24 = vadd.f32 %v19, %v22
  %v25 = vmul.f32 %v24, 0.5
  %v26 = vmul.f32 %v24, 0.70710677
  %vm27 = vcmp.ge.f32.partialorder %v26, 0.0
  %v28 = vsel %vm27, 1.0, -1.0
  %v29 = vand.u32 2147483647, %v26
  %v30 = vmul.f32 %v29, 0.3275911
  %v31 = vadd.f32 %v30, 1.0
  %v32 = vrcp.pop %v31
  %v33 = vmul.f32 %v31, %v32
  %v34 = vsub.f32 1.0, %v33
  %v35 = vmul.f32 %v32, %v34
  %v36 = vadd.f32 %v32, %v35
  %vm37 = vweird.f32 %v31
  %vm38 = vweird.f32 %v32
  %vm39 = vmor %vm37, %vm38
  %v40 = vsel %vm39, %v32, %v36
  %v41 = vand.u32 2147483647, %v31
  %vm42 = vcmp.eq.f32.partialorder %v41, 8.507059e+37
  %v43 = vand.u32 %v31, 2147483648
  %v44 = vor.u32 1.1754944e-38, %v43
  %v45 = vsel %vm42, %v44, %v40
  %v46 = vmul.f32 %v45, 1.0614054
  %v47 = vadd.f32 %v46, -1.4531521
  %v48 = vmul.f32 %v47, %v45
  %v49 = vadd.f32 %v48, 1.4214138
  %v50 = vmul.f32 %v49, %v45
  %v51 = vadd.f32 %v50, -0.28449672
  %v52 = vmul.f32 %v51, %v45
  %v53 = vadd.f32 %v52, 0.2548296
  %v54 = vmul.f32 %v53, %v45
  %v55 = vsub.f32 0.0, %v29
  %v56 = vmul.f32 %v55, %v29
  %v57 = vmul.f32 %v56, 1.442695
  %v58 = vpow.pop %v57
  %v59 = vmul.f32 %v54, %v58
  %v60 = vsub.f32 1.0, %v59
  %v61 = vmul.f32 %v28, %v60
  %v62 = vadd.f32 %v61, 1.0
  %v63 = vmul.f32 %v25, %v62
  %64 = vst [vmem:[%s3] sm:$0xff] %v63
  // Predicated region
  $region14: #{phd_net_res_forward.46} parent=0 // pred_check
    _
  $region15: #{phd_net_res_forward.46} parent=0 // pred_check_branch
    %66 = sbr.rel (0) target = $region17
  $region16: #{phd_net_res_forward.46} parent=0 // pred_region
    _
  $region17: #{phd_net_res_forward.46} parent=0 // pred_fallthru
    _
  // Predicated region
  $region18: #{phd_net_res_forward.46} parent=0 // pred_check
    _
  $region19: #{phd_net_res_forward.46} parent=0 // pred_check_branch
    %68 = sbr.rel (0) target = $region21
  $region20: #{phd_net_res_forward.46} parent=0 // pred_region
    _
  $region21: #{phd_net_res_forward.46} parent=0 // pred_fallthru
    _

// kernel: phd_net_res_forward.50
$region0: #{phd_net_res_forward.50}
  #allocation0 [shape = 'u32[]', space=smem, size = 0x4, offset = 0x4, fixed_abs, tag = 'smem constant byte address 0x4 - core index']
  #allocation1 [shape = 'u32[72,128]{1,0:T(1,128)}', space=vmem, size = 0x9000, scoped, tag = 'internal scratch']
  %s0 = inlined_call_operand.vmem [shape: f32[8,128], index: 0, kind: input, shape index: {}]
  %s1 = inlined_call_operand.vmem [shape: f32[1,128], index: 1, kind: input, shape index: {}]
  %s2 = inlined_call_operand.vmem [shape: f32[1,128], index: 2, kind: input, shape index: {}]
  %s3 = inlined_call_operand.vmem [shape: f32[8,128], index: 3, kind: input, shape index: {}]
  %s4 = inlined_call_operand.vmem [shape: f32[8,128], index: 4, kind: output, shape index: {}]
  %s5 = sld [smem:[#allocation0]]
  $region26: #{phd_net_res_forward.50} parent=0
    _
  %s7 = ssub.s32 1, %s5
  %s8 = scalar_select 0, %s7, %s5
  // Predicated region
  $region2: #{phd_net_res_forward.50} parent=0 // pred_check
    _
  $region3: #{phd_net_res_forward.50} parent=0 // pred_check_branch
    %10 = sbr.rel (0) target = $region5
  $region4: #{phd_net_res_forward.50} parent=0 // pred_region
    _
  $region5: #{phd_net_res_forward.50} parent=0 // pred_fallthru
    _
  // Predicated region
  $region6: #{phd_net_res_forward.50} parent=0 // pred_check
    _
  $region7: #{phd_net_res_forward.50} parent=0 // pred_check_branch
    %12 = sbr.rel (0) target = $region9
  $region8: #{phd_net_res_forward.50} parent=0 // pred_region
    _
  $region9: #{phd_net_res_forward.50} parent=0 // pred_fallthru
    _
  // Predicated region
  $region10: #{phd_net_res_forward.50} parent=0 // pred_check
    _
  $region11: #{phd_net_res_forward.50} parent=0 // pred_check_branch
    %14 = sbr.rel (0) target = $region13
  $region12: #{phd_net_res_forward.50} parent=0 // pred_region
    _
  $region13: #{phd_net_res_forward.50} parent=0 // pred_fallthru
    _
  // Predicated region
  $region14: #{phd_net_res_forward.50} parent=0 // pred_check
    _
  $region15: #{phd_net_res_forward.50} parent=0 // pred_check_branch
    %16 = sbr.rel (0) target = $region17
  $region16: #{phd_net_res_forward.50} parent=0 // pred_region
    _
  $region17: #{phd_net_res_forward.50} parent=0 // pred_fallthru
    _
  %v17 = vld [vmem:[%s0] sm:$0xff]
  %v18 = vld [vmem:[%s1] sm:$0x1]
  %v20 = vperm.slane %v18, 0
  %v22 = vmul.f32 %v17, %v20
  %v23 = vld [vmem:[%s2] sm:$0x1]
  %v25 = vperm.slane %v23, 0
  %v27 = vadd.f32 %v22, %v25
  %v28 = vmul.f32 %v27, 0.5
  %v29 = vmul.f32 %v27, 0.70710677
  %vm30 = vcmp.ge.f32.partialorder %v29, 0.0
  %v31 = vsel %vm30, 1.0, -1.0
  %v32 = vand.u32 2147483647, %v29
  %v33 = vmul.f32 %v32, 0.3275911
  %v34 = vadd.f32 %v33, 1.0
  %v35 = vrcp.pop %v34
  %v36 = vmul.f32 %v34, %v35
  %v37 = vsub.f32 1.0, %v36
  %v38 = vmul.f32 %v35, %v37
  %v39 = vadd.f32 %v35, %v38
  %vm40 = vweird.f32 %v34
  %vm41 = vweird.f32 %v35
  %vm42 = vmor %vm40, %vm41
  %v43 = vsel %vm42, %v35, %v39
  %v44 = vand.u32 2147483647, %v34
  %vm45 = vcmp.eq.f32.partialorder %v44, 8.507059e+37
  %v46 = vand.u32 %v34, 2147483648
  %v47 = vor.u32 1.1754944e-38, %v46
  %v48 = vsel %vm45, %v47, %v43
  %v49 = vmul.f32 %v48, 1.0614054
  %v50 = vadd.f32 %v49, -1.4531521
  %v51 = vmul.f32 %v50, %v48
  %v52 = vadd.f32 %v51, 1.4214138
  %v53 = vmul.f32 %v52, %v48
  %v54 = vadd.f32 %v53, -0.28449672
  %v55 = vmul.f32 %v54, %v48
  %v56 = vadd.f32 %v55, 0.2548296
  %v57 = vmul.f32 %v56, %v48
  %v58 = vsub.f32 0.0, %v32
  %v59 = vmul.f32 %v58, %v32
  %v60 = vmul.f32 %v59, 1.442695
  %v61 = vpow.pop %v60
  %v62 = vmul.f32 %v57, %v61
  %v63 = vsub.f32 1.0, %v62
  %v64 = vmul.f32 %v31, %v63
  %v65 = vadd.f32 %v64, 1.0
  %v66 = vmul.f32 %v28, %v65
  %v67 = vld [vmem:[%s3] sm:$0xff]
  %v68 = vadd.f32 %v66, %v67
  %69 = vst [vmem:[%s4] sm:$0xff] %v68
  // Predicated region
  $region18: #{phd_net_res_forward.50} parent=0 // pred_check
    _
  $region19: #{phd_net_res_forward.50} parent=0 // pred_check_branch
    %71 = sbr.rel (0) target = $region21
  $region20: #{phd_net_res_forward.50} parent=0 // pred_region
    _
  $region21: #{phd_net_res_forward.50} parent=0 // pred_fallthru
    _
  // Predicated region
  $region22: #{phd_net_res_forward.50} parent=0 // pred_check
    _
  $region23: #{phd_net_res_forward.50} parent=0 // pred_check_branch
    %73 = sbr.rel (0) target = $region25
  $region24: #{phd_net_res_forward.50} parent=0 // pred_region
    _
  $region25: #{phd_net_res_forward.50} parent=0 // pred_fallthru
    _

// kernel: phd_net_res_forward.47
$region0: #{phd_net_res_forward.47}
  #allocation0 [shape = 'u32[]', space=smem, size = 0x4, offset = 0x4, fixed_abs, tag = 'smem constant byte address 0x4 - core index']
  #allocation1 [shape = 'u32[72,128]{1,0:T(1,128)}', space=vmem, size = 0x9000, scoped, tag = 'internal scratch']
  %s0 = inlined_call_operand.vmem [shape: f32[8,1152], index: 0, kind: input, shape index: {}]
  %s1 = inlined_call_operand.vmem [shape: f32[1152,128], index: 1, kind: input, shape index: {}]
  %s2 = inlined_call_operand.vmem [shape: f32[8,128], index: 2, kind: output, shape index: {0}]
  %s3 = inlined_call_operand.vmem [shape: f32[1,128], index: 3, kind: output, shape index: {1}]
  %s4 = inlined_call_operand.vmem [shape: f32[1,128], index: 4, kind: output, shape index: {2}]
  %5 = xla_tuple %s2, %s3, %s4
  %s6 = sld [smem:[#allocation0]]
  $region38: #{phd_net_res_forward.47} parent=0
    _
  %s8 = ssub.s32 1, %s6
  %s9 = scalar_select 0, %s8, %s6
  // Predicated region
  $region2: #{phd_net_res_forward.47} parent=0 // pred_check
    _
  $region3: #{phd_net_res_forward.47} parent=0 // pred_check_branch
    %11 = sbr.rel (0) target = $region5
  $region4: #{phd_net_res_forward.47} parent=0 // pred_region
    _
  $region5: #{phd_net_res_forward.47} parent=0 // pred_fallthru
    _
  // Predicated region
  $region6: #{phd_net_res_forward.47} parent=0 // pred_check
    _
  $region7: #{phd_net_res_forward.47} parent=0 // pred_check_branch
    %13 = sbr.rel (0) target = $region9
  $region8: #{phd_net_res_forward.47} parent=0 // pred_region
    _
  $region9: #{phd_net_res_forward.47} parent=0 // pred_fallthru
    _
  %p14 = scmp.eq.s32.totalorder 0, 0
  // Predicated region
  $region10: #{phd_net_res_forward.47} parent=0 // pred_check
    %p15 = pneg %p14
  $region11: #{phd_net_res_forward.47} parent=0 // pred_check_branch
    %17 = sbr.rel (%p15) target = $region13
  $region12: #{phd_net_res_forward.47} parent=0 // pred_region
    %18 = vst [vmem:[%s3] sm:$0x1] 0.0
    %19 = vst [vmem:[%s4] sm:$0x1] 0.0
  $region13: #{phd_net_res_forward.47} parent=0 // pred_fallthru
    _
  %v20 = vld [vmem:[%s0] sm:$0xff]
  %v21 = vld [vmem:[%s0 + $0x8] sm:$0xff]
  %v22 = vld [vmem:[%s0 + $0x10] sm:$0xff]
  %v23 = vld [vmem:[%s0 + $0x18] sm:$0xff]
  %v24 = vld [vmem:[%s0 + $0x20] sm:$0xff]
  %v25 = vld [vmem:[%s0 + $0x28] sm:$0xff]
  %v26 = vld [vmem:[%s0 + $0x30] sm:$0xff]
  %v27 = vld [vmem:[%s0 + $0x38] sm:$0xff]
  %v28 = vld [vmem:[%s0 + $0x40] sm:$0xff]
  %v29 = vld [vmem:[%s1] sm:$0xff]
  %v30 = vld [vmem:[%s1 + $0x8] sm:$0xff]
  %v31 = vld [vmem:[%s1 + $0x10] sm:$0xff]
  %v32 = vld [vmem:[%s1 + $0x18] sm:$0xff]
  %v33 = vld [vmem:[%s1 + $0x20] sm:$0xff]
  %v34 = vld [vmem:[%s1 + $0x28] sm:$0xff]
  %v35 = vld [vmem:[%s1 + $0x30] sm:$0xff]
  %v36 = vld [vmem:[%s1 + $0x38] sm:$0xff]
  %v37 = vld [vmem:[%s1 + $0x40] sm:$0xff]
  %v38 = vld [vmem:[%s1 + $0x48] sm:$0xff]
  %v39 = vld [vmem:[%s1 + $0x50] sm:$0xff]
  %v40 = vld [vmem:[%s1 + $0x58] sm:$0xff]
  %v41 = vld [vmem:[%s1 + $0x60] sm:$0xff]
  %v42 = vld [vmem:[%s1 + $0x68] sm:$0xff]
  %v43 = vld [vmem:[%s1 + $0x70] sm:$0xff]
  %v44 = vld [vmem:[%s1 + $0x78] sm:$0xff]
  %v45 = vld [vmem:[%s1 + $0x80] sm:$0xff]
  %v46 = vld [vmem:[%s1 + $0x88] sm:$0xff]
  %v47 = vld [vmem:[%s1 + $0x90] sm:$0xff]
  %v48 = vld [vmem:[%s1 + $0x98] sm:$0xff]
  %v49 = vld [vmem:[%s1 + $0xa0] sm:$0xff]
  %v50 = vld [vmem:[%s1 + $0xa8] sm:$0xff]
  %v51 = vld [vmem:[%s1 + $0xb0] sm:$0xff]
  %v52 = vld [vmem:[%s1 + $0xb8] sm:$0xff]
  %v53 = vld [vmem:[%s1 + $0xc0] sm:$0xff]
  %v54 = vld [vmem:[%s1 + $0xc8] sm:$0xff]
  %v55 = vld [vmem:[%s1 + $0xd0] sm:$0xff]
  %v56 = vld [vmem:[%s1 + $0xd8] sm:$0xff]
  %v57 = vld [vmem:[%s1 + $0xe0] sm:$0xff]
  %v58 = vld [vmem:[%s1 + $0xe8] sm:$0xff]
  %v59 = vld [vmem:[%s1 + $0xf0] sm:$0xff]
  %v60 = vld [vmem:[%s1 + $0xf8] sm:$0xff]
  %v61 = vld [vmem:[%s1 + $0x100] sm:$0xff]
  %v62 = vld [vmem:[%s1 + $0x108] sm:$0xff]
  %v63 = vld [vmem:[%s1 + $0x110] sm:$0xff]
  %v64 = vld [vmem:[%s1 + $0x118] sm:$0xff]
  %v65 = vld [vmem:[%s1 + $0x120] sm:$0xff]
  %v66 = vld [vmem:[%s1 + $0x128] sm:$0xff]
  %v67 = vld [vmem:[%s1 + $0x130] sm:$0xff]
  %v68 = vld [vmem:[%s1 + $0x138] sm:$0xff]
  %v69 = vld [vmem:[%s1 + $0x140] sm:$0xff]
  %v70 = vld [vmem:[%s1 + $0x148] sm:$0xff]
  %v71 = vld [vmem:[%s1 + $0x150] sm:$0xff]
  %v72 = vld [vmem:[%s1 + $0x158] sm:$0xff]
  %v73 = vld [vmem:[%s1 + $0x160] sm:$0xff]
  %v74 = vld [vmem:[%s1 + $0x168] sm:$0xff]
  %v75 = vld [vmem:[%s1 + $0x170] sm:$0xff]
  %v76 = vld [vmem:[%s1 + $0x178] sm:$0xff]
  %v77 = vld [vmem:[%s1 + $0x180] sm:$0xff]
  %v78 = vld [vmem:[%s1 + $0x188] sm:$0xff]
  %v79 = vld [vmem:[%s1 + $0x190] sm:$0xff]
  %v80 = vld [vmem:[%s1 + $0x198] sm:$0xff]
  %v81 = vld [vmem:[%s1 + $0x1a0] sm:$0xff]
  %v82 = vld [vmem:[%s1 + $0x1a8] sm:$0xff]
  %v83 = vld [vmem:[%s1 + $0x1b0] sm:$0xff]
  %v84 = vld [vmem:[%s1 + $0x1b8] sm:$0xff]
  %v85 = vld [vmem:[%s1 + $0x1c0] sm:$0xff]
  %v86 = vld [vmem:[%s1 + $0x1c8] sm:$0xff]
  %v87 = vld [vmem:[%s1 + $0x1d0] sm:$0xff]
  %v88 = vld [vmem:[%s1 + $0x1d8] sm:$0xff]
  %v89 = vld [vmem:[%s1 + $0x1e0] sm:$0xff]
  %v90 = vld [vmem:[%s1 + $0x1e8] sm:$0xff]
  %v91 = vld [vmem:[%s1 + $0x1f0] sm:$0xff]
  %v92 = vld [vmem:[%s1 + $0x1f8] sm:$0xff]
  %v93 = vld [vmem:[%s1 + $0x200] sm:$0xff]
  %v94 = vld [vmem:[%s1 + $0x208] sm:$0xff]
  %v95 = vld [vmem:[%s1 + $0x210] sm:$0xff]
  %v96 = vld [vmem:[%s1 + $0x218] sm:$0xff]
  %v97 = vld [vmem:[%s1 + $0x220] sm:$0xff]
  %v98 = vld [vmem:[%s1 + $0x228] sm:$0xff]
  %v99 = vld [vmem:[%s1 + $0x230] sm:$0xff]
  %v100 = vld [vmem:[%s1 + $0x238] sm:$0xff]
  %v101 = vld [vmem:[%s1 + $0x240] sm:$0xff]
  %v102 = vld [vmem:[%s1 + $0x248] sm:$0xff]
  %v103 = vld [vmem:[%s1 + $0x250] sm:$0xff]
  %v104 = vld [vmem:[%s1 + $0x258] sm:$0xff]
  %v105 = vld [vmem:[%s1 + $0x260] sm:$0xff]
  %v106 = vld [vmem:[%s1 + $0x268] sm:$0xff]
  %v107 = vld [vmem:[%s1 + $0x270] sm:$0xff]
  %v108 = vld [vmem:[%s1 + $0x278] sm:$0xff]
  %v109 = vld [vmem:[%s1 + $0x280] sm:$0xff]
  %v110 = vld [vmem:[%s1 + $0x288] sm:$0xff]
  %v111 = vld [vmem:[%s1 + $0x290] sm:$0xff]
  %v112 = vld [vmem:[%s1 + $0x298] sm:$0xff]
  %v113 = vld [vmem:[%s1 + $0x2a0] sm:$0xff]
  %v114 = vld [vmem:[%s1 + $0x2a8] sm:$0xff]
  %v115 = vld [vmem:[%s1 + $0x2b0] sm:$0xff]
  %v116 = vld [vmem:[%s1 + $0x2b8] sm:$0xff]
  %v117 = vld [vmem:[%s1 + $0x2c0] sm:$0xff]
  %v118 = vld [vmem:[%s1 + $0x2c8] sm:$0xff]
  %v119 = vld [vmem:[%s1 + $0x2d0] sm:$0xff]
  %v120 = vld [vmem:[%s1 + $0x2d8] sm:$0xff]
  %v121 = vld [vmem:[%s1 + $0x2e0] sm:$0xff]
  %v122 = vld [vmem:[%s1 + $0x2e8] sm:$0xff]
  %v123 = vld [vmem:[%s1 + $0x2f0] sm:$0xff]
  %v124 = vld [vmem:[%s1 + $0x2f8] sm:$0xff]
  %v125 = vld [vmem:[%s1 + $0x300] sm:$0xff]
  %v126 = vld [vmem:[%s1 + $0x308] sm:$0xff]
  %v127 = vld [vmem:[%s1 + $0x310] sm:$0xff]
  %v128 = vld [vmem:[%s1 + $0x318] sm:$0xff]
  %v129 = vld [vmem:[%s1 + $0x320] sm:$0xff]
  %v130 = vld [vmem:[%s1 + $0x328] sm:$0xff]
  %v131 = vld [vmem:[%s1 + $0x330] sm:$0xff]
  %v132 = vld [vmem:[%s1 + $0x338] sm:$0xff]
  %v133 = vld [vmem:[%s1 + $0x340] sm:$0xff]
  %v134 = vld [vmem:[%s1 + $0x348] sm:$0xff]
  %v135 = vld [vmem:[%s1 + $0x350] sm:$0xff]
  %v136 = vld [vmem:[%s1 + $0x358] sm:$0xff]
  %v137 = vld [vmem:[%s1 + $0x360] sm:$0xff]
  %v138 = vld [vmem:[%s1 + $0x368] sm:$0xff]
  %v139 = vld [vmem:[%s1 + $0x370] sm:$0xff]
  %v140 = vld [vmem:[%s1 + $0x378] sm:$0xff]
  %v141 = vld [vmem:[%s1 + $0x380] sm:$0xff]
  %v142 = vld [vmem:[%s1 + $0x388] sm:$0xff]
  %v143 = vld [vmem:[%s1 + $0x390] sm:$0xff]
  %v144 = vld [vmem:[%s1 + $0x398] sm:$0xff]
  %v145 = vld [vmem:[%s1 + $0x3a0] sm:$0xff]
  %v146 = vld [vmem:[%s1 + $0x3a8] sm:$0xff]
  %v147 = vld [vmem:[%s1 + $0x3b0] sm:$0xff]
  %v148 = vld [vmem:[%s1 + $0x3b8] sm:$0xff]
  %v149 = vld [vmem:[%s1 + $0x3c0] sm:$0xff]
  %v150 = vld [vmem:[%s1 + $0x3c8] sm:$0xff]
  %v151 = vld [vmem:[%s1 + $0x3d0] sm:$0xff]
  %v152 = vld [vmem:[%s1 + $0x3d8] sm:$0xff]
  %v153 = vld [vmem:[%s1 + $0x3e0] sm:$0xff]
  %v154 = vld [vmem:[%s1 + $0x3e8] sm:$0xff]
  %v155 = vld [vmem:[%s1 + $0x3f0] sm:$0xff]
  %v156 = vld [vmem:[%s1 + $0x3f8] sm:$0xff]
  %v157 = vld [vmem:[%s1 + $0x400] sm:$0xff]
  %v158 = vld [vmem:[%s1 + $0x408] sm:$0xff]
  %v159 = vld [vmem:[%s1 + $0x410] sm:$0xff]
  %v160 = vld [vmem:[%s1 + $0x418] sm:$0xff]
  %v161 = vld [vmem:[%s1 + $0x420] sm:$0xff]
  %v162 = vld [vmem:[%s1 + $0x428] sm:$0xff]
  %v163 = vld [vmem:[%s1 + $0x430] sm:$0xff]
  %v164 = vld [vmem:[%s1 + $0x438] sm:$0xff]
  %v165 = vld [vmem:[%s1 + $0x440] sm:$0xff]
  %v166 = vld [vmem:[%s1 + $0x448] sm:$0xff]
  %v167 = vld [vmem:[%s1 + $0x450] sm:$0xff]
  %v168 = vld [vmem:[%s1 + $0x458] sm:$0xff]
  %v169 = vld [vmem:[%s1 + $0x460] sm:$0xff]
  %v170 = vld [vmem:[%s1 + $0x468] sm:$0xff]
  %v171 = vld [vmem:[%s1 + $0x470] sm:$0xff]
  %v172 = vld [vmem:[%s1 + $0x478] sm:$0xff]
  %173 = vmatpush.msra.mxu0 %v44
  %174 = vmatpush.msra.mxu0 %v43
  %175 = vmatpush.msra.mxu0 %v42
  %176 = vmatpush.msra.mxu0 %v41
  %177 = vmatpush.msra.mxu0 %v40
  %178 = vmatpush.msra.mxu0 %v39
  %179 = vmatpush.msra.mxu0 %v38
  %180 = vmatpush.msra.mxu0 %v37
  %181 = vmatpush.msra.mxu0 %v36
  %182 = vmatpush.msra.mxu0 %v35
  %183 = vmatpush.msra.mxu0 %v34
  %184 = vmatpush.msra.mxu0 %v33
  %185 = vmatpush.msra.mxu0 %v32
  %186 = vmatpush.msra.mxu0 %v31
  %187 = vmatpush.msra.mxu0 %v30
  %188 = vmatpush.msra.mxu0 %v29
  %189 = vmatmul.f32.gmra.mxu0 %v20
  %v190 = vpop.f32.mrf.mxu0
  %v191 = vadd.f32 0.0, %v190
  %192 = vdwg.mxu0
  %193 = vmatpush.msra.mxu0 %v60
  %194 = vmatpush.msra.mxu0 %v59
  %195 = vmatpush.msra.mxu0 %v58
  %196 = vmatpush.msra.mxu0 %v57
  %197 = vmatpush.msra.mxu0 %v56
  %198 = vmatpush.msra.mxu0 %v55
  %199 = vmatpush.msra.mxu0 %v54
  %200 = vmatpush.msra.mxu0 %v53
  %201 = vmatpush.msra.mxu0 %v52
  %202 = vmatpush.msra.mxu0 %v51
  %203 = vmatpush.msra.mxu0 %v50
  %204 = vmatpush.msra.mxu0 %v49
  %205 = vmatpush.msra.mxu0 %v48
  %206 = vmatpush.msra.mxu0 %v47
  %207 = vmatpush.msra.mxu0 %v46
  %208 = vmatpush.msra.mxu0 %v45
  %209 = vmatmul.f32.gmra.mxu0 %v21
  %v210 = vpop.f32.mrf.mxu0
  %v211 = vadd.f32 %v191, %v210
  %212 = vdwg.mxu0
  %213 = vmatpush.msra.mxu0 %v76
  %214 = vmatpush.msra.mxu0 %v75
  %215 = vmatpush.msra.mxu0 %v74
  %216 = vmatpush.msra.mxu0 %v73
  %217 = vmatpush.msra.mxu0 %v72
  %218 = vmatpush.msra.mxu0 %v71
  %219 = vmatpush.msra.mxu0 %v70
  %220 = vmatpush.msra.mxu0 %v69
  %221 = vmatpush.msra.mxu0 %v68
  %222 = vmatpush.msra.mxu0 %v67
  %223 = vmatpush.msra.mxu0 %v66
  %224 = vmatpush.msra.mxu0 %v65
  %225 = vmatpush.msra.mxu0 %v64
  %226 = vmatpush.msra.mxu0 %v63
  %227 = vmatpush.msra.mxu0 %v62
  %228 = vmatpush.msra.mxu0 %v61
  %229 = vmatmul.f32.gmra.mxu0 %v22
  %v230 = vpop.f32.mrf.mxu0
  %v231 = vadd.f32 %v211, %v230
  %232 = vdwg.mxu0
  %233 = vmatpush.msra.mxu0 %v92
  %234 = vmatpush.msra.mxu0 %v91
  %235 = vmatpush.msra.mxu0 %v90
  %236 = vmatpush.msra.mxu0 %v89
  %237 = vmatpush.msra.mxu0 %v88
  %238 = vmatpush.msra.mxu0 %v87
  %239 = vmatpush.msra.mxu0 %v86
  %240 = vmatpush.msra.mxu0 %v85
  %241 = vmatpush.msra.mxu0 %v84
  %242 = vmatpush.msra.mxu0 %v83
  %243 = vmatpush.msra.mxu0 %v82
  %244 = vmatpush.msra.mxu0 %v81
  %245 = vmatpush.msra.mxu0 %v80
  %246 = vmatpush.msra.mxu0 %v79
  %247 = vmatpush.msra.mxu0 %v78
  %248 = vmatpush.msra.mxu0 %v77
  %249 = vmatmul.f32.gmra.mxu0 %v23
  %v250 = vpop.f32.mrf.mxu0
  %v251 = vadd.f32 %v231, %v250
  %252 = vdwg.mxu0
  %253 = vmatpush.msra.mxu0 %v108
  %254 = vmatpush.msra.mxu0 %v107
  %255 = vmatpush.msra.mxu0 %v106
  %256 = vmatpush.msra.mxu0 %v105
  %257 = vmatpush.msra.mxu0 %v104
  %258 = vmatpush.msra.mxu0 %v103
  %259 = vmatpush.msra.mxu0 %v102
  %260 = vmatpush.msra.mxu0 %v101
  %261 = vmatpush.msra.mxu0 %v100
  %262 = vmatpush.msra.mxu0 %v99
  %263 = vmatpush.msra.mxu0 %v98
  %264 = vmatpush.msra.mxu0 %v97
  %265 = vmatpush.msra.mxu0 %v96
  %266 = vmatpush.msra.mxu0 %v95
  %267 = vmatpush.msra.mxu0 %v94
  %268 = vmatpush.msra.mxu0 %v93
  %269 = vmatmul.f32.gmra.mxu0 %v24
  %v270 = vpop.f32.mrf.mxu0
  %v271 = vadd.f32 %v251, %v270
  %272 = vdwg.mxu0
  %273 = vmatpush.msra.mxu0 %v124
  %274 = vmatpush.msra.mxu0 %v123
  %275 = vmatpush.msra.mxu0 %v122
  %276 = vmatpush.msra.mxu0 %v121
  %277 = vmatpush.msra.mxu0 %v120
  %278 = vmatpush.msra.mxu0 %v119
  %279 = vmatpush.msra.mxu0 %v118
  %280 = vmatpush.msra.mxu0 %v117
  %281 = vmatpush.msra.mxu0 %v116
  %282 = vmatpush.msra.mxu0 %v115
  %283 = vmatpush.msra.mxu0 %v114
  %284 = vmatpush.msra.mxu0 %v113
  %285 = vmatpush.msra.mxu0 %v112
  %286 = vmatpush.msra.mxu0 %v111
  %287 = vmatpush.msra.mxu0 %v110
  %288 = vmatpush.msra.mxu0 %v109
  %289 = vmatmul.f32.gmra.mxu0 %v25
  %v290 = vpop.f32.mrf.mxu0
  %v291 = vadd.f32 %v271, %v290
  %292 = vdwg.mxu0
  %293 = vmatpush.msra.mxu0 %v140
  %294 = vmatpush.msra.mxu0 %v139
  %295 = vmatpush.msra.mxu0 %v138
  %296 = vmatpush.msra.mxu0 %v137
  %297 = vmatpush.msra.mxu0 %v136
  %298 = vmatpush.msra.mxu0 %v135
  %299 = vmatpush.msra.mxu0 %v134
  %300 = vmatpush.msra.mxu0 %v133
  %301 = vmatpush.msra.mxu0 %v132
  %302 = vmatpush.msra.mxu0 %v131
  %303 = vmatpush.msra.mxu0 %v130
  %304 = vmatpush.msra.mxu0 %v129
  %305 = vmatpush.msra.mxu0 %v128
  %306 = vmatpush.msra.mxu0 %v127
  %307 = vmatpush.msra.mxu0 %v126
  %308 = vmatpush.msra.mxu0 %v125
  %309 = vmatmul.f32.gmra.mxu0 %v26
  %v310 = vpop.f32.mrf.mxu0
  %v311 = vadd.f32 %v291, %v310
  %312 = vdwg.mxu0
  %313 = vmatpush.msra.mxu0 %v156
  %314 = vmatpush.msra.mxu0 %v155
  %315 = vmatpush.msra.mxu0 %v154
  %316 = vmatpush.msra.mxu0 %v153
  %317 = vmatpush.msra.mxu0 %v152
  %318 = vmatpush.msra.mxu0 %v151
  %319 = vmatpush.msra.mxu0 %v150
  %320 = vmatpush.msra.mxu0 %v149
  %321 = vmatpush.msra.mxu0 %v148
  %322 = vmatpush.msra.mxu0 %v147
  %323 = vmatpush.msra.mxu0 %v146
  %324 = vmatpush.msra.mxu0 %v145
  %325 = vmatpush.msra.mxu0 %v144
  %326 = vmatpush.msra.mxu0 %v143
  %327 = vmatpush.msra.mxu0 %v142
  %328 = vmatpush.msra.mxu0 %v141
  %329 = vmatmul.f32.gmra.mxu0 %v27
  %v330 = vpop.f32.mrf.mxu0
  %v331 = vadd.f32 %v311, %v330
  %332 = vdwg.mxu0
  %333 = vmatpush.msra.mxu0 %v172
  %334 = vmatpush.msra.mxu0 %v171
  %335 = vmatpush.msra.mxu0 %v170
  %336 = vmatpush.msra.mxu0 %v169
  %337 = vmatpush.msra.mxu0 %v168
  %338 = vmatpush.msra.mxu0 %v167
  %339 = vmatpush.msra.mxu0 %v166
  %340 = vmatpush.msra.mxu0 %v165
  %341 = vmatpush.msra.mxu0 %v164
  %342 = vmatpush.msra.mxu0 %v163
  %343 = vmatpush.msra.mxu0 %v162
  %344 = vmatpush.msra.mxu0 %v161
  %345 = vmatpush.msra.mxu0 %v160
  %346 = vmatpush.msra.mxu0 %v159
  %347 = vmatpush.msra.mxu0 %v158
  %348 = vmatpush.msra.mxu0 %v157
  %349 = vmatmul.f32.gmra.mxu0 %v28
  %v350 = vpop.f32.mrf.mxu0
  %v351 = vadd.f32 %v331, %v350
  %352 = vdwg.mxu0
  %353 = vst [vmem:[%s2] sm:$0xff] %v351
  %v354 = vld [vmem:[%s3] sm:$0x1]
  %v355 = vrot.slane %v351, 4
  %v356 = vadd.f32 %v351, %v355
  %v357 = vrot.slane %v356, 2
  %v358 = vadd.f32 %v356, %v357
  %v359 = vrot.slane %v358, 1
  %v360 = vadd.f32 %v358, %v359
  %v361 = vadd.f32 %v354, %v360
  %362 = vst [vmem:[%s3] sm:$0x1] %v361
  %v363 = vld [vmem:[%s4] sm:$0x1]
  %v364 = vmul.f32 %v351, %v351
  %v365 = vrot.slane %v364, 4
  %v366 = vadd.f32 %v364, %v365
  %v367 = vrot.slane %v366, 2
  %v368 = vadd.f32 %v366, %v367
  %v369 = vrot.slane %v368, 1
  %v370 = vadd.f32 %v368, %v369
  %v371 = vadd.f32 %v363, %v370
  %372 = vst [vmem:[%s4] sm:$0x1] %v371
  // Predicated region
  $region14: #{phd_net_res_forward.47} parent=0 // pred_check
    _
  $region15: #{phd_net_res_forward.47} parent=0 // pred_check_branch
    %374 = sbr.rel (0) target = $region17
  $region16: #{phd_net_res_forward.47} parent=0 // pred_region
    _
  $region17: #{phd_net_res_forward.47} parent=0 // pred_fallthru
    _
  // Predicated region
  $region18: #{phd_net_res_forward.47} parent=0 // pred_check
    _
  $region19: #{phd_net_res_forward.47} parent=0 // pred_check_branch
    %376 = sbr.rel (0) target = $region21
  $region20: #{phd_net_res_forward.47} parent=0 // pred_region
    _
  $region21: #{phd_net_res_forward.47} parent=0 // pred_fallthru
    _
  // Predicated region
  $region22: #{phd_net_res_forward.47} parent=0 // pred_check
    _
  $region23: #{phd_net_res_forward.47} parent=0 // pred_check_branch
    %378 = sbr.rel (0) target = $region25
  $region24: #{phd_net_res_forward.47} parent=0 // pred_region
    _
  $region25: #{phd_net_res_forward.47} parent=0 // pred_fallthru
    _
  // Predicated region
  $region26: #{phd_net_res_forward.47} parent=0 // pred_check
    _
  $region27: #{phd_net_res_forward.47} parent=0 // pred_check_branch
    %380 = sbr.rel (0) target = $region29
  $region28: #{phd_net_res_forward.47} parent=0 // pred_region
    _
  $region29: #{phd_net_res_forward.47} parent=0 // pred_fallthru
    _
  // Predicated region
  $region30: #{phd_net_res_forward.47} parent=0 // pred_check
    _
  $region31: #{phd_net_res_forward.47} parent=0 // pred_check_branch
    %382 = sbr.rel (0) target = $region33
  $region32: #{phd_net_res_forward.47} parent=0 // pred_region
    _
  $region33: #{phd_net_res_forward.47} parent=0 // pred_fallthru
    _
  // Predicated region
  $region34: #{phd_net_res_forward.47} parent=0 // pred_check
    _
  $region35: #{phd_net_res_forward.47} parent=0 // pred_check_branch
    %384 = sbr.rel (0) target = $region37
  $region36: #{phd_net_res_forward.47} parent=0 // pred_region
    _
  $region37: #{phd_net_res_forward.47} parent=0 // pred_fallthru
    _

// kernel: phd_net_res_forward.52
$region0: #{phd_net_res_forward.52}
  #allocation0 [shape = 'u32[]', space=smem, size = 0x4, offset = 0x4, fixed_abs, tag = 'smem constant byte address 0x4 - core index']
  #allocation1 [shape = 'u32[72,128]{1,0:T(1,128)}', space=vmem, size = 0x9000, scoped, tag = 'internal scratch']
  %s0 = inlined_call_operand.vmem [shape: f32[8,256], index: 0, kind: input, shape index: {}]
  %s1 = inlined_call_operand.vmem [shape: f32[1,256], index: 1, kind: input, shape index: {}]
  %s2 = inlined_call_operand.vmem [shape: f32[1,256], index: 2, kind: input, shape index: {}]
  %s3 = inlined_call_operand.vmem [shape: f32[8,256], index: 3, kind: output, shape index: {}]
  %s4 = sld [smem:[#allocation0]]
  $region22: #{phd_net_res_forward.52} parent=0
    _
  %s6 = ssub.s32 1, %s4
  %s7 = scalar_select 0, %s6, %s4
  // Predicated region
  $region2: #{phd_net_res_forward.52} parent=0 // pred_check
    _
  $region3: #{phd_net_res_forward.52} parent=0 // pred_check_branch
    %9 = sbr.rel (0) target = $region5
  $region4: #{phd_net_res_forward.52} parent=0 // pred_region
    _
  $region5: #{phd_net_res_forward.52} parent=0 // pred_fallthru
    _
  // Predicated region
  $region6: #{phd_net_res_forward.52} parent=0 // pred_check
    _
  $region7: #{phd_net_res_forward.52} parent=0 // pred_check_branch
    %11 = sbr.rel (0) target = $region9
  $region8: #{phd_net_res_forward.52} parent=0 // pred_region
    _
  $region9: #{phd_net_res_forward.52} parent=0 // pred_fallthru
    _
  // Predicated region
  $region10: #{phd_net_res_forward.52} parent=0 // pred_check
    _
  $region11: #{phd_net_res_forward.52} parent=0 // pred_check_branch
    %13 = sbr.rel (0) target = $region13
  $region12: #{phd_net_res_forward.52} parent=0 // pred_region
    _
  $region13: #{phd_net_res_forward.52} parent=0 // pred_fallthru
    _
  %v14 = vld [vmem:[%s0] sm:$0xff]
  %v15 = vld [vmem:[%s0 + $0x8] sm:$0xff]
  %v16 = vld [vmem:[%s1] sm:$0x3]
  %v18 = vperm.slane %v16, 0
  %v19 = vperm.slane %v16, 1
  %v22 = vmul.f32 %v14, %v18
  %v23 = vmul.f32 %v15, %v19
  %v24 = vld [vmem:[%s2] sm:$0x3]
  %v26 = vperm.slane %v24, 0
  %v27 = vperm.slane %v24, 1
  %v30 = vadd.f32 %v22, %v26
  %v31 = vadd.f32 %v23, %v27
  %v32 = vmul.f32 %v30, 0.5
  %v33 = vmul.f32 %v31, 0.5
  %v34 = vmul.f32 %v30, 0.70710677
  %v35 = vmul.f32 %v31, 0.70710677
  %vm36 = vcmp.ge.f32.partialorder %v34, 0.0
  %vm37 = vcmp.ge.f32.partialorder %v35, 0.0
  %v38 = vsel %vm36, 1.0, -1.0
  %v39 = vsel %vm37, 1.0, -1.0
  %v40 = vand.u32 2147483647, %v34
  %v41 = vand.u32 2147483647, %v35
  %v42 = vmul.f32 %v40, 0.3275911
  %v43 = vmul.f32 %v41, 0.3275911
  %v44 = vadd.f32 %v42, 1.0
  %v45 = vadd.f32 %v43, 1.0
  %v46 = vrcp.pop %v44
  %v47 = vmul.f32 %v44, %v46
  %v48 = vsub.f32 1.0, %v47
  %v49 = vmul.f32 %v46, %v48
  %v50 = vadd.f32 %v46, %v49
  %vm51 = vweird.f32 %v44
  %vm52 = vweird.f32 %v46
  %vm53 = vmor %vm51, %vm52
  %v54 = vsel %vm53, %v46, %v50
  %v55 = vand.u32 2147483647, %v44
  %vm56 = vcmp.eq.f32.partialorder %v55, 8.507059e+37
  %v57 = vand.u32 %v44, 2147483648
  %v58 = vor.u32 1.1754944e-38, %v57
  %v59 = vsel %vm56, %v58, %v54
  %v60 = vrcp.pop %v45
  %v61 = vmul.f32 %v45, %v60
  %v62 = vsub.f32 1.0, %v61
  %v63 = vmul.f32 %v60, %v62
  %v64 = vadd.f32 %v60, %v63
  %vm65 = vweird.f32 %v45
  %vm66 = vweird.f32 %v60
  %vm67 = vmor %vm65, %vm66
  %v68 = vsel %vm67, %v60, %v64
  %v69 = vand.u32 2147483647, %v45
  %vm70 = vcmp.eq.f32.partialorder %v69, 8.507059e+37
  %v71 = vand.u32 %v45, 2147483648
  %v72 = vor.u32 1.1754944e-38, %v71
  %v73 = vsel %vm70, %v72, %v68
  %v74 = vmul.f32 %v59, 1.0614054
  %v75 = vmul.f32 %v73, 1.0614054
  %v76 = vadd.f32 %v74, -1.4531521
  %v77 = vadd.f32 %v75, -1.4531521
  %v78 = vmul.f32 %v76, %v59
  %v79 = vmul.f32 %v77, %v73
  %v80 = vadd.f32 %v78, 1.4214138
  %v81 = vadd.f32 %v79, 1.4214138
  %v82 = vmul.f32 %v80, %v59
  %v83 = vmul.f32 %v81, %v73
  %v84 = vadd.f32 %v82, -0.28449672
  %v85 = vadd.f32 %v83, -0.28449672
  %v86 = vmul.f32 %v84, %v59
  %v87 = vmul.f32 %v85, %v73
  %v88 = vadd.f32 %v86, 0.2548296
  %v89 = vadd.f32 %v87, 0.2548296
  %v90 = vmul.f32 %v88, %v59
  %v91 = vmul.f32 %v89, %v73
  %v92 = vsub.f32 0.0, %v40
  %v93 = vsub.f32 0.0, %v41
  %v94 = vmul.f32 %v92, %v40
  %v95 = vmul.f32 %v93, %v41
  %v96 = vmul.f32 %v94, 1.442695
  %v97 = vpow.pop %v96
  %v98 = vmul.f32 %v95, 1.442695
  %v99 = vpow.pop %v98
  %v100 = vmul.f32 %v90, %v97
  %v101 = vmul.f32 %v91, %v99
  %v102 = vsub.f32 1.0, %v100
  %v103 = vsub.f32 1.0, %v101
  %v104 = vmul.f32 %v38, %v102
  %v105 = vmul.f32 %v39, %v103
  %v106 = vadd.f32 %v104, 1.0
  %v107 = vadd.f32 %v105, 1.0
  %v108 = vmul.f32 %v32, %v106
  %v109 = vmul.f32 %v33, %v107
  %110 = vst [vmem:[%s3] sm:$0xff] %v108
  %111 = vst [vmem:[%s3 + $0x8] sm:$0xff] %v109
  // Predicated region
  $region14: #{phd_net_res_forward.52} parent=0 // pred_check
    _
  $region15: #{phd_net_res_forward.52} parent=0 // pred_check_branch
    %113 = sbr.rel (0) target = $region17
  $region16: #{phd_net_res_forward.52} parent=0 // pred_region
    _
  $region17: #{phd_net_res_forward.52} parent=0 // pred_fallthru
    _
  // Predicated region
  $region18: #{phd_net_res_forward.52} parent=0 // pred_check
    _
  $region19: #{phd_net_res_forward.52} parent=0 // pred_check_branch
    %115 = sbr.rel (0) target = $region21
  $region20: #{phd_net_res_forward.52} parent=0 // pred_region
    _
  $region21: #{phd_net_res_forward.52} parent=0 // pred_fallthru
    _

// kernel: phd_net_res_forward.51
$region0: #{phd_net_res_forward.51}
  #allocation0 [shape = 'u32[]', space=smem, size = 0x4, offset = 0x4, fixed_abs, tag = 'smem constant byte address 0x4 - core index']
  #allocation1 [shape = 'u32[72,128]{1,0:T(1,128)}', space=vmem, size = 0x9000, scoped, tag = 'internal scratch']
  %s0 = inlined_call_operand.vmem [shape: f32[8,1152], index: 0, kind: input, shape index: {}]
  %s1 = inlined_call_operand.vmem [shape: f32[1152,256], index: 1, kind: input, shape index: {}]
  %s2 = inlined_call_operand.vmem [shape: f32[8,256], index: 2, kind: output, shape index: {0}]
  %s3 = inlined_call_operand.vmem [shape: f32[1,256], index: 3, kind: output, shape index: {1}]
  %s4 = inlined_call_operand.vmem [shape: f32[1,256], index: 4, kind: output, shape index: {2}]
  %5 = xla_tuple %s2, %s3, %s4
  %s6 = sld [smem:[#allocation0]]
  $region38: #{phd_net_res_forward.51} parent=0
    _
  %s8 = ssub.s32 1, %s6
  %s9 = scalar_select 0, %s8, %s6
  // Predicated region
  $region2: #{phd_net_res_forward.51} parent=0 // pred_check
    _
  $region3: #{phd_net_res_forward.51} parent=0 // pred_check_branch
    %11 = sbr.rel (0) target = $region5
  $region4: #{phd_net_res_forward.51} parent=0 // pred_region
    _
  $region5: #{phd_net_res_forward.51} parent=0 // pred_fallthru
    _
  // Predicated region
  $region6: #{phd_net_res_forward.51} parent=0 // pred_check
    _
  $region7: #{phd_net_res_forward.51} parent=0 // pred_check_branch
    %13 = sbr.rel (0) target = $region9
  $region8: #{phd_net_res_forward.51} parent=0 // pred_region
    _
  $region9: #{phd_net_res_forward.51} parent=0 // pred_fallthru
    _
  %p14 = scmp.eq.s32.totalorder 0, 0
  // Predicated region
  $region10: #{phd_net_res_forward.51} parent=0 // pred_check
    %p15 = pneg %p14
  $region11: #{phd_net_res_forward.51} parent=0 // pred_check_branch
    %17 = sbr.rel (%p15) target = $region13
  $region12: #{phd_net_res_forward.51} parent=0 // pred_region
    %v18 = vlaneseq
    %vm19 = vcmp.ge.s32.totalorder %v18, 0
    %vm20 = vcmp.lt.s32.totalorder %v18, 256
    %vm21 = vmand %vm19, %vm20
    %22 = vst.msk [vmem:[%s3] sm:$0x3] %vm21, 0.0
    %23 = vst.msk [vmem:[%s4] sm:$0x3] %vm21, 0.0
  $region13: #{phd_net_res_forward.51} parent=0 // pred_fallthru
    _
  %v24 = vld [vmem:[%s0] sm:$0xff]
  %v25 = vld [vmem:[%s0 + $0x8] sm:$0xff]
  %v26 = vld [vmem:[%s0 + $0x10] sm:$0xff]
  %v27 = vld [vmem:[%s0 + $0x18] sm:$0xff]
  %v28 = vld [vmem:[%s0 + $0x20] sm:$0xff]
  %v29 = vld [vmem:[%s0 + $0x28] sm:$0xff]
  %v30 = vld [vmem:[%s0 + $0x30] sm:$0xff]
  %v31 = vld [vmem:[%s0 + $0x38] sm:$0xff]
  %v32 = vld [vmem:[%s0 + $0x40] sm:$0xff]
  %v33 = vld [vmem:[%s1] sm:$0xff]
  %v34 = vld [vmem:[%s1 + $0x8] sm:$0xff]
  %v35 = vld [vmem:[%s1 + $0x10] sm:$0xff]
  %v36 = vld [vmem:[%s1 + $0x18] sm:$0xff]
  %v37 = vld [vmem:[%s1 + $0x20] sm:$0xff]
  %v38 = vld [vmem:[%s1 + $0x28] sm:$0xff]
  %v39 = vld [vmem:[%s1 + $0x30] sm:$0xff]
  %v40 = vld [vmem:[%s1 + $0x38] sm:$0xff]
  %v41 = vld [vmem:[%s1 + $0x40] sm:$0xff]
  %v42 = vld [vmem:[%s1 + $0x48] sm:$0xff]
  %v43 = vld [vmem:[%s1 + $0x50] sm:$0xff]
  %v44 = vld [vmem:[%s1 + $0x58] sm:$0xff]
  %v45 = vld [vmem:[%s1 + $0x60] sm:$0xff]
  %v46 = vld [vmem:[%s1 + $0x68] sm:$0xff]
  %v47 = vld [vmem:[%s1 + $0x70] sm:$0xff]
  %v48 = vld [vmem:[%s1 + $0x78] sm:$0xff]
  %v49 = vld [vmem:[%s1 + $0x80] sm:$0xff]
  %v50 = vld [vmem:[%s1 + $0x88] sm:$0xff]
  %v51 = vld [vmem:[%s1 + $0x90] sm:$0xff]
  %v52 = vld [vmem:[%s1 + $0x98] sm:$0xff]
  %v53 = vld [vmem:[%s1 + $0xa0] sm:$0xff]
  %v54 = vld [vmem:[%s1 + $0xa8] sm:$0xff]
  %v55 = vld [vmem:[%s1 + $0xb0] sm:$0xff]
  %v56 = vld [vmem:[%s1 + $0xb8] sm:$0xff]
  %v57 = vld [vmem:[%s1 + $0xc0] sm:$0xff]
  %v58 = vld [vmem:[%s1 + $0xc8] sm:$0xff]
  %v59 = vld [vmem:[%s1 + $0xd0] sm:$0xff]
  %v60 = vld [vmem:[%s1 + $0xd8] sm:$0xff]
  %v61 = vld [vmem:[%s1 + $0xe0] sm:$0xff]
  %v62 = vld [vmem:[%s1 + $0xe8] sm:$0xff]
  %v63 = vld [vmem:[%s1 + $0xf0] sm:$0xff]
  %v64 = vld [vmem:[%s1 + $0xf8] sm:$0xff]
  %v65 = vld [vmem:[%s1 + $0x100] sm:$0xff]
  %v66 = vld [vmem:[%s1 + $0x108] sm:$0xff]
  %v67 = vld [vmem:[%s1 + $0x110] sm:$0xff]
  %v68 = vld [vmem:[%s1 + $0x118] sm:$0xff]
  %v69 = vld [vmem:[%s1 + $0x120] sm:$0xff]
  %v70 = vld [vmem:[%s1 + $0x128] sm:$0xff]
  %v71 = vld [vmem:[%s1 + $0x130] sm:$0xff]
  %v72 = vld [vmem:[%s1 + $0x138] sm:$0xff]
  %v73 = vld [vmem:[%s1 + $0x140] sm:$0xff]
  %v74 = vld [vmem:[%s1 + $0x148] sm:$0xff]
  %v75 = vld [vmem:[%s1 + $0x150] sm:$0xff]
  %v76 = vld [vmem:[%s1 + $0x158] sm:$0xff]
  %v77 = vld [vmem:[%s1 + $0x160] sm:$0xff]
  %v78 = vld [vmem:[%s1 + $0x168] sm:$0xff]
  %v79 = vld [vmem:[%s1 + $0x170] sm:$0xff]
  %v80 = vld [vmem:[%s1 + $0x178] sm:$0xff]
  %v81 = vld [vmem:[%s1 + $0x180] sm:$0xff]
  %v82 = vld [vmem:[%s1 + $0x188] sm:$0xff]
  %v83 = vld [vmem:[%s1 + $0x190] sm:$0xff]
  %v84 = vld [vmem:[%s1 + $0x198] sm:$0xff]
  %v85 = vld [vmem:[%s1 + $0x1a0] sm:$0xff]
  %v86 = vld [vmem:[%s1 + $0x1a8] sm:$0xff]
  %v87 = vld [vmem:[%s1 + $0x1b0] sm:$0xff]
  %v88 = vld [vmem:[%s1 + $0x1b8] sm:$0xff]
  %v89 = vld [vmem:[%s1 + $0x1c0] sm:$0xff]
  %v90 = vld [vmem:[%s1 + $0x1c8] sm:$0xff]
  %v91 = vld [vmem:[%s1 + $0x1d0] sm:$0xff]
  %v92 = vld [vmem:[%s1 + $0x1d8] sm:$0xff]
  %v93 = vld [vmem:[%s1 + $0x1e0] sm:$0xff]
  %v94 = vld [vmem:[%s1 + $0x1e8] sm:$0xff]
  %v95 = vld [vmem:[%s1 + $0x1f0] sm:$0xff]
  %v96 = vld [vmem:[%s1 + $0x1f8] sm:$0xff]
  %v97 = vld [vmem:[%s1 + $0x200] sm:$0xff]
  %v98 = vld [vmem:[%s1 + $0x208] sm:$0xff]
  %v99 = vld [vmem:[%s1 + $0x210] sm:$0xff]
  %v100 = vld [vmem:[%s1 + $0x218] sm:$0xff]
  %v101 = vld [vmem:[%s1 + $0x220] sm:$0xff]
  %v102 = vld [vmem:[%s1 + $0x228] sm:$0xff]
  %v103 = vld [vmem:[%s1 + $0x230] sm:$0xff]
  %v104 = vld [vmem:[%s1 + $0x238] sm:$0xff]
  %v105 = vld [vmem:[%s1 + $0x240] sm:$0xff]
  %v106 = vld [vmem:[%s1 + $0x248] sm:$0xff]
  %v107 = vld [vmem:[%s1 + $0x250] sm:$0xff]
  %v108 = vld [vmem:[%s1 + $0x258] sm:$0xff]
  %v109 = vld [vmem:[%s1 + $0x260] sm:$0xff]
  %v110 = vld [vmem:[%s1 + $0x268] sm:$0xff]
  %v111 = vld [vmem:[%s1 + $0x270] sm:$0xff]
  %v112 = vld [vmem:[%s1 + $0x278] sm:$0xff]
  %v113 = vld [vmem:[%s1 + $0x280] sm:$0xff]
  %v114 = vld [vmem:[%s1 + $0x288] sm:$0xff]
  %v115 = vld [vmem:[%s1 + $0x290] sm:$0xff]
  %v116 = vld [vmem:[%s1 + $0x298] sm:$0xff]
  %v117 = vld [vmem:[%s1 + $0x2a0] sm:$0xff]
  %v118 = vld [vmem:[%s1 + $0x2a8] sm:$0xff]
  %v119 = vld [vmem:[%s1 + $0x2b0] sm:$0xff]
  %v120 = vld [vmem:[%s1 + $0x2b8] sm:$0xff]
  %v121 = vld [vmem:[%s1 + $0x2c0] sm:$0xff]
  %v122 = vld [vmem:[%s1 + $0x2c8] sm:$0xff]
  %v123 = vld [vmem:[%s1 + $0x2d0] sm:$0xff]
  %v124 = vld [vmem:[%s1 + $0x2d8] sm:$0xff]
  %v125 = vld [vmem:[%s1 + $0x2e0] sm:$0xff]
  %v126 = vld [vmem:[%s1 + $0x2e8] sm:$0xff]
  %v127 = vld [vmem:[%s1 + $0x2f0] sm:$0xff]
  %v128 = vld [vmem:[%s1 + $0x2f8] sm:$0xff]
  %v129 = vld [vmem:[%s1 + $0x300] sm:$0xff]
  %v130 = vld [vmem:[%s1 + $0x308] sm:$0xff]
  %v131 = vld [vmem:[%s1 + $0x310] sm:$0xff]
  %v132 = vld [vmem:[%s1 + $0x318] sm:$0xff]
  %v133 = vld [vmem:[%s1 + $0x320] sm:$0xff]
  %v134 = vld [vmem:[%s1 + $0x328] sm:$0xff]
  %v135 = vld [vmem:[%s1 + $0x330] sm:$0xff]
  %v136 = vld [vmem:[%s1 + $0x338] sm:$0xff]
  %v137 = vld [vmem:[%s1 + $0x340] sm:$0xff]
  %v138 = vld [vmem:[%s1 + $0x348] sm:$0xff]
  %v139 = vld [vmem:[%s1 + $0x350] sm:$0xff]
  %v140 = vld [vmem:[%s1 + $0x358] sm:$0xff]
  %v141 = vld [vmem:[%s1 + $0x360] sm:$0xff]
  %v142 = vld [vmem:[%s1 + $0x368] sm:$0xff]
  %v143 = vld [vmem:[%s1 + $0x370] sm:$0xff]
  %v144 = vld [vmem:[%s1 + $0x378] sm:$0xff]
  %v145 = vld [vmem:[%s1 + $0x380] sm:$0xff]
  %v146 = vld [vmem:[%s1 + $0x388] sm:$0xff]
  %v147 = vld [vmem:[%s1 + $0x390] sm:$0xff]
  %v148 = vld [vmem:[%s1 + $0x398] sm:$0xff]
  %v149 = vld [vmem:[%s1 + $0x3a0] sm:$0xff]
  %v150 = vld [vmem:[%s1 + $0x3a8] sm:$0xff]
  %v151 = vld [vmem:[%s1 + $0x3b0] sm:$0xff]
  %v152 = vld [vmem:[%s1 + $0x3b8] sm:$0xff]
  %v153 = vld [vmem:[%s1 + $0x3c0] sm:$0xff]
  %v154 = vld [vmem:[%s1 + $0x3c8] sm:$0xff]
  %v155 = vld [vmem:[%s1 + $0x3d0] sm:$0xff]
  %v156 = vld [vmem:[%s1 + $0x3d8] sm:$0xff]
  %v157 = vld [vmem:[%s1 + $0x3e0] sm:$0xff]
  %v158 = vld [vmem:[%s1 + $0x3e8] sm:$0xff]
  %v159 = vld [vmem:[%s1 + $0x3f0] sm:$0xff]
  %v160 = vld [vmem:[%s1 + $0x3f8] sm:$0xff]
  %v161 = vld [vmem:[%s1 + $0x400] sm:$0xff]
  %v162 = vld [vmem:[%s1 + $0x408] sm:$0xff]
  %v163 = vld [vmem:[%s1 + $0x410] sm:$0xff]
  %v164 = vld [vmem:[%s1 + $0x418] sm:$0xff]
  %v165 = vld [vmem:[%s1 + $0x420] sm:$0xff]
  %v166 = vld [vmem:[%s1 + $0x428] sm:$0xff]
  %v167 = vld [vmem:[%s1 + $0x430] sm:$0xff]
  %v168 = vld [vmem:[%s1 + $0x438] sm:$0xff]
  %v169 = vld [vmem:[%s1 + $0x440] sm:$0xff]
  %v170 = vld [vmem:[%s1 + $0x448] sm:$0xff]
  %v171 = vld [vmem:[%s1 + $0x450] sm:$0xff]
  %v172 = vld [vmem:[%s1 + $0x458] sm:$0xff]
  %v173 = vld [vmem:[%s1 + $0x460] sm:$0xff]
  %v174 = vld [vmem:[%s1 + $0x468] sm:$0xff]
  %v175 = vld [vmem:[%s1 + $0x470] sm:$0xff]
  %v176 = vld [vmem:[%s1 + $0x478] sm:$0xff]
  %v177 = vld [vmem:[%s1 + $0x480] sm:$0xff]
  %v178 = vld [vmem:[%s1 + $0x488] sm:$0xff]
  %v179 = vld [vmem:[%s1 + $0x490] sm:$0xff]
  %v180 = vld [vmem:[%s1 + $0x498] sm:$0xff]
  %v181 = vld [vmem:[%s1 + $0x4a0] sm:$0xff]
  %v182 = vld [vmem:[%s1 + $0x4a8] sm:$0xff]
  %v183 = vld [vmem:[%s1 + $0x4b0] sm:$0xff]
  %v184 = vld [vmem:[%s1 + $0x4b8] sm:$0xff]
  %v185 = vld [vmem:[%s1 + $0x4c0] sm:$0xff]
  %v186 = vld [vmem:[%s1 + $0x4c8] sm:$0xff]
  %v187 = vld [vmem:[%s1 + $0x4d0] sm:$0xff]
  %v188 = vld [vmem:[%s1 + $0x4d8] sm:$0xff]
  %v189 = vld [vmem:[%s1 + $0x4e0] sm:$0xff]
  %v190 = vld [vmem:[%s1 + $0x4e8] sm:$0xff]
  %v191 = vld [vmem:[%s1 + $0x4f0] sm:$0xff]
  %v192 = vld [vmem:[%s1 + $0x4f8] sm:$0xff]
  %v193 = vld [vmem:[%s1 + $0x500] sm:$0xff]
  %v194 = vld [vmem:[%s1 + $0x508] sm:$0xff]
  %v195 = vld [vmem:[%s1 + $0x510] sm:$0xff]
  %v196 = vld [vmem:[%s1 + $0x518] sm:$0xff]
  %v197 = vld [vmem:[%s1 + $0x520] sm:$0xff]
  %v198 = vld [vmem:[%s1 + $0x528] sm:$0xff]
  %v199 = vld [vmem:[%s1 + $0x530] sm:$0xff]
  %v200 = vld [vmem:[%s1 + $0x538] sm:$0xff]
  %v201 = vld [vmem:[%s1 + $0x540] sm:$0xff]
  %v202 = vld [vmem:[%s1 + $0x548] sm:$0xff]
  %v203 = vld [vmem:[%s1 + $0x550] sm:$0xff]
  %v204 = vld [vmem:[%s1 + $0x558] sm:$0xff]
  %v205 = vld [vmem:[%s1 + $0x560] sm:$0xff]
  %v206 = vld [vmem:[%s1 + $0x568] sm:$0xff]
  %v207 = vld [vmem:[%s1 + $0x570] sm:$0xff]
  %v208 = vld [vmem:[%s1 + $0x578] sm:$0xff]
  %v209 = vld [vmem:[%s1 + $0x580] sm:$0xff]
  %v210 = vld [vmem:[%s1 + $0x588] sm:$0xff]
  %v211 = vld [vmem:[%s1 + $0x590] sm:$0xff]
  %v212 = vld [vmem:[%s1 + $0x598] sm:$0xff]
  %v213 = vld [vmem:[%s1 + $0x5a0] sm:$0xff]
  %v214 = vld [vmem:[%s1 + $0x5a8] sm:$0xff]
  %v215 = vld [vmem:[%s1 + $0x5b0] sm:$0xff]
  %v216 = vld [vmem:[%s1 + $0x5b8] sm:$0xff]
  %v217 = vld [vmem:[%s1 + $0x5c0] sm:$0xff]
  %v218 = vld [vmem:[%s1 + $0x5c8] sm:$0xff]
  %v219 = vld [vmem:[%s1 + $0x5d0] sm:$0xff]
  %v220 = vld [vmem:[%s1 + $0x5d8] sm:$0xff]
  %v221 = vld [vmem:[%s1 + $0x5e0] sm:$0xff]
  %v222 = vld [vmem:[%s1 + $0x5e8] sm:$0xff]
  %v223 = vld [vmem:[%s1 + $0x5f0] sm:$0xff]
  %v224 = vld [vmem:[%s1 + $0x5f8] sm:$0xff]
  %v225 = vld [vmem:[%s1 + $0x600] sm:$0xff]
  %v226 = vld [vmem:[%s1 + $0x608] sm:$0xff]
  %v227 = vld [vmem:[%s1 + $0x610] sm:$0xff]
  %v228 = vld [vmem:[%s1 + $0x618] sm:$0xff]
  %v229 = vld [vmem:[%s1 + $0x620] sm:$0xff]
  %v230 = vld [vmem:[%s1 + $0x628] sm:$0xff]
  %v231 = vld [vmem:[%s1 + $0x630] sm:$0xff]
  %v232 = vld [vmem:[%s1 + $0x638] sm:$0xff]
  %v233 = vld [vmem:[%s1 + $0x640] sm:$0xff]
  %v234 = vld [vmem:[%s1 + $0x648] sm:$0xff]
  %v235 = vld [vmem:[%s1 + $0x650] sm:$0xff]
  %v236 = vld [vmem:[%s1 + $0x658] sm:$0xff]
  %v237 = vld [vmem:[%s1 + $0x660] sm:$0xff]
  %v238 = vld [vmem:[%s1 + $0x668] sm:$0xff]
  %v239 = vld [vmem:[%s1 + $0x670] sm:$0xff]
  %v240 = vld [vmem:[%s1 + $0x678] sm:$0xff]
  %v241 = vld [vmem:[%s1 + $0x680] sm:$0xff]
  %v242 = vld [vmem:[%s1 + $0x688] sm:$0xff]
  %v243 = vld [vmem:[%s1 + $0x690] sm:$0xff]
  %v244 = vld [vmem:[%s1 + $0x698] sm:$0xff]
  %v245 = vld [vmem:[%s1 + $0x6a0] sm:$0xff]
  %v246 = vld [vmem:[%s1 + $0x6a8] sm:$0xff]
  %v247 = vld [vmem:[%s1 + $0x6b0] sm:$0xff]
  %v248 = vld [vmem:[%s1 + $0x6b8] sm:$0xff]
  %v249 = vld [vmem:[%s1 + $0x6c0] sm:$0xff]
  %v250 = vld [vmem:[%s1 + $0x6c8] sm:$0xff]
  %v251 = vld [vmem:[%s1 + $0x6d0] sm:$0xff]
  %v252 = vld [vmem:[%s1 + $0x6d8] sm:$0xff]
  %v253 = vld [vmem:[%s1 + $0x6e0] sm:$0xff]
  %v254 = vld [vmem:[%s1 + $0x6e8] sm:$0xff]
  %v255 = vld [vmem:[%s1 + $0x6f0] sm:$0xff]
  %v256 = vld [vmem:[%s1 + $0x6f8] sm:$0xff]
  %v257 = vld [vmem:[%s1 + $0x700] sm:$0xff]
  %v258 = vld [vmem:[%s1 + $0x708] sm:$0xff]
  %v259 = vld [vmem:[%s1 + $0x710] sm:$0xff]
  %v260 = vld [vmem:[%s1 + $0x718] sm:$0xff]
  %v261 = vld [vmem:[%s1 + $0x720] sm:$0xff]
  %v262 = vld [vmem:[%s1 + $0x728] sm:$0xff]
  %v263 = vld [vmem:[%s1 + $0x730] sm:$0xff]
  %v264 = vld [vmem:[%s1 + $0x738] sm:$0xff]
  %v265 = vld [vmem:[%s1 + $0x740] sm:$0xff]
  %v266 = vld [vmem:[%s1 + $0x748] sm:$0xff]
  %v267 = vld [vmem:[%s1 + $0x750] sm:$0xff]
  %v268 = vld [vmem:[%s1 + $0x758] sm:$0xff]
  %v269 = vld [vmem:[%s1 + $0x760] sm:$0xff]
  %v270 = vld [vmem:[%s1 + $0x768] sm:$0xff]
  %v271 = vld [vmem:[%s1 + $0x770] sm:$0xff]
  %v272 = vld [vmem:[%s1 + $0x778] sm:$0xff]
  %v273 = vld [vmem:[%s1 + $0x780] sm:$0xff]
  %v274 = vld [vmem:[%s1 + $0x788] sm:$0xff]
  %v275 = vld [vmem:[%s1 + $0x790] sm:$0xff]
  %v276 = vld [vmem:[%s1 + $0x798] sm:$0xff]
  %v277 = vld [vmem:[%s1 + $0x7a0] sm:$0xff]
  %v278 = vld [vmem:[%s1 + $0x7a8] sm:$0xff]
  %v279 = vld [vmem:[%s1 + $0x7b0] sm:$0xff]
  %v280 = vld [vmem:[%s1 + $0x7b8] sm:$0xff]
  %v281 = vld [vmem:[%s1 + $0x7c0] sm:$0xff]
  %v282 = vld [vmem:[%s1 + $0x7c8] sm:$0xff]
  %v283 = vld [vmem:[%s1 + $0x7d0] sm:$0xff]
  %v284 = vld [vmem:[%s1 + $0x7d8] sm:$0xff]
  %v285 = vld [vmem:[%s1 + $0x7e0] sm:$0xff]
  %v286 = vld [vmem:[%s1 + $0x7e8] sm:$0xff]
  %v287 = vld [vmem:[%s1 + $0x7f0] sm:$0xff]
  %v288 = vld [vmem:[%s1 + $0x7f8] sm:$0xff]
  %v289 = vld [vmem:[%s1 + $0x800] sm:$0xff]
  %v290 = vld [vmem:[%s1 + $0x808] sm:$0xff]
  %v291 = vld [vmem:[%s1 + $0x810] sm:$0xff]
  %v292 = vld [vmem:[%s1 + $0x818] sm:$0xff]
  %v293 = vld [vmem:[%s1 + $0x820] sm:$0xff]
  %v294 = vld [vmem:[%s1 + $0x828] sm:$0xff]
  %v295 = vld [vmem:[%s1 + $0x830] sm:$0xff]
  %v296 = vld [vmem:[%s1 + $0x838] sm:$0xff]
  %v297 = vld [vmem:[%s1 + $0x840] sm:$0xff]
  %v298 = vld [vmem:[%s1 + $0x848] sm:$0xff]
  %v299 = vld [vmem:[%s1 + $0x850] sm:$0xff]
  %v300 = vld [vmem:[%s1 + $0x858] sm:$0xff]
  %v301 = vld [vmem:[%s1 + $0x860] sm:$0xff]
  %v302 = vld [vmem:[%s1 + $0x868] sm:$0xff]
  %v303 = vld [vmem:[%s1 + $0x870] sm:$0xff]
  %v304 = vld [vmem:[%s1 + $0x878] sm:$0xff]
  %v305 = vld [vmem:[%s1 + $0x880] sm:$0xff]
  %v306 = vld [vmem:[%s1 + $0x888] sm:$0xff]
  %v307 = vld [vmem:[%s1 + $0x890] sm:$0xff]
  %v308 = vld [vmem:[%s1 + $0x898] sm:$0xff]
  %v309 = vld [vmem:[%s1 + $0x8a0] sm:$0xff]
  %v310 = vld [vmem:[%s1 + $0x8a8] sm:$0xff]
  %v311 = vld [vmem:[%s1 + $0x8b0] sm:$0xff]
  %v312 = vld [vmem:[%s1 + $0x8b8] sm:$0xff]
  %v313 = vld [vmem:[%s1 + $0x8c0] sm:$0xff]
  %v314 = vld [vmem:[%s1 + $0x8c8] sm:$0xff]
  %v315 = vld [vmem:[%s1 + $0x8d0] sm:$0xff]
  %v316 = vld [vmem:[%s1 + $0x8d8] sm:$0xff]
  %v317 = vld [vmem:[%s1 + $0x8e0] sm:$0xff]
  %v318 = vld [vmem:[%s1 + $0x8e8] sm:$0xff]
  %v319 = vld [vmem:[%s1 + $0x8f0] sm:$0xff]
  %v320 = vld [vmem:[%s1 + $0x8f8] sm:$0xff]
  %321 = vmatpush.msra.mxu0 %v63
  %322 = vmatpush.msra.mxu0 %v61
  %323 = vmatpush.msra.mxu0 %v59
  %324 = vmatpush.msra.mxu0 %v57
  %325 = vmatpush.msra.mxu0 %v55
  %326 = vmatpush.msra.mxu0 %v53
  %327 = vmatpush.msra.mxu0 %v51
  %328 = vmatpush.msra.mxu0 %v49
  %329 = vmatpush.msra.mxu0 %v47
  %330 = vmatpush.msra.mxu0 %v45
  %331 = vmatpush.msra.mxu0 %v43
  %332 = vmatpush.msra.mxu0 %v41
  %333 = vmatpush.msra.mxu0 %v39
  %334 = vmatpush.msra.mxu0 %v37
  %335 = vmatpush.msra.mxu0 %v35
  %336 = vmatpush.msra.mxu0 %v33
  %337 = vmatmul.f32.gmra.mxu0 %v24
  %v338 = vpop.f32.mrf.mxu0
  %v339 = vadd.f32 0.0, %v338
  %340 = vdwg.mxu0
  %341 = vmatpush.msra.mxu0 %v95
  %342 = vmatpush.msra.mxu0 %v93
  %343 = vmatpush.msra.mxu0 %v91
  %344 = vmatpush.msra.mxu0 %v89
  %345 = vmatpush.msra.mxu0 %v87
  %346 = vmatpush.msra.mxu0 %v85
  %347 = vmatpush.msra.mxu0 %v83
  %348 = vmatpush.msra.mxu0 %v81
  %349 = vmatpush.msra.mxu0 %v79
  %350 = vmatpush.msra.mxu0 %v77
  %351 = vmatpush.msra.mxu0 %v75
  %352 = vmatpush.msra.mxu0 %v73
  %353 = vmatpush.msra.mxu0 %v71
  %354 = vmatpush.msra.mxu0 %v69
  %355 = vmatpush.msra.mxu0 %v67
  %356 = vmatpush.msra.mxu0 %v65
  %357 = vmatmul.f32.gmra.mxu0 %v25
  %v358 = vpop.f32.mrf.mxu0
  %v359 = vadd.f32 %v339, %v358
  %360 = vdwg.mxu0
  %361 = vmatpush.msra.mxu0 %v127
  %362 = vmatpush.msra.mxu0 %v125
  %363 = vmatpush.msra.mxu0 %v123
  %364 = vmatpush.msra.mxu0 %v121
  %365 = vmatpush.msra.mxu0 %v119
  %366 = vmatpush.msra.mxu0 %v117
  %367 = vmatpush.msra.mxu0 %v115
  %368 = vmatpush.msra.mxu0 %v113
  %369 = vmatpush.msra.mxu0 %v111
  %370 = vmatpush.msra.mxu0 %v109
  %371 = vmatpush.msra.mxu0 %v107
  %372 = vmatpush.msra.mxu0 %v105
  %373 = vmatpush.msra.mxu0 %v103
  %374 = vmatpush.msra.mxu0 %v101
  %375 = vmatpush.msra.mxu0 %v99
  %376 = vmatpush.msra.mxu0 %v97
  %377 = vmatmul.f32.gmra.mxu0 %v26
  %v378 = vpop.f32.mrf.mxu0
  %v379 = vadd.f32 %v359, %v378
  %380 = vdwg.mxu0
  %381 = vmatpush.msra.mxu0 %v159
  %382 = vmatpush.msra.mxu0 %v157
  %383 = vmatpush.msra.mxu0 %v155
  %384 = vmatpush.msra.mxu0 %v153
  %385 = vmatpush.msra.mxu0 %v151
  %386 = vmatpush.msra.mxu0 %v149
  %387 = vmatpush.msra.mxu0 %v147
  %388 = vmatpush.msra.mxu0 %v145
  %389 = vmatpush.msra.mxu0 %v143
  %390 = vmatpush.msra.mxu0 %v141
  %391 = vmatpush.msra.mxu0 %v139
  %392 = vmatpush.msra.mxu0 %v137
  %393 = vmatpush.msra.mxu0 %v135
  %394 = vmatpush.msra.mxu0 %v133
  %395 = vmatpush.msra.mxu0 %v131
  %396 = vmatpush.msra.mxu0 %v129
  %397 = vmatmul.f32.gmra.mxu0 %v27
  %v398 = vpop.f32.mrf.mxu0
  %v399 = vadd.f32 %v379, %v398
  %400 = vdwg.mxu0
  %401 = vmatpush.msra.mxu0 %v191
  %402 = vmatpush.msra.mxu0 %v189
  %403 = vmatpush.msra.mxu0 %v187
  %404 = vmatpush.msra.mxu0 %v185
  %405 = vmatpush.msra.mxu0 %v183
  %406 = vmatpush.msra.mxu0 %v181
  %407 = vmatpush.msra.mxu0 %v179
  %408 = vmatpush.msra.mxu0 %v177
  %409 = vmatpush.msra.mxu0 %v175
  %410 = vmatpush.msra.mxu0 %v173
  %411 = vmatpush.msra.mxu0 %v171
  %412 = vmatpush.msra.mxu0 %v169
  %413 = vmatpush.msra.mxu0 %v167
  %414 = vmatpush.msra.mxu0 %v165
  %415 = vmatpush.msra.mxu0 %v163
  %416 = vmatpush.msra.mxu0 %v161
  %417 = vmatmul.f32.gmra.mxu0 %v28
  %v418 = vpop.f32.mrf.mxu0
  %v419 = vadd.f32 %v399, %v418
  %420 = vdwg.mxu0
  %421 = vmatpush.msra.mxu0 %v223
  %422 = vmatpush.msra.mxu0 %v221
  %423 = vmatpush.msra.mxu0 %v219
  %424 = vmatpush.msra.mxu0 %v217
  %425 = vmatpush.msra.mxu0 %v215
  %426 = vmatpush.msra.mxu0 %v213
  %427 = vmatpush.msra.mxu0 %v211
  %428 = vmatpush.msra.mxu0 %v209
  %429 = vmatpush.msra.mxu0 %v207
  %430 = vmatpush.msra.mxu0 %v205
  %431 = vmatpush.msra.mxu0 %v203
  %432 = vmatpush.msra.mxu0 %v201
  %433 = vmatpush.msra.mxu0 %v199
  %434 = vmatpush.msra.mxu0 %v197
  %435 = vmatpush.msra.mxu0 %v195
  %436 = vmatpush.msra.mxu0 %v193
  %437 = vmatmul.f32.gmra.mxu0 %v29
  %v438 = vpop.f32.mrf.mxu0
  %v439 = vadd.f32 %v419, %v438
  %440 = vdwg.mxu0
  %441 = vmatpush.msra.mxu0 %v255
  %442 = vmatpush.msra.mxu0 %v253
  %443 = vmatpush.msra.mxu0 %v251
  %444 = vmatpush.msra.mxu0 %v249
  %445 = vmatpush.msra.mxu0 %v247
  %446 = vmatpush.msra.mxu0 %v245
  %447 = vmatpush.msra.mxu0 %v243
  %448 = vmatpush.msra.mxu0 %v241
  %449 = vmatpush.msra.mxu0 %v239
  %450 = vmatpush.msra.mxu0 %v237
  %451 = vmatpush.msra.mxu0 %v235
  %452 = vmatpush.msra.mxu0 %v233
  %453 = vmatpush.msra.mxu0 %v231
  %454 = vmatpush.msra.mxu0 %v229
  %455 = vmatpush.msra.mxu0 %v227
  %456 = vmatpush.msra.mxu0 %v225
  %457 = vmatmul.f32.gmra.mxu0 %v30
  %v458 = vpop.f32.mrf.mxu0
  %v459 = vadd.f32 %v439, %v458
  %460 = vdwg.mxu0
  %461 = vmatpush.msra.mxu0 %v287
  %462 = vmatpush.msra.mxu0 %v285
  %463 = vmatpush.msra.mxu0 %v283
  %464 = vmatpush.msra.mxu0 %v281
  %465 = vmatpush.msra.mxu0 %v279
  %466 = vmatpush.msra.mxu0 %v277
  %467 = vmatpush.msra.mxu0 %v275
  %468 = vmatpush.msra.mxu0 %v273
  %469 = vmatpush.msra.mxu0 %v271
  %470 = vmatpush.msra.mxu0 %v269
  %471 = vmatpush.msra.mxu0 %v267
  %472 = vmatpush.msra.mxu0 %v265
  %473 = vmatpush.msra.mxu0 %v263
  %474 = vmatpush.msra.mxu0 %v261
  %475 = vmatpush.msra.mxu0 %v259
  %476 = vmatpush.msra.mxu0 %v257
  %477 = vmatmul.f32.gmra.mxu0 %v31
  %v478 = vpop.f32.mrf.mxu0
  %v479 = vadd.f32 %v459, %v478
  %480 = vdwg.mxu0
  %481 = vmatpush.msra.mxu0 %v319
  %482 = vmatpush.msra.mxu0 %v317
  %483 = vmatpush.msra.mxu0 %v315
  %484 = vmatpush.msra.mxu0 %v313
  %485 = vmatpush.msra.mxu0 %v311
  %486 = vmatpush.msra.mxu0 %v309
  %487 = vmatpush.msra.mxu0 %v307
  %488 = vmatpush.msra.mxu0 %v305
  %489 = vmatpush.msra.mxu0 %v303
  %490 = vmatpush.msra.mxu0 %v301
  %491 = vmatpush.msra.mxu0 %v299
  %492 = vmatpush.msra.mxu0 %v297
  %493 = vmatpush.msra.mxu0 %v295
  %494 = vmatpush.msra.mxu0 %v293
  %495 = vmatpush.msra.mxu0 %v291
  %496 = vmatpush.msra.mxu0 %v289
  %497 = vmatmul.f32.gmra.mxu0 %v32
  %v498 = vpop.f32.mrf.mxu0
  %v499 = vadd.f32 %v479, %v498
  %500 = vdwg.mxu0
  %501 = vmatpush.msra.mxu0 %v64
  %502 = vmatpush.msra.mxu0 %v62
  %503 = vmatpush.msra.mxu0 %v60
  %504 = vmatpush.msra.mxu0 %v58
  %505 = vmatpush.msra.mxu0 %v56
  %506 = vmatpush.msra.mxu0 %v54
  %507 = vmatpush.msra.mxu0 %v52
  %508 = vmatpush.msra.mxu0 %v50
  %509 = vmatpush.msra.mxu0 %v48
  %510 = vmatpush.msra.mxu0 %v46
  %511 = vmatpush.msra.mxu0 %v44
  %512 = vmatpush.msra.mxu0 %v42
  %513 = vmatpush.msra.mxu0 %v40
  %514 = vmatpush.msra.mxu0 %v38
  %515 = vmatpush.msra.mxu0 %v36
  %516 = vmatpush.msra.mxu0 %v34
  %517 = vmatmul.f32.gmra.mxu0 %v24
  %v518 = vpop.f32.mrf.mxu0
  %v519 = vadd.f32 0.0, %v518
  %520 = vdwg.mxu0
  %521 = vmatpush.msra.mxu0 %v96
  %522 = vmatpush.msra.mxu0 %v94
  %523 = vmatpush.msra.mxu0 %v92
  %524 = vmatpush.msra.mxu0 %v90
  %525 = vmatpush.msra.mxu0 %v88
  %526 = vmatpush.msra.mxu0 %v86
  %527 = vmatpush.msra.mxu0 %v84
  %528 = vmatpush.msra.mxu0 %v82
  %529 = vmatpush.msra.mxu0 %v80
  %530 = vmatpush.msra.mxu0 %v78
  %531 = vmatpush.msra.mxu0 %v76
  %532 = vmatpush.msra.mxu0 %v74
  %533 = vmatpush.msra.mxu0 %v72
  %534 = vmatpush.msra.mxu0 %v70
  %535 = vmatpush.msra.mxu0 %v68
  %536 = vmatpush.msra.mxu0 %v66
  %537 = vmatmul.f32.gmra.mxu0 %v25
  %v538 = vpop.f32.mrf.mxu0
  %v539 = vadd.f32 %v519, %v538
  %540 = vdwg.mxu0
  %541 = vmatpush.msra.mxu0 %v128
  %542 = vmatpush.msra.mxu0 %v126
  %543 = vmatpush.msra.mxu0 %v124
  %544 = vmatpush.msra.mxu0 %v122
  %545 = vmatpush.msra.mxu0 %v120
  %546 = vmatpush.msra.mxu0 %v118
  %547 = vmatpush.msra.mxu0 %v116
  %548 = vmatpush.msra.mxu0 %v114
  %549 = vmatpush.msra.mxu0 %v112
  %550 = vmatpush.msra.mxu0 %v110
  %551 = vmatpush.msra.mxu0 %v108
  %552 = vmatpush.msra.mxu0 %v106
  %553 = vmatpush.msra.mxu0 %v104
  %554 = vmatpush.msra.mxu0 %v102
  %555 = vmatpush.msra.mxu0 %v100
  %556 = vmatpush.msra.mxu0 %v98
  %557 = vmatmul.f32.gmra.mxu0 %v26
  %v558 = vpop.f32.mrf.mxu0
  %v559 = vadd.f32 %v539, %v558
  %560 = vdwg.mxu0
  %561 = vmatpush.msra.mxu0 %v160
  %562 = vmatpush.msra.mxu0 %v158
  %563 = vmatpush.msra.mxu0 %v156
  %564 = vmatpush.msra.mxu0 %v154
  %565 = vmatpush.msra.mxu0 %v152
  %566 = vmatpush.msra.mxu0 %v150
  %567 = vmatpush.msra.mxu0 %v148
  %568 = vmatpush.msra.mxu0 %v146
  %569 = vmatpush.msra.mxu0 %v144
  %570 = vmatpush.msra.mxu0 %v142
  %571 = vmatpush.msra.mxu0 %v140
  %572 = vmatpush.msra.mxu0 %v138
  %573 = vmatpush.msra.mxu0 %v136
  %574 = vmatpush.msra.mxu0 %v134
  %575 = vmatpush.msra.mxu0 %v132
  %576 = vmatpush.msra.mxu0 %v130
  %577 = vmatmul.f32.gmra.mxu0 %v27
  %v578 = vpop.f32.mrf.mxu0
  %v579 = vadd.f32 %v559, %v578
  %580 = vdwg.mxu0
  %581 = vmatpush.msra.mxu0 %v192
  %582 = vmatpush.msra.mxu0 %v190
  %583 = vmatpush.msra.mxu0 %v188
  %584 = vmatpush.msra.mxu0 %v186
  %585 = vmatpush.msra.mxu0 %v184
  %586 = vmatpush.msra.mxu0 %v182
  %587 = vmatpush.msra.mxu0 %v180
  %588 = vmatpush.msra.mxu0 %v178
  %589 = vmatpush.msra.mxu0 %v176
  %590 = vmatpush.msra.mxu0 %v174
  %591 = vmatpush.msra.mxu0 %v172
  %592 = vmatpush.msra.mxu0 %v170
  %593 = vmatpush.msra.mxu0 %v168
  %594 = vmatpush.msra.mxu0 %v166
  %595 = vmatpush.msra.mxu0 %v164
  %596 = vmatpush.msra.mxu0 %v162
  %597 = vmatmul.f32.gmra.mxu0 %v28
  %v598 = vpop.f32.mrf.mxu0
  %v599 = vadd.f32 %v579, %v598
  %600 = vdwg.mxu0
  %601 = vmatpush.msra.mxu0 %v224
  %602 = vmatpush.msra.mxu0 %v222
  %603 = vmatpush.msra.mxu0 %v220
  %604 = vmatpush.msra.mxu0 %v218
  %605 = vmatpush.msra.mxu0 %v216
  %606 = vmatpush.msra.mxu0 %v214
  %607 = vmatpush.msra.mxu0 %v212
  %608 = vmatpush.msra.mxu0 %v210
  %609 = vmatpush.msra.mxu0 %v208
  %610 = vmatpush.msra.mxu0 %v206
  %611 = vmatpush.msra.mxu0 %v204
  %612 = vmatpush.msra.mxu0 %v202
  %613 = vmatpush.msra.mxu0 %v200
  %614 = vmatpush.msra.mxu0 %v198
  %615 = vmatpush.msra.mxu0 %v196
  %616 = vmatpush.msra.mxu0 %v194
  %617 = vmatmul.f32.gmra.mxu0 %v29
  %v618 = vpop.f32.mrf.mxu0
  %v619 = vadd.f32 %v599, %v618
  %620 = vdwg.mxu0
  %621 = vmatpush.msra.mxu0 %v256
  %622 = vmatpush.msra.mxu0 %v254
  %623 = vmatpush.msra.mxu0 %v252
  %624 = vmatpush.msra.mxu0 %v250
  %625 = vmatpush.msra.mxu0 %v248
  %626 = vmatpush.msra.mxu0 %v246
  %627 = vmatpush.msra.mxu0 %v244
  %628 = vmatpush.msra.mxu0 %v242
  %629 = vmatpush.msra.mxu0 %v240
  %630 = vmatpush.msra.mxu0 %v238
  %631 = vmatpush.msra.mxu0 %v236
  %632 = vmatpush.msra.mxu0 %v234
  %633 = vmatpush.msra.mxu0 %v232
  %634 = vmatpush.msra.mxu0 %v230
  %635 = vmatpush.msra.mxu0 %v228
  %636 = vmatpush.msra.mxu0 %v226
  %637 = vmatmul.f32.gmra.mxu0 %v30
  %v638 = vpop.f32.mrf.mxu0
  %v639 = vadd.f32 %v619, %v638
  %640 = vdwg.mxu0
  %641 = vmatpush.msra.mxu0 %v288
  %642 = vmatpush.msra.mxu0 %v286
  %643 = vmatpush.msra.mxu0 %v284
  %644 = vmatpush.msra.mxu0 %v282
  %645 = vmatpush.msra.mxu0 %v280
  %646 = vmatpush.msra.mxu0 %v278
  %647 = vmatpush.msra.mxu0 %v276
  %648 = vmatpush.msra.mxu0 %v274
  %649 = vmatpush.msra.mxu0 %v272
  %650 = vmatpush.msra.mxu0 %v270
  %651 = vmatpush.msra.mxu0 %v268
  %652 = vmatpush.msra.mxu0 %v266
  %653 = vmatpush.msra.mxu0 %v264
  %654 = vmatpush.msra.mxu0 %v262
  %655 = vmatpush.msra.mxu0 %v260
  %656 = vmatpush.msra.mxu0 %v258
  %657 = vmatmul.f32.gmra.mxu0 %v31
  %v658 = vpop.f32.mrf.mxu0
  %v659 = vadd.f32 %v639, %v658
  %660 = vdwg.mxu0
  %661 = vmatpush.msra.mxu0 %v320
  %662 = vmatpush.msra.mxu0 %v318
  %663 = vmatpush.msra.mxu0 %v316
  %664 = vmatpush.msra.mxu0 %v314
  %665 = vmatpush.msra.mxu0 %v312
  %666 = vmatpush.msra.mxu0 %v310
  %667 = vmatpush.msra.mxu0 %v308
  %668 = vmatpush.msra.mxu0 %v306
  %669 = vmatpush.msra.mxu0 %v304
  %670 = vmatpush.msra.mxu0 %v302
  %671 = vmatpush.msra.mxu0 %v300
  %672 = vmatpush.msra.mxu0 %v298
  %673 = vmatpush.msra.mxu0 %v296
  %674 = vmatpush.msra.mxu0 %v294
  %675 = vmatpush.msra.mxu0 %v292
  %676 = vmatpush.msra.mxu0 %v290
  %677 = vmatmul.f32.gmra.mxu0 %v32
  %v678 = vpop.f32.mrf.mxu0
  %v679 = vadd.f32 %v659, %v678
  %680 = vdwg.mxu0
  %681 = vst [vmem:[%s2] sm:$0xff] %v499
  %682 = vst [vmem:[%s2 + $0x8] sm:$0xff] %v679
  %v683 = vld [vmem:[%s3] sm:$0x3]
  %v684 = vrot.slane %v499, 4
  %v685 = vadd.f32 %v499, %v684
  %v686 = vrot.slane %v685, 2
  %v687 = vadd.f32 %v685, %v686
  %v688 = vrot.slane %v687, 1
  %v689 = vadd.f32 %v687, %v688
  %v690 = vrot.slane %v679, 4
  %v691 = vadd.f32 %v679, %v690
  %v692 = vrot.slane %v691, 2
  %v693 = vadd.f32 %v691, %v692
  %v694 = vrot.slane %v693, 1
  %v695 = vadd.f32 %v693, %v694
  %v698 = vrot.slane %v695, 7
  %vm699 = vcmask 1040384
  %v700 = vsel %vm699, %v689, %v698
  %v702 = vadd.f32 %v683, %v700
  %v703 = vlaneseq
  %vm704 = vcmp.ge.s32.totalorder %v703, 0
  %vm705 = vcmp.lt.s32.totalorder %v703, 256
  %vm706 = vmand %vm704, %vm705
  %707 = vst.msk [vmem:[%s3] sm:$0x3] %vm706, %v702
  %v708 = vld [vmem:[%s4] sm:$0x3]
  %v709 = vmul.f32 %v499, %v499
  %v710 = vmul.f32 %v679, %v679
  %v711 = vrot.slane %v709, 4
  %v712 = vadd.f32 %v709, %v711
  %v713 = vrot.slane %v712, 2
  %v714 = vadd.f32 %v712, %v713
  %v715 = vrot.slane %v714, 1
  %v716 = vadd.f32 %v714, %v715
  %v717 = vrot.slane %v710, 4
  %v718 = vadd.f32 %v710, %v717
  %v719 = vrot.slane %v718, 2
  %v720 = vadd.f32 %v718, %v719
  %v721 = vrot.slane %v720, 1
  %v722 = vadd.f32 %v720, %v721
  %v725 = vrot.slane %v722, 7
  %v726 = vsel %vm699, %v716, %v725
  %v728 = vadd.f32 %v708, %v726
  %729 = vst.msk [vmem:[%s4] sm:$0x3] %vm706, %v728
  // Predicated region
  $region14: #{phd_net_res_forward.51} parent=0 // pred_check
    _
  $region15: #{phd_net_res_forward.51} parent=0 // pred_check_branch
    %731 = sbr.rel (0) target = $region17
  $region16: #{phd_net_res_forward.51} parent=0 // pred_region
    _
  $region17: #{phd_net_res_forward.51} parent=0 // pred_fallthru
    _
  // Predicated region
  $region18: #{phd_net_res_forward.51} parent=0 // pred_check
    _
  $region19: #{phd_net_res_forward.51} parent=0 // pred_check_branch
    %733 = sbr.rel (0) target = $region21
  $region20: #{phd_net_res_forward.51} parent=0 // pred_region
    _
  $region21: #{phd_net_res_forward.51} parent=0 // pred_fallthru
    _
  // Predicated region
  $region22: #{phd_net_res_forward.51} parent=0 // pred_check
    _
  $region23: #{phd_net_res_forward.51} parent=0 // pred_check_branch
    %735 = sbr.rel (0) target = $region25
  $region24: #{phd_net_res_forward.51} parent=0 // pred_region
    _
  $region25: #{phd_net_res_forward.51} parent=0 // pred_fallthru
    _
  // Predicated region
  $region26: #{phd_net_res_forward.51} parent=0 // pred_check
    _
  $region27: #{phd_net_res_forward.51} parent=0 // pred_check_branch
    %737 = sbr.rel (0) target = $region29
  $region28: #{phd_net_res_forward.51} parent=0 // pred_region
    _
  $region29: #{phd_net_res_forward.51} parent=0 // pred_fallthru
    _
  // Predicated region
  $region30: #{phd_net_res_forward.51} parent=0 // pred_check
    _
  $region31: #{phd_net_res_forward.51} parent=0 // pred_check_branch
    %739 = sbr.rel (0) target = $region33
  $region32: #{phd_net_res_forward.51} parent=0 // pred_region
    _
  $region33: #{phd_net_res_forward.51} parent=0 // pred_fallthru
    _
  // Predicated region
  $region34: #{phd_net_res_forward.51} parent=0 // pred_check
    _
  $region35: #{phd_net_res_forward.51} parent=0 // pred_check_branch
    %741 = sbr.rel (0) target = $region37
  $region36: #{phd_net_res_forward.51} parent=0 // pred_region
    _
  $region37: #{phd_net_res_forward.51} parent=0 // pred_fallthru
    _

// kernel: phd_net_res_forward.56
$region0: #{phd_net_res_forward.56}
  #allocation0 [shape = 'u32[]', space=smem, size = 0x4, offset = 0x4, fixed_abs, tag = 'smem constant byte address 0x4 - core index']
  #allocation1 [shape = 'u32[72,128]{1,0:T(1,128)}', space=vmem, size = 0x9000, scoped, tag = 'internal scratch']
  %s0 = inlined_call_operand.vmem [shape: f32[8,256], index: 0, kind: input, shape index: {}]
  %s1 = inlined_call_operand.vmem [shape: f32[1,256], index: 1, kind: input, shape index: {}]
  %s2 = inlined_call_operand.vmem [shape: f32[1,256], index: 2, kind: input, shape index: {}]
  %s3 = inlined_call_operand.vmem [shape: f32[8,256], index: 3, kind: input, shape index: {}]
  %s4 = inlined_call_operand.vmem [shape: f32[8,256], index: 4, kind: output, shape index: {}]
  %s5 = sld [smem:[#allocation0]]
  $region26: #{phd_net_res_forward.56} parent=0
    _
  %s7 = ssub.s32 1, %s5
  %s8 = scalar_select 0, %s7, %s5
  // Predicated region
  $region2: #{phd_net_res_forward.56} parent=0 // pred_check
    _
  $region3: #{phd_net_res_forward.56} parent=0 // pred_check_branch
    %10 = sbr.rel (0) target = $region5
  $region4: #{phd_net_res_forward.56} parent=0 // pred_region
    _
  $region5: #{phd_net_res_forward.56} parent=0 // pred_fallthru
    _
  // Predicated region
  $region6: #{phd_net_res_forward.56} parent=0 // pred_check
    _
  $region7: #{phd_net_res_forward.56} parent=0 // pred_check_branch
    %12 = sbr.rel (0) target = $region9
  $region8: #{phd_net_res_forward.56} parent=0 // pred_region
    _
  $region9: #{phd_net_res_forward.56} parent=0 // pred_fallthru
    _
  // Predicated region
  $region10: #{phd_net_res_forward.56} parent=0 // pred_check
    _
  $region11: #{phd_net_res_forward.56} parent=0 // pred_check_branch
    %14 = sbr.rel (0) target = $region13
  $region12: #{phd_net_res_forward.56} parent=0 // pred_region
    _
  $region13: #{phd_net_res_forward.56} parent=0 // pred_fallthru
    _
  // Predicated region
  $region14: #{phd_net_res_forward.56} parent=0 // pred_check
    _
  $region15: #{phd_net_res_forward.56} parent=0 // pred_check_branch
    %16 = sbr.rel (0) target = $region17
  $region16: #{phd_net_res_forward.56} parent=0 // pred_region
    _
  $region17: #{phd_net_res_forward.56} parent=0 // pred_fallthru
    _
  %v17 = vld [vmem:[%s0] sm:$0xff]
  %v18 = vld [vmem:[%s0 + $0x8] sm:$0xff]
  %v19 = vld [vmem:[%s1] sm:$0x3]
  %v21 = vperm.slane %v19, 0
  %v22 = vperm.slane %v19, 1
  %v25 = vmul.f32 %v17, %v21
  %v26 = vmul.f32 %v18, %v22
  %v27 = vld [vmem:[%s2] sm:$0x3]
  %v29 = vperm.slane %v27, 0
  %v30 = vperm.slane %v27, 1
  %v33 = vadd.f32 %v25, %v29
  %v34 = vadd.f32 %v26, %v30
  %v35 = vmul.f32 %v33, 0.5
  %v36 = vmul.f32 %v34, 0.5
  %v37 = vmul.f32 %v33, 0.70710677
  %v38 = vmul.f32 %v34, 0.70710677
  %vm39 = vcmp.ge.f32.partialorder %v37, 0.0
  %vm40 = vcmp.ge.f32.partialorder %v38, 0.0
  %v41 = vsel %vm39, 1.0, -1.0
  %v42 = vsel %vm40, 1.0, -1.0
  %v43 = vand.u32 2147483647, %v37
  %v44 = vand.u32 2147483647, %v38
  %v45 = vmul.f32 %v43, 0.3275911
  %v46 = vmul.f32 %v44, 0.3275911
  %v47 = vadd.f32 %v45, 1.0
  %v48 = vadd.f32 %v46, 1.0
  %v49 = vrcp.pop %v47
  %v50 = vmul.f32 %v47, %v49
  %v51 = vsub.f32 1.0, %v50
  %v52 = vmul.f32 %v49, %v51
  %v53 = vadd.f32 %v49, %v52
  %vm54 = vweird.f32 %v47
  %vm55 = vweird.f32 %v49
  %vm56 = vmor %vm54, %vm55
  %v57 = vsel %vm56, %v49, %v53
  %v58 = vand.u32 2147483647, %v47
  %vm59 = vcmp.eq.f32.partialorder %v58, 8.507059e+37
  %v60 = vand.u32 %v47, 2147483648
  %v61 = vor.u32 1.1754944e-38, %v60
  %v62 = vsel %vm59, %v61, %v57
  %v63 = vrcp.pop %v48
  %v64 = vmul.f32 %v48, %v63
  %v65 = vsub.f32 1.0, %v64
  %v66 = vmul.f32 %v63, %v65
  %v67 = vadd.f32 %v63, %v66
  %vm68 = vweird.f32 %v48
  %vm69 = vweird.f32 %v63
  %vm70 = vmor %vm68, %vm69
  %v71 = vsel %vm70, %v63, %v67
  %v72 = vand.u32 2147483647, %v48
  %vm73 = vcmp.eq.f32.partialorder %v72, 8.507059e+37
  %v74 = vand.u32 %v48, 2147483648
  %v75 = vor.u32 1.1754944e-38, %v74
  %v76 = vsel %vm73, %v75, %v71
  %v77 = vmul.f32 %v62, 1.0614054
  %v78 = vmul.f32 %v76, 1.0614054
  %v79 = vadd.f32 %v77, -1.4531521
  %v80 = vadd.f32 %v78, -1.4531521
  %v81 = vmul.f32 %v79, %v62
  %v82 = vmul.f32 %v80, %v76
  %v83 = vadd.f32 %v81, 1.4214138
  %v84 = vadd.f32 %v82, 1.4214138
  %v85 = vmul.f32 %v83, %v62
  %v86 = vmul.f32 %v84, %v76
  %v87 = vadd.f32 %v85, -0.28449672
  %v88 = vadd.f32 %v86, -0.28449672
  %v89 = vmul.f32 %v87, %v62
  %v90 = vmul.f32 %v88, %v76
  %v91 = vadd.f32 %v89, 0.2548296
  %v92 = vadd.f32 %v90, 0.2548296
  %v93 = vmul.f32 %v91, %v62
  %v94 = vmul.f32 %v92, %v76
  %v95 = vsub.f32 0.0, %v43
  %v96 = vsub.f32 0.0, %v44
  %v97 = vmul.f32 %v95, %v43
  %v98 = vmul.f32 %v96, %v44
  %v99 = vmul.f32 %v97, 1.442695
  %v100 = vpow.pop %v99
  %v101 = vmul.f32 %v98, 1.442695
  %v102 = vpow.pop %v101
  %v103 = vmul.f32 %v93, %v100
  %v104 = vmul.f32 %v94, %v102
  %v105 = vsub.f32 1.0, %v103
  %v106 = vsub.f32 1.0, %v104
  %v107 = vmul.f32 %v41, %v105
  %v108 = vmul.f32 %v42, %v106
  %v109 = vadd.f32 %v107, 1.0
  %v110 = vadd.f32 %v108, 1.0
  %v111 = vmul.f32 %v35, %v109
  %v112 = vmul.f32 %v36, %v110
  %v113 = vld [vmem:[%s3] sm:$0xff]
  %v114 = vld [vmem:[%s3 + $0x8] sm:$0xff]
  %v115 = vadd.f32 %v111, %v113
  %v116 = vadd.f32 %v112, %v114
  %117 = vst [vmem:[%s4] sm:$0xff] %v115
  %118 = vst [vmem:[%s4 + $0x8] sm:$0xff] %v116
  // Predicated region
  $region18: #{phd_net_res_forward.56} parent=0 // pred_check
    _
  $region19: #{phd_net_res_forward.56} parent=0 // pred_check_branch
    %120 = sbr.rel (0) target = $region21
  $region20: #{phd_net_res_forward.56} parent=0 // pred_region
    _
  $region21: #{phd_net_res_forward.56} parent=0 // pred_fallthru
    _
  // Predicated region
  $region22: #{phd_net_res_forward.56} parent=0 // pred_check
    _
  $region23: #{phd_net_res_forward.56} parent=0 // pred_check_branch
    %122 = sbr.rel (0) target = $region25
  $region24: #{phd_net_res_forward.56} parent=0 // pred_region
    _
  $region25: #{phd_net_res_forward.56} parent=0 // pred_fallthru
    _

// kernel: phd_net_res_forward.53
$region0: #{phd_net_res_forward.53}
  #allocation0 [shape = 'u32[]', space=smem, size = 0x4, offset = 0x4, fixed_abs, tag = 'smem constant byte address 0x4 - core index']
  #allocation1 [shape = 'u32[72,128]{1,0:T(1,128)}', space=vmem, size = 0x9000, scoped, tag = 'internal scratch']
  %s0 = inlined_call_operand.vmem [shape: f32[8,2304], index: 0, kind: input, shape index: {}]
  %s1 = inlined_call_operand.vmem [shape: f32[2304,256], index: 1, kind: input, shape index: {}]
  %s2 = inlined_call_operand.vmem [shape: f32[8,256], index: 2, kind: output, shape index: {0}]
  %s3 = inlined_call_operand.vmem [shape: f32[1,256], index: 3, kind: output, shape index: {1}]
  %s4 = inlined_call_operand.vmem [shape: f32[1,256], index: 4, kind: output, shape index: {2}]
  %5 = xla_tuple %s2, %s3, %s4
  %s6 = sld [smem:[#allocation0]]
  $region38: #{phd_net_res_forward.53} parent=0
    _
  %s8 = ssub.s32 1, %s6
  %s9 = scalar_select 0, %s8, %s6
  // Predicated region
  $region2: #{phd_net_res_forward.53} parent=0 // pred_check
    _
  $region3: #{phd_net_res_forward.53} parent=0 // pred_check_branch
    %11 = sbr.rel (0) target = $region5
  $region4: #{phd_net_res_forward.53} parent=0 // pred_region
    _
  $region5: #{phd_net_res_forward.53} parent=0 // pred_fallthru
    _
  // Predicated region
  $region6: #{phd_net_res_forward.53} parent=0 // pred_check
    _
  $region7: #{phd_net_res_forward.53} parent=0 // pred_check_branch
    %13 = sbr.rel (0) target = $region9
  $region8: #{phd_net_res_forward.53} parent=0 // pred_region
    _
  $region9: #{phd_net_res_forward.53} parent=0 // pred_fallthru
    _
  %p14 = scmp.eq.s32.totalorder 0, 0
  // Predicated region
  $region10: #{phd_net_res_forward.53} parent=0 // pred_check
    %p15 = pneg %p14
  $region11: #{phd_net_res_forward.53} parent=0 // pred_check_branch
    %17 = sbr.rel (%p15) target = $region13
  $region12: #{phd_net_res_forward.53} parent=0 // pred_region
    %v18 = vlaneseq
    %vm19 = vcmp.ge.s32.totalorder %v18, 0
    %vm20 = vcmp.lt.s32.totalorder %v18, 256
    %vm21 = vmand %vm19, %vm20
    %22 = vst.msk [vmem:[%s3] sm:$0x3] %vm21, 0.0
    %23 = vst.msk [vmem:[%s4] sm:$0x3] %vm21, 0.0
  $region13: #{phd_net_res_forward.53} parent=0 // pred_fallthru
    _
  %v24 = vld [vmem:[%s0] sm:$0xff]
  %v25 = vld [vmem:[%s0 + $0x8] sm:$0xff]
  %v26 = vld [vmem:[%s0 + $0x10] sm:$0xff]
  %v27 = vld [vmem:[%s0 + $0x18] sm:$0xff]
  %v28 = vld [vmem:[%s0 + $0x20] sm:$0xff]
  %v29 = vld [vmem:[%s0 + $0x28] sm:$0xff]
  %v30 = vld [vmem:[%s0 + $0x30] sm:$0xff]
  %v31 = vld [vmem:[%s0 + $0x38] sm:$0xff]
  %v32 = vld [vmem:[%s0 + $0x40] sm:$0xff]
  %v33 = vld [vmem:[%s0 + $0x48] sm:$0xff]
  %v34 = vld [vmem:[%s0 + $0x50] sm:$0xff]
  %v35 = vld [vmem:[%s0 + $0x58] sm:$0xff]
  %v36 = vld [vmem:[%s0 + $0x60] sm:$0xff]
  %v37 = vld [vmem:[%s0 + $0x68] sm:$0xff]
  %v38 = vld [vmem:[%s0 + $0x70] sm:$0xff]
  %v39 = vld [vmem:[%s0 + $0x78] sm:$0xff]
  %v40 = vld [vmem:[%s0 + $0x80] sm:$0xff]
  %v41 = vld [vmem:[%s0 + $0x88] sm:$0xff]
  %v42 = vld [vmem:[%s1] sm:$0xff]
  %v43 = vld [vmem:[%s1 + $0x8] sm:$0xff]
  %v44 = vld [vmem:[%s1 + $0x10] sm:$0xff]
  %v45 = vld [vmem:[%s1 + $0x18] sm:$0xff]
  %v46 = vld [vmem:[%s1 + $0x20] sm:$0xff]
  %v47 = vld [vmem:[%s1 + $0x28] sm:$0xff]
  %v48 = vld [vmem:[%s1 + $0x30] sm:$0xff]
  %v49 = vld [vmem:[%s1 + $0x38] sm:$0xff]
  %v50 = vld [vmem:[%s1 + $0x40] sm:$0xff]
  %v51 = vld [vmem:[%s1 + $0x48] sm:$0xff]
  %v52 = vld [vmem:[%s1 + $0x50] sm:$0xff]
  %v53 = vld [vmem:[%s1 + $0x58] sm:$0xff]
  %v54 = vld [vmem:[%s1 + $0x60] sm:$0xff]
  %v55 = vld [vmem:[%s1 + $0x68] sm:$0xff]
  %v56 = vld [vmem:[%s1 + $0x70] sm:$0xff]
  %v57 = vld [vmem:[%s1 + $0x78] sm:$0xff]
  %v58 = vld [vmem:[%s1 + $0x80] sm:$0xff]
  %v59 = vld [vmem:[%s1 + $0x88] sm:$0xff]
  %v60 = vld [vmem:[%s1 + $0x90] sm:$0xff]
  %v61 = vld [vmem:[%s1 + $0x98] sm:$0xff]
  %v62 = vld [vmem:[%s1 + $0xa0] sm:$0xff]
  %v63 = vld [vmem:[%s1 + $0xa8] sm:$0xff]
  %v64 = vld [vmem:[%s1 + $0xb0] sm:$0xff]
  %v65 = vld [vmem:[%s1 + $0xb8] sm:$0xff]
  %v66 = vld [vmem:[%s1 + $0xc0] sm:$0xff]
  %v67 = vld [vmem:[%s1 + $0xc8] sm:$0xff]
  %v68 = vld [vmem:[%s1 + $0xd0] sm:$0xff]
  %v69 = vld [vmem:[%s1 + $0xd8] sm:$0xff]
  %v70 = vld [vmem:[%s1 + $0xe0] sm:$0xff]
  %v71 = vld [vmem:[%s1 + $0xe8] sm:$0xff]
  %v72 = vld [vmem:[%s1 + $0xf0] sm:$0xff]
  %v73 = vld [vmem:[%s1 + $0xf8] sm:$0xff]
  %v74 = vld [vmem:[%s1 + $0x100] sm:$0xff]
  %v75 = vld [vmem:[%s1 + $0x108] sm:$0xff]
  %v76 = vld [vmem:[%s1 + $0x110] sm:$0xff]
  %v77 = vld [vmem:[%s1 + $0x118] sm:$0xff]
  %v78 = vld [vmem:[%s1 + $0x120] sm:$0xff]
  %v79 = vld [vmem:[%s1 + $0x128] sm:$0xff]
  %v80 = vld [vmem:[%s1 + $0x130] sm:$0xff]
  %v81 = vld [vmem:[%s1 + $0x138] sm:$0xff]
  %v82 = vld [vmem:[%s1 + $0x140] sm:$0xff]
  %v83 = vld [vmem:[%s1 + $0x148] sm:$0xff]
  %v84 = vld [vmem:[%s1 + $0x150] sm:$0xff]
  %v85 = vld [vmem:[%s1 + $0x158] sm:$0xff]
  %v86 = vld [vmem:[%s1 + $0x160] sm:$0xff]
  %v87 = vld [vmem:[%s1 + $0x168] sm:$0xff]
  %v88 = vld [vmem:[%s1 + $0x170] sm:$0xff]
  %v89 = vld [vmem:[%s1 + $0x178] sm:$0xff]
  %v90 = vld [vmem:[%s1 + $0x180] sm:$0xff]
  %v91 = vld [vmem:[%s1 + $0x188] sm:$0xff]
  %v92 = vld [vmem:[%s1 + $0x190] sm:$0xff]
  %v93 = vld [vmem:[%s1 + $0x198] sm:$0xff]
  %v94 = vld [vmem:[%s1 + $0x1a0] sm:$0xff]
  %v95 = vld [vmem:[%s1 + $0x1a8] sm:$0xff]
  %v96 = vld [vmem:[%s1 + $0x1b0] sm:$0xff]
  %v97 = vld [vmem:[%s1 + $0x1b8] sm:$0xff]
  %v98 = vld [vmem:[%s1 + $0x1c0] sm:$0xff]
  %v99 = vld [vmem:[%s1 + $0x1c8] sm:$0xff]
  %v100 = vld [vmem:[%s1 + $0x1d0] sm:$0xff]
  %v101 = vld [vmem:[%s1 + $0x1d8] sm:$0xff]
  %v102 = vld [vmem:[%s1 + $0x1e0] sm:$0xff]
  %v103 = vld [vmem:[%s1 + $0x1e8] sm:$0xff]
  %v104 = vld [vmem:[%s1 + $0x1f0] sm:$0xff]
  %v105 = vld [vmem:[%s1 + $0x1f8] sm:$0xff]
  %v106 = vld [vmem:[%s1 + $0x200] sm:$0xff]
  %v107 = vld [vmem:[%s1 + $0x208] sm:$0xff]
  %v108 = vld [vmem:[%s1 + $0x210] sm:$0xff]
  %v109 = vld [vmem:[%s1 + $0x218] sm:$0xff]
  %v110 = vld [vmem:[%s1 + $0x220] sm:$0xff]
  %v111 = vld [vmem:[%s1 + $0x228] sm:$0xff]
  %v112 = vld [vmem:[%s1 + $0x230] sm:$0xff]
  %v113 = vld [vmem:[%s1 + $0x238] sm:$0xff]
  %v114 = vld [vmem:[%s1 + $0x240] sm:$0xff]
  %v115 = vld [vmem:[%s1 + $0x248] sm:$0xff]
  %v116 = vld [vmem:[%s1 + $0x250] sm:$0xff]
  %v117 = vld [vmem:[%s1 + $0x258] sm:$0xff]
  %v118 = vld [vmem:[%s1 + $0x260] sm:$0xff]
  %v119 = vld [vmem:[%s1 + $0x268] sm:$0xff]
  %v120 = vld [vmem:[%s1 + $0x270] sm:$0xff]
  %v121 = vld [vmem:[%s1 + $0x278] sm:$0xff]
  %v122 = vld [vmem:[%s1 + $0x280] sm:$0xff]
  %v123 = vld [vmem:[%s1 + $0x288] sm:$0xff]
  %v124 = vld [vmem:[%s1 + $0x290] sm:$0xff]
  %v125 = vld [vmem:[%s1 + $0x298] sm:$0xff]
  %v126 = vld [vmem:[%s1 + $0x2a0] sm:$0xff]
  %v127 = vld [vmem:[%s1 + $0x2a8] sm:$0xff]
  %v128 = vld [vmem:[%s1 + $0x2b0] sm:$0xff]
  %v129 = vld [vmem:[%s1 + $0x2b8] sm:$0xff]
  %v130 = vld [vmem:[%s1 + $0x2c0] sm:$0xff]
  %v131 = vld [vmem:[%s1 + $0x2c8] sm:$0xff]
  %v132 = vld [vmem:[%s1 + $0x2d0] sm:$0xff]
  %v133 = vld [vmem:[%s1 + $0x2d8] sm:$0xff]
  %v134 = vld [vmem:[%s1 + $0x2e0] sm:$0xff]
  %v135 = vld [vmem:[%s1 + $0x2e8] sm:$0xff]
  %v136 = vld [vmem:[%s1 + $0x2f0] sm:$0xff]
  %v137 = vld [vmem:[%s1 + $0x2f8] sm:$0xff]
  %v138 = vld [vmem:[%s1 + $0x300] sm:$0xff]
  %v139 = vld [vmem:[%s1 + $0x308] sm:$0xff]
  %v140 = vld [vmem:[%s1 + $0x310] sm:$0xff]
  %v141 = vld [vmem:[%s1 + $0x318] sm:$0xff]
  %v142 = vld [vmem:[%s1 + $0x320] sm:$0xff]
  %v143 = vld [vmem:[%s1 + $0x328] sm:$0xff]
  %v144 = vld [vmem:[%s1 + $0x330] sm:$0xff]
  %v145 = vld [vmem:[%s1 + $0x338] sm:$0xff]
  %v146 = vld [vmem:[%s1 + $0x340] sm:$0xff]
  %v147 = vld [vmem:[%s1 + $0x348] sm:$0xff]
  %v148 = vld [vmem:[%s1 + $0x350] sm:$0xff]
  %v149 = vld [vmem:[%s1 + $0x358] sm:$0xff]
  %v150 = vld [vmem:[%s1 + $0x360] sm:$0xff]
  %v151 = vld [vmem:[%s1 + $0x368] sm:$0xff]
  %v152 = vld [vmem:[%s1 + $0x370] sm:$0xff]
  %v153 = vld [vmem:[%s1 + $0x378] sm:$0xff]
  %v154 = vld [vmem:[%s1 + $0x380] sm:$0xff]
  %v155 = vld [vmem:[%s1 + $0x388] sm:$0xff]
  %v156 = vld [vmem:[%s1 + $0x390] sm:$0xff]
  %v157 = vld [vmem:[%s1 + $0x398] sm:$0xff]
  %v158 = vld [vmem:[%s1 + $0x3a0] sm:$0xff]
  %v159 = vld [vmem:[%s1 + $0x3a8] sm:$0xff]
  %v160 = vld [vmem:[%s1 + $0x3b0] sm:$0xff]
  %v161 = vld [vmem:[%s1 + $0x3b8] sm:$0xff]
  %v162 = vld [vmem:[%s1 + $0x3c0] sm:$0xff]
  %v163 = vld [vmem:[%s1 + $0x3c8] sm:$0xff]
  %v164 = vld [vmem:[%s1 + $0x3d0] sm:$0xff]
  %v165 = vld [vmem:[%s1 + $0x3d8] sm:$0xff]
  %v166 = vld [vmem:[%s1 + $0x3e0] sm:$0xff]
  %v167 = vld [vmem:[%s1 + $0x3e8] sm:$0xff]
  %v168 = vld [vmem:[%s1 + $0x3f0] sm:$0xff]
  %v169 = vld [vmem:[%s1 + $0x3f8] sm:$0xff]
  %v170 = vld [vmem:[%s1 + $0x400] sm:$0xff]
  %v171 = vld [vmem:[%s1 + $0x408] sm:$0xff]
  %v172 = vld [vmem:[%s1 + $0x410] sm:$0xff]
  %v173 = vld [vmem:[%s1 + $0x418] sm:$0xff]
  %v174 = vld [vmem:[%s1 + $0x420] sm:$0xff]
  %v175 = vld [vmem:[%s1 + $0x428] sm:$0xff]
  %v176 = vld [vmem:[%s1 + $0x430] sm:$0xff]
  %v177 = vld [vmem:[%s1 + $0x438] sm:$0xff]
  %v178 = vld [vmem:[%s1 + $0x440] sm:$0xff]
  %v179 = vld [vmem:[%s1 + $0x448] sm:$0xff]
  %v180 = vld [vmem:[%s1 + $0x450] sm:$0xff]
  %v181 = vld [vmem:[%s1 + $0x458] sm:$0xff]
  %v182 = vld [vmem:[%s1 + $0x460] sm:$0xff]
  %v183 = vld [vmem:[%s1 + $0x468] sm:$0xff]
  %v184 = vld [vmem:[%s1 + $0x470] sm:$0xff]
  %v185 = vld [vmem:[%s1 + $0x478] sm:$0xff]
  %v186 = vld [vmem:[%s1 + $0x480] sm:$0xff]
  %v187 = vld [vmem:[%s1 + $0x488] sm:$0xff]
  %v188 = vld [vmem:[%s1 + $0x490] sm:$0xff]
  %v189 = vld [vmem:[%s1 + $0x498] sm:$0xff]
  %v190 = vld [vmem:[%s1 + $0x4a0] sm:$0xff]
  %v191 = vld [vmem:[%s1 + $0x4a8] sm:$0xff]
  %v192 = vld [vmem:[%s1 + $0x4b0] sm:$0xff]
  %v193 = vld [vmem:[%s1 + $0x4b8] sm:$0xff]
  %v194 = vld [vmem:[%s1 + $0x4c0] sm:$0xff]
  %v195 = vld [vmem:[%s1 + $0x4c8] sm:$0xff]
  %v196 = vld [vmem:[%s1 + $0x4d0] sm:$0xff]
  %v197 = vld [vmem:[%s1 + $0x4d8] sm:$0xff]
  %v198 = vld [vmem:[%s1 + $0x4e0] sm:$0xff]
  %v199 = vld [vmem:[%s1 + $0x4e8] sm:$0xff]
  %v200 = vld [vmem:[%s1 + $0x4f0] sm:$0xff]
  %v201 = vld [vmem:[%s1 + $0x4f8] sm:$0xff]
  %v202 = vld [vmem:[%s1 + $0x500] sm:$0xff]
  %v203 = vld [vmem:[%s1 + $0x508] sm:$0xff]
  %v204 = vld [vmem:[%s1 + $0x510] sm:$0xff]
  %v205 = vld [vmem:[%s1 + $0x518] sm:$0xff]
  %v206 = vld [vmem:[%s1 + $0x520] sm:$0xff]
  %v207 = vld [vmem:[%s1 + $0x528] sm:$0xff]
  %v208 = vld [vmem:[%s1 + $0x530] sm:$0xff]
  %v209 = vld [vmem:[%s1 + $0x538] sm:$0xff]
  %v210 = vld [vmem:[%s1 + $0x540] sm:$0xff]
  %v211 = vld [vmem:[%s1 + $0x548] sm:$0xff]
  %v212 = vld [vmem:[%s1 + $0x550] sm:$0xff]
  %v213 = vld [vmem:[%s1 + $0x558] sm:$0xff]
  %v214 = vld [vmem:[%s1 + $0x560] sm:$0xff]
  %v215 = vld [vmem:[%s1 + $0x568] sm:$0xff]
  %v216 = vld [vmem:[%s1 + $0x570] sm:$0xff]
  %v217 = vld [vmem:[%s1 + $0x578] sm:$0xff]
  %v218 = vld [vmem:[%s1 + $0x580] sm:$0xff]
  %v219 = vld [vmem:[%s1 + $0x588] sm:$0xff]
  %v220 = vld [vmem:[%s1 + $0x590] sm:$0xff]
  %v221 = vld [vmem:[%s1 + $0x598] sm:$0xff]
  %v222 = vld [vmem:[%s1 + $0x5a0] sm:$0xff]
  %v223 = vld [vmem:[%s1 + $0x5a8] sm:$0xff]
  %v224 = vld [vmem:[%s1 + $0x5b0] sm:$0xff]
  %v225 = vld [vmem:[%s1 + $0x5b8] sm:$0xff]
  %v226 = vld [vmem:[%s1 + $0x5c0] sm:$0xff]
  %v227 = vld [vmem:[%s1 + $0x5c8] sm:$0xff]
  %v228 = vld [vmem:[%s1 + $0x5d0] sm:$0xff]
  %v229 = vld [vmem:[%s1 + $0x5d8] sm:$0xff]
  %v230 = vld [vmem:[%s1 + $0x5e0] sm:$0xff]
  %v231 = vld [vmem:[%s1 + $0x5e8] sm:$0xff]
  %v232 = vld [vmem:[%s1 + $0x5f0] sm:$0xff]
  %v233 = vld [vmem:[%s1 + $0x5f8] sm:$0xff]
  %v234 = vld [vmem:[%s1 + $0x600] sm:$0xff]
  %v235 = vld [vmem:[%s1 + $0x608] sm:$0xff]
  %v236 = vld [vmem:[%s1 + $0x610] sm:$0xff]
  %v237 = vld [vmem:[%s1 + $0x618] sm:$0xff]
  %v238 = vld [vmem:[%s1 + $0x620] sm:$0xff]
  %v239 = vld [vmem:[%s1 + $0x628] sm:$0xff]
  %v240 = vld [vmem:[%s1 + $0x630] sm:$0xff]
  %v241 = vld [vmem:[%s1 + $0x638] sm:$0xff]
  %v242 = vld [vmem:[%s1 + $0x640] sm:$0xff]
  %v243 = vld [vmem:[%s1 + $0x648] sm:$0xff]
  %v244 = vld [vmem:[%s1 + $0x650] sm:$0xff]
  %v245 = vld [vmem:[%s1 + $0x658] sm:$0xff]
  %v246 = vld [vmem:[%s1 + $0x660] sm:$0xff]
  %v247 = vld [vmem:[%s1 + $0x668] sm:$0xff]
  %v248 = vld [vmem:[%s1 + $0x670] sm:$0xff]
  %v249 = vld [vmem:[%s1 + $0x678] sm:$0xff]
  %v250 = vld [vmem:[%s1 + $0x680] sm:$0xff]
  %v251 = vld [vmem:[%s1 + $0x688] sm:$0xff]
  %v252 = vld [vmem:[%s1 + $0x690] sm:$0xff]
  %v253 = vld [vmem:[%s1 + $0x698] sm:$0xff]
  %v254 = vld [vmem:[%s1 + $0x6a0] sm:$0xff]
  %v255 = vld [vmem:[%s1 + $0x6a8] sm:$0xff]
  %v256 = vld [vmem:[%s1 + $0x6b0] sm:$0xff]
  %v257 = vld [vmem:[%s1 + $0x6b8] sm:$0xff]
  %v258 = vld [vmem:[%s1 + $0x6c0] sm:$0xff]
  %v259 = vld [vmem:[%s1 + $0x6c8] sm:$0xff]
  %v260 = vld [vmem:[%s1 + $0x6d0] sm:$0xff]
  %v261 = vld [vmem:[%s1 + $0x6d8] sm:$0xff]
  %v262 = vld [vmem:[%s1 + $0x6e0] sm:$0xff]
  %v263 = vld [vmem:[%s1 + $0x6e8] sm:$0xff]
  %v264 = vld [vmem:[%s1 + $0x6f0] sm:$0xff]
  %v265 = vld [vmem:[%s1 + $0x6f8] sm:$0xff]
  %v266 = vld [vmem:[%s1 + $0x700] sm:$0xff]
  %v267 = vld [vmem:[%s1 + $0x708] sm:$0xff]
  %v268 = vld [vmem:[%s1 + $0x710] sm:$0xff]
  %v269 = vld [vmem:[%s1 + $0x718] sm:$0xff]
  %v270 = vld [vmem:[%s1 + $0x720] sm:$0xff]
  %v271 = vld [vmem:[%s1 + $0x728] sm:$0xff]
  %v272 = vld [vmem:[%s1 + $0x730] sm:$0xff]
  %v273 = vld [vmem:[%s1 + $0x738] sm:$0xff]
  %v274 = vld [vmem:[%s1 + $0x740] sm:$0xff]
  %v275 = vld [vmem:[%s1 + $0x748] sm:$0xff]
  %v276 = vld [vmem:[%s1 + $0x750] sm:$0xff]
  %v277 = vld [vmem:[%s1 + $0x758] sm:$0xff]
  %v278 = vld [vmem:[%s1 + $0x760] sm:$0xff]
  %v279 = vld [vmem:[%s1 + $0x768] sm:$0xff]
  %v280 = vld [vmem:[%s1 + $0x770] sm:$0xff]
  %v281 = vld [vmem:[%s1 + $0x778] sm:$0xff]
  %v282 = vld [vmem:[%s1 + $0x780] sm:$0xff]
  %v283 = vld [vmem:[%s1 + $0x788] sm:$0xff]
  %v284 = vld [vmem:[%s1 + $0x790] sm:$0xff]
  %v285 = vld [vmem:[%s1 + $0x798] sm:$0xff]
  %v286 = vld [vmem:[%s1 + $0x7a0] sm:$0xff]
  %v287 = vld [vmem:[%s1 + $0x7a8] sm:$0xff]
  %v288 = vld [vmem:[%s1 + $0x7b0] sm:$0xff]
  %v289 = vld [vmem:[%s1 + $0x7b8] sm:$0xff]
  %v290 = vld [vmem:[%s1 + $0x7c0] sm:$0xff]
  %v291 = vld [vmem:[%s1 + $0x7c8] sm:$0xff]
  %v292 = vld [vmem:[%s1 + $0x7d0] sm:$0xff]
  %v293 = vld [vmem:[%s1 + $0x7d8] sm:$0xff]
  %v294 = vld [vmem:[%s1 + $0x7e0] sm:$0xff]
  %v295 = vld [vmem:[%s1 + $0x7e8] sm:$0xff]
  %v296 = vld [vmem:[%s1 + $0x7f0] sm:$0xff]
  %v297 = vld [vmem:[%s1 + $0x7f8] sm:$0xff]
  %v298 = vld [vmem:[%s1 + $0x800] sm:$0xff]
  %v299 = vld [vmem:[%s1 + $0x808] sm:$0xff]
  %v300 = vld [vmem:[%s1 + $0x810] sm:$0xff]
  %v301 = vld [vmem:[%s1 + $0x818] sm:$0xff]
  %v302 = vld [vmem:[%s1 + $0x820] sm:$0xff]
  %v303 = vld [vmem:[%s1 + $0x828] sm:$0xff]
  %v304 = vld [vmem:[%s1 + $0x830] sm:$0xff]
  %v305 = vld [vmem:[%s1 + $0x838] sm:$0xff]
  %v306 = vld [vmem:[%s1 + $0x840] sm:$0xff]
  %v307 = vld [vmem:[%s1 + $0x848] sm:$0xff]
  %v308 = vld [vmem:[%s1 + $0x850] sm:$0xff]
  %v309 = vld [vmem:[%s1 + $0x858] sm:$0xff]
  %v310 = vld [vmem:[%s1 + $0x860] sm:$0xff]
  %v311 = vld [vmem:[%s1 + $0x868] sm:$0xff]
  %v312 = vld [vmem:[%s1 + $0x870] sm:$0xff]
  %v313 = vld [vmem:[%s1 + $0x878] sm:$0xff]
  %v314 = vld [vmem:[%s1 + $0x880] sm:$0xff]
  %v315 = vld [vmem:[%s1 + $0x888] sm:$0xff]
  %v316 = vld [vmem:[%s1 + $0x890] sm:$0xff]
  %v317 = vld [vmem:[%s1 + $0x898] sm:$0xff]
  %v318 = vld [vmem:[%s1 + $0x8a0] sm:$0xff]
  %v319 = vld [vmem:[%s1 + $0x8a8] sm:$0xff]
  %v320 = vld [vmem:[%s1 + $0x8b0] sm:$0xff]
  %v321 = vld [vmem:[%s1 + $0x8b8] sm:$0xff]
  %v322 = vld [vmem:[%s1 + $0x8c0] sm:$0xff]
  %v323 = vld [vmem:[%s1 + $0x8c8] sm:$0xff]
  %v324 = vld [vmem:[%s1 + $0x8d0] sm:$0xff]
  %v325 = vld [vmem:[%s1 + $0x8d8] sm:$0xff]
  %v326 = vld [vmem:[%s1 + $0x8e0] sm:$0xff]
  %v327 = vld [vmem:[%s1 + $0x8e8] sm:$0xff]
  %v328 = vld [vmem:[%s1 + $0x8f0] sm:$0xff]
  %v329 = vld [vmem:[%s1 + $0x8f8] sm:$0xff]
  %v330 = vld [vmem:[%s1 + $0x900] sm:$0xff]
  %v331 = vld [vmem:[%s1 + $0x908] sm:$0xff]
  %v332 = vld [vmem:[%s1 + $0x910] sm:$0xff]
  %v333 = vld [vmem:[%s1 + $0x918] sm:$0xff]
  %v334 = vld [vmem:[%s1 + $0x920] sm:$0xff]
  %v335 = vld [vmem:[%s1 + $0x928] sm:$0xff]
  %v336 = vld [vmem:[%s1 + $0x930] sm:$0xff]
  %v337 = vld [vmem:[%s1 + $0x938] sm:$0xff]
  %v338 = vld [vmem:[%s1 + $0x940] sm:$0xff]
  %v339 = vld [vmem:[%s1 + $0x948] sm:$0xff]
  %v340 = vld [vmem:[%s1 + $0x950] sm:$0xff]
  %v341 = vld [vmem:[%s1 + $0x958] sm:$0xff]
  %v342 = vld [vmem:[%s1 + $0x960] sm:$0xff]
  %v343 = vld [vmem:[%s1 + $0x968] sm:$0xff]
  %v344 = vld [vmem:[%s1 + $0x970] sm:$0xff]
  %v345 = vld [vmem:[%s1 + $0x978] sm:$0xff]
  %v346 = vld [vmem:[%s1 + $0x980] sm:$0xff]
  %v347 = vld [vmem:[%s1 + $0x988] sm:$0xff]
  %v348 = vld [vmem:[%s1 + $0x990] sm:$0xff]
  %v349 = vld [vmem:[%s1 + $0x998] sm:$0xff]
  %v350 = vld [vmem:[%s1 + $0x9a0] sm:$0xff]
  %v351 = vld [vmem:[%s1 + $0x9a8] sm:$0xff]
  %v352 = vld [vmem:[%s1 + $0x9b0] sm:$0xff]
  %v353 = vld [vmem:[%s1 + $0x9b8] sm:$0xff]
  %v354 = vld [vmem:[%s1 + $0x9c0] sm:$0xff]
  %v355 = vld [vmem:[%s1 + $0x9c8] sm:$0xff]
  %v356 = vld [vmem:[%s1 + $0x9d0] sm:$0xff]
  %v357 = vld [vmem:[%s1 + $0x9d8] sm:$0xff]
  %v358 = vld [vmem:[%s1 + $0x9e0] sm:$0xff]
  %v359 = vld [vmem:[%s1 + $0x9e8] sm:$0xff]
  %v360 = vld [vmem:[%s1 + $0x9f0] sm:$0xff]
  %v361 = vld [vmem:[%s1 + $0x9f8] sm:$0xff]
  %v362 = vld [vmem:[%s1 + $0xa00] sm:$0xff]
  %v363 = vld [vmem:[%s1 + $0xa08] sm:$0xff]
  %v364 = vld [vmem:[%s1 + $0xa10] sm:$0xff]
  %v365 = vld [vmem:[%s1 + $0xa18] sm:$0xff]
  %v366 = vld [vmem:[%s1 + $0xa20] sm:$0xff]
  %v367 = vld [vmem:[%s1 + $0xa28] sm:$0xff]
  %v368 = vld [vmem:[%s1 + $0xa30] sm:$0xff]
  %v369 = vld [vmem:[%s1 + $0xa38] sm:$0xff]
  %v370 = vld [vmem:[%s1 + $0xa40] sm:$0xff]
  %v371 = vld [vmem:[%s1 + $0xa48] sm:$0xff]
  %v372 = vld [vmem:[%s1 + $0xa50] sm:$0xff]
  %v373 = vld [vmem:[%s1 + $0xa58] sm:$0xff]
  %v374 = vld [vmem:[%s1 + $0xa60] sm:$0xff]
  %v375 = vld [vmem:[%s1 + $0xa68] sm:$0xff]
  %v376 = vld [vmem:[%s1 + $0xa70] sm:$0xff]
  %v377 = vld [vmem:[%s1 + $0xa78] sm:$0xff]
  %v378 = vld [vmem:[%s1 + $0xa80] sm:$0xff]
  %v379 = vld [vmem:[%s1 + $0xa88] sm:$0xff]
  %v380 = vld [vmem:[%s1 + $0xa90] sm:$0xff]
  %v381 = vld [vmem:[%s1 + $0xa98] sm:$0xff]
  %v382 = vld [vmem:[%s1 + $0xaa0] sm:$0xff]
  %v383 = vld [vmem:[%s1 + $0xaa8] sm:$0xff]
  %v384 = vld [vmem:[%s1 + $0xab0] sm:$0xff]
  %v385 = vld [vmem:[%s1 + $0xab8] sm:$0xff]
  %v386 = vld [vmem:[%s1 + $0xac0] sm:$0xff]
  %v387 = vld [vmem:[%s1 + $0xac8] sm:$0xff]
  %v388 = vld [vmem:[%s1 + $0xad0] sm:$0xff]
  %v389 = vld [vmem:[%s1 + $0xad8] sm:$0xff]
  %v390 = vld [vmem:[%s1 + $0xae0] sm:$0xff]
  %v391 = vld [vmem:[%s1 + $0xae8] sm:$0xff]
  %v392 = vld [vmem:[%s1 + $0xaf0] sm:$0xff]
  %v393 = vld [vmem:[%s1 + $0xaf8] sm:$0xff]
  %v394 = vld [vmem:[%s1 + $0xb00] sm:$0xff]
  %v395 = vld [vmem:[%s1 + $0xb08] sm:$0xff]
  %v396 = vld [vmem:[%s1 + $0xb10] sm:$0xff]
  %v397 = vld [vmem:[%s1 + $0xb18] sm:$0xff]
  %v398 = vld [vmem:[%s1 + $0xb20] sm:$0xff]
  %v399 = vld [vmem:[%s1 + $0xb28] sm:$0xff]
  %v400 = vld [vmem:[%s1 + $0xb30] sm:$0xff]
  %v401 = vld [vmem:[%s1 + $0xb38] sm:$0xff]
  %v402 = vld [vmem:[%s1 + $0xb40] sm:$0xff]
  %v403 = vld [vmem:[%s1 + $0xb48] sm:$0xff]
  %v404 = vld [vmem:[%s1 + $0xb50] sm:$0xff]
  %v405 = vld [vmem:[%s1 + $0xb58] sm:$0xff]
  %v406 = vld [vmem:[%s1 + $0xb60] sm:$0xff]
  %v407 = vld [vmem:[%s1 + $0xb68] sm:$0xff]
  %v408 = vld [vmem:[%s1 + $0xb70] sm:$0xff]
  %v409 = vld [vmem:[%s1 + $0xb78] sm:$0xff]
  %v410 = vld [vmem:[%s1 + $0xb80] sm:$0xff]
  %v411 = vld [vmem:[%s1 + $0xb88] sm:$0xff]
  %v412 = vld [vmem:[%s1 + $0xb90] sm:$0xff]
  %v413 = vld [vmem:[%s1 + $0xb98] sm:$0xff]
  %v414 = vld [vmem:[%s1 + $0xba0] sm:$0xff]
  %v415 = vld [vmem:[%s1 + $0xba8] sm:$0xff]
  %v416 = vld [vmem:[%s1 + $0xbb0] sm:$0xff]
  %v417 = vld [vmem:[%s1 + $0xbb8] sm:$0xff]
  %v418 = vld [vmem:[%s1 + $0xbc0] sm:$0xff]
  %v419 = vld [vmem:[%s1 + $0xbc8] sm:$0xff]
  %v420 = vld [vmem:[%s1 + $0xbd0] sm:$0xff]
  %v421 = vld [vmem:[%s1 + $0xbd8] sm:$0xff]
  %v422 = vld [vmem:[%s1 + $0xbe0] sm:$0xff]
  %v423 = vld [vmem:[%s1 + $0xbe8] sm:$0xff]
  %v424 = vld [vmem:[%s1 + $0xbf0] sm:$0xff]
  %v425 = vld [vmem:[%s1 + $0xbf8] sm:$0xff]
  %v426 = vld [vmem:[%s1 + $0xc00] sm:$0xff]
  %v427 = vld [vmem:[%s1 + $0xc08] sm:$0xff]
  %v428 = vld [vmem:[%s1 + $0xc10] sm:$0xff]
  %v429 = vld [vmem:[%s1 + $0xc18] sm:$0xff]
  %v430 = vld [vmem:[%s1 + $0xc20] sm:$0xff]
  %v431 = vld [vmem:[%s1 + $0xc28] sm:$0xff]
  %v432 = vld [vmem:[%s1 + $0xc30] sm:$0xff]
  %v433 = vld [vmem:[%s1 + $0xc38] sm:$0xff]
  %v434 = vld [vmem:[%s1 + $0xc40] sm:$0xff]
  %v435 = vld [vmem:[%s1 + $0xc48] sm:$0xff]
  %v436 = vld [vmem:[%s1 + $0xc50] sm:$0xff]
  %v437 = vld [vmem:[%s1 + $0xc58] sm:$0xff]
  %v438 = vld [vmem:[%s1 + $0xc60] sm:$0xff]
  %v439 = vld [vmem:[%s1 + $0xc68] sm:$0xff]
  %v440 = vld [vmem:[%s1 + $0xc70] sm:$0xff]
  %v441 = vld [vmem:[%s1 + $0xc78] sm:$0xff]
  %v442 = vld [vmem:[%s1 + $0xc80] sm:$0xff]
  %v443 = vld [vmem:[%s1 + $0xc88] sm:$0xff]
  %v444 = vld [vmem:[%s1 + $0xc90] sm:$0xff]
  %v445 = vld [vmem:[%s1 + $0xc98] sm:$0xff]
  %v446 = vld [vmem:[%s1 + $0xca0] sm:$0xff]
  %v447 = vld [vmem:[%s1 + $0xca8] sm:$0xff]
  %v448 = vld [vmem:[%s1 + $0xcb0] sm:$0xff]
  %v449 = vld [vmem:[%s1 + $0xcb8] sm:$0xff]
  %v450 = vld [vmem:[%s1 + $0xcc0] sm:$0xff]
  %v451 = vld [vmem:[%s1 + $0xcc8] sm:$0xff]
  %v452 = vld [vmem:[%s1 + $0xcd0] sm:$0xff]
  %v453 = vld [vmem:[%s1 + $0xcd8] sm:$0xff]
  %v454 = vld [vmem:[%s1 + $0xce0] sm:$0xff]
  %v455 = vld [vmem:[%s1 + $0xce8] sm:$0xff]
  %v456 = vld [vmem:[%s1 + $0xcf0] sm:$0xff]
  %v457 = vld [vmem:[%s1 + $0xcf8] sm:$0xff]
  %v458 = vld [vmem:[%s1 + $0xd00] sm:$0xff]
  %v459 = vld [vmem:[%s1 + $0xd08] sm:$0xff]
  %v460 = vld [vmem:[%s1 + $0xd10] sm:$0xff]
  %v461 = vld [vmem:[%s1 + $0xd18] sm:$0xff]
  %v462 = vld [vmem:[%s1 + $0xd20] sm:$0xff]
  %v463 = vld [vmem:[%s1 + $0xd28] sm:$0xff]
  %v464 = vld [vmem:[%s1 + $0xd30] sm:$0xff]
  %v465 = vld [vmem:[%s1 + $0xd38] sm:$0xff]
  %v466 = vld [vmem:[%s1 + $0xd40] sm:$0xff]
  %v467 = vld [vmem:[%s1 + $0xd48] sm:$0xff]
  %v468 = vld [vmem:[%s1 + $0xd50] sm:$0xff]
  %v469 = vld [vmem:[%s1 + $0xd58] sm:$0xff]
  %v470 = vld [vmem:[%s1 + $0xd60] sm:$0xff]
  %v471 = vld [vmem:[%s1 + $0xd68] sm:$0xff]
  %v472 = vld [vmem:[%s1 + $0xd70] sm:$0xff]
  %v473 = vld [vmem:[%s1 + $0xd78] sm:$0xff]
  %v474 = vld [vmem:[%s1 + $0xd80] sm:$0xff]
  %v475 = vld [vmem:[%s1 + $0xd88] sm:$0xff]
  %v476 = vld [vmem:[%s1 + $0xd90] sm:$0xff]
  %v477 = vld [vmem:[%s1 + $0xd98] sm:$0xff]
  %v478 = vld [vmem:[%s1 + $0xda0] sm:$0xff]
  %v479 = vld [vmem:[%s1 + $0xda8] sm:$0xff]
  %v480 = vld [vmem:[%s1 + $0xdb0] sm:$0xff]
  %v481 = vld [vmem:[%s1 + $0xdb8] sm:$0xff]
  %v482 = vld [vmem:[%s1 + $0xdc0] sm:$0xff]
  %v483 = vld [vmem:[%s1 + $0xdc8] sm:$0xff]
  %v484 = vld [vmem:[%s1 + $0xdd0] sm:$0xff]
  %v485 = vld [vmem:[%s1 + $0xdd8] sm:$0xff]
  %v486 = vld [vmem:[%s1 + $0xde0] sm:$0xff]
  %v487 = vld [vmem:[%s1 + $0xde8] sm:$0xff]
  %v488 = vld [vmem:[%s1 + $0xdf0] sm:$0xff]
  %v489 = vld [vmem:[%s1 + $0xdf8] sm:$0xff]
  %v490 = vld [vmem:[%s1 + $0xe00] sm:$0xff]
  %v491 = vld [vmem:[%s1 + $0xe08] sm:$0xff]
  %v492 = vld [vmem:[%s1 + $0xe10] sm:$0xff]
  %v493 = vld [vmem:[%s1 + $0xe18] sm:$0xff]
  %v494 = vld [vmem:[%s1 + $0xe20] sm:$0xff]
  %v495 = vld [vmem:[%s1 + $0xe28] sm:$0xff]
  %v496 = vld [vmem:[%s1 + $0xe30] sm:$0xff]
  %v497 = vld [vmem:[%s1 + $0xe38] sm:$0xff]
  %v498 = vld [vmem:[%s1 + $0xe40] sm:$0xff]
  %v499 = vld [vmem:[%s1 + $0xe48] sm:$0xff]
  %v500 = vld [vmem:[%s1 + $0xe50] sm:$0xff]
  %v501 = vld [vmem:[%s1 + $0xe58] sm:$0xff]
  %v502 = vld [vmem:[%s1 + $0xe60] sm:$0xff]
  %v503 = vld [vmem:[%s1 + $0xe68] sm:$0xff]
  %v504 = vld [vmem:[%s1 + $0xe70] sm:$0xff]
  %v505 = vld [vmem:[%s1 + $0xe78] sm:$0xff]
  %v506 = vld [vmem:[%s1 + $0xe80] sm:$0xff]
  %v507 = vld [vmem:[%s1 + $0xe88] sm:$0xff]
  %v508 = vld [vmem:[%s1 + $0xe90] sm:$0xff]
  %v509 = vld [vmem:[%s1 + $0xe98] sm:$0xff]
  %v510 = vld [vmem:[%s1 + $0xea0] sm:$0xff]
  %v511 = vld [vmem:[%s1 + $0xea8] sm:$0xff]
  %v512 = vld [vmem:[%s1 + $0xeb0] sm:$0xff]
  %v513 = vld [vmem:[%s1 + $0xeb8] sm:$0xff]
  %v514 = vld [vmem:[%s1 + $0xec0] sm:$0xff]
  %v515 = vld [vmem:[%s1 + $0xec8] sm:$0xff]
  %v516 = vld [vmem:[%s1 + $0xed0] sm:$0xff]
  %v517 = vld [vmem:[%s1 + $0xed8] sm:$0xff]
  %v518 = vld [vmem:[%s1 + $0xee0] sm:$0xff]
  %v519 = vld [vmem:[%s1 + $0xee8] sm:$0xff]
  %v520 = vld [vmem:[%s1 + $0xef0] sm:$0xff]
  %v521 = vld [vmem:[%s1 + $0xef8] sm:$0xff]
  %v522 = vld [vmem:[%s1 + $0xf00] sm:$0xff]
  %v523 = vld [vmem:[%s1 + $0xf08] sm:$0xff]
  %v524 = vld [vmem:[%s1 + $0xf10] sm:$0xff]
  %v525 = vld [vmem:[%s1 + $0xf18] sm:$0xff]
  %v526 = vld [vmem:[%s1 + $0xf20] sm:$0xff]
  %v527 = vld [vmem:[%s1 + $0xf28] sm:$0xff]
  %v528 = vld [vmem:[%s1 + $0xf30] sm:$0xff]
  %v529 = vld [vmem:[%s1 + $0xf38] sm:$0xff]
  %v530 = vld [vmem:[%s1 + $0xf40] sm:$0xff]
  %v531 = vld [vmem:[%s1 + $0xf48] sm:$0xff]
  %v532 = vld [vmem:[%s1 + $0xf50] sm:$0xff]
  %v533 = vld [vmem:[%s1 + $0xf58] sm:$0xff]
  %v534 = vld [vmem:[%s1 + $0xf60] sm:$0xff]
  %v535 = vld [vmem:[%s1 + $0xf68] sm:$0xff]
  %v536 = vld [vmem:[%s1 + $0xf70] sm:$0xff]
  %v537 = vld [vmem:[%s1 + $0xf78] sm:$0xff]
  %v538 = vld [vmem:[%s1 + $0xf80] sm:$0xff]
  %v539 = vld [vmem:[%s1 + $0xf88] sm:$0xff]
  %v540 = vld [vmem:[%s1 + $0xf90] sm:$0xff]
  %v541 = vld [vmem:[%s1 + $0xf98] sm:$0xff]
  %v542 = vld [vmem:[%s1 + $0xfa0] sm:$0xff]
  %v543 = vld [vmem:[%s1 + $0xfa8] sm:$0xff]
  %v544 = vld [vmem:[%s1 + $0xfb0] sm:$0xff]
  %v545 = vld [vmem:[%s1 + $0xfb8] sm:$0xff]
  %v546 = vld [vmem:[%s1 + $0xfc0] sm:$0xff]
  %v547 = vld [vmem:[%s1 + $0xfc8] sm:$0xff]
  %v548 = vld [vmem:[%s1 + $0xfd0] sm:$0xff]
  %v549 = vld [vmem:[%s1 + $0xfd8] sm:$0xff]
  %v550 = vld [vmem:[%s1 + $0xfe0] sm:$0xff]
  %v551 = vld [vmem:[%s1 + $0xfe8] sm:$0xff]
  %v552 = vld [vmem:[%s1 + $0xff0] sm:$0xff]
  %v553 = vld [vmem:[%s1 + $0xff8] sm:$0xff]
  %v554 = vld [vmem:[%s1 + $0x1000] sm:$0xff]
  %v555 = vld [vmem:[%s1 + $0x1008] sm:$0xff]
  %v556 = vld [vmem:[%s1 + $0x1010] sm:$0xff]
  %v557 = vld [vmem:[%s1 + $0x1018] sm:$0xff]
  %v558 = vld [vmem:[%s1 + $0x1020] sm:$0xff]
  %v559 = vld [vmem:[%s1 + $0x1028] sm:$0xff]
  %v560 = vld [vmem:[%s1 + $0x1030] sm:$0xff]
  %v561 = vld [vmem:[%s1 + $0x1038] sm:$0xff]
  %v562 = vld [vmem:[%s1 + $0x1040] sm:$0xff]
  %v563 = vld [vmem:[%s1 + $0x1048] sm:$0xff]
  %v564 = vld [vmem:[%s1 + $0x1050] sm:$0xff]
  %v565 = vld [vmem:[%s1 + $0x1058] sm:$0xff]
  %v566 = vld [vmem:[%s1 + $0x1060] sm:$0xff]
  %v567 = vld [vmem:[%s1 + $0x1068] sm:$0xff]
  %v568 = vld [vmem:[%s1 + $0x1070] sm:$0xff]
  %v569 = vld [vmem:[%s1 + $0x1078] sm:$0xff]
  %v570 = vld [vmem:[%s1 + $0x1080] sm:$0xff]
  %v571 = vld [vmem:[%s1 + $0x1088] sm:$0xff]
  %v572 = vld [vmem:[%s1 + $0x1090] sm:$0xff]
  %v573 = vld [vmem:[%s1 + $0x1098] sm:$0xff]
  %v574 = vld [vmem:[%s1 + $0x10a0] sm:$0xff]
  %v575 = vld [vmem:[%s1 + $0x10a8] sm:$0xff]
  %v576 = vld [vmem:[%s1 + $0x10b0] sm:$0xff]
  %v577 = vld [vmem:[%s1 + $0x10b8] sm:$0xff]
  %v578 = vld [vmem:[%s1 + $0x10c0] sm:$0xff]
  %v579 = vld [vmem:[%s1 + $0x10c8] sm:$0xff]
  %v580 = vld [vmem:[%s1 + $0x10d0] sm:$0xff]
  %v581 = vld [vmem:[%s1 + $0x10d8] sm:$0xff]
  %v582 = vld [vmem:[%s1 + $0x10e0] sm:$0xff]
  %v583 = vld [vmem:[%s1 + $0x10e8] sm:$0xff]
  %v584 = vld [vmem:[%s1 + $0x10f0] sm:$0xff]
  %v585 = vld [vmem:[%s1 + $0x10f8] sm:$0xff]
  %v586 = vld [vmem:[%s1 + $0x1100] sm:$0xff]
  %v587 = vld [vmem:[%s1 + $0x1108] sm:$0xff]
  %v588 = vld [vmem:[%s1 + $0x1110] sm:$0xff]
  %v589 = vld [vmem:[%s1 + $0x1118] sm:$0xff]
  %v590 = vld [vmem:[%s1 + $0x1120] sm:$0xff]
  %v591 = vld [vmem:[%s1 + $0x1128] sm:$0xff]
  %v592 = vld [vmem:[%s1 + $0x1130] sm:$0xff]
  %v593 = vld [vmem:[%s1 + $0x1138] sm:$0xff]
  %v594 = vld [vmem:[%s1 + $0x1140] sm:$0xff]
  %v595 = vld [vmem:[%s1 + $0x1148] sm:$0xff]
  %v596 = vld [vmem:[%s1 + $0x1150] sm:$0xff]
  %v597 = vld [vmem:[%s1 + $0x1158] sm:$0xff]
  %v598 = vld [vmem:[%s1 + $0x1160] sm:$0xff]
  %v599 = vld [vmem:[%s1 + $0x1168] sm:$0xff]
  %v600 = vld [vmem:[%s1 + $0x1170] sm:$0xff]
  %v601 = vld [vmem:[%s1 + $0x1178] sm:$0xff]
  %v602 = vld [vmem:[%s1 + $0x1180] sm:$0xff]
  %v603 = vld [vmem:[%s1 + $0x1188] sm:$0xff]
  %v604 = vld [vmem:[%s1 + $0x1190] sm:$0xff]
  %v605 = vld [vmem:[%s1 + $0x1198] sm:$0xff]
  %v606 = vld [vmem:[%s1 + $0x11a0] sm:$0xff]
  %v607 = vld [vmem:[%s1 + $0x11a8] sm:$0xff]
  %v608 = vld [vmem:[%s1 + $0x11b0] sm:$0xff]
  %v609 = vld [vmem:[%s1 + $0x11b8] sm:$0xff]
  %v610 = vld [vmem:[%s1 + $0x11c0] sm:$0xff]
  %v611 = vld [vmem:[%s1 + $0x11c8] sm:$0xff]
  %v612 = vld [vmem:[%s1 + $0x11d0] sm:$0xff]
  %v613 = vld [vmem:[%s1 + $0x11d8] sm:$0xff]
  %v614 = vld [vmem:[%s1 + $0x11e0] sm:$0xff]
  %v615 = vld [vmem:[%s1 + $0x11e8] sm:$0xff]
  %v616 = vld [vmem:[%s1 + $0x11f0] sm:$0xff]
  %v617 = vld [vmem:[%s1 + $0x11f8] sm:$0xff]
  %618 = vmatpush.msra.mxu0 %v72
  %619 = vmatpush.msra.mxu0 %v70
  %620 = vmatpush.msra.mxu0 %v68
  %621 = vmatpush.msra.mxu0 %v66
  %622 = vmatpush.msra.mxu0 %v64
  %623 = vmatpush.msra.mxu0 %v62
  %624 = vmatpush.msra.mxu0 %v60
  %625 = vmatpush.msra.mxu0 %v58
  %626 = vmatpush.msra.mxu0 %v56
  %627 = vmatpush.msra.mxu0 %v54
  %628 = vmatpush.msra.mxu0 %v52
  %629 = vmatpush.msra.mxu0 %v50
  %630 = vmatpush.msra.mxu0 %v48
  %631 = vmatpush.msra.mxu0 %v46
  %632 = vmatpush.msra.mxu0 %v44
  %633 = vmatpush.msra.mxu0 %v42
  %634 = vmatmul.f32.gmra.mxu0 %v24
  %v635 = vpop.f32.mrf.mxu0
  %v636 = vadd.f32 0.0, %v635
  %637 = vdwg.mxu0
  %638 = vmatpush.msra.mxu0 %v104
  %639 = vmatpush.msra.mxu0 %v102
  %640 = vmatpush.msra.mxu0 %v100
  %641 = vmatpush.msra.mxu0 %v98
  %642 = vmatpush.msra.mxu0 %v96
  %643 = vmatpush.msra.mxu0 %v94
  %644 = vmatpush.msra.mxu0 %v92
  %645 = vmatpush.msra.mxu0 %v90
  %646 = vmatpush.msra.mxu0 %v88
  %647 = vmatpush.msra.mxu0 %v86
  %648 = vmatpush.msra.mxu0 %v84
  %649 = vmatpush.msra.mxu0 %v82
  %650 = vmatpush.msra.mxu0 %v80
  %651 = vmatpush.msra.mxu0 %v78
  %652 = vmatpush.msra.mxu0 %v76
  %653 = vmatpush.msra.mxu0 %v74
  %654 = vmatmul.f32.gmra.mxu0 %v25
  %v655 = vpop.f32.mrf.mxu0
  %v656 = vadd.f32 %v636, %v655
  %657 = vdwg.mxu0
  %658 = vmatpush.msra.mxu0 %v136
  %659 = vmatpush.msra.mxu0 %v134
  %660 = vmatpush.msra.mxu0 %v132
  %661 = vmatpush.msra.mxu0 %v130
  %662 = vmatpush.msra.mxu0 %v128
  %663 = vmatpush.msra.mxu0 %v126
  %664 = vmatpush.msra.mxu0 %v124
  %665 = vmatpush.msra.mxu0 %v122
  %666 = vmatpush.msra.mxu0 %v120
  %667 = vmatpush.msra.mxu0 %v118
  %668 = vmatpush.msra.mxu0 %v116
  %669 = vmatpush.msra.mxu0 %v114
  %670 = vmatpush.msra.mxu0 %v112
  %671 = vmatpush.msra.mxu0 %v110
  %672 = vmatpush.msra.mxu0 %v108
  %673 = vmatpush.msra.mxu0 %v106
  %674 = vmatmul.f32.gmra.mxu0 %v26
  %v675 = vpop.f32.mrf.mxu0
  %v676 = vadd.f32 %v656, %v675
  %677 = vdwg.mxu0
  %678 = vmatpush.msra.mxu0 %v168
  %679 = vmatpush.msra.mxu0 %v166
  %680 = vmatpush.msra.mxu0 %v164
  %681 = vmatpush.msra.mxu0 %v162
  %682 = vmatpush.msra.mxu0 %v160
  %683 = vmatpush.msra.mxu0 %v158
  %684 = vmatpush.msra.mxu0 %v156
  %685 = vmatpush.msra.mxu0 %v154
  %686 = vmatpush.msra.mxu0 %v152
  %687 = vmatpush.msra.mxu0 %v150
  %688 = vmatpush.msra.mxu0 %v148
  %689 = vmatpush.msra.mxu0 %v146
  %690 = vmatpush.msra.mxu0 %v144
  %691 = vmatpush.msra.mxu0 %v142
  %692 = vmatpush.msra.mxu0 %v140
  %693 = vmatpush.msra.mxu0 %v138
  %694 = vmatmul.f32.gmra.mxu0 %v27
  %v695 = vpop.f32.mrf.mxu0
  %v696 = vadd.f32 %v676, %v695
  %697 = vdwg.mxu0
  %698 = vmatpush.msra.mxu0 %v200
  %699 = vmatpush.msra.mxu0 %v198
  %700 = vmatpush.msra.mxu0 %v196
  %701 = vmatpush.msra.mxu0 %v194
  %702 = vmatpush.msra.mxu0 %v192
  %703 = vmatpush.msra.mxu0 %v190
  %704 = vmatpush.msra.mxu0 %v188
  %705 = vmatpush.msra.mxu0 %v186
  %706 = vmatpush.msra.mxu0 %v184
  %707 = vmatpush.msra.mxu0 %v182
  %708 = vmatpush.msra.mxu0 %v180
  %709 = vmatpush.msra.mxu0 %v178
  %710 = vmatpush.msra.mxu0 %v176
  %711 = vmatpush.msra.mxu0 %v174
  %712 = vmatpush.msra.mxu0 %v172
  %713 = vmatpush.msra.mxu0 %v170
  %714 = vmatmul.f32.gmra.mxu0 %v28
  %v715 = vpop.f32.mrf.mxu0
  %v716 = vadd.f32 %v696, %v715
  %717 = vdwg.mxu0
  %718 = vmatpush.msra.mxu0 %v232
  %719 = vmatpush.msra.mxu0 %v230
  %720 = vmatpush.msra.mxu0 %v228
  %721 = vmatpush.msra.mxu0 %v226
  %722 = vmatpush.msra.mxu0 %v224
  %723 = vmatpush.msra.mxu0 %v222
  %724 = vmatpush.msra.mxu0 %v220
  %725 = vmatpush.msra.mxu0 %v218
  %726 = vmatpush.msra.mxu0 %v216
  %727 = vmatpush.msra.mxu0 %v214
  %728 = vmatpush.msra.mxu0 %v212
  %729 = vmatpush.msra.mxu0 %v210
  %730 = vmatpush.msra.mxu0 %v208
  %731 = vmatpush.msra.mxu0 %v206
  %732 = vmatpush.msra.mxu0 %v204
  %733 = vmatpush.msra.mxu0 %v202
  %734 = vmatmul.f32.gmra.mxu0 %v29
  %v735 = vpop.f32.mrf.mxu0
  %v736 = vadd.f32 %v716, %v735
  %737 = vdwg.mxu0
  %738 = vmatpush.msra.mxu0 %v264
  %739 = vmatpush.msra.mxu0 %v262
  %740 = vmatpush.msra.mxu0 %v260
  %741 = vmatpush.msra.mxu0 %v258
  %742 = vmatpush.msra.mxu0 %v256
  %743 = vmatpush.msra.mxu0 %v254
  %744 = vmatpush.msra.mxu0 %v252
  %745 = vmatpush.msra.mxu0 %v250
  %746 = vmatpush.msra.mxu0 %v248
  %747 = vmatpush.msra.mxu0 %v246
  %748 = vmatpush.msra.mxu0 %v244
  %749 = vmatpush.msra.mxu0 %v242
  %750 = vmatpush.msra.mxu0 %v240
  %751 = vmatpush.msra.mxu0 %v238
  %752 = vmatpush.msra.mxu0 %v236
  %753 = vmatpush.msra.mxu0 %v234
  %754 = vmatmul.f32.gmra.mxu0 %v30
  %v755 = vpop.f32.mrf.mxu0
  %v756 = vadd.f32 %v736, %v755
  %757 = vdwg.mxu0
  %758 = vmatpush.msra.mxu0 %v296
  %759 = vmatpush.msra.mxu0 %v294
  %760 = vmatpush.msra.mxu0 %v292
  %761 = vmatpush.msra.mxu0 %v290
  %762 = vmatpush.msra.mxu0 %v288
  %763 = vmatpush.msra.mxu0 %v286
  %764 = vmatpush.msra.mxu0 %v284
  %765 = vmatpush.msra.mxu0 %v282
  %766 = vmatpush.msra.mxu0 %v280
  %767 = vmatpush.msra.mxu0 %v278
  %768 = vmatpush.msra.mxu0 %v276
  %769 = vmatpush.msra.mxu0 %v274
  %770 = vmatpush.msra.mxu0 %v272
  %771 = vmatpush.msra.mxu0 %v270
  %772 = vmatpush.msra.mxu0 %v268
  %773 = vmatpush.msra.mxu0 %v266
  %774 = vmatmul.f32.gmra.mxu0 %v31
  %v775 = vpop.f32.mrf.mxu0
  %v776 = vadd.f32 %v756, %v775
  %777 = vdwg.mxu0
  %778 = vmatpush.msra.mxu0 %v328
  %779 = vmatpush.msra.mxu0 %v326
  %780 = vmatpush.msra.mxu0 %v324
  %781 = vmatpush.msra.mxu0 %v322
  %782 = vmatpush.msra.mxu0 %v320
  %783 = vmatpush.msra.mxu0 %v318
  %784 = vmatpush.msra.mxu0 %v316
  %785 = vmatpush.msra.mxu0 %v314
  %786 = vmatpush.msra.mxu0 %v312
  %787 = vmatpush.msra.mxu0 %v310
  %788 = vmatpush.msra.mxu0 %v308
  %789 = vmatpush.msra.mxu0 %v306
  %790 = vmatpush.msra.mxu0 %v304
  %791 = vmatpush.msra.mxu0 %v302
  %792 = vmatpush.msra.mxu0 %v300
  %793 = vmatpush.msra.mxu0 %v298
  %794 = vmatmul.f32.gmra.mxu0 %v32
  %v795 = vpop.f32.mrf.mxu0
  %v796 = vadd.f32 %v776, %v795
  %797 = vdwg.mxu0
  %798 = vmatpush.msra.mxu0 %v360
  %799 = vmatpush.msra.mxu0 %v358
  %800 = vmatpush.msra.mxu0 %v356
  %801 = vmatpush.msra.mxu0 %v354
  %802 = vmatpush.msra.mxu0 %v352
  %803 = vmatpush.msra.mxu0 %v350
  %804 = vmatpush.msra.mxu0 %v348
  %805 = vmatpush.msra.mxu0 %v346
  %806 = vmatpush.msra.mxu0 %v344
  %807 = vmatpush.msra.mxu0 %v342
  %808 = vmatpush.msra.mxu0 %v340
  %809 = vmatpush.msra.mxu0 %v338
  %810 = vmatpush.msra.mxu0 %v336
  %811 = vmatpush.msra.mxu0 %v334
  %812 = vmatpush.msra.mxu0 %v332
  %813 = vmatpush.msra.mxu0 %v330
  %814 = vmatmul.f32.gmra.mxu0 %v33
  %v815 = vpop.f32.mrf.mxu0
  %v816 = vadd.f32 %v796, %v815
  %817 = vdwg.mxu0
  %818 = vmatpush.msra.mxu0 %v392
  %819 = vmatpush.msra.mxu0 %v390
  %820 = vmatpush.msra.mxu0 %v388
  %821 = vmatpush.msra.mxu0 %v386
  %822 = vmatpush.msra.mxu0 %v384
  %823 = vmatpush.msra.mxu0 %v382
  %824 = vmatpush.msra.mxu0 %v380
  %825 = vmatpush.msra.mxu0 %v378
  %826 = vmatpush.msra.mxu0 %v376
  %827 = vmatpush.msra.mxu0 %v374
  %828 = vmatpush.msra.mxu0 %v372
  %829 = vmatpush.msra.mxu0 %v370
  %830 = vmatpush.msra.mxu0 %v368
  %831 = vmatpush.msra.mxu0 %v366
  %832 = vmatpush.msra.mxu0 %v364
  %833 = vmatpush.msra.mxu0 %v362
  %834 = vmatmul.f32.gmra.mxu0 %v34
  %v835 = vpop.f32.mrf.mxu0
  %v836 = vadd.f32 %v816, %v835
  %837 = vdwg.mxu0
  %838 = vmatpush.msra.mxu0 %v424
  %839 = vmatpush.msra.mxu0 %v422
  %840 = vmatpush.msra.mxu0 %v420
  %841 = vmatpush.msra.mxu0 %v418
  %842 = vmatpush.msra.mxu0 %v416
  %843 = vmatpush.msra.mxu0 %v414
  %844 = vmatpush.msra.mxu0 %v412
  %845 = vmatpush.msra.mxu0 %v410
  %846 = vmatpush.msra.mxu0 %v408
  %847 = vmatpush.msra.mxu0 %v406
  %848 = vmatpush.msra.mxu0 %v404
  %849 = vmatpush.msra.mxu0 %v402
  %850 = vmatpush.msra.mxu0 %v400
  %851 = vmatpush.msra.mxu0 %v398
  %852 = vmatpush.msra.mxu0 %v396
  %853 = vmatpush.msra.mxu0 %v394
  %854 = vmatmul.f32.gmra.mxu0 %v35
  %v855 = vpop.f32.mrf.mxu0
  %v856 = vadd.f32 %v836, %v855
  %857 = vdwg.mxu0
  %858 = vmatpush.msra.mxu0 %v456
  %859 = vmatpush.msra.mxu0 %v454
  %860 = vmatpush.msra.mxu0 %v452
  %861 = vmatpush.msra.mxu0 %v450
  %862 = vmatpush.msra.mxu0 %v448
  %863 = vmatpush.msra.mxu0 %v446
  %864 = vmatpush.msra.mxu0 %v444
  %865 = vmatpush.msra.mxu0 %v442
  %866 = vmatpush.msra.mxu0 %v440
  %867 = vmatpush.msra.mxu0 %v438
  %868 = vmatpush.msra.mxu0 %v436
  %869 = vmatpush.msra.mxu0 %v434
  %870 = vmatpush.msra.mxu0 %v432
  %871 = vmatpush.msra.mxu0 %v430
  %872 = vmatpush.msra.mxu0 %v428
  %873 = vmatpush.msra.mxu0 %v426
  %874 = vmatmul.f32.gmra.mxu0 %v36
  %v875 = vpop.f32.mrf.mxu0
  %v876 = vadd.f32 %v856, %v875
  %877 = vdwg.mxu0
  %878 = vmatpush.msra.mxu0 %v488
  %879 = vmatpush.msra.mxu0 %v486
  %880 = vmatpush.msra.mxu0 %v484
  %881 = vmatpush.msra.mxu0 %v482
  %882 = vmatpush.msra.mxu0 %v480
  %883 = vmatpush.msra.mxu0 %v478
  %884 = vmatpush.msra.mxu0 %v476
  %885 = vmatpush.msra.mxu0 %v474
  %886 = vmatpush.msra.mxu0 %v472
  %887 = vmatpush.msra.mxu0 %v470
  %888 = vmatpush.msra.mxu0 %v468
  %889 = vmatpush.msra.mxu0 %v466
  %890 = vmatpush.msra.mxu0 %v464
  %891 = vmatpush.msra.mxu0 %v462
  %892 = vmatpush.msra.mxu0 %v460
  %893 = vmatpush.msra.mxu0 %v458
  %894 = vmatmul.f32.gmra.mxu0 %v37
  %v895 = vpop.f32.mrf.mxu0
  %v896 = vadd.f32 %v876, %v895
  %897 = vdwg.mxu0
  %898 = vmatpush.msra.mxu0 %v520
  %899 = vmatpush.msra.mxu0 %v518
  %900 = vmatpush.msra.mxu0 %v516
  %901 = vmatpush.msra.mxu0 %v514
  %902 = vmatpush.msra.mxu0 %v512
  %903 = vmatpush.msra.mxu0 %v510
  %904 = vmatpush.msra.mxu0 %v508
  %905 = vmatpush.msra.mxu0 %v506
  %906 = vmatpush.msra.mxu0 %v504
  %907 = vmatpush.msra.mxu0 %v502
  %908 = vmatpush.msra.mxu0 %v500
  %909 = vmatpush.msra.mxu0 %v498
  %910 = vmatpush.msra.mxu0 %v496
  %911 = vmatpush.msra.mxu0 %v494
  %912 = vmatpush.msra.mxu0 %v492
  %913 = vmatpush.msra.mxu0 %v490
  %914 = vmatmul.f32.gmra.mxu0 %v38
  %v915 = vpop.f32.mrf.mxu0
  %v916 = vadd.f32 %v896, %v915
  %917 = vdwg.mxu0
  %918 = vmatpush.msra.mxu0 %v552
  %919 = vmatpush.msra.mxu0 %v550
  %920 = vmatpush.msra.mxu0 %v548
  %921 = vmatpush.msra.mxu0 %v546
  %922 = vmatpush.msra.mxu0 %v544
  %923 = vmatpush.msra.mxu0 %v542
  %924 = vmatpush.msra.mxu0 %v540
  %925 = vmatpush.msra.mxu0 %v538
  %926 = vmatpush.msra.mxu0 %v536
  %927 = vmatpush.msra.mxu0 %v534
  %928 = vmatpush.msra.mxu0 %v532
  %929 = vmatpush.msra.mxu0 %v530
  %930 = vmatpush.msra.mxu0 %v528
  %931 = vmatpush.msra.mxu0 %v526
  %932 = vmatpush.msra.mxu0 %v524
  %933 = vmatpush.msra.mxu0 %v522
  %934 = vmatmul.f32.gmra.mxu0 %v39
  %v935 = vpop.f32.mrf.mxu0
  %v936 = vadd.f32 %v916, %v935
  %937 = vdwg.mxu0
  %938 = vmatpush.msra.mxu0 %v584
  %939 = vmatpush.msra.mxu0 %v582
  %940 = vmatpush.msra.mxu0 %v580
  %941 = vmatpush.msra.mxu0 %v578
  %942 = vmatpush.msra.mxu0 %v576
  %943 = vmatpush.msra.mxu0 %v574
  %944 = vmatpush.msra.mxu0 %v572
  %945 = vmatpush.msra.mxu0 %v570
  %946 = vmatpush.msra.mxu0 %v568
  %947 = vmatpush.msra.mxu0 %v566
  %948 = vmatpush.msra.mxu0 %v564
  %949 = vmatpush.msra.mxu0 %v562
  %950 = vmatpush.msra.mxu0 %v560
  %951 = vmatpush.msra.mxu0 %v558
  %952 = vmatpush.msra.mxu0 %v556
  %953 = vmatpush.msra.mxu0 %v554
  %954 = vmatmul.f32.gmra.mxu0 %v40
  %v955 = vpop.f32.mrf.mxu0
  %v956 = vadd.f32 %v936, %v955
  %957 = vdwg.mxu0
  %958 = vmatpush.msra.mxu0 %v616
  %959 = vmatpush.msra.mxu0 %v614
  %960 = vmatpush.msra.mxu0 %v612
  %961 = vmatpush.msra.mxu0 %v610
  %962 = vmatpush.msra.mxu0 %v608
  %963 = vmatpush.msra.mxu0 %v606
  %964 = vmatpush.msra.mxu0 %v604
  %965 = vmatpush.msra.mxu0 %v602
  %966 = vmatpush.msra.mxu0 %v600
  %967 = vmatpush.msra.mxu0 %v598
  %968 = vmatpush.msra.mxu0 %v596
  %969 = vmatpush.msra.mxu0 %v594
  %970 = vmatpush.msra.mxu0 %v592
  %971 = vmatpush.msra.mxu0 %v590
  %972 = vmatpush.msra.mxu0 %v588
  %973 = vmatpush.msra.mxu0 %v586
  %974 = vmatmul.f32.gmra.mxu0 %v41
  %v975 = vpop.f32.mrf.mxu0
  %v976 = vadd.f32 %v956, %v975
  %977 = vdwg.mxu0
  %978 = vmatpush.msra.mxu0 %v73
  %979 = vmatpush.msra.mxu0 %v71
  %980 = vmatpush.msra.mxu0 %v69
  %981 = vmatpush.msra.mxu0 %v67
  %982 = vmatpush.msra.mxu0 %v65
  %983 = vmatpush.msra.mxu0 %v63
  %984 = vmatpush.msra.mxu0 %v61
  %985 = vmatpush.msra.mxu0 %v59
  %986 = vmatpush.msra.mxu0 %v57
  %987 = vmatpush.msra.mxu0 %v55
  %988 = vmatpush.msra.mxu0 %v53
  %989 = vmatpush.msra.mxu0 %v51
  %990 = vmatpush.msra.mxu0 %v49
  %991 = vmatpush.msra.mxu0 %v47
  %992 = vmatpush.msra.mxu0 %v45
  %993 = vmatpush.msra.mxu0 %v43
  %994 = vmatmul.f32.gmra.mxu0 %v24
  %v995 = vpop.f32.mrf.mxu0
  %v996 = vadd.f32 0.0, %v995
  %997 = vdwg.mxu0
  %998 = vmatpush.msra.mxu0 %v105
  %999 = vmatpush.msra.mxu0 %v103
  %1000 = vmatpush.msra.mxu0 %v101
  %1001 = vmatpush.msra.mxu0 %v99
  %1002 = vmatpush.msra.mxu0 %v97
  %1003 = vmatpush.msra.mxu0 %v95
  %1004 = vmatpush.msra.mxu0 %v93
  %1005 = vmatpush.msra.mxu0 %v91
  %1006 = vmatpush.msra.mxu0 %v89
  %1007 = vmatpush.msra.mxu0 %v87
  %1008 = vmatpush.msra.mxu0 %v85
  %1009 = vmatpush.msra.mxu0 %v83
  %1010 = vmatpush.msra.mxu0 %v81
  %1011 = vmatpush.msra.mxu0 %v79
  %1012 = vmatpush.msra.mxu0 %v77
  %1013 = vmatpush.msra.mxu0 %v75
  %1014 = vmatmul.f32.gmra.mxu0 %v25
  %v1015 = vpop.f32.mrf.mxu0
  %v1016 = vadd.f32 %v996, %v1015
  %1017 = vdwg.mxu0
  %1018 = vmatpush.msra.mxu0 %v137
  %1019 = vmatpush.msra.mxu0 %v135
  %1020 = vmatpush.msra.mxu0 %v133
  %1021 = vmatpush.msra.mxu0 %v131
  %1022 = vmatpush.msra.mxu0 %v129
  %1023 = vmatpush.msra.mxu0 %v127
  %1024 = vmatpush.msra.mxu0 %v125
  %1025 = vmatpush.msra.mxu0 %v123
  %1026 = vmatpush.msra.mxu0 %v121
  %1027 = vmatpush.msra.mxu0 %v119
  %1028 = vmatpush.msra.mxu0 %v117
  %1029 = vmatpush.msra.mxu0 %v115
  %1030 = vmatpush.msra.mxu0 %v113
  %1031 = vmatpush.msra.mxu0 %v111
  %1032 = vmatpush.msra.mxu0 %v109
  %1033 = vmatpush.msra.mxu0 %v107
  %1034 = vmatmul.f32.gmra.mxu0 %v26
  %v1035 = vpop.f32.mrf.mxu0
  %v1036 = vadd.f32 %v1016, %v1035
  %1037 = vdwg.mxu0
  %1038 = vmatpush.msra.mxu0 %v169
  %1039 = vmatpush.msra.mxu0 %v167
  %1040 = vmatpush.msra.mxu0 %v165
  %1041 = vmatpush.msra.mxu0 %v163
  %1042 = vmatpush.msra.mxu0 %v161
  %1043 = vmatpush.msra.mxu0 %v159
  %1044 = vmatpush.msra.mxu0 %v157
  %1045 = vmatpush.msra.mxu0 %v155
  %1046 = vmatpush.msra.mxu0 %v153
  %1047 = vmatpush.msra.mxu0 %v151
  %1048 = vmatpush.msra.mxu0 %v149
  %1049 = vmatpush.msra.mxu0 %v147
  %1050 = vmatpush.msra.mxu0 %v145
  %1051 = vmatpush.msra.mxu0 %v143
  %1052 = vmatpush.msra.mxu0 %v141
  %1053 = vmatpush.msra.mxu0 %v139
  %1054 = vmatmul.f32.gmra.mxu0 %v27
  %v1055 = vpop.f32.mrf.mxu0
  %v1056 = vadd.f32 %v1036, %v1055
  %1057 = vdwg.mxu0
  %1058 = vmatpush.msra.mxu0 %v201
  %1059 = vmatpush.msra.mxu0 %v199
  %1060 = vmatpush.msra.mxu0 %v197
  %1061 = vmatpush.msra.mxu0 %v195
  %1062 = vmatpush.msra.mxu0 %v193
  %1063 = vmatpush.msra.mxu0 %v191
  %1064 = vmatpush.msra.mxu0 %v189
  %1065 = vmatpush.msra.mxu0 %v187
  %1066 = vmatpush.msra.mxu0 %v185
  %1067 = vmatpush.msra.mxu0 %v183
  %1068 = vmatpush.msra.mxu0 %v181
  %1069 = vmatpush.msra.mxu0 %v179
  %1070 = vmatpush.msra.mxu0 %v177
  %1071 = vmatpush.msra.mxu0 %v175
  %1072 = vmatpush.msra.mxu0 %v173
  %1073 = vmatpush.msra.mxu0 %v171
  %1074 = vmatmul.f32.gmra.mxu0 %v28
  %v1075 = vpop.f32.mrf.mxu0
  %v1076 = vadd.f32 %v1056, %v1075
  %1077 = vdwg.mxu0
  %1078 = vmatpush.msra.mxu0 %v233
  %1079 = vmatpush.msra.mxu0 %v231
  %1080 = vmatpush.msra.mxu0 %v229
  %1081 = vmatpush.msra.mxu0 %v227
  %1082 = vmatpush.msra.mxu0 %v225
  %1083 = vmatpush.msra.mxu0 %v223
  %1084 = vmatpush.msra.mxu0 %v221
  %1085 = vmatpush.msra.mxu0 %v219
  %1086 = vmatpush.msra.mxu0 %v217
  %1087 = vmatpush.msra.mxu0 %v215
  %1088 = vmatpush.msra.mxu0 %v213
  %1089 = vmatpush.msra.mxu0 %v211
  %1090 = vmatpush.msra.mxu0 %v209
  %1091 = vmatpush.msra.mxu0 %v207
  %1092 = vmatpush.msra.mxu0 %v205
  %1093 = vmatpush.msra.mxu0 %v203
  %1094 = vmatmul.f32.gmra.mxu0 %v29
  %v1095 = vpop.f32.mrf.mxu0
  %v1096 = vadd.f32 %v1076, %v1095
  %1097 = vdwg.mxu0
  %1098 = vmatpush.msra.mxu0 %v265
  %1099 = vmatpush.msra.mxu0 %v263
  %1100 = vmatpush.msra.mxu0 %v261
  %1101 = vmatpush.msra.mxu0 %v259
  %1102 = vmatpush.msra.mxu0 %v257
  %1103 = vmatpush.msra.mxu0 %v255
  %1104 = vmatpush.msra.mxu0 %v253
  %1105 = vmatpush.msra.mxu0 %v251
  %1106 = vmatpush.msra.mxu0 %v249
  %1107 = vmatpush.msra.mxu0 %v247
  %1108 = vmatpush.msra.mxu0 %v245
  %1109 = vmatpush.msra.mxu0 %v243
  %1110 = vmatpush.msra.mxu0 %v241
  %1111 = vmatpush.msra.mxu0 %v239
  %1112 = vmatpush.msra.mxu0 %v237
  %1113 = vmatpush.msra.mxu0 %v235
  %1114 = vmatmul.f32.gmra.mxu0 %v30
  %v1115 = vpop.f32.mrf.mxu0
  %v1116 = vadd.f32 %v1096, %v1115
  %1117 = vdwg.mxu0
  %1118 = vmatpush.msra.mxu0 %v297
  %1119 = vmatpush.msra.mxu0 %v295
  %1120 = vmatpush.msra.mxu0 %v293
  %1121 = vmatpush.msra.mxu0 %v291
  %1122 = vmatpush.msra.mxu0 %v289
  %1123 = vmatpush.msra.mxu0 %v287
  %1124 = vmatpush.msra.mxu0 %v285
  %1125 = vmatpush.msra.mxu0 %v283
  %1126 = vmatpush.msra.mxu0 %v281
  %1127 = vmatpush.msra.mxu0 %v279
  %1128 = vmatpush.msra.mxu0 %v277
  %1129 = vmatpush.msra.mxu0 %v275
  %1130 = vmatpush.msra.mxu0 %v273
  %1131 = vmatpush.msra.mxu0 %v271
  %1132 = vmatpush.msra.mxu0 %v269
  %1133 = vmatpush.msra.mxu0 %v267
  %1134 = vmatmul.f32.gmra.mxu0 %v31
  %v1135 = vpop.f32.mrf.mxu0
  %v1136 = vadd.f32 %v1116, %v1135
  %1137 = vdwg.mxu0
  %1138 = vmatpush.msra.mxu0 %v329
  %1139 = vmatpush.msra.mxu0 %v327
  %1140 = vmatpush.msra.mxu0 %v325
  %1141 = vmatpush.msra.mxu0 %v323
  %1142 = vmatpush.msra.mxu0 %v321
  %1143 = vmatpush.msra.mxu0 %v319
  %1144 = vmatpush.msra.mxu0 %v317
  %1145 = vmatpush.msra.mxu0 %v315
  %1146 = vmatpush.msra.mxu0 %v313
  %1147 = vmatpush.msra.mxu0 %v311
  %1148 = vmatpush.msra.mxu0 %v309
  %1149 = vmatpush.msra.mxu0 %v307
  %1150 = vmatpush.msra.mxu0 %v305
  %1151 = vmatpush.msra.mxu0 %v303
  %1152 = vmatpush.msra.mxu0 %v301
  %1153 = vmatpush.msra.mxu0 %v299
  %1154 = vmatmul.f32.gmra.mxu0 %v32
  %v1155 = vpop.f32.mrf.mxu0
  %v1156 = vadd.f32 %v1136, %v1155
  %1157 = vdwg.mxu0
  %1158 = vmatpush.msra.mxu0 %v361
  %1159 = vmatpush.msra.mxu0 %v359
  %1160 = vmatpush.msra.mxu0 %v357
  %1161 = vmatpush.msra.mxu0 %v355
  %1162 = vmatpush.msra.mxu0 %v353
  %1163 = vmatpush.msra.mxu0 %v351
  %1164 = vmatpush.msra.mxu0 %v349
  %1165 = vmatpush.msra.mxu0 %v347
  %1166 = vmatpush.msra.mxu0 %v345
  %1167 = vmatpush.msra.mxu0 %v343
  %1168 = vmatpush.msra.mxu0 %v341
  %1169 = vmatpush.msra.mxu0 %v339
  %1170 = vmatpush.msra.mxu0 %v337
  %1171 = vmatpush.msra.mxu0 %v335
  %1172 = vmatpush.msra.mxu0 %v333
  %1173 = vmatpush.msra.mxu0 %v331
  %1174 = vmatmul.f32.gmra.mxu0 %v33
  %v1175 = vpop.f32.mrf.mxu0
  %v1176 = vadd.f32 %v1156, %v1175
  %1177 = vdwg.mxu0
  %1178 = vmatpush.msra.mxu0 %v393
  %1179 = vmatpush.msra.mxu0 %v391
  %1180 = vmatpush.msra.mxu0 %v389
  %1181 = vmatpush.msra.mxu0 %v387
  %1182 = vmatpush.msra.mxu0 %v385
  %1183 = vmatpush.msra.mxu0 %v383
  %1184 = vmatpush.msra.mxu0 %v381
  %1185 = vmatpush.msra.mxu0 %v379
  %1186 = vmatpush.msra.mxu0 %v377
  %1187 = vmatpush.msra.mxu0 %v375
  %1188 = vmatpush.msra.mxu0 %v373
  %1189 = vmatpush.msra.mxu0 %v371
  %1190 = vmatpush.msra.mxu0 %v369
  %1191 = vmatpush.msra.mxu0 %v367
  %1192 = vmatpush.msra.mxu0 %v365
  %1193 = vmatpush.msra.mxu0 %v363
  %1194 = vmatmul.f32.gmra.mxu0 %v34
  %v1195 = vpop.f32.mrf.mxu0
  %v1196 = vadd.f32 %v1176, %v1195
  %1197 = vdwg.mxu0
  %1198 = vmatpush.msra.mxu0 %v425
  %1199 = vmatpush.msra.mxu0 %v423
  %1200 = vmatpush.msra.mxu0 %v421
  %1201 = vmatpush.msra.mxu0 %v419
  %1202 = vmatpush.msra.mxu0 %v417
  %1203 = vmatpush.msra.mxu0 %v415
  %1204 = vmatpush.msra.mxu0 %v413
  %1205 = vmatpush.msra.mxu0 %v411
  %1206 = vmatpush.msra.mxu0 %v409
  %1207 = vmatpush.msra.mxu0 %v407
  %1208 = vmatpush.msra.mxu0 %v405
  %1209 = vmatpush.msra.mxu0 %v403
  %1210 = vmatpush.msra.mxu0 %v401
  %1211 = vmatpush.msra.mxu0 %v399
  %1212 = vmatpush.msra.mxu0 %v397
  %1213 = vmatpush.msra.mxu0 %v395
  %1214 = vmatmul.f32.gmra.mxu0 %v35
  %v1215 = vpop.f32.mrf.mxu0
  %v1216 = vadd.f32 %v1196, %v1215
  %1217 = vdwg.mxu0
  %1218 = vmatpush.msra.mxu0 %v457
  %1219 = vmatpush.msra.mxu0 %v455
  %1220 = vmatpush.msra.mxu0 %v453
  %1221 = vmatpush.msra.mxu0 %v451
  %1222 = vmatpush.msra.mxu0 %v449
  %1223 = vmatpush.msra.mxu0 %v447
  %1224 = vmatpush.msra.mxu0 %v445
  %1225 = vmatpush.msra.mxu0 %v443
  %1226 = vmatpush.msra.mxu0 %v441
  %1227 = vmatpush.msra.mxu0 %v439
  %1228 = vmatpush.msra.mxu0 %v437
  %1229 = vmatpush.msra.mxu0 %v435
  %1230 = vmatpush.msra.mxu0 %v433
  %1231 = vmatpush.msra.mxu0 %v431
  %1232 = vmatpush.msra.mxu0 %v429
  %1233 = vmatpush.msra.mxu0 %v427
  %1234 = vmatmul.f32.gmra.mxu0 %v36
  %v1235 = vpop.f32.mrf.mxu0
  %v1236 = vadd.f32 %v1216, %v1235
  %1237 = vdwg.mxu0
  %1238 = vmatpush.msra.mxu0 %v489
  %1239 = vmatpush.msra.mxu0 %v487
  %1240 = vmatpush.msra.mxu0 %v485
  %1241 = vmatpush.msra.mxu0 %v483
  %1242 = vmatpush.msra.mxu0 %v481
  %1243 = vmatpush.msra.mxu0 %v479
  %1244 = vmatpush.msra.mxu0 %v477
  %1245 = vmatpush.msra.mxu0 %v475
  %1246 = vmatpush.msra.mxu0 %v473
  %1247 = vmatpush.msra.mxu0 %v471
  %1248 = vmatpush.msra.mxu0 %v469
  %1249 = vmatpush.msra.mxu0 %v467
  %1250 = vmatpush.msra.mxu0 %v465
  %1251 = vmatpush.msra.mxu0 %v463
  %1252 = vmatpush.msra.mxu0 %v461
  %1253 = vmatpush.msra.mxu0 %v459
  %1254 = vmatmul.f32.gmra.mxu0 %v37
  %v1255 = vpop.f32.mrf.mxu0
  %v1256 = vadd.f32 %v1236, %v1255
  %1257 = vdwg.mxu0
  %1258 = vmatpush.msra.mxu0 %v521
  %1259 = vmatpush.msra.mxu0 %v519
  %1260 = vmatpush.msra.mxu0 %v517
  %1261 = vmatpush.msra.mxu0 %v515
  %1262 = vmatpush.msra.mxu0 %v513
  %1263 = vmatpush.msra.mxu0 %v511
  %1264 = vmatpush.msra.mxu0 %v509
  %1265 = vmatpush.msra.mxu0 %v507
  %1266 = vmatpush.msra.mxu0 %v505
  %1267 = vmatpush.msra.mxu0 %v503
  %1268 = vmatpush.msra.mxu0 %v501
  %1269 = vmatpush.msra.mxu0 %v499
  %1270 = vmatpush.msra.mxu0 %v497
  %1271 = vmatpush.msra.mxu0 %v495
  %1272 = vmatpush.msra.mxu0 %v493
  %1273 = vmatpush.msra.mxu0 %v491
  %1274 = vmatmul.f32.gmra.mxu0 %v38
  %v1275 = vpop.f32.mrf.mxu0
  %v1276 = vadd.f32 %v1256, %v1275
  %1277 = vdwg.mxu0
  %1278 = vmatpush.msra.mxu0 %v553
  %1279 = vmatpush.msra.mxu0 %v551
  %1280 = vmatpush.msra.mxu0 %v549
  %1281 = vmatpush.msra.mxu0 %v547
  %1282 = vmatpush.msra.mxu0 %v545
  %1283 = vmatpush.msra.mxu0 %v543
  %1284 = vmatpush.msra.mxu0 %v541
  %1285 = vmatpush.msra.mxu0 %v539
  %1286 = vmatpush.msra.mxu0 %v537
  %1287 = vmatpush.msra.mxu0 %v535
  %1288 = vmatpush.msra.mxu0 %v533
  %1289 = vmatpush.msra.mxu0 %v531
  %1290 = vmatpush.msra.mxu0 %v529
  %1291 = vmatpush.msra.mxu0 %v527
  %1292 = vmatpush.msra.mxu0 %v525
  %1293 = vmatpush.msra.mxu0 %v523
  %1294 = vmatmul.f32.gmra.mxu0 %v39
  %v1295 = vpop.f32.mrf.mxu0
  %v1296 = vadd.f32 %v1276, %v1295
  %1297 = vdwg.mxu0
  %1298 = vmatpush.msra.mxu0 %v585
  %1299 = vmatpush.msra.mxu0 %v583
  %1300 = vmatpush.msra.mxu0 %v581
  %1301 = vmatpush.msra.mxu0 %v579
  %1302 = vmatpush.msra.mxu0 %v577
  %1303 = vmatpush.msra.mxu0 %v575
  %1304 = vmatpush.msra.mxu0 %v573
  %1305 = vmatpush.msra.mxu0 %v571
  %1306 = vmatpush.msra.mxu0 %v569
  %1307 = vmatpush.msra.mxu0 %v567
  %1308 = vmatpush.msra.mxu0 %v565
  %1309 = vmatpush.msra.mxu0 %v563
  %1310 = vmatpush.msra.mxu0 %v561
  %1311 = vmatpush.msra.mxu0 %v559
  %1312 = vmatpush.msra.mxu0 %v557
  %1313 = vmatpush.msra.mxu0 %v555
  %1314 = vmatmul.f32.gmra.mxu0 %v40
  %v1315 = vpop.f32.mrf.mxu0
  %v1316 = vadd.f32 %v1296, %v1315
  %1317 = vdwg.mxu0
  %1318 = vmatpush.msra.mxu0 %v617
  %1319 = vmatpush.msra.mxu0 %v615
  %1320 = vmatpush.msra.mxu0 %v613
  %1321 = vmatpush.msra.mxu0 %v611
  %1322 = vmatpush.msra.mxu0 %v609
  %1323 = vmatpush.msra.mxu0 %v607
  %1324 = vmatpush.msra.mxu0 %v605
  %1325 = vmatpush.msra.mxu0 %v603
  %1326 = vmatpush.msra.mxu0 %v601
  %1327 = vmatpush.msra.mxu0 %v599
  %1328 = vmatpush.msra.mxu0 %v597
  %1329 = vmatpush.msra.mxu0 %v595
  %1330 = vmatpush.msra.mxu0 %v593
  %1331 = vmatpush.msra.mxu0 %v591
  %1332 = vmatpush.msra.mxu0 %v589
  %1333 = vmatpush.msra.mxu0 %v587
  %1334 = vmatmul.f32.gmra.mxu0 %v41
  %v1335 = vpop.f32.mrf.mxu0
  %v1336 = vadd.f32 %v1316, %v1335
  %1337 = vdwg.mxu0
  %1338 = vst [vmem:[%s2] sm:$0xff] %v976
  %1339 = vst [vmem:[%s2 + $0x8] sm:$0xff] %v1336
  %v1340 = vld [vmem:[%s3] sm:$0x3]
  %v1341 = vrot.slane %v976, 4
  %v1342 = vadd.f32 %v976, %v1341
  %v1343 = vrot.slane %v1342, 2
  %v1344 = vadd.f32 %v1342, %v1343
  %v1345 = vrot.slane %v1344, 1
  %v1346 = vadd.f32 %v1344, %v1345
  %v1347 = vrot.slane %v1336, 4
  %v1348 = vadd.f32 %v1336, %v1347
  %v1349 = vrot.slane %v1348, 2
  %v1350 = vadd.f32 %v1348, %v1349
  %v1351 = vrot.slane %v1350, 1
  %v1352 = vadd.f32 %v1350, %v1351
  %v1355 = vrot.slane %v1352, 7
  %vm1356 = vcmask 1040384
  %v1357 = vsel %vm1356, %v1346, %v1355
  %v1359 = vadd.f32 %v1340, %v1357
  %v1360 = vlaneseq
  %vm1361 = vcmp.ge.s32.totalorder %v1360, 0
  %vm1362 = vcmp.lt.s32.totalorder %v1360, 256
  %vm1363 = vmand %vm1361, %vm1362
  %1364 = vst.msk [vmem:[%s3] sm:$0x3] %vm1363, %v1359
  %v1365 = vld [vmem:[%s4] sm:$0x3]
  %v1366 = vmul.f32 %v976, %v976
  %v1367 = vmul.f32 %v1336, %v1336
  %v1368 = vrot.slane %v1366, 4
  %v1369 = vadd.f32 %v1366, %v1368
  %v1370 = vrot.slane %v1369, 2
  %v1371 = vadd.f32 %v1369, %v1370
  %v1372 = vrot.slane %v1371, 1
  %v1373 = vadd.f32 %v1371, %v1372
  %v1374 = vrot.slane %v1367, 4
  %v1375 = vadd.f32 %v1367, %v1374
  %v1376 = vrot.slane %v1375, 2
  %v1377 = vadd.f32 %v1375, %v1376
  %v1378 = vrot.slane %v1377, 1
  %v1379 = vadd.f32 %v1377, %v1378
  %v1382 = vrot.slane %v1379, 7
  %v1383 = vsel %vm1356, %v1373, %v1382
  %v1385 = vadd.f32 %v1365, %v1383
  %1386 = vst.msk [vmem:[%s4] sm:$0x3] %vm1363, %v1385
  // Predicated region
  $region14: #{phd_net_res_forward.53} parent=0 // pred_check
    _
  $region15: #{phd_net_res_forward.53} parent=0 // pred_check_branch
    %1388 = sbr.rel (0) target = $region17
  $region16: #{phd_net_res_forward.53} parent=0 // pred_region
    _
  $region17: #{phd_net_res_forward.53} parent=0 // pred_fallthru
    _
  // Predicated region
  $region18: #{phd_net_res_forward.53} parent=0 // pred_check
    _
  $region19: #{phd_net_res_forward.53} parent=0 // pred_check_branch
    %1390 = sbr.rel (0) target = $region21
  $region20: #{phd_net_res_forward.53} parent=0 // pred_region
    _
  $region21: #{phd_net_res_forward.53} parent=0 // pred_fallthru
    _
  // Predicated region
  $region22: #{phd_net_res_forward.53} parent=0 // pred_check
    _
  $region23: #{phd_net_res_forward.53} parent=0 // pred_check_branch
    %1392 = sbr.rel (0) target = $region25
  $region24: #{phd_net_res_forward.53} parent=0 // pred_region
    _
  $region25: #{phd_net_res_forward.53} parent=0 // pred_fallthru
    _
  // Predicated region
  $region26: #{phd_net_res_forward.53} parent=0 // pred_check
    _
  $region27: #{phd_net_res_forward.53} parent=0 // pred_check_branch
    %1394 = sbr.rel (0) target = $region29
  $region28: #{phd_net_res_forward.53} parent=0 // pred_region
    _
  $region29: #{phd_net_res_forward.53} parent=0 // pred_fallthru
    _
  // Predicated region
  $region30: #{phd_net_res_forward.53} parent=0 // pred_check
    _
  $region31: #{phd_net_res_forward.53} parent=0 // pred_check_branch
    %1396 = sbr.rel (0) target = $region33
  $region32: #{phd_net_res_forward.53} parent=0 // pred_region
    _
  $region33: #{phd_net_res_forward.53} parent=0 // pred_fallthru
    _
  // Predicated region
  $region34: #{phd_net_res_forward.53} parent=0 // pred_check
    _
  $region35: #{phd_net_res_forward.53} parent=0 // pred_check_branch
    %1398 = sbr.rel (0) target = $region37
  $region36: #{phd_net_res_forward.53} parent=0 // pred_region
    _
  $region37: #{phd_net_res_forward.53} parent=0 // pred_fallthru
    _

// kernel: phd_net_res_forward.57
$region0: #{phd_net_res_forward.57}
  #allocation0 [shape = 'u32[]', space=smem, size = 0x4, offset = 0x4, fixed_abs, tag = 'smem constant byte address 0x4 - core index']
  #allocation1 [shape = 'u32[72,128]{1,0:T(1,128)}', space=vmem, size = 0x9000, scoped, tag = 'internal scratch']
  %s0 = inlined_call_operand.vmem [shape: f32[8,256], index: 0, kind: input, shape index: {}]
  %s1 = inlined_call_operand.vmem [shape: f32[256,256], index: 1, kind: input, shape index: {}]
  %s2 = inlined_call_operand.vmem [shape: f32[8,256], index: 2, kind: output, shape index: {0}]
  %s3 = inlined_call_operand.vmem [shape: f32[1,256], index: 3, kind: output, shape index: {1}]
  %s4 = inlined_call_operand.vmem [shape: f32[1,256], index: 4, kind: output, shape index: {2}]
  %5 = xla_tuple %s2, %s3, %s4
  %s6 = sld [smem:[#allocation0]]
  $region38: #{phd_net_res_forward.57} parent=0
    _
  %s8 = ssub.s32 1, %s6
  %s9 = scalar_select 0, %s8, %s6
  // Predicated region
  $region2: #{phd_net_res_forward.57} parent=0 // pred_check
    _
  $region3: #{phd_net_res_forward.57} parent=0 // pred_check_branch
    %11 = sbr.rel (0) target = $region5
  $region4: #{phd_net_res_forward.57} parent=0 // pred_region
    _
  $region5: #{phd_net_res_forward.57} parent=0 // pred_fallthru
    _
  // Predicated region
  $region6: #{phd_net_res_forward.57} parent=0 // pred_check
    _
  $region7: #{phd_net_res_forward.57} parent=0 // pred_check_branch
    %13 = sbr.rel (0) target = $region9
  $region8: #{phd_net_res_forward.57} parent=0 // pred_region
    _
  $region9: #{phd_net_res_forward.57} parent=0 // pred_fallthru
    _
  %p14 = scmp.eq.s32.totalorder 0, 0
  // Predicated region
  $region10: #{phd_net_res_forward.57} parent=0 // pred_check
    %p15 = pneg %p14
  $region11: #{phd_net_res_forward.57} parent=0 // pred_check_branch
    %17 = sbr.rel (%p15) target = $region13
  $region12: #{phd_net_res_forward.57} parent=0 // pred_region
    %v18 = vlaneseq
    %vm19 = vcmp.ge.s32.totalorder %v18, 0
    %vm20 = vcmp.lt.s32.totalorder %v18, 256
    %vm21 = vmand %vm19, %vm20
    %22 = vst.msk [vmem:[%s3] sm:$0x3] %vm21, 0.0
    %23 = vst.msk [vmem:[%s4] sm:$0x3] %vm21, 0.0
  $region13: #{phd_net_res_forward.57} parent=0 // pred_fallthru
    _
  %v24 = vld [vmem:[%s0] sm:$0xff]
  %v25 = vld [vmem:[%s0 + $0x8] sm:$0xff]
  %v26 = vld [vmem:[%s1] sm:$0xff]
  %v27 = vld [vmem:[%s1 + $0x8] sm:$0xff]
  %v28 = vld [vmem:[%s1 + $0x10] sm:$0xff]
  %v29 = vld [vmem:[%s1 + $0x18] sm:$0xff]
  %v30 = vld [vmem:[%s1 + $0x20] sm:$0xff]
  %v31 = vld [vmem:[%s1 + $0x28] sm:$0xff]
  %v32 = vld [vmem:[%s1 + $0x30] sm:$0xff]
  %v33 = vld [vmem:[%s1 + $0x38] sm:$0xff]
  %v34 = vld [vmem:[%s1 + $0x40] sm:$0xff]
  %v35 = vld [vmem:[%s1 + $0x48] sm:$0xff]
  %v36 = vld [vmem:[%s1 + $0x50] sm:$0xff]
  %v37 = vld [vmem:[%s1 + $0x58] sm:$0xff]
  %v38 = vld [vmem:[%s1 + $0x60] sm:$0xff]
  %v39 = vld [vmem:[%s1 + $0x68] sm:$0xff]
  %v40 = vld [vmem:[%s1 + $0x70] sm:$0xff]
  %v41 = vld [vmem:[%s1 + $0x78] sm:$0xff]
  %v42 = vld [vmem:[%s1 + $0x80] sm:$0xff]
  %v43 = vld [vmem:[%s1 + $0x88] sm:$0xff]
  %v44 = vld [vmem:[%s1 + $0x90] sm:$0xff]
  %v45 = vld [vmem:[%s1 + $0x98] sm:$0xff]
  %v46 = vld [vmem:[%s1 + $0xa0] sm:$0xff]
  %v47 = vld [vmem:[%s1 + $0xa8] sm:$0xff]
  %v48 = vld [vmem:[%s1 + $0xb0] sm:$0xff]
  %v49 = vld [vmem:[%s1 + $0xb8] sm:$0xff]
  %v50 = vld [vmem:[%s1 + $0xc0] sm:$0xff]
  %v51 = vld [vmem:[%s1 + $0xc8] sm:$0xff]
  %v52 = vld [vmem:[%s1 + $0xd0] sm:$0xff]
  %v53 = vld [vmem:[%s1 + $0xd8] sm:$0xff]
  %v54 = vld [vmem:[%s1 + $0xe0] sm:$0xff]
  %v55 = vld [vmem:[%s1 + $0xe8] sm:$0xff]
  %v56 = vld [vmem:[%s1 + $0xf0] sm:$0xff]
  %v57 = vld [vmem:[%s1 + $0xf8] sm:$0xff]
  %v58 = vld [vmem:[%s1 + $0x100] sm:$0xff]
  %v59 = vld [vmem:[%s1 + $0x108] sm:$0xff]
  %v60 = vld [vmem:[%s1 + $0x110] sm:$0xff]
  %v61 = vld [vmem:[%s1 + $0x118] sm:$0xff]
  %v62 = vld [vmem:[%s1 + $0x120] sm:$0xff]
  %v63 = vld [vmem:[%s1 + $0x128] sm:$0xff]
  %v64 = vld [vmem:[%s1 + $0x130] sm:$0xff]
  %v65 = vld [vmem:[%s1 + $0x138] sm:$0xff]
  %v66 = vld [vmem:[%s1 + $0x140] sm:$0xff]
  %v67 = vld [vmem:[%s1 + $0x148] sm:$0xff]
  %v68 = vld [vmem:[%s1 + $0x150] sm:$0xff]
  %v69 = vld [vmem:[%s1 + $0x158] sm:$0xff]
  %v70 = vld [vmem:[%s1 + $0x160] sm:$0xff]
  %v71 = vld [vmem:[%s1 + $0x168] sm:$0xff]
  %v72 = vld [vmem:[%s1 + $0x170] sm:$0xff]
  %v73 = vld [vmem:[%s1 + $0x178] sm:$0xff]
  %v74 = vld [vmem:[%s1 + $0x180] sm:$0xff]
  %v75 = vld [vmem:[%s1 + $0x188] sm:$0xff]
  %v76 = vld [vmem:[%s1 + $0x190] sm:$0xff]
  %v77 = vld [vmem:[%s1 + $0x198] sm:$0xff]
  %v78 = vld [vmem:[%s1 + $0x1a0] sm:$0xff]
  %v79 = vld [vmem:[%s1 + $0x1a8] sm:$0xff]
  %v80 = vld [vmem:[%s1 + $0x1b0] sm:$0xff]
  %v81 = vld [vmem:[%s1 + $0x1b8] sm:$0xff]
  %v82 = vld [vmem:[%s1 + $0x1c0] sm:$0xff]
  %v83 = vld [vmem:[%s1 + $0x1c8] sm:$0xff]
  %v84 = vld [vmem:[%s1 + $0x1d0] sm:$0xff]
  %v85 = vld [vmem:[%s1 + $0x1d8] sm:$0xff]
  %v86 = vld [vmem:[%s1 + $0x1e0] sm:$0xff]
  %v87 = vld [vmem:[%s1 + $0x1e8] sm:$0xff]
  %v88 = vld [vmem:[%s1 + $0x1f0] sm:$0xff]
  %v89 = vld [vmem:[%s1 + $0x1f8] sm:$0xff]
  %90 = vmatpush.msra.mxu0 %v56
  %91 = vmatpush.msra.mxu0 %v54
  %92 = vmatpush.msra.mxu0 %v52
  %93 = vmatpush.msra.mxu0 %v50
  %94 = vmatpush.msra.mxu0 %v48
  %95 = vmatpush.msra.mxu0 %v46
  %96 = vmatpush.msra.mxu0 %v44
  %97 = vmatpush.msra.mxu0 %v42
  %98 = vmatpush.msra.mxu0 %v40
  %99 = vmatpush.msra.mxu0 %v38
  %100 = vmatpush.msra.mxu0 %v36
  %101 = vmatpush.msra.mxu0 %v34
  %102 = vmatpush.msra.mxu0 %v32
  %103 = vmatpush.msra.mxu0 %v30
  %104 = vmatpush.msra.mxu0 %v28
  %105 = vmatpush.msra.mxu0 %v26
  %106 = vmatmul.f32.gmra.mxu0 %v24
  %v107 = vpop.f32.mrf.mxu0
  %v108 = vadd.f32 0.0, %v107
  %109 = vdwg.mxu0
  %110 = vmatpush.msra.mxu0 %v88
  %111 = vmatpush.msra.mxu0 %v86
  %112 = vmatpush.msra.mxu0 %v84
  %113 = vmatpush.msra.mxu0 %v82
  %114 = vmatpush.msra.mxu0 %v80
  %115 = vmatpush.msra.mxu0 %v78
  %116 = vmatpush.msra.mxu0 %v76
  %117 = vmatpush.msra.mxu0 %v74
  %118 = vmatpush.msra.mxu0 %v72
  %119 = vmatpush.msra.mxu0 %v70
  %120 = vmatpush.msra.mxu0 %v68
  %121 = vmatpush.msra.mxu0 %v66
  %122 = vmatpush.msra.mxu0 %v64
  %123 = vmatpush.msra.mxu0 %v62
  %124 = vmatpush.msra.mxu0 %v60
  %125 = vmatpush.msra.mxu0 %v58
  %126 = vmatmul.f32.gmra.mxu0 %v25
  %v127 = vpop.f32.mrf.mxu0
  %v128 = vadd.f32 %v108, %v127
  %129 = vdwg.mxu0
  %130 = vmatpush.msra.mxu0 %v57
  %131 = vmatpush.msra.mxu0 %v55
  %132 = vmatpush.msra.mxu0 %v53
  %133 = vmatpush.msra.mxu0 %v51
  %134 = vmatpush.msra.mxu0 %v49
  %135 = vmatpush.msra.mxu0 %v47
  %136 = vmatpush.msra.mxu0 %v45
  %137 = vmatpush.msra.mxu0 %v43
  %138 = vmatpush.msra.mxu0 %v41
  %139 = vmatpush.msra.mxu0 %v39
  %140 = vmatpush.msra.mxu0 %v37
  %141 = vmatpush.msra.mxu0 %v35
  %142 = vmatpush.msra.mxu0 %v33
  %143 = vmatpush.msra.mxu0 %v31
  %144 = vmatpush.msra.mxu0 %v29
  %145 = vmatpush.msra.mxu0 %v27
  %146 = vmatmul.f32.gmra.mxu0 %v24
  %v147 = vpop.f32.mrf.mxu0
  %v148 = vadd.f32 0.0, %v147
  %149 = vdwg.mxu0
  %150 = vmatpush.msra.mxu0 %v89
  %151 = vmatpush.msra.mxu0 %v87
  %152 = vmatpush.msra.mxu0 %v85
  %153 = vmatpush.msra.mxu0 %v83
  %154 = vmatpush.msra.mxu0 %v81
  %155 = vmatpush.msra.mxu0 %v79
  %156 = vmatpush.msra.mxu0 %v77
  %157 = vmatpush.msra.mxu0 %v75
  %158 = vmatpush.msra.mxu0 %v73
  %159 = vmatpush.msra.mxu0 %v71
  %160 = vmatpush.msra.mxu0 %v69
  %161 = vmatpush.msra.mxu0 %v67
  %162 = vmatpush.msra.mxu0 %v65
  %163 = vmatpush.msra.mxu0 %v63
  %164 = vmatpush.msra.mxu0 %v61
  %165 = vmatpush.msra.mxu0 %v59
  %166 = vmatmul.f32.gmra.mxu0 %v25
  %v167 = vpop.f32.mrf.mxu0
  %v168 = vadd.f32 %v148, %v167
  %169 = vdwg.mxu0
  %170 = vst [vmem:[%s2] sm:$0xff] %v128
  %171 = vst [vmem:[%s2 + $0x8] sm:$0xff] %v168
  %v172 = vld [vmem:[%s3] sm:$0x3]
  %v173 = vrot.slane %v128, 4
  %v174 = vadd.f32 %v128, %v173
  %v175 = vrot.slane %v174, 2
  %v176 = vadd.f32 %v174, %v175
  %v177 = vrot.slane %v176, 1
  %v178 = vadd.f32 %v176, %v177
  %v179 = vrot.slane %v168, 4
  %v180 = vadd.f32 %v168, %v179
  %v181 = vrot.slane %v180, 2
  %v182 = vadd.f32 %v180, %v181
  %v183 = vrot.slane %v182, 1
  %v184 = vadd.f32 %v182, %v183
  %v187 = vrot.slane %v184, 7
  %vm188 = vcmask 1040384
  %v189 = vsel %vm188, %v178, %v187
  %v191 = vadd.f32 %v172, %v189
  %v192 = vlaneseq
  %vm193 = vcmp.ge.s32.totalorder %v192, 0
  %vm194 = vcmp.lt.s32.totalorder %v192, 256
  %vm195 = vmand %vm193, %vm194
  %196 = vst.msk [vmem:[%s3] sm:$0x3] %vm195, %v191
  %v197 = vld [vmem:[%s4] sm:$0x3]
  %v198 = vmul.f32 %v128, %v128
  %v199 = vmul.f32 %v168, %v168
  %v200 = vrot.slane %v198, 4
  %v201 = vadd.f32 %v198, %v200
  %v202 = vrot.slane %v201, 2
  %v203 = vadd.f32 %v201, %v202
  %v204 = vrot.slane %v203, 1
  %v205 = vadd.f32 %v203, %v204
  %v206 = vrot.slane %v199, 4
  %v207 = vadd.f32 %v199, %v206
  %v208 = vrot.slane %v207, 2
  %v209 = vadd.f32 %v207, %v208
  %v210 = vrot.slane %v209, 1
  %v211 = vadd.f32 %v209, %v210
  %v214 = vrot.slane %v211, 7
  %v215 = vsel %vm188, %v205, %v214
  %v217 = vadd.f32 %v197, %v215
  %218 = vst.msk [vmem:[%s4] sm:$0x3] %vm195, %v217
  // Predicated region
  $region14: #{phd_net_res_forward.57} parent=0 // pred_check
    _
  $region15: #{phd_net_res_forward.57} parent=0 // pred_check_branch
    %220 = sbr.rel (0) target = $region17
  $region16: #{phd_net_res_forward.57} parent=0 // pred_region
    _
  $region17: #{phd_net_res_forward.57} parent=0 // pred_fallthru
    _
  // Predicated region
  $region18: #{phd_net_res_forward.57} parent=0 // pred_check
    _
  $region19: #{phd_net_res_forward.57} parent=0 // pred_check_branch
    %222 = sbr.rel (0) target = $region21
  $region20: #{phd_net_res_forward.57} parent=0 // pred_region
    _
  $region21: #{phd_net_res_forward.57} parent=0 // pred_fallthru
    _
  // Predicated region
  $region22: #{phd_net_res_forward.57} parent=0 // pred_check
    _
  $region23: #{phd_net_res_forward.57} parent=0 // pred_check_branch
    %224 = sbr.rel (0) target = $region25
  $region24: #{phd_net_res_forward.57} parent=0 // pred_region
    _
  $region25: #{phd_net_res_forward.57} parent=0 // pred_fallthru
    _
  // Predicated region
  $region26: #{phd_net_res_forward.57} parent=0 // pred_check
    _
  $region27: #{phd_net_res_forward.57} parent=0 // pred_check_branch
    %226 = sbr.rel (0) target = $region29
  $region28: #{phd_net_res_forward.57} parent=0 // pred_region
    _
  $region29: #{phd_net_res_forward.57} parent=0 // pred_fallthru
    _
  // Predicated region
  $region30: #{phd_net_res_forward.57} parent=0 // pred_check
    _
  $region31: #{phd_net_res_forward.57} parent=0 // pred_check_branch
    %228 = sbr.rel (0) target = $region33
  $region32: #{phd_net_res_forward.57} parent=0 // pred_region
    _
  $region33: #{phd_net_res_forward.57} parent=0 // pred_fallthru
    _
  // Predicated region
  $region34: #{phd_net_res_forward.57} parent=0 // pred_check
    _
  $region35: #{phd_net_res_forward.57} parent=0 // pred_check_branch
    %230 = sbr.rel (0) target = $region37
  $region36: #{phd_net_res_forward.57} parent=0 // pred_region
    _
  $region37: #{phd_net_res_forward.57} parent=0 // pred_fallthru
    _

// kernel: phd_net_res_forward.59
$region0: #{phd_net_res_forward.59}
  #allocation0 [shape = 'u32[]', space=smem, size = 0x4, offset = 0x4, fixed_abs, tag = 'smem constant byte address 0x4 - core index']
  #allocation1 [shape = 'u32[72,128]{1,0:T(1,128)}', space=vmem, size = 0x9000, scoped, tag = 'internal scratch']
  %s0 = inlined_call_operand.vmem [shape: f32[8,256], index: 0, kind: input, shape index: {}]
  %s1 = inlined_call_operand.vmem [shape: f32[256,3], index: 1, kind: input, shape index: {}]
  %s2 = inlined_call_operand.vmem [shape: f32[1,3], index: 2, kind: input, shape index: {}]
  %s3 = inlined_call_operand.vmem [shape: f32[8,3], index: 3, kind: output, shape index: {}]
  %s4 = sld [smem:[#allocation0]]
  $region22: #{phd_net_res_forward.59} parent=0
    _
  %s6 = ssub.s32 1, %s4
  %s7 = scalar_select 0, %s6, %s4
  // Predicated region
  $region2: #{phd_net_res_forward.59} parent=0 // pred_check
    _
  $region3: #{phd_net_res_forward.59} parent=0 // pred_check_branch
    %9 = sbr.rel (0) target = $region5
  $region4: #{phd_net_res_forward.59} parent=0 // pred_region
    _
  $region5: #{phd_net_res_forward.59} parent=0 // pred_fallthru
    _
  // Predicated region
  $region6: #{phd_net_res_forward.59} parent=0 // pred_check
    _
  $region7: #{phd_net_res_forward.59} parent=0 // pred_check_branch
    %11 = sbr.rel (0) target = $region9
  $region8: #{phd_net_res_forward.59} parent=0 // pred_region
    _
  $region9: #{phd_net_res_forward.59} parent=0 // pred_fallthru
    _
  // Predicated region
  $region10: #{phd_net_res_forward.59} parent=0 // pred_check
    _
  $region11: #{phd_net_res_forward.59} parent=0 // pred_check_branch
    %13 = sbr.rel (0) target = $region13
  $region12: #{phd_net_res_forward.59} parent=0 // pred_region
    _
  $region13: #{phd_net_res_forward.59} parent=0 // pred_fallthru
    _
  %v14 = vld [vmem:[%s0] sm:$0xff]
  %v15 = vld [vmem:[%s0 + $0x8] sm:$0xff]
  %v16 = vld [vmem:[%s1] sm:$0xff]
  %v17 = vld [vmem:[%s1 + $0x8] sm:$0xff]
  %v18 = vld [vmem:[%s1 + $0x10] sm:$0xff]
  %v19 = vld [vmem:[%s1 + $0x18] sm:$0xff]
  %v20 = vld [vmem:[%s1 + $0x20] sm:$0xff]
  %v21 = vld [vmem:[%s1 + $0x28] sm:$0xff]
  %v22 = vld [vmem:[%s1 + $0x30] sm:$0xff]
  %v23 = vld [vmem:[%s1 + $0x38] sm:$0xff]
  %v24 = vld [vmem:[%s1 + $0x40] sm:$0xff]
  %v25 = vld [vmem:[%s1 + $0x48] sm:$0xff]
  %v26 = vld [vmem:[%s1 + $0x50] sm:$0xff]
  %v27 = vld [vmem:[%s1 + $0x58] sm:$0xff]
  %v28 = vld [vmem:[%s1 + $0x60] sm:$0xff]
  %v29 = vld [vmem:[%s1 + $0x68] sm:$0xff]
  %v30 = vld [vmem:[%s1 + $0x70] sm:$0xff]
  %v31 = vld [vmem:[%s1 + $0x78] sm:$0xff]
  %v32 = vld [vmem:[%s1 + $0x80] sm:$0xff]
  %v33 = vld [vmem:[%s1 + $0x88] sm:$0xff]
  %v34 = vld [vmem:[%s1 + $0x90] sm:$0xff]
  %v35 = vld [vmem:[%s1 + $0x98] sm:$0xff]
  %v36 = vld [vmem:[%s1 + $0xa0] sm:$0xff]
  %v37 = vld [vmem:[%s1 + $0xa8] sm:$0xff]
  %v38 = vld [vmem:[%s1 + $0xb0] sm:$0xff]
  %v39 = vld [vmem:[%s1 + $0xb8] sm:$0xff]
  %v40 = vld [vmem:[%s1 + $0xc0] sm:$0xff]
  %v41 = vld [vmem:[%s1 + $0xc8] sm:$0xff]
  %v42 = vld [vmem:[%s1 + $0xd0] sm:$0xff]
  %v43 = vld [vmem:[%s1 + $0xd8] sm:$0xff]
  %v44 = vld [vmem:[%s1 + $0xe0] sm:$0xff]
  %v45 = vld [vmem:[%s1 + $0xe8] sm:$0xff]
  %v46 = vld [vmem:[%s1 + $0xf0] sm:$0xff]
  %v47 = vld [vmem:[%s1 + $0xf8] sm:$0xff]
  %v48 = vld [vmem:[%s2] sm:$0x1]
  %v50 = vperm.slane %v48, 0
  %52 = vmatpush.msra.mxu0 %v31
  %53 = vmatpush.msra.mxu0 %v30
  %54 = vmatpush.msra.mxu0 %v29
  %55 = vmatpush.msra.mxu0 %v28
  %56 = vmatpush.msra.mxu0 %v27
  %57 = vmatpush.msra.mxu0 %v26
  %58 = vmatpush.msra.mxu0 %v25
  %59 = vmatpush.msra.mxu0 %v24
  %60 = vmatpush.msra.mxu0 %v23
  %61 = vmatpush.msra.mxu0 %v22
  %62 = vmatpush.msra.mxu0 %v21
  %63 = vmatpush.msra.mxu0 %v20
  %64 = vmatpush.msra.mxu0 %v19
  %65 = vmatpush.msra.mxu0 %v18
  %66 = vmatpush.msra.mxu0 %v17
  %67 = vmatpush.msra.mxu0 %v16
  %68 = vmatmul.f32.gmra.mxu0 %v14
  %v69 = vpop.f32.mrf.mxu0
  %v70 = vadd.f32 %v50, %v69
  %71 = vdwg.mxu0
  %72 = vmatpush.msra.mxu0 %v47
  %73 = vmatpush.msra.mxu0 %v46
  %74 = vmatpush.msra.mxu0 %v45
  %75 = vmatpush.msra.mxu0 %v44
  %76 = vmatpush.msra.mxu0 %v43
  %77 = vmatpush.msra.mxu0 %v42
  %78 = vmatpush.msra.mxu0 %v41
  %79 = vmatpush.msra.mxu0 %v40
  %80 = vmatpush.msra.mxu0 %v39
  %81 = vmatpush.msra.mxu0 %v38
  %82 = vmatpush.msra.mxu0 %v37
  %83 = vmatpush.msra.mxu0 %v36
  %84 = vmatpush.msra.mxu0 %v35
  %85 = vmatpush.msra.mxu0 %v34
  %86 = vmatpush.msra.mxu0 %v33
  %87 = vmatpush.msra.mxu0 %v32
  %88 = vmatmul.f32.gmra.mxu0 %v15
  %v89 = vpop.f32.mrf.mxu0
  %v90 = vadd.f32 %v70, %v89
  %91 = vdwg.mxu0
  %vm92 = vcmask 23552
  %93 = vst.msk [vmem:[%s3] sm:$0xff] %vm92, %v90
  // Predicated region
  $region14: #{phd_net_res_forward.59} parent=0 // pred_check
    _
  $region15: #{phd_net_res_forward.59} parent=0 // pred_check_branch
    %95 = sbr.rel (0) target = $region17
  $region16: #{phd_net_res_forward.59} parent=0 // pred_region
    _
  $region17: #{phd_net_res_forward.59} parent=0 // pred_fallthru
    _
  // Predicated region
  $region18: #{phd_net_res_forward.59} parent=0 // pred_check
    _
  $region19: #{phd_net_res_forward.59} parent=0 // pred_check_branch
    %97 = sbr.rel (0) target = $region21
  $region20: #{phd_net_res_forward.59} parent=0 // pred_region
    _
  $region21: #{phd_net_res_forward.59} parent=0 // pred_fallthru
    _

</llo_original>
